<compile_context>
chip_gen: v7x
topology: tpu7x:2x2x1
jax: 0.10.0
libtpu: 0.0.40
codegen_flags: <defaults>
</compile_context>

<pallas_src>
import jax
import jax.numpy as jnp
from jax.experimental import pallas as pl
from jax.experimental.pallas import tpu as pltpu

HIDDEN = 64                                # hidden width of the SLF MLP
MULTIRES_VIEW = 4                          # frequency bands for view-dir embedding
EMB_DIM = 3 + 3 * 2 * MULTIRES_VIEW        # 27
D_IN = 3 + EMB_DIM                         # 30 = points(3) ++ embedded view dirs
D_IN_PAD = 32                              # MLP input rows padded to sublane multiple
HEAD_PAD = 8                               # rgb head padded 3 -> 8 output rows
IN_ROWS = 24                               # packed input slab rows (22 used + 2 pad)
OUT_ROWS = 16                              # packed output slab rows (13 used + 3 pad)
TN = 1024                                  # samples per grid tile (lane axis); sweep 512-2048

# input slab rows:  0:u 1:v 2..10:R(row-major) 11:fx 12:fy 13:cx 14:cy 15:sk
#                   16..18:normal 19..21:point 22..23:zero pad
# output slab rows: 0..2:view_dirs 3..5:normals 6:mask 7..9:rgb 10..12:pre 13..15:pad


def geometry_kernel(in_ref,
                    w0_ref, b0_ref, w1_ref, b1_ref,
                    w2h_ref, w2x_ref, b2_ref, w3_ref, b3_ref, w4_ref, b4_ref,
                    out_ref, xin_ref):
    X = in_ref[...]                                          # (24, TN) f32

    # ---------------- camera rays (get_camera_params: lift with z = 1) --------
    u = X[0:1, :] + 0.5
    v = X[1:2, :] + 0.5
    fx, fy = X[11:12, :], X[12:13, :]
    cx, cy, sk = X[13:14, :], X[14:15, :], X[15:16, :]
    inv_fy = 1.0 / fy
    x_lift = (u - cx + cy * sk * inv_fy - sk * v * inv_fy) / fx     # z == 1
    y_lift = (v - cy) * inv_fy
    # pose @ [x_lift, y_lift, 1, 1] - cam_loc  ==  R @ [x_lift, y_lift, 1]
    wx = X[2:3, :] * x_lift + X[3:4, :] * y_lift + X[4:5, :]
    wy = X[5:6, :] * x_lift + X[6:7, :] * y_lift + X[7:8, :]
    wz = X[8:9, :] * x_lift + X[9:10, :] * y_lift + X[10:11, :]
    inv_rn = jax.lax.rsqrt(jnp.maximum(wx * wx + wy * wy + wz * wz, 1e-24))
    view_dirs = -jnp.concatenate([wx, wy, wz], axis=0) * inv_rn     # (3, TN)
    out_ref[0:3, :] = view_dirs

    # ---------------- normalized normals (F.normalize semantics) --------------
    nrm = X[16:19, :]
    inv_nn = jax.lax.rsqrt(
        jnp.maximum(jnp.sum(nrm * nrm, axis=0, keepdims=True), 1e-24))
    out_ref[3:6, :] = nrm * inv_nn

    # ---------------- render mask: (points != 0).sum(-1) > 0 ------------------
    pts = X[19:22, :]
    nz = jnp.sum((pts != 0.0).astype(jnp.float32), axis=0, keepdims=True)
    out_ref[6:7, :] = (nz > 0.0).astype(jnp.float32)

    # ------- MLP input [points, view_dirs, sin/cos bands] via VMEM scratch ----
    xin_ref[0:3, :] = pts
    xin_ref[3:6, :] = view_dirs
    for k in range(MULTIRES_VIEW):
        f = jnp.float32(2.0 ** k)
        xin_ref[6 + 6 * k: 9 + 6 * k, :] = jnp.sin(f * view_dirs)
        xin_ref[9 + 6 * k:12 + 6 * k, :] = jnp.cos(f * view_dirs)
    xin_ref[D_IN:D_IN_PAD, :] = jnp.zeros((D_IN_PAD - D_IN, TN), jnp.float32)
    x_in = xin_ref[...].astype(jnp.bfloat16)                 # (32, TN) bf16

    # ---------------- surface-light-field MLP (bf16 MXU, f32 accumulation) ----
    h = jnp.maximum(
        jnp.dot(w0_ref[...], x_in, preferred_element_type=jnp.float32)
        + b0_ref[...], 0.0)
    h = jnp.maximum(
        jnp.dot(w1_ref[...], h.astype(jnp.bfloat16),
                preferred_element_type=jnp.float32) + b1_ref[...], 0.0)
    # skip connection without concat: relu(W2_h @ h + W2_x @ x_in + b2)
    h = jnp.maximum(
        jnp.dot(w2h_ref[...], h.astype(jnp.bfloat16),
                preferred_element_type=jnp.float32)
        + jnp.dot(w2x_ref[...], x_in, preferred_element_type=jnp.float32)
        + b2_ref[...], 0.0)
    h = jnp.maximum(
        jnp.dot(w3_ref[...], h.astype(jnp.bfloat16),
                preferred_element_type=jnp.float32) + b3_ref[...], 0.0)
    pre_full = jnp.dot(w4_ref[...], h.astype(jnp.bfloat16),
                       preferred_element_type=jnp.float32) + b4_ref[...]   # (8, TN)
    pre = pre_full[0:3, :]
    out_ref[7:10, :] = jax.nn.sigmoid(pre)
    out_ref[10:13, :] = pre
    out_ref[13:16, :] = jnp.zeros((OUT_ROWS - 13, TN), jnp.float32)


def init_params(key):
    """Deterministic synthetic SLF-MLP weights in their logical (checkpoint-like)
    layout: w0 (D_IN,H), w1 (H,H), w2 (H+D_IN,H) with rows ordered [h, x_in],
    w3 (H,H), w4 (H,3); biases 1-D."""
    H = HIDDEN
    shapes = {
        'w0': (D_IN, H), 'b0': (H,),
        'w1': (H, H),    'b1': (H,),
        'w2': (H + D_IN, H), 'b2': (H,),
        'w3': (H, H),    'b3': (H,),
        'w4': (H, 3),    'b4': (3,),
    }
    params = {}
    names = sorted(shapes)
    keys = jax.random.split(key, len(names))
    for name, k in zip(names, keys):
        shp = shapes[name]
        if name.startswith('w'):
            params[name] = jax.random.normal(k, shp, jnp.float32) / jnp.sqrt(
                jnp.float32(shp[0]))
        else:
            params[name] = jnp.zeros(shp, jnp.float32)
    return params


def prepare_params(params):
    """Transpose / pad / cast logical weights into the kernel layout.
    NOTE: if real checkpoint weights are loaded, the w2 row split must match the
    concat order [h, x_in] (rows 0:H -> w2h, rows H:H+D_IN -> w2x)."""
    H = HIDDEN
    bf = lambda x: x.astype(jnp.bfloat16)
    w0t = jnp.zeros((H, D_IN_PAD), jnp.float32).at[:, :D_IN].set(params['w0'].T)
    w2 = params['w2']
    w2h_t = w2[:H, :].T
    w2x_t = jnp.zeros((H, D_IN_PAD), jnp.float32).at[:, :D_IN].set(w2[H:, :].T)
    w4t = jnp.zeros((HEAD_PAD, H), jnp.float32).at[:3, :].set(params['w4'].T)
    b4 = jnp.zeros((HEAD_PAD, 1), jnp.float32).at[:3, 0].set(params['b4'])
    return dict(
        w0=bf(w0t),            b0=params['b0'].reshape(H, 1),
        w1=bf(params['w1'].T), b1=params['b1'].reshape(H, 1),
        w2h=bf(w2h_t), w2x=bf(w2x_t), b2=params['b2'].reshape(H, 1),
        w3=bf(params['w3'].T), b3=params['b3'].reshape(H, 1),
        w4=bf(w4t),            b4=b4,
    )


def geometry_forward(params, inputs):
    """Mirrors Geometry.forward: returns
    (points, normals, view_dirs, slf_rgb, render_masks, total_samples,
     {}, {'rgb': pre_activation})."""
    intr = inputs['intrinsics'].reshape(-1, 4, 4).astype(jnp.float32)
    pose = inputs['pose'].reshape(-1, 4, 4).astype(jnp.float32)
    uv = inputs['uv'].reshape(-1, 2).astype(jnp.float32)
    points = inputs['positions'].reshape(-1, 3).astype(jnp.float32)
    normals = inputs['normals'].reshape(-1, 3).astype(jnp.float32)
    N = uv.shape[0]
    total_samples = N

    # pack per-sample features into one lane-dense slab (samples on lanes);
    # only R and (fx, fy, cx, cy, sk) are needed — cam_loc cancels in ray dirs.
    R = pose[:, :3, :3].reshape(N, 9)
    K5 = jnp.stack([intr[:, 0, 0], intr[:, 1, 1], intr[:, 0, 2],
                    intr[:, 1, 2], intr[:, 0, 1]], axis=-1)       # fx, fy, cx, cy, sk
    slab = jnp.concatenate(
        [uv, R, K5, normals, points, jnp.zeros((N, IN_ROWS - 22), jnp.float32)],
        axis=-1)                                                  # (N, 24)

    n_pad = pl.cdiv(N, TN) * TN
    slab = jnp.pad(slab, ((0, n_pad - N), (0, 0)), mode='edge')   # padded cols sliced off
    slab_t = slab.T                                               # (24, n_pad)

    kp = prepare_params(params)
    weight_order = ('w0', 'b0', 'w1', 'b1', 'w2h', 'w2x', 'b2', 'w3', 'b3', 'w4', 'b4')

    def _full_spec(a):
        return pl.BlockSpec(a.shape, lambda i: (0, 0))

    grid_spec = pltpu.PrefetchScalarGridSpec(
        num_scalar_prefetch=0,
        grid=(n_pad // TN,),
        in_specs=[pl.BlockSpec((IN_ROWS, TN), lambda i: (0, i))]
                + [_full_spec(kp[name]) for name in weight_order],
        out_specs=pl.BlockSpec((OUT_ROWS, TN), lambda i: (0, i)),
        scratch_shapes=[pltpu.VMEM((D_IN_PAD, TN), jnp.float32)],
    )

    out_slab = pl.pallas_call(
        geometry_kernel,
        grid_spec=grid_spec,
        out_shape=jax.ShapeDtypeStruct((OUT_ROWS, n_pad), jnp.float32),
        compiler_params=pltpu.CompilerParams(dimension_semantics=("parallel",)),
    )(slab_t, *[kp[name] for name in weight_order])

    out = out_slab[:, :N]
    view_dirs = out[0:3, :].T
    normals_n = out[3:6, :].T
    render_masks = out[6, :] > 0.5
    slf_rgb = out[7:10, :].T
    pre_activation_output_geo = {'rgb': out[10:13, :].T}
    return (points, normals_n, view_dirs, slf_rgb, render_masks,
            total_samples, {}, pre_activation_output_geo)


if __name__ == "__main__":
    key = jax.random.PRNGKey(0)
    k_uv, k_pos, k_nrm, k_t, k_w = jax.random.split(key, 5)

    B, S = 2, 100          # 2 views, 100 ray samples each -> N = 200 samples
    N = B * S

    # per-sample 4x4 intrinsics (fx=fy=100, cx=cy=8, no skew)
    K = jnp.array([[100.0, 0.0, 8.0, 0.0],
                   [0.0, 100.0, 8.0, 0.0],
                   [0.0, 0.0, 1.0, 0.0],
                   [0.0, 0.0, 0.0, 1.0]], jnp.float32)
    intrinsics = jnp.broadcast_to(K, (B, S, 4, 4))

    # per-sample 4x4 pose (identity rotation + random translation)
    pose = jnp.broadcast_to(jnp.eye(4, dtype=jnp.float32), (B, S, 4, 4))
    pose = pose.at[:, :, :3, 3].set(0.1 * jax.random.normal(k_t, (B, S, 3)))

    uv = jax.random.uniform(k_uv, (B, S, 2), jnp.float32, 0.0, 16.0)
    positions = jax.random.normal(k_pos, (B, S, 3), jnp.float32)
    positions = positions.at[0, :5].set(0.0)    # exercise render_masks == False
    normals = jax.random.normal(k_nrm, (B, S, 3), jnp.float32)

    inputs = {'intrinsics': intrinsics, 'pose': pose, 'uv': uv,
              'positions': positions, 'normals': normals}
    params = init_params(k_w)

    out = geometry_forward(params, inputs)
    (points, nrm, vdir, slf_rgb, masks, total, _, pre_geo) = out
    jax.block_until_ready(slf_rgb)
    jax.block_until_ready(pre_geo['rgb'])
    jax.block_until_ready(vdir)

    assert points.shape == (N, 3) and nrm.shape == (N, 3)
    assert vdir.shape == (N, 3) and slf_rgb.shape == (N, 3)
    assert masks.shape == (N,) and masks.dtype == jnp.bool_
    assert pre_geo['rgb'].shape == (N, 3) and total == N
    print("KERNEL_OK")
</pallas_src>

<mosaic_0001>
module attributes {stable_mosaic.version = 11 : i64} {
  func.func @geometry_kernel(%arg0: i32, %arg1: memref<24x1024xf32, #tpu.memory_space<vmem>>, %arg2: memref<64x32xbf16, #tpu.memory_space<vmem>>, %arg3: memref<64x1xf32, #tpu.memory_space<vmem>>, %arg4: memref<64x64xbf16, #tpu.memory_space<vmem>>, %arg5: memref<64x1xf32, #tpu.memory_space<vmem>>, %arg6: memref<64x64xbf16, #tpu.memory_space<vmem>>, %arg7: memref<64x32xbf16, #tpu.memory_space<vmem>>, %arg8: memref<64x1xf32, #tpu.memory_space<vmem>>, %arg9: memref<64x64xbf16, #tpu.memory_space<vmem>>, %arg10: memref<64x1xf32, #tpu.memory_space<vmem>>, %arg11: memref<8x64xbf16, #tpu.memory_space<vmem>>, %arg12: memref<8x1xf32, #tpu.memory_space<vmem>>, %arg13: memref<16x1024xf32, #tpu.memory_space<vmem>>, %arg14: memref<32x1024xf32, #tpu.memory_space<vmem>>) attributes {dimension_semantics = [#tpu.dimension_semantics<parallel>], iteration_bounds = array<i64: 1>, scalar_prefetch = 0 : i64, scratch_operands = 1 : i64, tpu.core_type = #tpu.core_type<tc>, window_params = [{transform_indices = @transform_0, window_bounds = array<i64: 24, 1024>}, {pipeline_mode = #tpu.pipeline_mode<synchronous>, transform_indices = @transform_1, window_bounds = array<i64: 64, 32>}, {pipeline_mode = #tpu.pipeline_mode<synchronous>, transform_indices = @transform_2, window_bounds = array<i64: 64, 1>}, {pipeline_mode = #tpu.pipeline_mode<synchronous>, transform_indices = @transform_3, window_bounds = array<i64: 64, 64>}, {pipeline_mode = #tpu.pipeline_mode<synchronous>, transform_indices = @transform_4, window_bounds = array<i64: 64, 1>}, {pipeline_mode = #tpu.pipeline_mode<synchronous>, transform_indices = @transform_5, window_bounds = array<i64: 64, 64>}, {pipeline_mode = #tpu.pipeline_mode<synchronous>, transform_indices = @transform_6, window_bounds = array<i64: 64, 32>}, {pipeline_mode = #tpu.pipeline_mode<synchronous>, transform_indices = @transform_7, window_bounds = array<i64: 64, 1>}, {pipeline_mode = #tpu.pipeline_mode<synchronous>, transform_indices = @transform_8, window_bounds = array<i64: 64, 64>}, {pipeline_mode = #tpu.pipeline_mode<synchronous>, transform_indices = @transform_9, window_bounds = array<i64: 64, 1>}, {pipeline_mode = #tpu.pipeline_mode<synchronous>, transform_indices = @transform_10, window_bounds = array<i64: 8, 64>}, {pipeline_mode = #tpu.pipeline_mode<synchronous>, transform_indices = @transform_11, window_bounds = array<i64: 8, 1>}, {transform_indices = @transform_12, window_bounds = array<i64: 16, 1024>}]} {
    %c0 = arith.constant 0 : index
    %c0_0 = arith.constant 0 : index
    %0 = vector.load %arg1[%c0, %c0_0] : memref<24x1024xf32, #tpu.memory_space<vmem>>, vector<24x1024xf32>
    %1 = vector.extract_strided_slice %0 {offsets = [0, 0], sizes = [1, 1024], strides = [1, 1]} : vector<24x1024xf32> to vector<1x1024xf32>
    %cst = arith.constant 5.000000e-01 : f32
    %2 = vector.broadcast %cst : f32 to vector<1x1024xf32>
    %3 = arith.addf %1, %2 : vector<1x1024xf32>
    %4 = vector.extract_strided_slice %0 {offsets = [1, 0], sizes = [1, 1024], strides = [1, 1]} : vector<24x1024xf32> to vector<1x1024xf32>
    %cst_1 = arith.constant 5.000000e-01 : f32
    %5 = vector.broadcast %cst_1 : f32 to vector<1x1024xf32>
    %6 = arith.addf %4, %5 : vector<1x1024xf32>
    %7 = vector.extract_strided_slice %0 {offsets = [11, 0], sizes = [1, 1024], strides = [1, 1]} : vector<24x1024xf32> to vector<1x1024xf32>
    %8 = vector.extract_strided_slice %0 {offsets = [12, 0], sizes = [1, 1024], strides = [1, 1]} : vector<24x1024xf32> to vector<1x1024xf32>
    %9 = vector.extract_strided_slice %0 {offsets = [13, 0], sizes = [1, 1024], strides = [1, 1]} : vector<24x1024xf32> to vector<1x1024xf32>
    %10 = vector.extract_strided_slice %0 {offsets = [14, 0], sizes = [1, 1024], strides = [1, 1]} : vector<24x1024xf32> to vector<1x1024xf32>
    %11 = vector.extract_strided_slice %0 {offsets = [15, 0], sizes = [1, 1024], strides = [1, 1]} : vector<24x1024xf32> to vector<1x1024xf32>
    %cst_2 = arith.constant 1.000000e+00 : f32
    %12 = vector.broadcast %cst_2 : f32 to vector<1x1024xf32>
    %13 = arith.divf %12, %8 : vector<1x1024xf32>
    %14 = arith.subf %3, %9 : vector<1x1024xf32>
    %15 = arith.mulf %10, %11 : vector<1x1024xf32>
    %16 = arith.mulf %15, %13 : vector<1x1024xf32>
    %17 = arith.addf %14, %16 : vector<1x1024xf32>
    %18 = arith.mulf %11, %6 : vector<1x1024xf32>
    %19 = arith.mulf %18, %13 : vector<1x1024xf32>
    %20 = arith.subf %17, %19 : vector<1x1024xf32>
    %21 = arith.divf %20, %7 : vector<1x1024xf32>
    %22 = arith.subf %6, %10 : vector<1x1024xf32>
    %23 = arith.mulf %22, %13 : vector<1x1024xf32>
    %24 = vector.extract_strided_slice %0 {offsets = [2, 0], sizes = [1, 1024], strides = [1, 1]} : vector<24x1024xf32> to vector<1x1024xf32>
    %25 = arith.mulf %24, %21 : vector<1x1024xf32>
    %26 = vector.extract_strided_slice %0 {offsets = [3, 0], sizes = [1, 1024], strides = [1, 1]} : vector<24x1024xf32> to vector<1x1024xf32>
    %27 = arith.mulf %26, %23 : vector<1x1024xf32>
    %28 = arith.addf %25, %27 : vector<1x1024xf32>
    %29 = vector.extract_strided_slice %0 {offsets = [4, 0], sizes = [1, 1024], strides = [1, 1]} : vector<24x1024xf32> to vector<1x1024xf32>
    %30 = arith.addf %28, %29 : vector<1x1024xf32>
    %31 = vector.extract_strided_slice %0 {offsets = [5, 0], sizes = [1, 1024], strides = [1, 1]} : vector<24x1024xf32> to vector<1x1024xf32>
    %32 = arith.mulf %31, %21 : vector<1x1024xf32>
    %33 = vector.extract_strided_slice %0 {offsets = [6, 0], sizes = [1, 1024], strides = [1, 1]} : vector<24x1024xf32> to vector<1x1024xf32>
    %34 = arith.mulf %33, %23 : vector<1x1024xf32>
    %35 = arith.addf %32, %34 : vector<1x1024xf32>
    %36 = vector.extract_strided_slice %0 {offsets = [7, 0], sizes = [1, 1024], strides = [1, 1]} : vector<24x1024xf32> to vector<1x1024xf32>
    %37 = arith.addf %35, %36 : vector<1x1024xf32>
    %38 = vector.extract_strided_slice %0 {offsets = [8, 0], sizes = [1, 1024], strides = [1, 1]} : vector<24x1024xf32> to vector<1x1024xf32>
    %39 = arith.mulf %38, %21 : vector<1x1024xf32>
    %40 = vector.extract_strided_slice %0 {offsets = [9, 0], sizes = [1, 1024], strides = [1, 1]} : vector<24x1024xf32> to vector<1x1024xf32>
    %41 = arith.mulf %40, %23 : vector<1x1024xf32>
    %42 = arith.addf %39, %41 : vector<1x1024xf32>
    %43 = vector.extract_strided_slice %0 {offsets = [10, 0], sizes = [1, 1024], strides = [1, 1]} : vector<24x1024xf32> to vector<1x1024xf32>
    %44 = arith.addf %42, %43 : vector<1x1024xf32>
    %45 = arith.mulf %30, %30 : vector<1x1024xf32>
    %46 = arith.mulf %37, %37 : vector<1x1024xf32>
    %47 = arith.addf %45, %46 : vector<1x1024xf32>
    %48 = arith.mulf %44, %44 : vector<1x1024xf32>
    %49 = arith.addf %47, %48 : vector<1x1024xf32>
    %cst_3 = arith.constant 1.000000e-24 : f32
    %50 = vector.broadcast %cst_3 : f32 to vector<1x1024xf32>
    %51 = arith.maximumf %49, %50 : vector<1x1024xf32>
    %52 = math.rsqrt %51 : vector<1x1024xf32>
    %53 = tpu.concatenate %30, %37, %44 in 0 : vector<1x1024xf32>, vector<1x1024xf32>, vector<1x1024xf32> -> vector<3x1024xf32>
    %cst_4 = arith.constant 0.000000e+00 : f32
    %54 = vector.broadcast %cst_4 : f32 to vector<3x1024xf32>
    %55 = arith.subf %54, %53 : vector<3x1024xf32>
    %56 = vector.broadcast %52 : vector<1x1024xf32> to vector<3x1024xf32>
    %57 = arith.mulf %55, %56 : vector<3x1024xf32>
    %c0_5 = arith.constant 0 : index
    %c0_6 = arith.constant 0 : index
    %58 = vector.load %arg13[%c0_5, %c0_6] : memref<16x1024xf32, #tpu.memory_space<vmem>>, vector<3x1024xf32>
    tpu.vector_store %arg13[%c0_5, %c0_6], %57 {strides = array<i32>} : memref<16x1024xf32, #tpu.memory_space<vmem>>, vector<3x1024xf32>,
    %59 = vector.extract_strided_slice %0 {offsets = [16, 0], sizes = [3, 1024], strides = [1, 1]} : vector<24x1024xf32> to vector<3x1024xf32>
    %60 = arith.mulf %59, %59 : vector<3x1024xf32>
    %cst_7 = arith.constant dense<0.000000e+00> : vector<1024xf32>
    %61 = vector.multi_reduction <add>, %60, %cst_7 [0] : vector<3x1024xf32> to vector<1024xf32>
    %62 = vector.shape_cast %61 : vector<1024xf32> to vector<1x1024xf32>
    %cst_8 = arith.constant 1.000000e-24 : f32
    %63 = vector.broadcast %cst_8 : f32 to vector<1x1024xf32>
    %64 = arith.maximumf %62, %63 : vector<1x1024xf32>
    %65 = math.rsqrt %64 : vector<1x1024xf32>
    %66 = vector.broadcast %65 : vector<1x1024xf32> to vector<3x1024xf32>
    %67 = arith.mulf %59, %66 : vector<3x1024xf32>
    %c3 = arith.constant 3 : index
    %c0_9 = arith.constant 0 : index
    %68 = vector.load %arg13[%c3, %c0_9] : memref<16x1024xf32, #tpu.memory_space<vmem>>, vector<3x1024xf32>
    tpu.vector_store %arg13[%c3, %c0_9], %67 {strides = array<i32>} : memref<16x1024xf32, #tpu.memory_space<vmem>>, vector<3x1024xf32>,
    %69 = vector.extract_strided_slice %0 {offsets = [19, 0], sizes = [3, 1024], strides = [1, 1]} : vector<24x1024xf32> to vector<3x1024xf32>
    %cst_10 = arith.constant 0.000000e+00 : f32
    %70 = vector.broadcast %cst_10 : f32 to vector<3x1024xf32>
    %71 = arith.cmpf one, %69, %70 : vector<3x1024xf32>
    %72 = arith.extui %71 : vector<3x1024xi1> to vector<3x1024xi32>
    %73 = arith.sitofp %72 : vector<3x1024xi32> to vector<3x1024xf32>
    %cst_11 = arith.constant dense<0.000000e+00> : vector<1024xf32>
    %74 = vector.multi_reduction <add>, %73, %cst_11 [0] : vector<3x1024xf32> to vector<1024xf32>
    %75 = vector.shape_cast %74 : vector<1024xf32> to vector<1x1024xf32>
    %cst_12 = arith.constant 0.000000e+00 : f32
    %76 = vector.broadcast %cst_12 : f32 to vector<1x1024xf32>
    %77 = arith.cmpf ogt, %75, %76 : vector<1x1024xf32>
    %78 = arith.extui %77 : vector<1x1024xi1> to vector<1x1024xi32>
    %79 = arith.sitofp %78 : vector<1x1024xi32> to vector<1x1024xf32>
    %c6 = arith.constant 6 : index
    %c0_13 = arith.constant 0 : index
    %80 = vector.load %arg13[%c6, %c0_13] : memref<16x1024xf32, #tpu.memory_space<vmem>>, vector<1x1024xf32>
    tpu.vector_store %arg13[%c6, %c0_13], %79 {strides = array<i32>} : memref<16x1024xf32, #tpu.memory_space<vmem>>, vector<1x1024xf32>,
    %c0_14 = arith.constant 0 : index
    %c0_15 = arith.constant 0 : index
    %81 = vector.load %arg14[%c0_14, %c0_15] : memref<32x1024xf32, #tpu.memory_space<vmem>>, vector<3x1024xf32>
    tpu.vector_store %arg14[%c0_14, %c0_15], %69 {strides = array<i32>} : memref<32x1024xf32, #tpu.memory_space<vmem>>, vector<3x1024xf32>,
    %c3_16 = arith.constant 3 : index
    %c0_17 = arith.constant 0 : index
    %82 = vector.load %arg14[%c3_16, %c0_17] : memref<32x1024xf32, #tpu.memory_space<vmem>>, vector<3x1024xf32>
    tpu.vector_store %arg14[%c3_16, %c0_17], %57 {strides = array<i32>} : memref<32x1024xf32, #tpu.memory_space<vmem>>, vector<3x1024xf32>,
    %cst_18 = arith.constant 1.000000e+00 : f32
    %83 = vector.broadcast %cst_18 : f32 to vector<3x1024xf32>
    %84 = arith.mulf %83, %57 : vector<3x1024xf32>
    %85 = math.sin %84 : vector<3x1024xf32>
    %c6_19 = arith.constant 6 : index
    %c0_20 = arith.constant 0 : index
    %86 = vector.load %arg14[%c6_19, %c0_20] : memref<32x1024xf32, #tpu.memory_space<vmem>>, vector<3x1024xf32>
    tpu.vector_store %arg14[%c6_19, %c0_20], %85 {strides = array<i32>} : memref<32x1024xf32, #tpu.memory_space<vmem>>, vector<3x1024xf32>,
    %cst_21 = arith.constant 1.000000e+00 : f32
    %87 = vector.broadcast %cst_21 : f32 to vector<3x1024xf32>
    %88 = arith.mulf %87, %57 : vector<3x1024xf32>
    %89 = math.cos %88 : vector<3x1024xf32>
    %c9 = arith.constant 9 : index
    %c0_22 = arith.constant 0 : index
    %90 = vector.load %arg14[%c9, %c0_22] : memref<32x1024xf32, #tpu.memory_space<vmem>>, vector<3x1024xf32>
    tpu.vector_store %arg14[%c9, %c0_22], %89 {strides = array<i32>} : memref<32x1024xf32, #tpu.memory_space<vmem>>, vector<3x1024xf32>,
    %cst_23 = arith.constant 2.000000e+00 : f32
    %91 = vector.broadcast %cst_23 : f32 to vector<3x1024xf32>
    %92 = arith.mulf %91, %57 : vector<3x1024xf32>
    %93 = math.sin %92 : vector<3x1024xf32>
    %c12 = arith.constant 12 : index
    %c0_24 = arith.constant 0 : index
    %94 = vector.load %arg14[%c12, %c0_24] : memref<32x1024xf32, #tpu.memory_space<vmem>>, vector<3x1024xf32>
    tpu.vector_store %arg14[%c12, %c0_24], %93 {strides = array<i32>} : memref<32x1024xf32, #tpu.memory_space<vmem>>, vector<3x1024xf32>,
    %cst_25 = arith.constant 2.000000e+00 : f32
    %95 = vector.broadcast %cst_25 : f32 to vector<3x1024xf32>
    %96 = arith.mulf %95, %57 : vector<3x1024xf32>
    %97 = math.cos %96 : vector<3x1024xf32>
    %c15 = arith.constant 15 : index
    %c0_26 = arith.constant 0 : index
    %98 = vector.load %arg14[%c15, %c0_26] : memref<32x1024xf32, #tpu.memory_space<vmem>>, vector<3x1024xf32>
    tpu.vector_store %arg14[%c15, %c0_26], %97 {strides = array<i32>} : memref<32x1024xf32, #tpu.memory_space<vmem>>, vector<3x1024xf32>,
    %cst_27 = arith.constant 4.000000e+00 : f32
    %99 = vector.broadcast %cst_27 : f32 to vector<3x1024xf32>
    %100 = arith.mulf %99, %57 : vector<3x1024xf32>
    %101 = math.sin %100 : vector<3x1024xf32>
    %c18 = arith.constant 18 : index
    %c0_28 = arith.constant 0 : index
    %102 = vector.load %arg14[%c18, %c0_28] : memref<32x1024xf32, #tpu.memory_space<vmem>>, vector<3x1024xf32>
    tpu.vector_store %arg14[%c18, %c0_28], %101 {strides = array<i32>} : memref<32x1024xf32, #tpu.memory_space<vmem>>, vector<3x1024xf32>,
    %cst_29 = arith.constant 4.000000e+00 : f32
    %103 = vector.broadcast %cst_29 : f32 to vector<3x1024xf32>
    %104 = arith.mulf %103, %57 : vector<3x1024xf32>
    %105 = math.cos %104 : vector<3x1024xf32>
    %c21 = arith.constant 21 : index
    %c0_30 = arith.constant 0 : index
    %106 = vector.load %arg14[%c21, %c0_30] : memref<32x1024xf32, #tpu.memory_space<vmem>>, vector<3x1024xf32>
    tpu.vector_store %arg14[%c21, %c0_30], %105 {strides = array<i32>} : memref<32x1024xf32, #tpu.memory_space<vmem>>, vector<3x1024xf32>,
    %cst_31 = arith.constant 8.000000e+00 : f32
    %107 = vector.broadcast %cst_31 : f32 to vector<3x1024xf32>
    %108 = arith.mulf %107, %57 : vector<3x1024xf32>
    %109 = math.sin %108 : vector<3x1024xf32>
    %c24 = arith.constant 24 : index
    %c0_32 = arith.constant 0 : index
    %110 = vector.load %arg14[%c24, %c0_32] : memref<32x1024xf32, #tpu.memory_space<vmem>>, vector<3x1024xf32>
    tpu.vector_store %arg14[%c24, %c0_32], %109 {strides = array<i32>} : memref<32x1024xf32, #tpu.memory_space<vmem>>, vector<3x1024xf32>,
    %cst_33 = arith.constant 8.000000e+00 : f32
    %111 = vector.broadcast %cst_33 : f32 to vector<3x1024xf32>
    %112 = arith.mulf %111, %57 : vector<3x1024xf32>
    %113 = math.cos %112 : vector<3x1024xf32>
    %c27 = arith.constant 27 : index
    %c0_34 = arith.constant 0 : index
    %114 = vector.load %arg14[%c27, %c0_34] : memref<32x1024xf32, #tpu.memory_space<vmem>>, vector<3x1024xf32>
    tpu.vector_store %arg14[%c27, %c0_34], %113 {strides = array<i32>} : memref<32x1024xf32, #tpu.memory_space<vmem>>, vector<3x1024xf32>,
    %cst_35 = arith.constant 0.000000e+00 : f32
    %115 = vector.broadcast %cst_35 : f32 to vector<2x1024xf32>
    %c30 = arith.constant 30 : index
    %c0_36 = arith.constant 0 : index
    %116 = vector.load %arg14[%c30, %c0_36] : memref<32x1024xf32, #tpu.memory_space<vmem>>, vector<2x1024xf32>
    tpu.vector_store %arg14[%c30, %c0_36], %115 {strides = array<i32>} : memref<32x1024xf32, #tpu.memory_space<vmem>>, vector<2x1024xf32>,
    %c0_37 = arith.constant 0 : index
    %c0_38 = arith.constant 0 : index
    %117 = vector.load %arg14[%c0_37, %c0_38] : memref<32x1024xf32, #tpu.memory_space<vmem>>, vector<32x1024xf32>
    %118 = arith.truncf %117 : vector<32x1024xf32> to vector<32x1024xbf16>
    %c0_39 = arith.constant 0 : index
    %c0_40 = arith.constant 0 : index
    %119 = vector.load %arg2[%c0_39, %c0_40] : memref<64x32xbf16, #tpu.memory_space<vmem>>, vector<64x32xbf16>
    %cst_41 = arith.constant dense<0.000000e+00> : vector<64x1024xf32>
    %120 = tpu.matmul %119, %118, %cst_41 {dimension_numbers = #tpu.dot_dimension_numbers<[1], [0], [0], [1], [0, 0, 1, 1], [], []>} : vector<64x32xbf16>, vector<32x1024xbf16>, vector<64x1024xf32> -> vector<64x1024xf32>
    %c0_42 = arith.constant 0 : index
    %c0_43 = arith.constant 0 : index
    %121 = vector.load %arg3[%c0_42, %c0_43] : memref<64x1xf32, #tpu.memory_space<vmem>>, vector<64x1xf32>
    %122 = vector.broadcast %121 : vector<64x1xf32> to vector<64x1024xf32>
    %123 = arith.addf %120, %122 : vector<64x1024xf32>
    %cst_44 = arith.constant 0.000000e+00 : f32
    %124 = vector.broadcast %cst_44 : f32 to vector<64x1024xf32>
    %125 = arith.maximumf %123, %124 : vector<64x1024xf32>
    %c0_45 = arith.constant 0 : index
    %c0_46 = arith.constant 0 : index
    %126 = vector.load %arg4[%c0_45, %c0_46] : memref<64x64xbf16, #tpu.memory_space<vmem>>, vector<64x64xbf16>
    %127 = arith.truncf %125 : vector<64x1024xf32> to vector<64x1024xbf16>
    %cst_47 = arith.constant dense<0.000000e+00> : vector<64x1024xf32>
    %128 = tpu.matmul %126, %127, %cst_47 {dimension_numbers = #tpu.dot_dimension_numbers<[1], [0], [0], [1], [0, 0, 1, 1], [], []>} : vector<64x64xbf16>, vector<64x1024xbf16>, vector<64x1024xf32> -> vector<64x1024xf32>
    %c0_48 = arith.constant 0 : index
    %c0_49 = arith.constant 0 : index
    %129 = vector.load %arg5[%c0_48, %c0_49] : memref<64x1xf32, #tpu.memory_space<vmem>>, vector<64x1xf32>
    %130 = vector.broadcast %129 : vector<64x1xf32> to vector<64x1024xf32>
    %131 = arith.addf %128, %130 : vector<64x1024xf32>
    %cst_50 = arith.constant 0.000000e+00 : f32
    %132 = vector.broadcast %cst_50 : f32 to vector<64x1024xf32>
    %133 = arith.maximumf %131, %132 : vector<64x1024xf32>
    %c0_51 = arith.constant 0 : index
    %c0_52 = arith.constant 0 : index
    %134 = vector.load %arg6[%c0_51, %c0_52] : memref<64x64xbf16, #tpu.memory_space<vmem>>, vector<64x64xbf16>
    %135 = arith.truncf %133 : vector<64x1024xf32> to vector<64x1024xbf16>
    %cst_53 = arith.constant dense<0.000000e+00> : vector<64x1024xf32>
    %136 = tpu.matmul %134, %135, %cst_53 {dimension_numbers = #tpu.dot_dimension_numbers<[1], [0], [0], [1], [0, 0, 1, 1], [], []>} : vector<64x64xbf16>, vector<64x1024xbf16>, vector<64x1024xf32> -> vector<64x1024xf32>
    %c0_54 = arith.constant 0 : index
    %c0_55 = arith.constant 0 : index
    %137 = vector.load %arg7[%c0_54, %c0_55] : memref<64x32xbf16, #tpu.memory_space<vmem>>, vector<64x32xbf16>
    %cst_56 = arith.constant dense<0.000000e+00> : vector<64x1024xf32>
    %138 = tpu.matmul %137, %118, %cst_56 {dimension_numbers = #tpu.dot_dimension_numbers<[1], [0], [0], [1], [0, 0, 1, 1], [], []>} : vector<64x32xbf16>, vector<32x1024xbf16>, vector<64x1024xf32> -> vector<64x1024xf32>
    %139 = arith.addf %136, %138 : vector<64x1024xf32>
    %c0_57 = arith.constant 0 : index
    %c0_58 = arith.constant 0 : index
    %140 = vector.load %arg8[%c0_57, %c0_58] : memref<64x1xf32, #tpu.memory_space<vmem>>, vector<64x1xf32>
    %141 = vector.broadcast %140 : vector<64x1xf32> to vector<64x1024xf32>
    %142 = arith.addf %139, %141 : vector<64x1024xf32>
    %cst_59 = arith.constant 0.000000e+00 : f32
    %143 = vector.broadcast %cst_59 : f32 to vector<64x1024xf32>
    %144 = arith.maximumf %142, %143 : vector<64x1024xf32>
    %c0_60 = arith.constant 0 : index
    %c0_61 = arith.constant 0 : index
    %145 = vector.load %arg9[%c0_60, %c0_61] : memref<64x64xbf16, #tpu.memory_space<vmem>>, vector<64x64xbf16>
    %146 = arith.truncf %144 : vector<64x1024xf32> to vector<64x1024xbf16>
    %cst_62 = arith.constant dense<0.000000e+00> : vector<64x1024xf32>
    %147 = tpu.matmul %145, %146, %cst_62 {dimension_numbers = #tpu.dot_dimension_numbers<[1], [0], [0], [1], [0, 0, 1, 1], [], []>} : vector<64x64xbf16>, vector<64x1024xbf16>, vector<64x1024xf32> -> vector<64x1024xf32>
    %c0_63 = arith.constant 0 : index
    %c0_64 = arith.constant 0 : index
    %148 = vector.load %arg10[%c0_63, %c0_64] : memref<64x1xf32, #tpu.memory_space<vmem>>, vector<64x1xf32>
    %149 = vector.broadcast %148 : vector<64x1xf32> to vector<64x1024xf32>
    %150 = arith.addf %147, %149 : vector<64x1024xf32>
    %cst_65 = arith.constant 0.000000e+00 : f32
    %151 = vector.broadcast %cst_65 : f32 to vector<64x1024xf32>
    %152 = arith.maximumf %150, %151 : vector<64x1024xf32>
    %c0_66 = arith.constant 0 : index
    %c0_67 = arith.constant 0 : index
    %153 = vector.load %arg11[%c0_66, %c0_67] : memref<8x64xbf16, #tpu.memory_space<vmem>>, vector<8x64xbf16>
    %154 = arith.truncf %152 : vector<64x1024xf32> to vector<64x1024xbf16>
    %cst_68 = arith.constant dense<0.000000e+00> : vector<8x1024xf32>
    %155 = tpu.matmul %153, %154, %cst_68 {dimension_numbers = #tpu.dot_dimension_numbers<[1], [0], [0], [1], [0, 0, 1, 1], [], []>} : vector<8x64xbf16>, vector<64x1024xbf16>, vector<8x1024xf32> -> vector<8x1024xf32>
    %c0_69 = arith.constant 0 : index
    %c0_70 = arith.constant 0 : index
    %156 = vector.load %arg12[%c0_69, %c0_70] : memref<8x1xf32, #tpu.memory_space<vmem>>, vector<8x1xf32>
    %157 = vector.broadcast %156 : vector<8x1xf32> to vector<8x1024xf32>
    %158 = arith.addf %155, %157 : vector<8x1024xf32>
    %159 = vector.extract_strided_slice %158 {offsets = [0, 0], sizes = [3, 1024], strides = [1, 1]} : vector<8x1024xf32> to vector<3x1024xf32>
    %160 = arith.negf %159 : vector<3x1024xf32>
    %161 = math.exp %160 : vector<3x1024xf32>
    %cst_71 = arith.constant 1.000000e+00 : f32
    %162 = vector.broadcast %cst_71 : f32 to vector<3x1024xf32>
    %163 = arith.addf %162, %161 : vector<3x1024xf32>
    %164 = arith.divf %162, %163 : vector<3x1024xf32>
    %c7 = arith.constant 7 : index
    %c0_72 = arith.constant 0 : index
    %165 = vector.load %arg13[%c7, %c0_72] : memref<16x1024xf32, #tpu.memory_space<vmem>>, vector<3x1024xf32>
    tpu.vector_store %arg13[%c7, %c0_72], %164 {strides = array<i32>} : memref<16x1024xf32, #tpu.memory_space<vmem>>, vector<3x1024xf32>,
    %c10 = arith.constant 10 : index
    %c0_73 = arith.constant 0 : index
    %166 = vector.load %arg13[%c10, %c0_73] : memref<16x1024xf32, #tpu.memory_space<vmem>>, vector<3x1024xf32>
    tpu.vector_store %arg13[%c10, %c0_73], %159 {strides = array<i32>} : memref<16x1024xf32, #tpu.memory_space<vmem>>, vector<3x1024xf32>,
    %cst_74 = arith.constant 0.000000e+00 : f32
    %167 = vector.broadcast %cst_74 : f32 to vector<3x1024xf32>
    %c13 = arith.constant 13 : index
    %c0_75 = arith.constant 0 : index
    %168 = vector.load %arg13[%c13, %c0_75] : memref<16x1024xf32, #tpu.memory_space<vmem>>, vector<3x1024xf32>
    tpu.vector_store %arg13[%c13, %c0_75], %167 {strides = array<i32>} : memref<16x1024xf32, #tpu.memory_space<vmem>>, vector<3x1024xf32>,
    return
  }
  func.func @transform_0(%arg0: i32) -> (i32, i32) {
    %c0_i32 = arith.constant 0 : i32
    %c0_i32_0 = arith.constant 0 : i32
    return %c0_i32, %arg0 : i32, i32
  }
  func.func @transform_1(%arg0: i32) -> (i32, i32) {
    %c0_i32 = arith.constant 0 : i32
    %c0_i32_0 = arith.constant 0 : i32
    %c0_i32_1 = arith.constant 0 : i32
    return %c0_i32, %c0_i32_0 : i32, i32
  }
  func.func @transform_2(%arg0: i32) -> (i32, i32) {
    %c0_i32 = arith.constant 0 : i32
    %c0_i32_0 = arith.constant 0 : i32
    %c0_i32_1 = arith.constant 0 : i32
    return %c0_i32, %c0_i32_0 : i32, i32
  }
  func.func @transform_3(%arg0: i32) -> (i32, i32) {
    %c0_i32 = arith.constant 0 : i32
    %c0_i32_0 = arith.constant 0 : i32
    %c0_i32_1 = arith.constant 0 : i32
    return %c0_i32, %c0_i32_0 : i32, i32
  }
  func.func @transform_4(%arg0: i32) -> (i32, i32) {
    %c0_i32 = arith.constant 0 : i32
    %c0_i32_0 = arith.constant 0 : i32
    %c0_i32_1 = arith.constant 0 : i32
    return %c0_i32, %c0_i32_0 : i32, i32
  }
  func.func @transform_5(%arg0: i32) -> (i32, i32) {
    %c0_i32 = arith.constant 0 : i32
    %c0_i32_0 = arith.constant 0 : i32
    %c0_i32_1 = arith.constant 0 : i32
    return %c0_i32, %c0_i32_0 : i32, i32
  }
  func.func @transform_6(%arg0: i32) -> (i32, i32) {
    %c0_i32 = arith.constant 0 : i32
    %c0_i32_0 = arith.constant 0 : i32
    %c0_i32_1 = arith.constant 0 : i32
    return %c0_i32, %c0_i32_0 : i32, i32
  }
  func.func @transform_7(%arg0: i32) -> (i32, i32) {
    %c0_i32 = arith.constant 0 : i32
    %c0_i32_0 = arith.constant 0 : i32
    %c0_i32_1 = arith.constant 0 : i32
    return %c0_i32, %c0_i32_0 : i32, i32
  }
  func.func @transform_8(%arg0: i32) -> (i32, i32) {
    %c0_i32 = arith.constant 0 : i32
    %c0_i32_0 = arith.constant 0 : i32
    %c0_i32_1 = arith.constant 0 : i32
    return %c0_i32, %c0_i32_0 : i32, i32
  }
  func.func @transform_9(%arg0: i32) -> (i32, i32) {
    %c0_i32 = arith.constant 0 : i32
    %c0_i32_0 = arith.constant 0 : i32
    %c0_i32_1 = arith.constant 0 : i32
    return %c0_i32, %c0_i32_0 : i32, i32
  }
  func.func @transform_10(%arg0: i32) -> (i32, i32) {
    %c0_i32 = arith.constant 0 : i32
    %c0_i32_0 = arith.constant 0 : i32
    %c0_i32_1 = arith.constant 0 : i32
    return %c0_i32, %c0_i32_0 : i32, i32
  }
  func.func @transform_11(%arg0: i32) -> (i32, i32) {
    %c0_i32 = arith.constant 0 : i32
    %c0_i32_0 = arith.constant 0 : i32
    %c0_i32_1 = arith.constant 0 : i32
    return %c0_i32, %c0_i32_0 : i32, i32
  }
  func.func @transform_12(%arg0: i32) -> (i32, i32) {
    %c0_i32 = arith.constant 0 : i32
    %c0_i32_0 = arith.constant 0 : i32
    return %c0_i32, %arg0 : i32, i32
  }
}

</mosaic_0001>

<llo_original>
// kernel: tpu_custom_call.1
$region0: #{tpu_custom_call.1}
  #allocation0 [shape = 'u32[]', space=smem, size = 0x4, offset = 0x4, fixed_abs, tag = 'smem constant byte address 0x4 - core index']
  #allocation1 [shape = 'u32[144,128]{1,0:T(1,128)}', space=vmem, size = 0x12000, scoped, tag = 'internal scratch']
  #allocation2 [shape = 'f32[32,1024]{1,0:T(8,128)}', space=vmem, size = 0x20000, scoped, tag = 'scratch operand']
  %s0 = inlined_call_operand.vmem [shape: f32[24,1024], index: 0, kind: input, shape index: {}]
  %s1 = inlined_call_operand.vmem [shape: bf16[64,32], index: 1, kind: input, shape index: {}]
  %s2 = inlined_call_operand.vmem [shape: f32[64,1], index: 2, kind: input, shape index: {}]
  %s3 = inlined_call_operand.vmem [shape: bf16[64,64], index: 3, kind: input, shape index: {}]
  %s4 = inlined_call_operand.vmem [shape: f32[64,1], index: 4, kind: input, shape index: {}]
  %s5 = inlined_call_operand.vmem [shape: bf16[64,64], index: 5, kind: input, shape index: {}]
  %s6 = inlined_call_operand.vmem [shape: bf16[64,32], index: 6, kind: input, shape index: {}]
  %s7 = inlined_call_operand.vmem [shape: f32[64,1], index: 7, kind: input, shape index: {}]
  %s8 = inlined_call_operand.vmem [shape: bf16[64,64], index: 8, kind: input, shape index: {}]
  %s9 = inlined_call_operand.vmem [shape: f32[64,1], index: 9, kind: input, shape index: {}]
  %s10 = inlined_call_operand.vmem [shape: bf16[8,64], index: 10, kind: input, shape index: {}]
  %s11 = inlined_call_operand.vmem [shape: f32[8,1], index: 11, kind: input, shape index: {}]
  %s12 = inlined_call_operand.hbm [shape: f32[16,1024], index: 12, kind: output, shape index: {}]
  %s13 = sld [smem:[#allocation0]]
  $region58: #{tpu_custom_call.1} parent=0
    _
  %s15 = ssub.s32 1, %s13
  %s16 = scalar_select 0, %s15, %s13
  $region1: #{tpu_custom_call.1} parent=0
    #allocation3 [shape = 'u8[65536]{0}', space=vmem, size = 0x10000, scoped, tag = 'output window, operand 0, single buffered']
    #allocation4 [shape = 's32[1]{0}', space=sflag, size = 0x4, scoped, tag = 'scoped memory for tpu_custom_call.1']
    %17 = vsyncpa [#allocation4], 0
    // Predicated region
    $region2: #{tpu_custom_call.1} parent=1 // pred_check
      _
    $region3: #{tpu_custom_call.1} parent=1 // pred_check_branch
      %19 = sbr.rel (0) target = $region5
    $region4: #{tpu_custom_call.1} parent=1 // pred_region
      _
    $region5: #{tpu_custom_call.1} parent=1 // pred_fallthru
      _
    // Predicated region
    $region6: #{tpu_custom_call.1} parent=1 // pred_check
      _
    $region7: #{tpu_custom_call.1} parent=1 // pred_check_branch
      %21 = sbr.rel (0) target = $region9
    $region8: #{tpu_custom_call.1} parent=1 // pred_region
      _
    $region9: #{tpu_custom_call.1} parent=1 // pred_fallthru
      _
    // Predicated region
    $region10: #{tpu_custom_call.1} parent=1 // pred_check
      _
    $region11: #{tpu_custom_call.1} parent=1 // pred_check_branch
      %23 = sbr.rel (0) target = $region13
    $region12: #{tpu_custom_call.1} parent=1 // pred_region
      _
    $region13: #{tpu_custom_call.1} parent=1 // pred_fallthru
      _
    // Predicated region
    $region14: #{tpu_custom_call.1} parent=1 // pred_check
      _
    $region15: #{tpu_custom_call.1} parent=1 // pred_check_branch
      %25 = sbr.rel (0) target = $region17
    $region16: #{tpu_custom_call.1} parent=1 // pred_region
      _
    $region17: #{tpu_custom_call.1} parent=1 // pred_fallthru
      _
    // Predicated region
    $region18: #{tpu_custom_call.1} parent=1 // pred_check
      _
    $region19: #{tpu_custom_call.1} parent=1 // pred_check_branch
      %27 = sbr.rel (0) target = $region21
    $region20: #{tpu_custom_call.1} parent=1 // pred_region
      _
    $region21: #{tpu_custom_call.1} parent=1 // pred_fallthru
      _
    // Predicated region
    $region22: #{tpu_custom_call.1} parent=1 // pred_check
      _
    $region23: #{tpu_custom_call.1} parent=1 // pred_check_branch
      %29 = sbr.rel (0) target = $region25
    $region24: #{tpu_custom_call.1} parent=1 // pred_region
      _
    $region25: #{tpu_custom_call.1} parent=1 // pred_fallthru
      _
    // Predicated region
    $region26: #{tpu_custom_call.1} parent=1 // pred_check
      _
    $region27: #{tpu_custom_call.1} parent=1 // pred_check_branch
      %31 = sbr.rel (0) target = $region29
    $region28: #{tpu_custom_call.1} parent=1 // pred_region
      _
    $region29: #{tpu_custom_call.1} parent=1 // pred_fallthru
      _
    // Predicated region
    $region30: #{tpu_custom_call.1} parent=1 // pred_check
      _
    $region31: #{tpu_custom_call.1} parent=1 // pred_check_branch
      %33 = sbr.rel (0) target = $region33
    $region32: #{tpu_custom_call.1} parent=1 // pred_region
      _
    $region33: #{tpu_custom_call.1} parent=1 // pred_fallthru
      _
    // Predicated region
    $region34: #{tpu_custom_call.1} parent=1 // pred_check
      _
    $region35: #{tpu_custom_call.1} parent=1 // pred_check_branch
      %35 = sbr.rel (0) target = $region37
    $region36: #{tpu_custom_call.1} parent=1 // pred_region
      _
    $region37: #{tpu_custom_call.1} parent=1 // pred_fallthru
      _
    // Predicated region
    $region38: #{tpu_custom_call.1} parent=1 // pred_check
      _
    $region39: #{tpu_custom_call.1} parent=1 // pred_check_branch
      %37 = sbr.rel (0) target = $region41
    $region40: #{tpu_custom_call.1} parent=1 // pred_region
      _
    $region41: #{tpu_custom_call.1} parent=1 // pred_fallthru
      _
    // Predicated region
    $region42: #{tpu_custom_call.1} parent=1 // pred_check
      _
    $region43: #{tpu_custom_call.1} parent=1 // pred_check_branch
      %39 = sbr.rel (0) target = $region45
    $region44: #{tpu_custom_call.1} parent=1 // pred_region
      _
    $region45: #{tpu_custom_call.1} parent=1 // pred_fallthru
      _
    // Predicated region
    $region46: #{tpu_custom_call.1} parent=1 // pred_check
      _
    $region47: #{tpu_custom_call.1} parent=1 // pred_check_branch
      %41 = sbr.rel (0) target = $region49
    $region48: #{tpu_custom_call.1} parent=1 // pred_region
      _
    $region49: #{tpu_custom_call.1} parent=1 // pred_fallthru
      _
    %v43 = vld [vmem:[%s0] sm:$0xff]
    %v44 = vld [vmem:[%s0 + $0x8] sm:$0xff]
    %v45 = vld [vmem:[%s0 + $0x10] sm:$0xff]
    %v46 = vld [vmem:[%s0 + $0x18] sm:$0xff]
    %v47 = vld [vmem:[%s0 + $0x20] sm:$0xff]
    %v48 = vld [vmem:[%s0 + $0x28] sm:$0xff]
    %v49 = vld [vmem:[%s0 + $0x30] sm:$0xff]
    %v50 = vld [vmem:[%s0 + $0x38] sm:$0xff]
    %v51 = vld [vmem:[%s0 + $0x40] sm:$0xff]
    %v52 = vld [vmem:[%s0 + $0x48] sm:$0xff]
    %v53 = vld [vmem:[%s0 + $0x50] sm:$0xff]
    %v54 = vld [vmem:[%s0 + $0x58] sm:$0xff]
    %v55 = vld [vmem:[%s0 + $0x60] sm:$0xff]
    %v56 = vld [vmem:[%s0 + $0x68] sm:$0xff]
    %v57 = vld [vmem:[%s0 + $0x70] sm:$0xff]
    %v58 = vld [vmem:[%s0 + $0x78] sm:$0xff]
    %v59 = vld [vmem:[%s0 + $0x80] sm:$0xff]
    %v60 = vld [vmem:[%s0 + $0x88] sm:$0xff]
    %v61 = vld [vmem:[%s0 + $0x90] sm:$0xff]
    %v62 = vld [vmem:[%s0 + $0x98] sm:$0xff]
    %v63 = vld [vmem:[%s0 + $0xa0] sm:$0xff]
    %v64 = vld [vmem:[%s0 + $0xa8] sm:$0xff]
    %v65 = vld [vmem:[%s0 + $0xb0] sm:$0xff]
    %v66 = vld [vmem:[%s0 + $0xb8] sm:$0xff]
    %v67 = vadd.f32 %v43, 0.5
    %v68 = vadd.f32 %v44, 0.5
    %v69 = vadd.f32 %v45, 0.5
    %v70 = vadd.f32 %v46, 0.5
    %v71 = vadd.f32 %v47, 0.5
    %v72 = vadd.f32 %v48, 0.5
    %v73 = vadd.f32 %v49, 0.5
    %v74 = vadd.f32 %v50, 0.5
    %v75 = vrcp.pop %v51
    %v76 = vmul.f32 1.0, %v75
    %v77 = vrcp.pop %v52
    %v78 = vmul.f32 1.0, %v77
    %v79 = vrcp.pop %v53
    %v80 = vmul.f32 1.0, %v79
    %v81 = vrcp.pop %v54
    %v82 = vmul.f32 1.0, %v81
    %v83 = vrcp.pop %v55
    %v84 = vmul.f32 1.0, %v83
    %v85 = vrcp.pop %v56
    %v86 = vmul.f32 1.0, %v85
    %v87 = vrcp.pop %v57
    %v88 = vmul.f32 1.0, %v87
    %v89 = vrcp.pop %v58
    %v90 = vmul.f32 1.0, %v89
    %v99 = vrot.slane %v51, 5
    %v100 = vrot.slane %v52, 5
    %v101 = vrot.slane %v53, 5
    %v102 = vrot.slane %v54, 5
    %v103 = vrot.slane %v55, 5
    %v104 = vrot.slane %v56, 5
    %v105 = vrot.slane %v57, 5
    %v106 = vrot.slane %v58, 5
    %v115 = vsub.f32 %v67, %v99
    %v116 = vsub.f32 %v68, %v100
    %v117 = vsub.f32 %v69, %v101
    %v118 = vsub.f32 %v70, %v102
    %v119 = vsub.f32 %v71, %v103
    %v120 = vsub.f32 %v72, %v104
    %v121 = vsub.f32 %v73, %v105
    %v122 = vsub.f32 %v74, %v106
    %v123 = vrot.slane %v51, 1
    %v124 = vrot.slane %v52, 1
    %v125 = vrot.slane %v53, 1
    %v126 = vrot.slane %v54, 1
    %v127 = vrot.slane %v55, 1
    %v128 = vrot.slane %v56, 1
    %v129 = vrot.slane %v57, 1
    %v130 = vrot.slane %v58, 1
    %v139 = vmul.f32 %v51, %v123
    %v140 = vmul.f32 %v52, %v124
    %v141 = vmul.f32 %v53, %v125
    %v142 = vmul.f32 %v54, %v126
    %v143 = vmul.f32 %v55, %v127
    %v144 = vmul.f32 %v56, %v128
    %v145 = vmul.f32 %v57, %v129
    %v146 = vmul.f32 %v58, %v130
    %v155 = vrot.slane %v76, 6
    %v156 = vrot.slane %v78, 6
    %v157 = vrot.slane %v80, 6
    %v158 = vrot.slane %v82, 6
    %v159 = vrot.slane %v84, 6
    %v160 = vrot.slane %v86, 6
    %v161 = vrot.slane %v88, 6
    %v162 = vrot.slane %v90, 6
    %v171 = vmul.f32 %v139, %v155
    %v172 = vmul.f32 %v140, %v156
    %v173 = vmul.f32 %v141, %v157
    %v174 = vmul.f32 %v142, %v158
    %v175 = vmul.f32 %v143, %v159
    %v176 = vmul.f32 %v144, %v160
    %v177 = vmul.f32 %v145, %v161
    %v178 = vmul.f32 %v146, %v162
    %v187 = vrot.slane %v171, 6
    %v188 = vrot.slane %v172, 6
    %v189 = vrot.slane %v173, 6
    %v190 = vrot.slane %v174, 6
    %v191 = vrot.slane %v175, 6
    %v192 = vrot.slane %v176, 6
    %v193 = vrot.slane %v177, 6
    %v194 = vrot.slane %v178, 6
    %v203 = vadd.f32 %v115, %v187
    %v204 = vadd.f32 %v116, %v188
    %v205 = vadd.f32 %v117, %v189
    %v206 = vadd.f32 %v118, %v190
    %v207 = vadd.f32 %v119, %v191
    %v208 = vadd.f32 %v120, %v192
    %v209 = vadd.f32 %v121, %v193
    %v210 = vadd.f32 %v122, %v194
    %v219 = vrot.slane %v67, 2
    %v220 = vrot.slane %v68, 2
    %v221 = vrot.slane %v69, 2
    %v222 = vrot.slane %v70, 2
    %v223 = vrot.slane %v71, 2
    %v224 = vrot.slane %v72, 2
    %v225 = vrot.slane %v73, 2
    %v226 = vrot.slane %v74, 2
    %v235 = vmul.f32 %v51, %v219
    %v236 = vmul.f32 %v52, %v220
    %v237 = vmul.f32 %v53, %v221
    %v238 = vmul.f32 %v54, %v222
    %v239 = vmul.f32 %v55, %v223
    %v240 = vmul.f32 %v56, %v224
    %v241 = vmul.f32 %v57, %v225
    %v242 = vmul.f32 %v58, %v226
    %v243 = vrot.slane %v76, 5
    %v244 = vrot.slane %v78, 5
    %v245 = vrot.slane %v80, 5
    %v246 = vrot.slane %v82, 5
    %v247 = vrot.slane %v84, 5
    %v248 = vrot.slane %v86, 5
    %v249 = vrot.slane %v88, 5
    %v250 = vrot.slane %v90, 5
    %v259 = vmul.f32 %v235, %v243
    %v260 = vmul.f32 %v236, %v244
    %v261 = vmul.f32 %v237, %v245
    %v262 = vmul.f32 %v238, %v246
    %v263 = vmul.f32 %v239, %v247
    %v264 = vmul.f32 %v240, %v248
    %v265 = vmul.f32 %v241, %v249
    %v266 = vmul.f32 %v242, %v250
    %v275 = vrot.slane %v259, 7
    %v276 = vrot.slane %v260, 7
    %v277 = vrot.slane %v261, 7
    %v278 = vrot.slane %v262, 7
    %v279 = vrot.slane %v263, 7
    %v280 = vrot.slane %v264, 7
    %v281 = vrot.slane %v265, 7
    %v282 = vrot.slane %v266, 7
    %v291 = vsub.f32 %v203, %v275
    %v292 = vsub.f32 %v204, %v276
    %v293 = vsub.f32 %v205, %v277
    %v294 = vsub.f32 %v206, %v278
    %v295 = vsub.f32 %v207, %v279
    %v296 = vsub.f32 %v208, %v280
    %v297 = vsub.f32 %v209, %v281
    %v298 = vsub.f32 %v210, %v282
    %v299 = vrot.slane %v51, 3
    %v300 = vrot.slane %v52, 3
    %v301 = vrot.slane %v53, 3
    %v302 = vrot.slane %v54, 3
    %v303 = vrot.slane %v55, 3
    %v304 = vrot.slane %v56, 3
    %v305 = vrot.slane %v57, 3
    %v306 = vrot.slane %v58, 3
    %v315 = vrcp.pop %v299
    %v316 = vmul.f32 %v291, %v315
    %v317 = vrcp.pop %v300
    %v318 = vmul.f32 %v292, %v317
    %v319 = vrcp.pop %v301
    %v320 = vmul.f32 %v293, %v319
    %v321 = vrcp.pop %v302
    %v322 = vmul.f32 %v294, %v321
    %v323 = vrcp.pop %v303
    %v324 = vmul.f32 %v295, %v323
    %v325 = vrcp.pop %v304
    %v326 = vmul.f32 %v296, %v325
    %v327 = vrcp.pop %v305
    %v328 = vmul.f32 %v297, %v327
    %v329 = vrcp.pop %v306
    %v330 = vmul.f32 %v298, %v329
    %v331 = vrot.slane %v76, 3
    %v332 = vrot.slane %v78, 3
    %v333 = vrot.slane %v80, 3
    %v334 = vrot.slane %v82, 3
    %v335 = vrot.slane %v84, 3
    %v336 = vrot.slane %v86, 3
    %v337 = vrot.slane %v88, 3
    %v338 = vrot.slane %v90, 3
    %v347 = vmul.f32 %v115, %v331
    %v348 = vmul.f32 %v116, %v332
    %v349 = vmul.f32 %v117, %v333
    %v350 = vmul.f32 %v118, %v334
    %v351 = vmul.f32 %v119, %v335
    %v352 = vmul.f32 %v120, %v336
    %v353 = vmul.f32 %v121, %v337
    %v354 = vmul.f32 %v122, %v338
    %v363 = vrot.slane %v316, 6
    %v364 = vrot.slane %v318, 6
    %v365 = vrot.slane %v320, 6
    %v366 = vrot.slane %v322, 6
    %v367 = vrot.slane %v324, 6
    %v368 = vrot.slane %v326, 6
    %v369 = vrot.slane %v328, 6
    %v370 = vrot.slane %v330, 6
    %v379 = vmul.f32 %v43, %v363
    %v380 = vmul.f32 %v44, %v364
    %v381 = vmul.f32 %v45, %v365
    %v382 = vmul.f32 %v46, %v366
    %v383 = vmul.f32 %v47, %v367
    %v384 = vmul.f32 %v48, %v368
    %v385 = vmul.f32 %v49, %v369
    %v386 = vmul.f32 %v50, %v370
    %v395 = vrot.slane %v347, 6
    %v396 = vrot.slane %v348, 6
    %v397 = vrot.slane %v349, 6
    %v398 = vrot.slane %v350, 6
    %v399 = vrot.slane %v351, 6
    %v400 = vrot.slane %v352, 6
    %v401 = vrot.slane %v353, 6
    %v402 = vrot.slane %v354, 6
    %v411 = vmul.f32 %v43, %v395
    %v412 = vmul.f32 %v44, %v396
    %v413 = vmul.f32 %v45, %v397
    %v414 = vmul.f32 %v46, %v398
    %v415 = vmul.f32 %v47, %v399
    %v416 = vmul.f32 %v48, %v400
    %v417 = vmul.f32 %v49, %v401
    %v418 = vmul.f32 %v50, %v402
    %v427 = vrot.slane %v411, 1
    %v428 = vrot.slane %v412, 1
    %v429 = vrot.slane %v413, 1
    %v430 = vrot.slane %v414, 1
    %v431 = vrot.slane %v415, 1
    %v432 = vrot.slane %v416, 1
    %v433 = vrot.slane %v417, 1
    %v434 = vrot.slane %v418, 1
    %v443 = vadd.f32 %v379, %v427
    %v444 = vadd.f32 %v380, %v428
    %v445 = vadd.f32 %v381, %v429
    %v446 = vadd.f32 %v382, %v430
    %v447 = vadd.f32 %v383, %v431
    %v448 = vadd.f32 %v384, %v432
    %v449 = vadd.f32 %v385, %v433
    %v450 = vadd.f32 %v386, %v434
    %v459 = vrot.slane %v43, 2
    %v460 = vrot.slane %v44, 2
    %v461 = vrot.slane %v45, 2
    %v462 = vrot.slane %v46, 2
    %v463 = vrot.slane %v47, 2
    %v464 = vrot.slane %v48, 2
    %v465 = vrot.slane %v49, 2
    %v466 = vrot.slane %v50, 2
    %v475 = vadd.f32 %v443, %v459
    %v476 = vadd.f32 %v444, %v460
    %v477 = vadd.f32 %v445, %v461
    %v478 = vadd.f32 %v446, %v462
    %v479 = vadd.f32 %v447, %v463
    %v480 = vadd.f32 %v448, %v464
    %v481 = vadd.f32 %v449, %v465
    %v482 = vadd.f32 %v450, %v466
    %v483 = vrot.slane %v316, 3
    %v484 = vrot.slane %v318, 3
    %v485 = vrot.slane %v320, 3
    %v486 = vrot.slane %v322, 3
    %v487 = vrot.slane %v324, 3
    %v488 = vrot.slane %v326, 3
    %v489 = vrot.slane %v328, 3
    %v490 = vrot.slane %v330, 3
    %v499 = vmul.f32 %v43, %v483
    %v500 = vmul.f32 %v44, %v484
    %v501 = vmul.f32 %v45, %v485
    %v502 = vmul.f32 %v46, %v486
    %v503 = vmul.f32 %v47, %v487
    %v504 = vmul.f32 %v48, %v488
    %v505 = vmul.f32 %v49, %v489
    %v506 = vmul.f32 %v50, %v490
    %v507 = vrot.slane %v347, 3
    %v508 = vrot.slane %v348, 3
    %v509 = vrot.slane %v349, 3
    %v510 = vrot.slane %v350, 3
    %v511 = vrot.slane %v351, 3
    %v512 = vrot.slane %v352, 3
    %v513 = vrot.slane %v353, 3
    %v514 = vrot.slane %v354, 3
    %v523 = vmul.f32 %v43, %v507
    %v524 = vmul.f32 %v44, %v508
    %v525 = vmul.f32 %v45, %v509
    %v526 = vmul.f32 %v46, %v510
    %v527 = vmul.f32 %v47, %v511
    %v528 = vmul.f32 %v48, %v512
    %v529 = vmul.f32 %v49, %v513
    %v530 = vmul.f32 %v50, %v514
    %v539 = vrot.slane %v523, 1
    %v540 = vrot.slane %v524, 1
    %v541 = vrot.slane %v525, 1
    %v542 = vrot.slane %v526, 1
    %v543 = vrot.slane %v527, 1
    %v544 = vrot.slane %v528, 1
    %v545 = vrot.slane %v529, 1
    %v546 = vrot.slane %v530, 1
    %v555 = vadd.f32 %v499, %v539
    %v556 = vadd.f32 %v500, %v540
    %v557 = vadd.f32 %v501, %v541
    %v558 = vadd.f32 %v502, %v542
    %v559 = vadd.f32 %v503, %v543
    %v560 = vadd.f32 %v504, %v544
    %v561 = vadd.f32 %v505, %v545
    %v562 = vadd.f32 %v506, %v546
    %v563 = vadd.f32 %v555, %v459
    %v564 = vadd.f32 %v556, %v460
    %v565 = vadd.f32 %v557, %v461
    %v566 = vadd.f32 %v558, %v462
    %v567 = vadd.f32 %v559, %v463
    %v568 = vadd.f32 %v560, %v464
    %v569 = vadd.f32 %v561, %v465
    %v570 = vadd.f32 %v562, %v466
    %v571 = vmul.f32 %v51, %v316
    %v572 = vmul.f32 %v52, %v318
    %v573 = vmul.f32 %v53, %v320
    %v574 = vmul.f32 %v54, %v322
    %v575 = vmul.f32 %v55, %v324
    %v576 = vmul.f32 %v56, %v326
    %v577 = vmul.f32 %v57, %v328
    %v578 = vmul.f32 %v58, %v330
    %v579 = vmul.f32 %v51, %v347
    %v580 = vmul.f32 %v52, %v348
    %v581 = vmul.f32 %v53, %v349
    %v582 = vmul.f32 %v54, %v350
    %v583 = vmul.f32 %v55, %v351
    %v584 = vmul.f32 %v56, %v352
    %v585 = vmul.f32 %v57, %v353
    %v586 = vmul.f32 %v58, %v354
    %v595 = vrot.slane %v579, 1
    %v596 = vrot.slane %v580, 1
    %v597 = vrot.slane %v581, 1
    %v598 = vrot.slane %v582, 1
    %v599 = vrot.slane %v583, 1
    %v600 = vrot.slane %v584, 1
    %v601 = vrot.slane %v585, 1
    %v602 = vrot.slane %v586, 1
    %v611 = vadd.f32 %v571, %v595
    %v612 = vadd.f32 %v572, %v596
    %v613 = vadd.f32 %v573, %v597
    %v614 = vadd.f32 %v574, %v598
    %v615 = vadd.f32 %v575, %v599
    %v616 = vadd.f32 %v576, %v600
    %v617 = vadd.f32 %v577, %v601
    %v618 = vadd.f32 %v578, %v602
    %v619 = vrot.slane %v51, 2
    %v620 = vrot.slane %v52, 2
    %v621 = vrot.slane %v53, 2
    %v622 = vrot.slane %v54, 2
    %v623 = vrot.slane %v55, 2
    %v624 = vrot.slane %v56, 2
    %v625 = vrot.slane %v57, 2
    %v626 = vrot.slane %v58, 2
    %v635 = vadd.f32 %v611, %v619
    %v636 = vadd.f32 %v612, %v620
    %v637 = vadd.f32 %v613, %v621
    %v638 = vadd.f32 %v614, %v622
    %v639 = vadd.f32 %v615, %v623
    %v640 = vadd.f32 %v616, %v624
    %v641 = vadd.f32 %v617, %v625
    %v642 = vadd.f32 %v618, %v626
    %v643 = vmul.f32 %v475, %v475
    %v644 = vmul.f32 %v476, %v476
    %v645 = vmul.f32 %v477, %v477
    %v646 = vmul.f32 %v478, %v478
    %v647 = vmul.f32 %v479, %v479
    %v648 = vmul.f32 %v480, %v480
    %v649 = vmul.f32 %v481, %v481
    %v650 = vmul.f32 %v482, %v482
    %v651 = vmul.f32 %v563, %v563
    %v652 = vmul.f32 %v564, %v564
    %v653 = vmul.f32 %v565, %v565
    %v654 = vmul.f32 %v566, %v566
    %v655 = vmul.f32 %v567, %v567
    %v656 = vmul.f32 %v568, %v568
    %v657 = vmul.f32 %v569, %v569
    %v658 = vmul.f32 %v570, %v570
    %v667 = vrot.slane %v651, 3
    %v668 = vrot.slane %v652, 3
    %v669 = vrot.slane %v653, 3
    %v670 = vrot.slane %v654, 3
    %v671 = vrot.slane %v655, 3
    %v672 = vrot.slane %v656, 3
    %v673 = vrot.slane %v657, 3
    %v674 = vrot.slane %v658, 3
    %v683 = vadd.f32 %v643, %v667
    %v684 = vadd.f32 %v644, %v668
    %v685 = vadd.f32 %v645, %v669
    %v686 = vadd.f32 %v646, %v670
    %v687 = vadd.f32 %v647, %v671
    %v688 = vadd.f32 %v648, %v672
    %v689 = vadd.f32 %v649, %v673
    %v690 = vadd.f32 %v650, %v674
    %v691 = vmul.f32 %v635, %v635
    %v692 = vmul.f32 %v636, %v636
    %v693 = vmul.f32 %v637, %v637
    %v694 = vmul.f32 %v638, %v638
    %v695 = vmul.f32 %v639, %v639
    %v696 = vmul.f32 %v640, %v640
    %v697 = vmul.f32 %v641, %v641
    %v698 = vmul.f32 %v642, %v642
    %v707 = vrot.slane %v691, 6
    %v708 = vrot.slane %v692, 6
    %v709 = vrot.slane %v693, 6
    %v710 = vrot.slane %v694, 6
    %v711 = vrot.slane %v695, 6
    %v712 = vrot.slane %v696, 6
    %v713 = vrot.slane %v697, 6
    %v714 = vrot.slane %v698, 6
    %v723 = vadd.f32 %v683, %v707
    %v724 = vadd.f32 %v684, %v708
    %v725 = vadd.f32 %v685, %v709
    %v726 = vadd.f32 %v686, %v710
    %v727 = vadd.f32 %v687, %v711
    %v728 = vadd.f32 %v688, %v712
    %v729 = vadd.f32 %v689, %v713
    %v730 = vadd.f32 %v690, %v714
    %v731 = vmax.f32 %v723, 1e-24
    %v732 = vmax.f32 %v724, 1e-24
    %v733 = vmax.f32 %v725, 1e-24
    %v734 = vmax.f32 %v726, 1e-24
    %v735 = vmax.f32 %v727, 1e-24
    %v736 = vmax.f32 %v728, 1e-24
    %v737 = vmax.f32 %v729, 1e-24
    %v738 = vmax.f32 %v730, 1e-24
    %v739 = vrsqrt.pop %v731
    %v740 = vrsqrt.pop %v732
    %v741 = vrsqrt.pop %v733
    %v742 = vrsqrt.pop %v734
    %v743 = vrsqrt.pop %v735
    %v744 = vrsqrt.pop %v736
    %v745 = vrsqrt.pop %v737
    %v746 = vrsqrt.pop %v738
    %v755 = vrot.slane %v475, 2
    %v756 = vrot.slane %v476, 2
    %v757 = vrot.slane %v477, 2
    %v758 = vrot.slane %v478, 2
    %v759 = vrot.slane %v479, 2
    %v760 = vrot.slane %v480, 2
    %v761 = vrot.slane %v481, 2
    %v762 = vrot.slane %v482, 2
    %v779 = vrot.slane %v563, 4
    %v780 = vrot.slane %v564, 4
    %v781 = vrot.slane %v565, 4
    %v782 = vrot.slane %v566, 4
    %v783 = vrot.slane %v567, 4
    %v784 = vrot.slane %v568, 4
    %v785 = vrot.slane %v569, 4
    %v786 = vrot.slane %v570, 4
    %v803 = vrot.slane %v635, 6
    %v804 = vrot.slane %v636, 6
    %v805 = vrot.slane %v637, 6
    %v806 = vrot.slane %v638, 6
    %v807 = vrot.slane %v639, 6
    %v808 = vrot.slane %v640, 6
    %v809 = vrot.slane %v641, 6
    %v810 = vrot.slane %v642, 6
    %vm819 = vcmask 1040384
    %v820 = vsel %vm819, %v755, %v779
    %v821 = vsel %vm819, %v756, %v780
    %v822 = vsel %vm819, %v757, %v781
    %v823 = vsel %vm819, %v758, %v782
    %v824 = vsel %vm819, %v759, %v783
    %v825 = vsel %vm819, %v760, %v784
    %v826 = vsel %vm819, %v761, %v785
    %v827 = vsel %vm819, %v762, %v786
    %vm828 = vcmask 1041408
    %v829 = vsel %vm828, %v820, %v803
    %v830 = vsel %vm828, %v821, %v804
    %v831 = vsel %vm828, %v822, %v805
    %v832 = vsel %vm828, %v823, %v806
    %v833 = vsel %vm828, %v824, %v807
    %v834 = vsel %vm828, %v825, %v808
    %v835 = vsel %vm828, %v826, %v809
    %v836 = vsel %vm828, %v827, %v810
    %v837 = vsub.f32 0.0, %v829
    %v838 = vsub.f32 0.0, %v830
    %v839 = vsub.f32 0.0, %v831
    %v840 = vsub.f32 0.0, %v832
    %v841 = vsub.f32 0.0, %v833
    %v842 = vsub.f32 0.0, %v834
    %v843 = vsub.f32 0.0, %v835
    %v844 = vsub.f32 0.0, %v836
    %v845 = vlaneseq
    %v846 = vshrl.u32 %v845, 7
    %v847 = vsub.s32 2, %v846
    %v848 = vrot.slane %v739, %v847
    %v849 = vlaneseq
    %v850 = vshrl.u32 %v849, 7
    %v851 = vsub.s32 2, %v850
    %v852 = vrot.slane %v740, %v851
    %v853 = vlaneseq
    %v854 = vshrl.u32 %v853, 7
    %v855 = vsub.s32 2, %v854
    %v856 = vrot.slane %v741, %v855
    %v857 = vlaneseq
    %v858 = vshrl.u32 %v857, 7
    %v859 = vsub.s32 2, %v858
    %v860 = vrot.slane %v742, %v859
    %v861 = vlaneseq
    %v862 = vshrl.u32 %v861, 7
    %v863 = vsub.s32 2, %v862
    %v864 = vrot.slane %v743, %v863
    %v865 = vlaneseq
    %v866 = vshrl.u32 %v865, 7
    %v867 = vsub.s32 2, %v866
    %v868 = vrot.slane %v744, %v867
    %v869 = vlaneseq
    %v870 = vshrl.u32 %v869, 7
    %v871 = vsub.s32 2, %v870
    %v872 = vrot.slane %v745, %v871
    %v873 = vlaneseq
    %v874 = vshrl.u32 %v873, 7
    %v875 = vsub.s32 2, %v874
    %v876 = vrot.slane %v746, %v875
    %v877 = vmul.f32 %v837, %v848
    %v878 = vmul.f32 %v838, %v852
    %v879 = vmul.f32 %v839, %v856
    %v880 = vmul.f32 %v840, %v860
    %v881 = vmul.f32 %v841, %v864
    %v882 = vmul.f32 %v842, %v868
    %v883 = vmul.f32 %v843, %v872
    %v884 = vmul.f32 %v844, %v876
    %885 = vst [vmem:[#allocation3] sm:$0x7] %v877
    %886 = vst [vmem:[#allocation3 + $0x8] sm:$0x7] %v878
    %887 = vst [vmem:[#allocation3 + $0x10] sm:$0x7] %v879
    %888 = vst [vmem:[#allocation3 + $0x18] sm:$0x7] %v880
    %889 = vst [vmem:[#allocation3 + $0x20] sm:$0x7] %v881
    %890 = vst [vmem:[#allocation3 + $0x28] sm:$0x7] %v882
    %891 = vst [vmem:[#allocation3 + $0x30] sm:$0x7] %v883
    %892 = vst [vmem:[#allocation3 + $0x38] sm:$0x7] %v884
    %v893 = vmul.f32 %v59, %v59
    %v894 = vmul.f32 %v60, %v60
    %v895 = vmul.f32 %v61, %v61
    %v896 = vmul.f32 %v62, %v62
    %v897 = vmul.f32 %v63, %v63
    %v898 = vmul.f32 %v64, %v64
    %v899 = vmul.f32 %v65, %v65
    %v900 = vmul.f32 %v66, %v66
    %vm901 = vcmask 1042432
    %v902 = vsel %vm901, %v893, 0.0
    %v903 = vrot.slane %v902, 4
    %v904 = vadd.f32 %v902, %v903
    %v905 = vrot.slane %v904, 2
    %v906 = vadd.f32 %v904, %v905
    %v907 = vrot.slane %v906, 1
    %v908 = vadd.f32 %v906, %v907
    %v909 = vsel %vm901, %v894, 0.0
    %v910 = vrot.slane %v909, 4
    %v911 = vadd.f32 %v909, %v910
    %v912 = vrot.slane %v911, 2
    %v913 = vadd.f32 %v911, %v912
    %v914 = vrot.slane %v913, 1
    %v915 = vadd.f32 %v913, %v914
    %v916 = vsel %vm901, %v895, 0.0
    %v917 = vrot.slane %v916, 4
    %v918 = vadd.f32 %v916, %v917
    %v919 = vrot.slane %v918, 2
    %v920 = vadd.f32 %v918, %v919
    %v921 = vrot.slane %v920, 1
    %v922 = vadd.f32 %v920, %v921
    %v923 = vsel %vm901, %v896, 0.0
    %v924 = vrot.slane %v923, 4
    %v925 = vadd.f32 %v923, %v924
    %v926 = vrot.slane %v925, 2
    %v927 = vadd.f32 %v925, %v926
    %v928 = vrot.slane %v927, 1
    %v929 = vadd.f32 %v927, %v928
    %v930 = vsel %vm901, %v897, 0.0
    %v931 = vrot.slane %v930, 4
    %v932 = vadd.f32 %v930, %v931
    %v933 = vrot.slane %v932, 2
    %v934 = vadd.f32 %v932, %v933
    %v935 = vrot.slane %v934, 1
    %v936 = vadd.f32 %v934, %v935
    %v937 = vsel %vm901, %v898, 0.0
    %v938 = vrot.slane %v937, 4
    %v939 = vadd.f32 %v937, %v938
    %v940 = vrot.slane %v939, 2
    %v941 = vadd.f32 %v939, %v940
    %v942 = vrot.slane %v941, 1
    %v943 = vadd.f32 %v941, %v942
    %v944 = vsel %vm901, %v899, 0.0
    %v945 = vrot.slane %v944, 4
    %v946 = vadd.f32 %v944, %v945
    %v947 = vrot.slane %v946, 2
    %v948 = vadd.f32 %v946, %v947
    %v949 = vrot.slane %v948, 1
    %v950 = vadd.f32 %v948, %v949
    %v951 = vsel %vm901, %v900, 0.0
    %v952 = vrot.slane %v951, 4
    %v953 = vadd.f32 %v951, %v952
    %v954 = vrot.slane %v953, 2
    %v955 = vadd.f32 %v953, %v954
    %v956 = vrot.slane %v955, 1
    %v957 = vadd.f32 %v955, %v956
    %v958 = vmax.f32 %v908, 1e-24
    %v959 = vmax.f32 %v915, 1e-24
    %v960 = vmax.f32 %v922, 1e-24
    %v961 = vmax.f32 %v929, 1e-24
    %v962 = vmax.f32 %v936, 1e-24
    %v963 = vmax.f32 %v943, 1e-24
    %v964 = vmax.f32 %v950, 1e-24
    %v965 = vmax.f32 %v957, 1e-24
    %v966 = vrsqrt.pop %v958
    %v967 = vrsqrt.pop %v959
    %v968 = vrsqrt.pop %v960
    %v969 = vrsqrt.pop %v961
    %v970 = vrsqrt.pop %v962
    %v971 = vrsqrt.pop %v963
    %v972 = vrsqrt.pop %v964
    %v973 = vrsqrt.pop %v965
    %v974 = vmul.f32 %v59, %v966
    %v975 = vmul.f32 %v60, %v967
    %v976 = vmul.f32 %v61, %v968
    %v977 = vmul.f32 %v62, %v969
    %v978 = vmul.f32 %v63, %v970
    %v979 = vmul.f32 %v64, %v971
    %v980 = vmul.f32 %v65, %v972
    %v981 = vmul.f32 %v66, %v973
    %v990 = vrot.slane %v974, 5
    %v991 = vrot.slane %v975, 5
    %v992 = vrot.slane %v976, 5
    %v993 = vrot.slane %v977, 5
    %v994 = vrot.slane %v978, 5
    %v995 = vrot.slane %v979, 5
    %v996 = vrot.slane %v980, 5
    %v997 = vrot.slane %v981, 5
    %1006 = vst [vmem:[#allocation3] sm:$0x38] %v990
    %1007 = vst [vmem:[#allocation3 + $0x8] sm:$0x38] %v991
    %1008 = vst [vmem:[#allocation3 + $0x10] sm:$0x38] %v992
    %1009 = vst [vmem:[#allocation3 + $0x18] sm:$0x38] %v993
    %1010 = vst [vmem:[#allocation3 + $0x20] sm:$0x38] %v994
    %1011 = vst [vmem:[#allocation3 + $0x28] sm:$0x38] %v995
    %1012 = vst [vmem:[#allocation3 + $0x30] sm:$0x38] %v996
    %1013 = vst [vmem:[#allocation3 + $0x38] sm:$0x38] %v997
    %vm1014 = vcmp.ne.f32.partialorder %v59, 0.0
    %vm1015 = vcmp.ne.f32.partialorder %v60, 0.0
    %vm1016 = vcmp.ne.f32.partialorder %v61, 0.0
    %vm1017 = vcmp.ne.f32.partialorder %v62, 0.0
    %vm1018 = vcmp.ne.f32.partialorder %v63, 0.0
    %vm1019 = vcmp.ne.f32.partialorder %v64, 0.0
    %vm1020 = vcmp.ne.f32.partialorder %v65, 0.0
    %vm1021 = vcmp.ne.f32.partialorder %v66, 0.0
    %v1022 = vsel %vm1014, 1, 0
    %v1023 = vsel %vm1015, 1, 0
    %v1024 = vsel %vm1016, 1, 0
    %v1025 = vsel %vm1017, 1, 0
    %v1026 = vsel %vm1018, 1, 0
    %v1027 = vsel %vm1019, 1, 0
    %v1028 = vsel %vm1020, 1, 0
    %v1029 = vsel %vm1021, 1, 0
    %v1030 = vcvt.s32.f32 %v1022
    %v1031 = vcvt.s32.f32 %v1023
    %v1032 = vcvt.s32.f32 %v1024
    %v1033 = vcvt.s32.f32 %v1025
    %v1034 = vcvt.s32.f32 %v1026
    %v1035 = vcvt.s32.f32 %v1027
    %v1036 = vcvt.s32.f32 %v1028
    %v1037 = vcvt.s32.f32 %v1029
    %v1046 = vrot.slane %v1030, 3
    %v1047 = vrot.slane %v1031, 3
    %v1048 = vrot.slane %v1032, 3
    %v1049 = vrot.slane %v1033, 3
    %v1050 = vrot.slane %v1034, 3
    %v1051 = vrot.slane %v1035, 3
    %v1052 = vrot.slane %v1036, 3
    %v1053 = vrot.slane %v1037, 3
    %v1062 = vsel %vm901, %v1046, 0.0
    %v1063 = vrot.slane %v1062, 4
    %v1064 = vadd.f32 %v1062, %v1063
    %v1065 = vrot.slane %v1064, 2
    %v1066 = vadd.f32 %v1064, %v1065
    %v1067 = vrot.slane %v1066, 1
    %v1068 = vadd.f32 %v1066, %v1067
    %v1069 = vsel %vm901, %v1047, 0.0
    %v1070 = vrot.slane %v1069, 4
    %v1071 = vadd.f32 %v1069, %v1070
    %v1072 = vrot.slane %v1071, 2
    %v1073 = vadd.f32 %v1071, %v1072
    %v1074 = vrot.slane %v1073, 1
    %v1075 = vadd.f32 %v1073, %v1074
    %v1076 = vsel %vm901, %v1048, 0.0
    %v1077 = vrot.slane %v1076, 4
    %v1078 = vadd.f32 %v1076, %v1077
    %v1079 = vrot.slane %v1078, 2
    %v1080 = vadd.f32 %v1078, %v1079
    %v1081 = vrot.slane %v1080, 1
    %v1082 = vadd.f32 %v1080, %v1081
    %v1083 = vsel %vm901, %v1049, 0.0
    %v1084 = vrot.slane %v1083, 4
    %v1085 = vadd.f32 %v1083, %v1084
    %v1086 = vrot.slane %v1085, 2
    %v1087 = vadd.f32 %v1085, %v1086
    %v1088 = vrot.slane %v1087, 1
    %v1089 = vadd.f32 %v1087, %v1088
    %v1090 = vsel %vm901, %v1050, 0.0
    %v1091 = vrot.slane %v1090, 4
    %v1092 = vadd.f32 %v1090, %v1091
    %v1093 = vrot.slane %v1092, 2
    %v1094 = vadd.f32 %v1092, %v1093
    %v1095 = vrot.slane %v1094, 1
    %v1096 = vadd.f32 %v1094, %v1095
    %v1097 = vsel %vm901, %v1051, 0.0
    %v1098 = vrot.slane %v1097, 4
    %v1099 = vadd.f32 %v1097, %v1098
    %v1100 = vrot.slane %v1099, 2
    %v1101 = vadd.f32 %v1099, %v1100
    %v1102 = vrot.slane %v1101, 1
    %v1103 = vadd.f32 %v1101, %v1102
    %v1104 = vsel %vm901, %v1052, 0.0
    %v1105 = vrot.slane %v1104, 4
    %v1106 = vadd.f32 %v1104, %v1105
    %v1107 = vrot.slane %v1106, 2
    %v1108 = vadd.f32 %v1106, %v1107
    %v1109 = vrot.slane %v1108, 1
    %v1110 = vadd.f32 %v1108, %v1109
    %v1111 = vsel %vm901, %v1053, 0.0
    %v1112 = vrot.slane %v1111, 4
    %v1113 = vadd.f32 %v1111, %v1112
    %v1114 = vrot.slane %v1113, 2
    %v1115 = vadd.f32 %v1113, %v1114
    %v1116 = vrot.slane %v1115, 1
    %v1117 = vadd.f32 %v1115, %v1116
    %vm1118 = vcmp.gt.f32.partialorder %v1068, 0.0
    %vm1119 = vcmp.gt.f32.partialorder %v1075, 0.0
    %vm1120 = vcmp.gt.f32.partialorder %v1082, 0.0
    %vm1121 = vcmp.gt.f32.partialorder %v1089, 0.0
    %vm1122 = vcmp.gt.f32.partialorder %v1096, 0.0
    %vm1123 = vcmp.gt.f32.partialorder %v1103, 0.0
    %vm1124 = vcmp.gt.f32.partialorder %v1110, 0.0
    %vm1125 = vcmp.gt.f32.partialorder %v1117, 0.0
    %v1126 = vsel %vm1118, 1, 0
    %v1127 = vsel %vm1119, 1, 0
    %v1128 = vsel %vm1120, 1, 0
    %v1129 = vsel %vm1121, 1, 0
    %v1130 = vsel %vm1122, 1, 0
    %v1131 = vsel %vm1123, 1, 0
    %v1132 = vsel %vm1124, 1, 0
    %v1133 = vsel %vm1125, 1, 0
    %v1134 = vcvt.s32.f32 %v1126
    %v1135 = vcvt.s32.f32 %v1127
    %v1136 = vcvt.s32.f32 %v1128
    %v1137 = vcvt.s32.f32 %v1129
    %v1138 = vcvt.s32.f32 %v1130
    %v1139 = vcvt.s32.f32 %v1131
    %v1140 = vcvt.s32.f32 %v1132
    %v1141 = vcvt.s32.f32 %v1133
    %v1150 = vcombine.low %v1134, %v1135
    %v1151 = vcombine.low %v1136, %v1137
    %v1152 = vcombine.low %v1138, %v1139
    %v1153 = vcombine.low %v1140, %v1141
    %v1155 = vunpack.c.l.s4 1966171168
    %v1156 = vunpack.c.0.s8 %v1155
    %v1157 = vlaneseq
    %v1158 = vshrl.u32 %v1157, 7
    %v1159 = vsub.s32 %v1156, %v1158
    %v1160 = vrot.slane %v1150, %v1159
    %v1162 = vunpack.c.l.s4 1966171168
    %v1163 = vunpack.c.0.s8 %v1162
    %v1164 = vlaneseq
    %v1165 = vshrl.u32 %v1164, 7
    %v1166 = vsub.s32 %v1163, %v1165
    %v1167 = vrot.slane %v1151, %v1166
    %v1169 = vunpack.c.l.s4 1966171168
    %v1170 = vunpack.c.0.s8 %v1169
    %v1171 = vlaneseq
    %v1172 = vshrl.u32 %v1171, 7
    %v1173 = vsub.s32 %v1170, %v1172
    %v1174 = vrot.slane %v1152, %v1173
    %v1176 = vunpack.c.l.s4 1966171168
    %v1177 = vunpack.c.0.s8 %v1176
    %v1178 = vlaneseq
    %v1179 = vshrl.u32 %v1178, 7
    %v1180 = vsub.s32 %v1177, %v1179
    %v1181 = vrot.slane %v1153, %v1180
    %v1182 = vcombine.low %v1160, %v1167
    %v1183 = vcombine.low %v1174, %v1181
    %v1185 = vunpack.c.l.s4 1966171168
    %v1186 = vunpack.c.0.s8 %v1185
    %v1187 = vlaneseq
    %v1188 = vshrl.u32 %v1187, 7
    %v1189 = vsub.s32 %v1186, %v1188
    %v1190 = vrot.slane %v1182, %v1189
    %v1192 = vunpack.c.l.s4 1966171168
    %v1193 = vunpack.c.0.s8 %v1192
    %v1194 = vlaneseq
    %v1195 = vshrl.u32 %v1194, 7
    %v1196 = vsub.s32 %v1193, %v1195
    %v1197 = vrot.slane %v1183, %v1196
    %v1198 = vcombine.low %v1190, %v1197
    %s1200 = scalar_lea.vmem [#allocation3], 6
    %1201 = vst [vmem:[%s1200] ss:$8 sm:$0xf] %v1198
    %1202 = vst [vmem:[%s1200] ss:$8 sm:$0xf0] %v1198
    %v1211 = vrot.slane %v59, 3
    %v1212 = vrot.slane %v60, 3
    %v1213 = vrot.slane %v61, 3
    %v1214 = vrot.slane %v62, 3
    %v1215 = vrot.slane %v63, 3
    %v1216 = vrot.slane %v64, 3
    %v1217 = vrot.slane %v65, 3
    %v1218 = vrot.slane %v66, 3
    %1227 = vst [vmem:[#allocation2] sm:$0x7] %v1211
    %1228 = vst [vmem:[#allocation2 + $0x8] sm:$0x7] %v1212
    %1229 = vst [vmem:[#allocation2 + $0x10] sm:$0x7] %v1213
    %1230 = vst [vmem:[#allocation2 + $0x18] sm:$0x7] %v1214
    %1231 = vst [vmem:[#allocation2 + $0x20] sm:$0x7] %v1215
    %1232 = vst [vmem:[#allocation2 + $0x28] sm:$0x7] %v1216
    %1233 = vst [vmem:[#allocation2 + $0x30] sm:$0x7] %v1217
    %1234 = vst [vmem:[#allocation2 + $0x38] sm:$0x7] %v1218
    %v1243 = vrot.slane %v877, 5
    %v1244 = vrot.slane %v878, 5
    %v1245 = vrot.slane %v879, 5
    %v1246 = vrot.slane %v880, 5
    %v1247 = vrot.slane %v881, 5
    %v1248 = vrot.slane %v882, 5
    %v1249 = vrot.slane %v883, 5
    %v1250 = vrot.slane %v884, 5
    %1259 = vst [vmem:[#allocation2] sm:$0x38] %v1243
    %1260 = vst [vmem:[#allocation2 + $0x8] sm:$0x38] %v1244
    %1261 = vst [vmem:[#allocation2 + $0x10] sm:$0x38] %v1245
    %1262 = vst [vmem:[#allocation2 + $0x18] sm:$0x38] %v1246
    %1263 = vst [vmem:[#allocation2 + $0x20] sm:$0x38] %v1247
    %1264 = vst [vmem:[#allocation2 + $0x28] sm:$0x38] %v1248
    %1265 = vst [vmem:[#allocation2 + $0x30] sm:$0x38] %v1249
    %1266 = vst [vmem:[#allocation2 + $0x38] sm:$0x38] %v1250
    %v1267 = vand.u32 2147483647, %v877
    %vm1268 = vcmp.le.f32.partialorder %v1267, 0.7853982
    %vm1269 = vcmp.lt.s32.totalorder %v877, 0
    %v1270 = vand.u32 %v877, 2139095040
    %v1271 = vshrl.u32 %v1270, 23
    %v1272 = vsub.s32 %v1271, 127
    %v1273 = vand.u32 2147483647, %v877
    %v1274 = vand.u32 %v1273, 8388607
    %v1275 = vor.u32 %v1274, 8388608
    %v1276 = vsub.s32 0, %v1275
    %v1277 = vadd.s32 %v1272, 1
    %vm1278 = vcmp.gt.s32.totalorder %v1277, 0
    %v1279 = vsel %vm1278, %v1277, 0
    %v1280 = vshrl.u32 %v1279, 5
    %v1281 = vand.u32 %v1279, 31
    %v1282 = vsub.s32 32, %v1281
    %v1283 = vshrl.u32 683565275, %v1282
    %v1284 = vshll.u32 683565275, %v1281
    %v1285 = vshrl.u32 2475754826, %v1282
    %v1286 = vor.u32 %v1284, %v1285
    %v1287 = vshll.u32 2475754826, %v1281
    %v1288 = vshrl.u32 2131351028, %v1282
    %v1289 = vor.u32 %v1287, %v1288
    %v1290 = vshll.u32 2131351028, %v1281
    %v1291 = vshrl.u32 2102212464, %v1282
    %v1292 = vor.u32 %v1290, %v1291
    %v1293 = vshll.u32 2102212464, %v1281
    %v1294 = vshrl.u32 920167782, %v1282
    %v1295 = vor.u32 %v1293, %v1294
    %v1296 = vshll.u32 920167782, %v1281
    %v1297 = vshrl.u32 1326507024, %v1282
    %v1298 = vor.u32 %v1296, %v1297
    %vm1299 = vcmp.lt.s32.totalorder %v1280, 1
    %vm1300 = vcmp.lt.s32.totalorder %v1280, 2
    %vm1301 = vcmp.lt.s32.totalorder %v1280, 3
    %vm1302 = vcmp.lt.s32.totalorder %v1280, 4
    %v1303 = vsel %vm1299, %v1283, %v1286
    %v1304 = vsel %vm1302, %v1292, 2102212464
    %v1305 = vsel %vm1301, %v1289, %v1304
    %v1306 = vsel %vm1300, %v1303, %v1305
    %v1307 = vsel %vm1299, %v1286, %v1289
    %v1308 = vsel %vm1302, %v1295, 920167782
    %v1309 = vsel %vm1301, %v1292, %v1308
    %v1310 = vsel %vm1300, %v1307, %v1309
    %v1311 = vsel %vm1299, %v1289, %v1292
    %v1312 = vsel %vm1302, %v1298, 1326507024
    %v1313 = vsel %vm1301, %v1295, %v1312
    %v1314 = vsel %vm1300, %v1311, %v1313
    %v1315 = vshll.u32 %v1275, 8
    %v1316 = vmul.u32.u64.compose %v1315, %v1314
    %v1317 = vextract.low.u32 %v1316
    %v1318 = vextract.high.u32 %v1316
    %v1319 = vmul.u32.u64.compose %v1315, %v1310
    %v1320 = vextract.low.u32 %v1319
    %v1321 = vextract.high.u32 %v1319
    %v1322 = vmul.u32 %v1315, %v1306
    %v1323 = vadd.s32 %v1318, %v1320
    %vm1324 = vc.u32 %v1318, %v1320
    %v1325 = vadd.s32 %v1321, 1
    %v1326 = vsel %vm1324, %v1325, %v1321
    %v1327 = vadd.s32 %v1322, %v1326
    %v1328 = vadd.s32 %v1327, 536870912
    %v1329 = vshrl.u32 %v1328, 30
    %v1330 = vshll.u32 %v1329, 30
    %v1331 = vsub.s32 %v1327, %v1330
    %vm1332 = vcmp.lt.s32.totalorder %v1331, 0
    %v1333 = vsub.s32 0, %v1331
    %v1334 = vsel %vm1332, %v1333, %v1331
    %v1335 = vclz %v1334
    %v1336 = vsub.s32 %v1335, 2
    %vm1337 = vcmp.gt.s32.totalorder 0, %v1336
    %v1338 = vsel %vm1337, 0, %v1336
    %v1339 = vsub.s32 32, %v1338
    %v1340 = vshll.u32 %v1331, %v1338
    %v1341 = vshrl.u32 %v1323, %v1339
    %v1342 = vor.u32 %v1340, %v1341
    %v1343 = vsub.s32 4294967266, %v1338
    %v1344 = vadd.s32 %v1343, 127
    %v1345 = vshll.u32 %v1344, 23
    %v1346 = vor.u32 4788187, %v1345
    %v1347 = vand.u32 2147483647, %v1346
    %v1349 = vcvt.s32.f32 %v1342
    %v1350 = vmul.f32 %v1349, %v1347
    %v1351 = vxor.u32 %v1350, 2147483648
    %v1352 = vsel %vm1269, %v1351, %v1350
    %v1353 = vsub.s32 4, %v1329
    %v1354 = vsel %vm1269, %v1353, %v1329
    %v1355 = vsel %vm1268, %v877, %v1352
    %v1356 = vsel %vm1268, 0, %v1354
    %v1357 = vcosq.f32.pop %v1355
    %v1358 = vsinq.f32.pop %v1355
    %vm1359 = vweird.f32 %v877
    %v1360 = vadd.s32 %v1356, 3
    %v1361 = vand.u32 %v1360, 3
    %vm1362 = vcmp.lt.s32.totalorder %v1361, 2
    %vm1363 = vcmp.eq.s32.totalorder %v1361, 0
    %v1364 = vxor.u32 %v1358, 2147483648
    %v1365 = vsel %vm1363, %v1357, %v1364
    %vm1366 = vcmp.eq.s32.totalorder %v1361, 2
    %v1367 = vxor.u32 %v1357, 2147483648
    %v1368 = vsel %vm1366, %v1367, %v1358
    %v1369 = vsel %vm1362, %v1365, %v1368
    %v1370 = vsel %vm1359, nan, %v1369
    %v1371 = vand.u32 2147483647, %v878
    %vm1372 = vcmp.le.f32.partialorder %v1371, 0.7853982
    %vm1373 = vcmp.lt.s32.totalorder %v878, 0
    %v1374 = vand.u32 %v878, 2139095040
    %v1375 = vshrl.u32 %v1374, 23
    %v1376 = vsub.s32 %v1375, 127
    %v1377 = vand.u32 2147483647, %v878
    %v1378 = vand.u32 %v1377, 8388607
    %v1379 = vor.u32 %v1378, 8388608
    %v1380 = vsub.s32 0, %v1379
    %v1381 = vadd.s32 %v1376, 1
    %vm1382 = vcmp.gt.s32.totalorder %v1381, 0
    %v1383 = vsel %vm1382, %v1381, 0
    %v1384 = vshrl.u32 %v1383, 5
    %v1385 = vand.u32 %v1383, 31
    %v1386 = vsub.s32 32, %v1385
    %v1387 = vshrl.u32 683565275, %v1386
    %v1388 = vshll.u32 683565275, %v1385
    %v1389 = vshrl.u32 2475754826, %v1386
    %v1390 = vor.u32 %v1388, %v1389
    %v1391 = vshll.u32 2475754826, %v1385
    %v1392 = vshrl.u32 2131351028, %v1386
    %v1393 = vor.u32 %v1391, %v1392
    %v1394 = vshll.u32 2131351028, %v1385
    %v1395 = vshrl.u32 2102212464, %v1386
    %v1396 = vor.u32 %v1394, %v1395
    %v1397 = vshll.u32 2102212464, %v1385
    %v1398 = vshrl.u32 920167782, %v1386
    %v1399 = vor.u32 %v1397, %v1398
    %v1400 = vshll.u32 920167782, %v1385
    %v1401 = vshrl.u32 1326507024, %v1386
    %v1402 = vor.u32 %v1400, %v1401
    %vm1403 = vcmp.lt.s32.totalorder %v1384, 1
    %vm1404 = vcmp.lt.s32.totalorder %v1384, 2
    %vm1405 = vcmp.lt.s32.totalorder %v1384, 3
    %vm1406 = vcmp.lt.s32.totalorder %v1384, 4
    %v1407 = vsel %vm1403, %v1387, %v1390
    %v1408 = vsel %vm1406, %v1396, 2102212464
    %v1409 = vsel %vm1405, %v1393, %v1408
    %v1410 = vsel %vm1404, %v1407, %v1409
    %v1411 = vsel %vm1403, %v1390, %v1393
    %v1412 = vsel %vm1406, %v1399, 920167782
    %v1413 = vsel %vm1405, %v1396, %v1412
    %v1414 = vsel %vm1404, %v1411, %v1413
    %v1415 = vsel %vm1403, %v1393, %v1396
    %v1416 = vsel %vm1406, %v1402, 1326507024
    %v1417 = vsel %vm1405, %v1399, %v1416
    %v1418 = vsel %vm1404, %v1415, %v1417
    %v1419 = vshll.u32 %v1379, 8
    %v1420 = vmul.u32.u64.compose %v1419, %v1418
    %v1421 = vextract.low.u32 %v1420
    %v1422 = vextract.high.u32 %v1420
    %v1423 = vmul.u32.u64.compose %v1419, %v1414
    %v1424 = vextract.low.u32 %v1423
    %v1425 = vextract.high.u32 %v1423
    %v1426 = vmul.u32 %v1419, %v1410
    %v1427 = vadd.s32 %v1422, %v1424
    %vm1428 = vc.u32 %v1422, %v1424
    %v1429 = vadd.s32 %v1425, 1
    %v1430 = vsel %vm1428, %v1429, %v1425
    %v1431 = vadd.s32 %v1426, %v1430
    %v1432 = vadd.s32 %v1431, 536870912
    %v1433 = vshrl.u32 %v1432, 30
    %v1434 = vshll.u32 %v1433, 30
    %v1435 = vsub.s32 %v1431, %v1434
    %vm1436 = vcmp.lt.s32.totalorder %v1435, 0
    %v1437 = vsub.s32 0, %v1435
    %v1438 = vsel %vm1436, %v1437, %v1435
    %v1439 = vclz %v1438
    %v1440 = vsub.s32 %v1439, 2
    %vm1441 = vcmp.gt.s32.totalorder 0, %v1440
    %v1442 = vsel %vm1441, 0, %v1440
    %v1443 = vsub.s32 32, %v1442
    %v1444 = vshll.u32 %v1435, %v1442
    %v1445 = vshrl.u32 %v1427, %v1443
    %v1446 = vor.u32 %v1444, %v1445
    %v1447 = vsub.s32 4294967266, %v1442
    %v1448 = vadd.s32 %v1447, 127
    %v1449 = vshll.u32 %v1448, 23
    %v1450 = vor.u32 4788187, %v1449
    %v1451 = vand.u32 2147483647, %v1450
    %v1453 = vcvt.s32.f32 %v1446
    %v1454 = vmul.f32 %v1453, %v1451
    %v1455 = vxor.u32 %v1454, 2147483648
    %v1456 = vsel %vm1373, %v1455, %v1454
    %v1457 = vsub.s32 4, %v1433
    %v1458 = vsel %vm1373, %v1457, %v1433
    %v1459 = vsel %vm1372, %v878, %v1456
    %v1460 = vsel %vm1372, 0, %v1458
    %v1461 = vcosq.f32.pop %v1459
    %v1462 = vsinq.f32.pop %v1459
    %vm1463 = vweird.f32 %v878
    %v1464 = vadd.s32 %v1460, 3
    %v1465 = vand.u32 %v1464, 3
    %vm1466 = vcmp.lt.s32.totalorder %v1465, 2
    %vm1467 = vcmp.eq.s32.totalorder %v1465, 0
    %v1468 = vxor.u32 %v1462, 2147483648
    %v1469 = vsel %vm1467, %v1461, %v1468
    %vm1470 = vcmp.eq.s32.totalorder %v1465, 2
    %v1471 = vxor.u32 %v1461, 2147483648
    %v1472 = vsel %vm1470, %v1471, %v1462
    %v1473 = vsel %vm1466, %v1469, %v1472
    %v1474 = vsel %vm1463, nan, %v1473
    %v1475 = vand.u32 2147483647, %v879
    %vm1476 = vcmp.le.f32.partialorder %v1475, 0.7853982
    %vm1477 = vcmp.lt.s32.totalorder %v879, 0
    %v1478 = vand.u32 %v879, 2139095040
    %v1479 = vshrl.u32 %v1478, 23
    %v1480 = vsub.s32 %v1479, 127
    %v1481 = vand.u32 2147483647, %v879
    %v1482 = vand.u32 %v1481, 8388607
    %v1483 = vor.u32 %v1482, 8388608
    %v1484 = vsub.s32 0, %v1483
    %v1485 = vadd.s32 %v1480, 1
    %vm1486 = vcmp.gt.s32.totalorder %v1485, 0
    %v1487 = vsel %vm1486, %v1485, 0
    %v1488 = vshrl.u32 %v1487, 5
    %v1489 = vand.u32 %v1487, 31
    %v1490 = vsub.s32 32, %v1489
    %v1491 = vshrl.u32 683565275, %v1490
    %v1492 = vshll.u32 683565275, %v1489
    %v1493 = vshrl.u32 2475754826, %v1490
    %v1494 = vor.u32 %v1492, %v1493
    %v1495 = vshll.u32 2475754826, %v1489
    %v1496 = vshrl.u32 2131351028, %v1490
    %v1497 = vor.u32 %v1495, %v1496
    %v1498 = vshll.u32 2131351028, %v1489
    %v1499 = vshrl.u32 2102212464, %v1490
    %v1500 = vor.u32 %v1498, %v1499
    %v1501 = vshll.u32 2102212464, %v1489
    %v1502 = vshrl.u32 920167782, %v1490
    %v1503 = vor.u32 %v1501, %v1502
    %v1504 = vshll.u32 920167782, %v1489
    %v1505 = vshrl.u32 1326507024, %v1490
    %v1506 = vor.u32 %v1504, %v1505
    %vm1507 = vcmp.lt.s32.totalorder %v1488, 1
    %vm1508 = vcmp.lt.s32.totalorder %v1488, 2
    %vm1509 = vcmp.lt.s32.totalorder %v1488, 3
    %vm1510 = vcmp.lt.s32.totalorder %v1488, 4
    %v1511 = vsel %vm1507, %v1491, %v1494
    %v1512 = vsel %vm1510, %v1500, 2102212464
    %v1513 = vsel %vm1509, %v1497, %v1512
    %v1514 = vsel %vm1508, %v1511, %v1513
    %v1515 = vsel %vm1507, %v1494, %v1497
    %v1516 = vsel %vm1510, %v1503, 920167782
    %v1517 = vsel %vm1509, %v1500, %v1516
    %v1518 = vsel %vm1508, %v1515, %v1517
    %v1519 = vsel %vm1507, %v1497, %v1500
    %v1520 = vsel %vm1510, %v1506, 1326507024
    %v1521 = vsel %vm1509, %v1503, %v1520
    %v1522 = vsel %vm1508, %v1519, %v1521
    %v1523 = vshll.u32 %v1483, 8
    %v1524 = vmul.u32.u64.compose %v1523, %v1522
    %v1525 = vextract.low.u32 %v1524
    %v1526 = vextract.high.u32 %v1524
    %v1527 = vmul.u32.u64.compose %v1523, %v1518
    %v1528 = vextract.low.u32 %v1527
    %v1529 = vextract.high.u32 %v1527
    %v1530 = vmul.u32 %v1523, %v1514
    %v1531 = vadd.s32 %v1526, %v1528
    %vm1532 = vc.u32 %v1526, %v1528
    %v1533 = vadd.s32 %v1529, 1
    %v1534 = vsel %vm1532, %v1533, %v1529
    %v1535 = vadd.s32 %v1530, %v1534
    %v1536 = vadd.s32 %v1535, 536870912
    %v1537 = vshrl.u32 %v1536, 30
    %v1538 = vshll.u32 %v1537, 30
    %v1539 = vsub.s32 %v1535, %v1538
    %vm1540 = vcmp.lt.s32.totalorder %v1539, 0
    %v1541 = vsub.s32 0, %v1539
    %v1542 = vsel %vm1540, %v1541, %v1539
    %v1543 = vclz %v1542
    %v1544 = vsub.s32 %v1543, 2
    %vm1545 = vcmp.gt.s32.totalorder 0, %v1544
    %v1546 = vsel %vm1545, 0, %v1544
    %v1547 = vsub.s32 32, %v1546
    %v1548 = vshll.u32 %v1539, %v1546
    %v1549 = vshrl.u32 %v1531, %v1547
    %v1550 = vor.u32 %v1548, %v1549
    %v1551 = vsub.s32 4294967266, %v1546
    %v1552 = vadd.s32 %v1551, 127
    %v1553 = vshll.u32 %v1552, 23
    %v1554 = vor.u32 4788187, %v1553
    %v1555 = vand.u32 2147483647, %v1554
    %v1557 = vcvt.s32.f32 %v1550
    %v1558 = vmul.f32 %v1557, %v1555
    %v1559 = vxor.u32 %v1558, 2147483648
    %v1560 = vsel %vm1477, %v1559, %v1558
    %v1561 = vsub.s32 4, %v1537
    %v1562 = vsel %vm1477, %v1561, %v1537
    %v1563 = vsel %vm1476, %v879, %v1560
    %v1564 = vsel %vm1476, 0, %v1562
    %v1565 = vcosq.f32.pop %v1563
    %v1566 = vsinq.f32.pop %v1563
    %vm1567 = vweird.f32 %v879
    %v1568 = vadd.s32 %v1564, 3
    %v1569 = vand.u32 %v1568, 3
    %vm1570 = vcmp.lt.s32.totalorder %v1569, 2
    %vm1571 = vcmp.eq.s32.totalorder %v1569, 0
    %v1572 = vxor.u32 %v1566, 2147483648
    %v1573 = vsel %vm1571, %v1565, %v1572
    %vm1574 = vcmp.eq.s32.totalorder %v1569, 2
    %v1575 = vxor.u32 %v1565, 2147483648
    %v1576 = vsel %vm1574, %v1575, %v1566
    %v1577 = vsel %vm1570, %v1573, %v1576
    %v1578 = vsel %vm1567, nan, %v1577
    %v1579 = vand.u32 2147483647, %v880
    %vm1580 = vcmp.le.f32.partialorder %v1579, 0.7853982
    %vm1581 = vcmp.lt.s32.totalorder %v880, 0
    %v1582 = vand.u32 %v880, 2139095040
    %v1583 = vshrl.u32 %v1582, 23
    %v1584 = vsub.s32 %v1583, 127
    %v1585 = vand.u32 2147483647, %v880
    %v1586 = vand.u32 %v1585, 8388607
    %v1587 = vor.u32 %v1586, 8388608
    %v1588 = vsub.s32 0, %v1587
    %v1589 = vadd.s32 %v1584, 1
    %vm1590 = vcmp.gt.s32.totalorder %v1589, 0
    %v1591 = vsel %vm1590, %v1589, 0
    %v1592 = vshrl.u32 %v1591, 5
    %v1593 = vand.u32 %v1591, 31
    %v1594 = vsub.s32 32, %v1593
    %v1595 = vshrl.u32 683565275, %v1594
    %v1596 = vshll.u32 683565275, %v1593
    %v1597 = vshrl.u32 2475754826, %v1594
    %v1598 = vor.u32 %v1596, %v1597
    %v1599 = vshll.u32 2475754826, %v1593
    %v1600 = vshrl.u32 2131351028, %v1594
    %v1601 = vor.u32 %v1599, %v1600
    %v1602 = vshll.u32 2131351028, %v1593
    %v1603 = vshrl.u32 2102212464, %v1594
    %v1604 = vor.u32 %v1602, %v1603
    %v1605 = vshll.u32 2102212464, %v1593
    %v1606 = vshrl.u32 920167782, %v1594
    %v1607 = vor.u32 %v1605, %v1606
    %v1608 = vshll.u32 920167782, %v1593
    %v1609 = vshrl.u32 1326507024, %v1594
    %v1610 = vor.u32 %v1608, %v1609
    %vm1611 = vcmp.lt.s32.totalorder %v1592, 1
    %vm1612 = vcmp.lt.s32.totalorder %v1592, 2
    %vm1613 = vcmp.lt.s32.totalorder %v1592, 3
    %vm1614 = vcmp.lt.s32.totalorder %v1592, 4
    %v1615 = vsel %vm1611, %v1595, %v1598
    %v1616 = vsel %vm1614, %v1604, 2102212464
    %v1617 = vsel %vm1613, %v1601, %v1616
    %v1618 = vsel %vm1612, %v1615, %v1617
    %v1619 = vsel %vm1611, %v1598, %v1601
    %v1620 = vsel %vm1614, %v1607, 920167782
    %v1621 = vsel %vm1613, %v1604, %v1620
    %v1622 = vsel %vm1612, %v1619, %v1621
    %v1623 = vsel %vm1611, %v1601, %v1604
    %v1624 = vsel %vm1614, %v1610, 1326507024
    %v1625 = vsel %vm1613, %v1607, %v1624
    %v1626 = vsel %vm1612, %v1623, %v1625
    %v1627 = vshll.u32 %v1587, 8
    %v1628 = vmul.u32.u64.compose %v1627, %v1626
    %v1629 = vextract.low.u32 %v1628
    %v1630 = vextract.high.u32 %v1628
    %v1631 = vmul.u32.u64.compose %v1627, %v1622
    %v1632 = vextract.low.u32 %v1631
    %v1633 = vextract.high.u32 %v1631
    %v1634 = vmul.u32 %v1627, %v1618
    %v1635 = vadd.s32 %v1630, %v1632
    %vm1636 = vc.u32 %v1630, %v1632
    %v1637 = vadd.s32 %v1633, 1
    %v1638 = vsel %vm1636, %v1637, %v1633
    %v1639 = vadd.s32 %v1634, %v1638
    %v1640 = vadd.s32 %v1639, 536870912
    %v1641 = vshrl.u32 %v1640, 30
    %v1642 = vshll.u32 %v1641, 30
    %v1643 = vsub.s32 %v1639, %v1642
    %vm1644 = vcmp.lt.s32.totalorder %v1643, 0
    %v1645 = vsub.s32 0, %v1643
    %v1646 = vsel %vm1644, %v1645, %v1643
    %v1647 = vclz %v1646
    %v1648 = vsub.s32 %v1647, 2
    %vm1649 = vcmp.gt.s32.totalorder 0, %v1648
    %v1650 = vsel %vm1649, 0, %v1648
    %v1651 = vsub.s32 32, %v1650
    %v1652 = vshll.u32 %v1643, %v1650
    %v1653 = vshrl.u32 %v1635, %v1651
    %v1654 = vor.u32 %v1652, %v1653
    %v1655 = vsub.s32 4294967266, %v1650
    %v1656 = vadd.s32 %v1655, 127
    %v1657 = vshll.u32 %v1656, 23
    %v1658 = vor.u32 4788187, %v1657
    %v1659 = vand.u32 2147483647, %v1658
    %v1661 = vcvt.s32.f32 %v1654
    %v1662 = vmul.f32 %v1661, %v1659
    %v1663 = vxor.u32 %v1662, 2147483648
    %v1664 = vsel %vm1581, %v1663, %v1662
    %v1665 = vsub.s32 4, %v1641
    %v1666 = vsel %vm1581, %v1665, %v1641
    %v1667 = vsel %vm1580, %v880, %v1664
    %v1668 = vsel %vm1580, 0, %v1666
    %v1669 = vcosq.f32.pop %v1667
    %v1670 = vsinq.f32.pop %v1667
    %vm1671 = vweird.f32 %v880
    %v1672 = vadd.s32 %v1668, 3
    %v1673 = vand.u32 %v1672, 3
    %vm1674 = vcmp.lt.s32.totalorder %v1673, 2
    %vm1675 = vcmp.eq.s32.totalorder %v1673, 0
    %v1676 = vxor.u32 %v1670, 2147483648
    %v1677 = vsel %vm1675, %v1669, %v1676
    %vm1678 = vcmp.eq.s32.totalorder %v1673, 2
    %v1679 = vxor.u32 %v1669, 2147483648
    %v1680 = vsel %vm1678, %v1679, %v1670
    %v1681 = vsel %vm1674, %v1677, %v1680
    %v1682 = vsel %vm1671, nan, %v1681
    %v1683 = vand.u32 2147483647, %v881
    %vm1684 = vcmp.le.f32.partialorder %v1683, 0.7853982
    %vm1685 = vcmp.lt.s32.totalorder %v881, 0
    %v1686 = vand.u32 %v881, 2139095040
    %v1687 = vshrl.u32 %v1686, 23
    %v1688 = vsub.s32 %v1687, 127
    %v1689 = vand.u32 2147483647, %v881
    %v1690 = vand.u32 %v1689, 8388607
    %v1691 = vor.u32 %v1690, 8388608
    %v1692 = vsub.s32 0, %v1691
    %v1693 = vadd.s32 %v1688, 1
    %vm1694 = vcmp.gt.s32.totalorder %v1693, 0
    %v1695 = vsel %vm1694, %v1693, 0
    %v1696 = vshrl.u32 %v1695, 5
    %v1697 = vand.u32 %v1695, 31
    %v1698 = vsub.s32 32, %v1697
    %v1699 = vshrl.u32 683565275, %v1698
    %v1700 = vshll.u32 683565275, %v1697
    %v1701 = vshrl.u32 2475754826, %v1698
    %v1702 = vor.u32 %v1700, %v1701
    %v1703 = vshll.u32 2475754826, %v1697
    %v1704 = vshrl.u32 2131351028, %v1698
    %v1705 = vor.u32 %v1703, %v1704
    %v1706 = vshll.u32 2131351028, %v1697
    %v1707 = vshrl.u32 2102212464, %v1698
    %v1708 = vor.u32 %v1706, %v1707
    %v1709 = vshll.u32 2102212464, %v1697
    %v1710 = vshrl.u32 920167782, %v1698
    %v1711 = vor.u32 %v1709, %v1710
    %v1712 = vshll.u32 920167782, %v1697
    %v1713 = vshrl.u32 1326507024, %v1698
    %v1714 = vor.u32 %v1712, %v1713
    %vm1715 = vcmp.lt.s32.totalorder %v1696, 1
    %vm1716 = vcmp.lt.s32.totalorder %v1696, 2
    %vm1717 = vcmp.lt.s32.totalorder %v1696, 3
    %vm1718 = vcmp.lt.s32.totalorder %v1696, 4
    %v1719 = vsel %vm1715, %v1699, %v1702
    %v1720 = vsel %vm1718, %v1708, 2102212464
    %v1721 = vsel %vm1717, %v1705, %v1720
    %v1722 = vsel %vm1716, %v1719, %v1721
    %v1723 = vsel %vm1715, %v1702, %v1705
    %v1724 = vsel %vm1718, %v1711, 920167782
    %v1725 = vsel %vm1717, %v1708, %v1724
    %v1726 = vsel %vm1716, %v1723, %v1725
    %v1727 = vsel %vm1715, %v1705, %v1708
    %v1728 = vsel %vm1718, %v1714, 1326507024
    %v1729 = vsel %vm1717, %v1711, %v1728
    %v1730 = vsel %vm1716, %v1727, %v1729
    %v1731 = vshll.u32 %v1691, 8
    %v1732 = vmul.u32.u64.compose %v1731, %v1730
    %v1733 = vextract.low.u32 %v1732
    %v1734 = vextract.high.u32 %v1732
    %v1735 = vmul.u32.u64.compose %v1731, %v1726
    %v1736 = vextract.low.u32 %v1735
    %v1737 = vextract.high.u32 %v1735
    %v1738 = vmul.u32 %v1731, %v1722
    %v1739 = vadd.s32 %v1734, %v1736
    %vm1740 = vc.u32 %v1734, %v1736
    %v1741 = vadd.s32 %v1737, 1
    %v1742 = vsel %vm1740, %v1741, %v1737
    %v1743 = vadd.s32 %v1738, %v1742
    %v1744 = vadd.s32 %v1743, 536870912
    %v1745 = vshrl.u32 %v1744, 30
    %v1746 = vshll.u32 %v1745, 30
    %v1747 = vsub.s32 %v1743, %v1746
    %vm1748 = vcmp.lt.s32.totalorder %v1747, 0
    %v1749 = vsub.s32 0, %v1747
    %v1750 = vsel %vm1748, %v1749, %v1747
    %v1751 = vclz %v1750
    %v1752 = vsub.s32 %v1751, 2
    %vm1753 = vcmp.gt.s32.totalorder 0, %v1752
    %v1754 = vsel %vm1753, 0, %v1752
    %v1755 = vsub.s32 32, %v1754
    %v1756 = vshll.u32 %v1747, %v1754
    %v1757 = vshrl.u32 %v1739, %v1755
    %v1758 = vor.u32 %v1756, %v1757
    %v1759 = vsub.s32 4294967266, %v1754
    %v1760 = vadd.s32 %v1759, 127
    %v1761 = vshll.u32 %v1760, 23
    %v1762 = vor.u32 4788187, %v1761
    %v1763 = vand.u32 2147483647, %v1762
    %v1765 = vcvt.s32.f32 %v1758
    %v1766 = vmul.f32 %v1765, %v1763
    %v1767 = vxor.u32 %v1766, 2147483648
    %v1768 = vsel %vm1685, %v1767, %v1766
    %v1769 = vsub.s32 4, %v1745
    %v1770 = vsel %vm1685, %v1769, %v1745
    %v1771 = vsel %vm1684, %v881, %v1768
    %v1772 = vsel %vm1684, 0, %v1770
    %v1773 = vcosq.f32.pop %v1771
    %v1774 = vsinq.f32.pop %v1771
    %vm1775 = vweird.f32 %v881
    %v1776 = vadd.s32 %v1772, 3
    %v1777 = vand.u32 %v1776, 3
    %vm1778 = vcmp.lt.s32.totalorder %v1777, 2
    %vm1779 = vcmp.eq.s32.totalorder %v1777, 0
    %v1780 = vxor.u32 %v1774, 2147483648
    %v1781 = vsel %vm1779, %v1773, %v1780
    %vm1782 = vcmp.eq.s32.totalorder %v1777, 2
    %v1783 = vxor.u32 %v1773, 2147483648
    %v1784 = vsel %vm1782, %v1783, %v1774
    %v1785 = vsel %vm1778, %v1781, %v1784
    %v1786 = vsel %vm1775, nan, %v1785
    %v1787 = vand.u32 2147483647, %v882
    %vm1788 = vcmp.le.f32.partialorder %v1787, 0.7853982
    %vm1789 = vcmp.lt.s32.totalorder %v882, 0
    %v1790 = vand.u32 %v882, 2139095040
    %v1791 = vshrl.u32 %v1790, 23
    %v1792 = vsub.s32 %v1791, 127
    %v1793 = vand.u32 2147483647, %v882
    %v1794 = vand.u32 %v1793, 8388607
    %v1795 = vor.u32 %v1794, 8388608
    %v1796 = vsub.s32 0, %v1795
    %v1797 = vadd.s32 %v1792, 1
    %vm1798 = vcmp.gt.s32.totalorder %v1797, 0
    %v1799 = vsel %vm1798, %v1797, 0
    %v1800 = vshrl.u32 %v1799, 5
    %v1801 = vand.u32 %v1799, 31
    %v1802 = vsub.s32 32, %v1801
    %v1803 = vshrl.u32 683565275, %v1802
    %v1804 = vshll.u32 683565275, %v1801
    %v1805 = vshrl.u32 2475754826, %v1802
    %v1806 = vor.u32 %v1804, %v1805
    %v1807 = vshll.u32 2475754826, %v1801
    %v1808 = vshrl.u32 2131351028, %v1802
    %v1809 = vor.u32 %v1807, %v1808
    %v1810 = vshll.u32 2131351028, %v1801
    %v1811 = vshrl.u32 2102212464, %v1802
    %v1812 = vor.u32 %v1810, %v1811
    %v1813 = vshll.u32 2102212464, %v1801
    %v1814 = vshrl.u32 920167782, %v1802
    %v1815 = vor.u32 %v1813, %v1814
    %v1816 = vshll.u32 920167782, %v1801
    %v1817 = vshrl.u32 1326507024, %v1802
    %v1818 = vor.u32 %v1816, %v1817
    %vm1819 = vcmp.lt.s32.totalorder %v1800, 1
    %vm1820 = vcmp.lt.s32.totalorder %v1800, 2
    %vm1821 = vcmp.lt.s32.totalorder %v1800, 3
    %vm1822 = vcmp.lt.s32.totalorder %v1800, 4
    %v1823 = vsel %vm1819, %v1803, %v1806
    %v1824 = vsel %vm1822, %v1812, 2102212464
    %v1825 = vsel %vm1821, %v1809, %v1824
    %v1826 = vsel %vm1820, %v1823, %v1825
    %v1827 = vsel %vm1819, %v1806, %v1809
    %v1828 = vsel %vm1822, %v1815, 920167782
    %v1829 = vsel %vm1821, %v1812, %v1828
    %v1830 = vsel %vm1820, %v1827, %v1829
    %v1831 = vsel %vm1819, %v1809, %v1812
    %v1832 = vsel %vm1822, %v1818, 1326507024
    %v1833 = vsel %vm1821, %v1815, %v1832
    %v1834 = vsel %vm1820, %v1831, %v1833
    %v1835 = vshll.u32 %v1795, 8
    %v1836 = vmul.u32.u64.compose %v1835, %v1834
    %v1837 = vextract.low.u32 %v1836
    %v1838 = vextract.high.u32 %v1836
    %v1839 = vmul.u32.u64.compose %v1835, %v1830
    %v1840 = vextract.low.u32 %v1839
    %v1841 = vextract.high.u32 %v1839
    %v1842 = vmul.u32 %v1835, %v1826
    %v1843 = vadd.s32 %v1838, %v1840
    %vm1844 = vc.u32 %v1838, %v1840
    %v1845 = vadd.s32 %v1841, 1
    %v1846 = vsel %vm1844, %v1845, %v1841
    %v1847 = vadd.s32 %v1842, %v1846
    %v1848 = vadd.s32 %v1847, 536870912
    %v1849 = vshrl.u32 %v1848, 30
    %v1850 = vshll.u32 %v1849, 30
    %v1851 = vsub.s32 %v1847, %v1850
    %vm1852 = vcmp.lt.s32.totalorder %v1851, 0
    %v1853 = vsub.s32 0, %v1851
    %v1854 = vsel %vm1852, %v1853, %v1851
    %v1855 = vclz %v1854
    %v1856 = vsub.s32 %v1855, 2
    %vm1857 = vcmp.gt.s32.totalorder 0, %v1856
    %v1858 = vsel %vm1857, 0, %v1856
    %v1859 = vsub.s32 32, %v1858
    %v1860 = vshll.u32 %v1851, %v1858
    %v1861 = vshrl.u32 %v1843, %v1859
    %v1862 = vor.u32 %v1860, %v1861
    %v1863 = vsub.s32 4294967266, %v1858
    %v1864 = vadd.s32 %v1863, 127
    %v1865 = vshll.u32 %v1864, 23
    %v1866 = vor.u32 4788187, %v1865
    %v1867 = vand.u32 2147483647, %v1866
    %v1869 = vcvt.s32.f32 %v1862
    %v1870 = vmul.f32 %v1869, %v1867
    %v1871 = vxor.u32 %v1870, 2147483648
    %v1872 = vsel %vm1789, %v1871, %v1870
    %v1873 = vsub.s32 4, %v1849
    %v1874 = vsel %vm1789, %v1873, %v1849
    %v1875 = vsel %vm1788, %v882, %v1872
    %v1876 = vsel %vm1788, 0, %v1874
    %v1877 = vcosq.f32.pop %v1875
    %v1878 = vsinq.f32.pop %v1875
    %vm1879 = vweird.f32 %v882
    %v1880 = vadd.s32 %v1876, 3
    %v1881 = vand.u32 %v1880, 3
    %vm1882 = vcmp.lt.s32.totalorder %v1881, 2
    %vm1883 = vcmp.eq.s32.totalorder %v1881, 0
    %v1884 = vxor.u32 %v1878, 2147483648
    %v1885 = vsel %vm1883, %v1877, %v1884
    %vm1886 = vcmp.eq.s32.totalorder %v1881, 2
    %v1887 = vxor.u32 %v1877, 2147483648
    %v1888 = vsel %vm1886, %v1887, %v1878
    %v1889 = vsel %vm1882, %v1885, %v1888
    %v1890 = vsel %vm1879, nan, %v1889
    %v1891 = vand.u32 2147483647, %v883
    %vm1892 = vcmp.le.f32.partialorder %v1891, 0.7853982
    %vm1893 = vcmp.lt.s32.totalorder %v883, 0
    %v1894 = vand.u32 %v883, 2139095040
    %v1895 = vshrl.u32 %v1894, 23
    %v1896 = vsub.s32 %v1895, 127
    %v1897 = vand.u32 2147483647, %v883
    %v1898 = vand.u32 %v1897, 8388607
    %v1899 = vor.u32 %v1898, 8388608
    %v1900 = vsub.s32 0, %v1899
    %v1901 = vadd.s32 %v1896, 1
    %vm1902 = vcmp.gt.s32.totalorder %v1901, 0
    %v1903 = vsel %vm1902, %v1901, 0
    %v1904 = vshrl.u32 %v1903, 5
    %v1905 = vand.u32 %v1903, 31
    %v1906 = vsub.s32 32, %v1905
    %v1907 = vshrl.u32 683565275, %v1906
    %v1908 = vshll.u32 683565275, %v1905
    %v1909 = vshrl.u32 2475754826, %v1906
    %v1910 = vor.u32 %v1908, %v1909
    %v1911 = vshll.u32 2475754826, %v1905
    %v1912 = vshrl.u32 2131351028, %v1906
    %v1913 = vor.u32 %v1911, %v1912
    %v1914 = vshll.u32 2131351028, %v1905
    %v1915 = vshrl.u32 2102212464, %v1906
    %v1916 = vor.u32 %v1914, %v1915
    %v1917 = vshll.u32 2102212464, %v1905
    %v1918 = vshrl.u32 920167782, %v1906
    %v1919 = vor.u32 %v1917, %v1918
    %v1920 = vshll.u32 920167782, %v1905
    %v1921 = vshrl.u32 1326507024, %v1906
    %v1922 = vor.u32 %v1920, %v1921
    %vm1923 = vcmp.lt.s32.totalorder %v1904, 1
    %vm1924 = vcmp.lt.s32.totalorder %v1904, 2
    %vm1925 = vcmp.lt.s32.totalorder %v1904, 3
    %vm1926 = vcmp.lt.s32.totalorder %v1904, 4
    %v1927 = vsel %vm1923, %v1907, %v1910
    %v1928 = vsel %vm1926, %v1916, 2102212464
    %v1929 = vsel %vm1925, %v1913, %v1928
    %v1930 = vsel %vm1924, %v1927, %v1929
    %v1931 = vsel %vm1923, %v1910, %v1913
    %v1932 = vsel %vm1926, %v1919, 920167782
    %v1933 = vsel %vm1925, %v1916, %v1932
    %v1934 = vsel %vm1924, %v1931, %v1933
    %v1935 = vsel %vm1923, %v1913, %v1916
    %v1936 = vsel %vm1926, %v1922, 1326507024
    %v1937 = vsel %vm1925, %v1919, %v1936
    %v1938 = vsel %vm1924, %v1935, %v1937
    %v1939 = vshll.u32 %v1899, 8
    %v1940 = vmul.u32.u64.compose %v1939, %v1938
    %v1941 = vextract.low.u32 %v1940
    %v1942 = vextract.high.u32 %v1940
    %v1943 = vmul.u32.u64.compose %v1939, %v1934
    %v1944 = vextract.low.u32 %v1943
    %v1945 = vextract.high.u32 %v1943
    %v1946 = vmul.u32 %v1939, %v1930
    %v1947 = vadd.s32 %v1942, %v1944
    %vm1948 = vc.u32 %v1942, %v1944
    %v1949 = vadd.s32 %v1945, 1
    %v1950 = vsel %vm1948, %v1949, %v1945
    %v1951 = vadd.s32 %v1946, %v1950
    %v1952 = vadd.s32 %v1951, 536870912
    %v1953 = vshrl.u32 %v1952, 30
    %v1954 = vshll.u32 %v1953, 30
    %v1955 = vsub.s32 %v1951, %v1954
    %vm1956 = vcmp.lt.s32.totalorder %v1955, 0
    %v1957 = vsub.s32 0, %v1955
    %v1958 = vsel %vm1956, %v1957, %v1955
    %v1959 = vclz %v1958
    %v1960 = vsub.s32 %v1959, 2
    %vm1961 = vcmp.gt.s32.totalorder 0, %v1960
    %v1962 = vsel %vm1961, 0, %v1960
    %v1963 = vsub.s32 32, %v1962
    %v1964 = vshll.u32 %v1955, %v1962
    %v1965 = vshrl.u32 %v1947, %v1963
    %v1966 = vor.u32 %v1964, %v1965
    %v1967 = vsub.s32 4294967266, %v1962
    %v1968 = vadd.s32 %v1967, 127
    %v1969 = vshll.u32 %v1968, 23
    %v1970 = vor.u32 4788187, %v1969
    %v1971 = vand.u32 2147483647, %v1970
    %v1973 = vcvt.s32.f32 %v1966
    %v1974 = vmul.f32 %v1973, %v1971
    %v1975 = vxor.u32 %v1974, 2147483648
    %v1976 = vsel %vm1893, %v1975, %v1974
    %v1977 = vsub.s32 4, %v1953
    %v1978 = vsel %vm1893, %v1977, %v1953
    %v1979 = vsel %vm1892, %v883, %v1976
    %v1980 = vsel %vm1892, 0, %v1978
    %v1981 = vcosq.f32.pop %v1979
    %v1982 = vsinq.f32.pop %v1979
    %vm1983 = vweird.f32 %v883
    %v1984 = vadd.s32 %v1980, 3
    %v1985 = vand.u32 %v1984, 3
    %vm1986 = vcmp.lt.s32.totalorder %v1985, 2
    %vm1987 = vcmp.eq.s32.totalorder %v1985, 0
    %v1988 = vxor.u32 %v1982, 2147483648
    %v1989 = vsel %vm1987, %v1981, %v1988
    %vm1990 = vcmp.eq.s32.totalorder %v1985, 2
    %v1991 = vxor.u32 %v1981, 2147483648
    %v1992 = vsel %vm1990, %v1991, %v1982
    %v1993 = vsel %vm1986, %v1989, %v1992
    %v1994 = vsel %vm1983, nan, %v1993
    %v1995 = vand.u32 2147483647, %v884
    %vm1996 = vcmp.le.f32.partialorder %v1995, 0.7853982
    %vm1997 = vcmp.lt.s32.totalorder %v884, 0
    %v1998 = vand.u32 %v884, 2139095040
    %v1999 = vshrl.u32 %v1998, 23
    %v2000 = vsub.s32 %v1999, 127
    %v2001 = vand.u32 2147483647, %v884
    %v2002 = vand.u32 %v2001, 8388607
    %v2003 = vor.u32 %v2002, 8388608
    %v2004 = vsub.s32 0, %v2003
    %v2005 = vadd.s32 %v2000, 1
    %vm2006 = vcmp.gt.s32.totalorder %v2005, 0
    %v2007 = vsel %vm2006, %v2005, 0
    %v2008 = vshrl.u32 %v2007, 5
    %v2009 = vand.u32 %v2007, 31
    %v2010 = vsub.s32 32, %v2009
    %v2011 = vshrl.u32 683565275, %v2010
    %v2012 = vshll.u32 683565275, %v2009
    %v2013 = vshrl.u32 2475754826, %v2010
    %v2014 = vor.u32 %v2012, %v2013
    %v2015 = vshll.u32 2475754826, %v2009
    %v2016 = vshrl.u32 2131351028, %v2010
    %v2017 = vor.u32 %v2015, %v2016
    %v2018 = vshll.u32 2131351028, %v2009
    %v2019 = vshrl.u32 2102212464, %v2010
    %v2020 = vor.u32 %v2018, %v2019
    %v2021 = vshll.u32 2102212464, %v2009
    %v2022 = vshrl.u32 920167782, %v2010
    %v2023 = vor.u32 %v2021, %v2022
    %v2024 = vshll.u32 920167782, %v2009
    %v2025 = vshrl.u32 1326507024, %v2010
    %v2026 = vor.u32 %v2024, %v2025
    %vm2027 = vcmp.lt.s32.totalorder %v2008, 1
    %vm2028 = vcmp.lt.s32.totalorder %v2008, 2
    %vm2029 = vcmp.lt.s32.totalorder %v2008, 3
    %vm2030 = vcmp.lt.s32.totalorder %v2008, 4
    %v2031 = vsel %vm2027, %v2011, %v2014
    %v2032 = vsel %vm2030, %v2020, 2102212464
    %v2033 = vsel %vm2029, %v2017, %v2032
    %v2034 = vsel %vm2028, %v2031, %v2033
    %v2035 = vsel %vm2027, %v2014, %v2017
    %v2036 = vsel %vm2030, %v2023, 920167782
    %v2037 = vsel %vm2029, %v2020, %v2036
    %v2038 = vsel %vm2028, %v2035, %v2037
    %v2039 = vsel %vm2027, %v2017, %v2020
    %v2040 = vsel %vm2030, %v2026, 1326507024
    %v2041 = vsel %vm2029, %v2023, %v2040
    %v2042 = vsel %vm2028, %v2039, %v2041
    %v2043 = vshll.u32 %v2003, 8
    %v2044 = vmul.u32.u64.compose %v2043, %v2042
    %v2045 = vextract.low.u32 %v2044
    %v2046 = vextract.high.u32 %v2044
    %v2047 = vmul.u32.u64.compose %v2043, %v2038
    %v2048 = vextract.low.u32 %v2047
    %v2049 = vextract.high.u32 %v2047
    %v2050 = vmul.u32 %v2043, %v2034
    %v2051 = vadd.s32 %v2046, %v2048
    %vm2052 = vc.u32 %v2046, %v2048
    %v2053 = vadd.s32 %v2049, 1
    %v2054 = vsel %vm2052, %v2053, %v2049
    %v2055 = vadd.s32 %v2050, %v2054
    %v2056 = vadd.s32 %v2055, 536870912
    %v2057 = vshrl.u32 %v2056, 30
    %v2058 = vshll.u32 %v2057, 30
    %v2059 = vsub.s32 %v2055, %v2058
    %vm2060 = vcmp.lt.s32.totalorder %v2059, 0
    %v2061 = vsub.s32 0, %v2059
    %v2062 = vsel %vm2060, %v2061, %v2059
    %v2063 = vclz %v2062
    %v2064 = vsub.s32 %v2063, 2
    %vm2065 = vcmp.gt.s32.totalorder 0, %v2064
    %v2066 = vsel %vm2065, 0, %v2064
    %v2067 = vsub.s32 32, %v2066
    %v2068 = vshll.u32 %v2059, %v2066
    %v2069 = vshrl.u32 %v2051, %v2067
    %v2070 = vor.u32 %v2068, %v2069
    %v2071 = vsub.s32 4294967266, %v2066
    %v2072 = vadd.s32 %v2071, 127
    %v2073 = vshll.u32 %v2072, 23
    %v2074 = vor.u32 4788187, %v2073
    %v2075 = vand.u32 2147483647, %v2074
    %v2077 = vcvt.s32.f32 %v2070
    %v2078 = vmul.f32 %v2077, %v2075
    %v2079 = vxor.u32 %v2078, 2147483648
    %v2080 = vsel %vm1997, %v2079, %v2078
    %v2081 = vsub.s32 4, %v2057
    %v2082 = vsel %vm1997, %v2081, %v2057
    %v2083 = vsel %vm1996, %v884, %v2080
    %v2084 = vsel %vm1996, 0, %v2082
    %v2085 = vcosq.f32.pop %v2083
    %v2086 = vsinq.f32.pop %v2083
    %vm2087 = vweird.f32 %v884
    %v2088 = vadd.s32 %v2084, 3
    %v2089 = vand.u32 %v2088, 3
    %vm2090 = vcmp.lt.s32.totalorder %v2089, 2
    %vm2091 = vcmp.eq.s32.totalorder %v2089, 0
    %v2092 = vxor.u32 %v2086, 2147483648
    %v2093 = vsel %vm2091, %v2085, %v2092
    %vm2094 = vcmp.eq.s32.totalorder %v2089, 2
    %v2095 = vxor.u32 %v2085, 2147483648
    %v2096 = vsel %vm2094, %v2095, %v2086
    %v2097 = vsel %vm2090, %v2093, %v2096
    %v2098 = vsel %vm2087, nan, %v2097
    %v2107 = vrot.slane %v1370, 2
    %v2108 = vrot.slane %v1474, 2
    %v2109 = vrot.slane %v1578, 2
    %v2110 = vrot.slane %v1682, 2
    %v2111 = vrot.slane %v1786, 2
    %v2112 = vrot.slane %v1890, 2
    %v2113 = vrot.slane %v1994, 2
    %v2114 = vrot.slane %v2098, 2
    %2123 = vst [vmem:[#allocation2] sm:$0xc0] %v2107
    %2124 = vst [vmem:[#allocation2 + $0x8] sm:$0xc0] %v2108
    %2125 = vst [vmem:[#allocation2 + $0x10] sm:$0xc0] %v2109
    %2126 = vst [vmem:[#allocation2 + $0x18] sm:$0xc0] %v2110
    %2127 = vst [vmem:[#allocation2 + $0x20] sm:$0xc0] %v2111
    %2128 = vst [vmem:[#allocation2 + $0x28] sm:$0xc0] %v2112
    %2129 = vst [vmem:[#allocation2 + $0x30] sm:$0xc0] %v2113
    %2130 = vst [vmem:[#allocation2 + $0x38] sm:$0xc0] %v2114
    %2131 = vst [vmem:[#allocation2 + $0x40] sm:$0x1] %v2107
    %2132 = vst [vmem:[#allocation2 + $0x48] sm:$0x1] %v2108
    %2133 = vst [vmem:[#allocation2 + $0x50] sm:$0x1] %v2109
    %2134 = vst [vmem:[#allocation2 + $0x58] sm:$0x1] %v2110
    %2135 = vst [vmem:[#allocation2 + $0x60] sm:$0x1] %v2111
    %2136 = vst [vmem:[#allocation2 + $0x68] sm:$0x1] %v2112
    %2137 = vst [vmem:[#allocation2 + $0x70] sm:$0x1] %v2113
    %2138 = vst [vmem:[#allocation2 + $0x78] sm:$0x1] %v2114
    %v2139 = vand.u32 2147483647, %v877
    %vm2140 = vcmp.le.f32.partialorder %v2139, 0.7853982
    %vm2141 = vcmp.lt.s32.totalorder %v877, 0
    %v2142 = vand.u32 %v877, 2139095040
    %v2143 = vshrl.u32 %v2142, 23
    %v2144 = vsub.s32 %v2143, 127
    %v2145 = vand.u32 2147483647, %v877
    %v2146 = vand.u32 %v2145, 8388607
    %v2147 = vor.u32 %v2146, 8388608
    %v2148 = vsub.s32 0, %v2147
    %v2149 = vadd.s32 %v2144, 1
    %vm2150 = vcmp.gt.s32.totalorder %v2149, 0
    %v2151 = vsel %vm2150, %v2149, 0
    %v2152 = vshrl.u32 %v2151, 5
    %v2153 = vand.u32 %v2151, 31
    %v2154 = vsub.s32 32, %v2153
    %v2155 = vshrl.u32 683565275, %v2154
    %v2156 = vshll.u32 683565275, %v2153
    %v2157 = vshrl.u32 2475754826, %v2154
    %v2158 = vor.u32 %v2156, %v2157
    %v2159 = vshll.u32 2475754826, %v2153
    %v2160 = vshrl.u32 2131351028, %v2154
    %v2161 = vor.u32 %v2159, %v2160
    %v2162 = vshll.u32 2131351028, %v2153
    %v2163 = vshrl.u32 2102212464, %v2154
    %v2164 = vor.u32 %v2162, %v2163
    %v2165 = vshll.u32 2102212464, %v2153
    %v2166 = vshrl.u32 920167782, %v2154
    %v2167 = vor.u32 %v2165, %v2166
    %v2168 = vshll.u32 920167782, %v2153
    %v2169 = vshrl.u32 1326507024, %v2154
    %v2170 = vor.u32 %v2168, %v2169
    %vm2171 = vcmp.lt.s32.totalorder %v2152, 1
    %vm2172 = vcmp.lt.s32.totalorder %v2152, 2
    %vm2173 = vcmp.lt.s32.totalorder %v2152, 3
    %vm2174 = vcmp.lt.s32.totalorder %v2152, 4
    %v2175 = vsel %vm2171, %v2155, %v2158
    %v2176 = vsel %vm2174, %v2164, 2102212464
    %v2177 = vsel %vm2173, %v2161, %v2176
    %v2178 = vsel %vm2172, %v2175, %v2177
    %v2179 = vsel %vm2171, %v2158, %v2161
    %v2180 = vsel %vm2174, %v2167, 920167782
    %v2181 = vsel %vm2173, %v2164, %v2180
    %v2182 = vsel %vm2172, %v2179, %v2181
    %v2183 = vsel %vm2171, %v2161, %v2164
    %v2184 = vsel %vm2174, %v2170, 1326507024
    %v2185 = vsel %vm2173, %v2167, %v2184
    %v2186 = vsel %vm2172, %v2183, %v2185
    %v2187 = vshll.u32 %v2147, 8
    %v2188 = vmul.u32.u64.compose %v2187, %v2186
    %v2189 = vextract.low.u32 %v2188
    %v2190 = vextract.high.u32 %v2188
    %v2191 = vmul.u32.u64.compose %v2187, %v2182
    %v2192 = vextract.low.u32 %v2191
    %v2193 = vextract.high.u32 %v2191
    %v2194 = vmul.u32 %v2187, %v2178
    %v2195 = vadd.s32 %v2190, %v2192
    %vm2196 = vc.u32 %v2190, %v2192
    %v2197 = vadd.s32 %v2193, 1
    %v2198 = vsel %vm2196, %v2197, %v2193
    %v2199 = vadd.s32 %v2194, %v2198
    %v2200 = vadd.s32 %v2199, 536870912
    %v2201 = vshrl.u32 %v2200, 30
    %v2202 = vshll.u32 %v2201, 30
    %v2203 = vsub.s32 %v2199, %v2202
    %vm2204 = vcmp.lt.s32.totalorder %v2203, 0
    %v2205 = vsub.s32 0, %v2203
    %v2206 = vsel %vm2204, %v2205, %v2203
    %v2207 = vclz %v2206
    %v2208 = vsub.s32 %v2207, 2
    %vm2209 = vcmp.gt.s32.totalorder 0, %v2208
    %v2210 = vsel %vm2209, 0, %v2208
    %v2211 = vsub.s32 32, %v2210
    %v2212 = vshll.u32 %v2203, %v2210
    %v2213 = vshrl.u32 %v2195, %v2211
    %v2214 = vor.u32 %v2212, %v2213
    %v2215 = vsub.s32 4294967266, %v2210
    %v2216 = vadd.s32 %v2215, 127
    %v2217 = vshll.u32 %v2216, 23
    %v2218 = vor.u32 4788187, %v2217
    %v2219 = vand.u32 2147483647, %v2218
    %v2221 = vcvt.s32.f32 %v2214
    %v2222 = vmul.f32 %v2221, %v2219
    %v2223 = vxor.u32 %v2222, 2147483648
    %v2224 = vsel %vm2141, %v2223, %v2222
    %v2225 = vsub.s32 4, %v2201
    %v2226 = vsel %vm2141, %v2225, %v2201
    %v2227 = vsel %vm2140, %v877, %v2224
    %v2228 = vsel %vm2140, 0, %v2226
    %v2229 = vcosq.f32.pop %v2227
    %v2230 = vsinq.f32.pop %v2227
    %vm2231 = vweird.f32 %v877
    %v2232 = vand.u32 %v2228, 3
    %vm2233 = vcmp.lt.s32.totalorder %v2232, 2
    %vm2234 = vcmp.eq.s32.totalorder %v2232, 0
    %v2235 = vxor.u32 %v2230, 2147483648
    %v2236 = vsel %vm2234, %v2229, %v2235
    %vm2237 = vcmp.eq.s32.totalorder %v2232, 2
    %v2238 = vxor.u32 %v2229, 2147483648
    %v2239 = vsel %vm2237, %v2238, %v2230
    %v2240 = vsel %vm2233, %v2236, %v2239
    %v2241 = vsel %vm2231, nan, %v2240
    %v2242 = vand.u32 2147483647, %v878
    %vm2243 = vcmp.le.f32.partialorder %v2242, 0.7853982
    %vm2244 = vcmp.lt.s32.totalorder %v878, 0
    %v2245 = vand.u32 %v878, 2139095040
    %v2246 = vshrl.u32 %v2245, 23
    %v2247 = vsub.s32 %v2246, 127
    %v2248 = vand.u32 2147483647, %v878
    %v2249 = vand.u32 %v2248, 8388607
    %v2250 = vor.u32 %v2249, 8388608
    %v2251 = vsub.s32 0, %v2250
    %v2252 = vadd.s32 %v2247, 1
    %vm2253 = vcmp.gt.s32.totalorder %v2252, 0
    %v2254 = vsel %vm2253, %v2252, 0
    %v2255 = vshrl.u32 %v2254, 5
    %v2256 = vand.u32 %v2254, 31
    %v2257 = vsub.s32 32, %v2256
    %v2258 = vshrl.u32 683565275, %v2257
    %v2259 = vshll.u32 683565275, %v2256
    %v2260 = vshrl.u32 2475754826, %v2257
    %v2261 = vor.u32 %v2259, %v2260
    %v2262 = vshll.u32 2475754826, %v2256
    %v2263 = vshrl.u32 2131351028, %v2257
    %v2264 = vor.u32 %v2262, %v2263
    %v2265 = vshll.u32 2131351028, %v2256
    %v2266 = vshrl.u32 2102212464, %v2257
    %v2267 = vor.u32 %v2265, %v2266
    %v2268 = vshll.u32 2102212464, %v2256
    %v2269 = vshrl.u32 920167782, %v2257
    %v2270 = vor.u32 %v2268, %v2269
    %v2271 = vshll.u32 920167782, %v2256
    %v2272 = vshrl.u32 1326507024, %v2257
    %v2273 = vor.u32 %v2271, %v2272
    %vm2274 = vcmp.lt.s32.totalorder %v2255, 1
    %vm2275 = vcmp.lt.s32.totalorder %v2255, 2
    %vm2276 = vcmp.lt.s32.totalorder %v2255, 3
    %vm2277 = vcmp.lt.s32.totalorder %v2255, 4
    %v2278 = vsel %vm2274, %v2258, %v2261
    %v2279 = vsel %vm2277, %v2267, 2102212464
    %v2280 = vsel %vm2276, %v2264, %v2279
    %v2281 = vsel %vm2275, %v2278, %v2280
    %v2282 = vsel %vm2274, %v2261, %v2264
    %v2283 = vsel %vm2277, %v2270, 920167782
    %v2284 = vsel %vm2276, %v2267, %v2283
    %v2285 = vsel %vm2275, %v2282, %v2284
    %v2286 = vsel %vm2274, %v2264, %v2267
    %v2287 = vsel %vm2277, %v2273, 1326507024
    %v2288 = vsel %vm2276, %v2270, %v2287
    %v2289 = vsel %vm2275, %v2286, %v2288
    %v2290 = vshll.u32 %v2250, 8
    %v2291 = vmul.u32.u64.compose %v2290, %v2289
    %v2292 = vextract.low.u32 %v2291
    %v2293 = vextract.high.u32 %v2291
    %v2294 = vmul.u32.u64.compose %v2290, %v2285
    %v2295 = vextract.low.u32 %v2294
    %v2296 = vextract.high.u32 %v2294
    %v2297 = vmul.u32 %v2290, %v2281
    %v2298 = vadd.s32 %v2293, %v2295
    %vm2299 = vc.u32 %v2293, %v2295
    %v2300 = vadd.s32 %v2296, 1
    %v2301 = vsel %vm2299, %v2300, %v2296
    %v2302 = vadd.s32 %v2297, %v2301
    %v2303 = vadd.s32 %v2302, 536870912
    %v2304 = vshrl.u32 %v2303, 30
    %v2305 = vshll.u32 %v2304, 30
    %v2306 = vsub.s32 %v2302, %v2305
    %vm2307 = vcmp.lt.s32.totalorder %v2306, 0
    %v2308 = vsub.s32 0, %v2306
    %v2309 = vsel %vm2307, %v2308, %v2306
    %v2310 = vclz %v2309
    %v2311 = vsub.s32 %v2310, 2
    %vm2312 = vcmp.gt.s32.totalorder 0, %v2311
    %v2313 = vsel %vm2312, 0, %v2311
    %v2314 = vsub.s32 32, %v2313
    %v2315 = vshll.u32 %v2306, %v2313
    %v2316 = vshrl.u32 %v2298, %v2314
    %v2317 = vor.u32 %v2315, %v2316
    %v2318 = vsub.s32 4294967266, %v2313
    %v2319 = vadd.s32 %v2318, 127
    %v2320 = vshll.u32 %v2319, 23
    %v2321 = vor.u32 4788187, %v2320
    %v2322 = vand.u32 2147483647, %v2321
    %v2324 = vcvt.s32.f32 %v2317
    %v2325 = vmul.f32 %v2324, %v2322
    %v2326 = vxor.u32 %v2325, 2147483648
    %v2327 = vsel %vm2244, %v2326, %v2325
    %v2328 = vsub.s32 4, %v2304
    %v2329 = vsel %vm2244, %v2328, %v2304
    %v2330 = vsel %vm2243, %v878, %v2327
    %v2331 = vsel %vm2243, 0, %v2329
    %v2332 = vcosq.f32.pop %v2330
    %v2333 = vsinq.f32.pop %v2330
    %vm2334 = vweird.f32 %v878
    %v2335 = vand.u32 %v2331, 3
    %vm2336 = vcmp.lt.s32.totalorder %v2335, 2
    %vm2337 = vcmp.eq.s32.totalorder %v2335, 0
    %v2338 = vxor.u32 %v2333, 2147483648
    %v2339 = vsel %vm2337, %v2332, %v2338
    %vm2340 = vcmp.eq.s32.totalorder %v2335, 2
    %v2341 = vxor.u32 %v2332, 2147483648
    %v2342 = vsel %vm2340, %v2341, %v2333
    %v2343 = vsel %vm2336, %v2339, %v2342
    %v2344 = vsel %vm2334, nan, %v2343
    %v2345 = vand.u32 2147483647, %v879
    %vm2346 = vcmp.le.f32.partialorder %v2345, 0.7853982
    %vm2347 = vcmp.lt.s32.totalorder %v879, 0
    %v2348 = vand.u32 %v879, 2139095040
    %v2349 = vshrl.u32 %v2348, 23
    %v2350 = vsub.s32 %v2349, 127
    %v2351 = vand.u32 2147483647, %v879
    %v2352 = vand.u32 %v2351, 8388607
    %v2353 = vor.u32 %v2352, 8388608
    %v2354 = vsub.s32 0, %v2353
    %v2355 = vadd.s32 %v2350, 1
    %vm2356 = vcmp.gt.s32.totalorder %v2355, 0
    %v2357 = vsel %vm2356, %v2355, 0
    %v2358 = vshrl.u32 %v2357, 5
    %v2359 = vand.u32 %v2357, 31
    %v2360 = vsub.s32 32, %v2359
    %v2361 = vshrl.u32 683565275, %v2360
    %v2362 = vshll.u32 683565275, %v2359
    %v2363 = vshrl.u32 2475754826, %v2360
    %v2364 = vor.u32 %v2362, %v2363
    %v2365 = vshll.u32 2475754826, %v2359
    %v2366 = vshrl.u32 2131351028, %v2360
    %v2367 = vor.u32 %v2365, %v2366
    %v2368 = vshll.u32 2131351028, %v2359
    %v2369 = vshrl.u32 2102212464, %v2360
    %v2370 = vor.u32 %v2368, %v2369
    %v2371 = vshll.u32 2102212464, %v2359
    %v2372 = vshrl.u32 920167782, %v2360
    %v2373 = vor.u32 %v2371, %v2372
    %v2374 = vshll.u32 920167782, %v2359
    %v2375 = vshrl.u32 1326507024, %v2360
    %v2376 = vor.u32 %v2374, %v2375
    %vm2377 = vcmp.lt.s32.totalorder %v2358, 1
    %vm2378 = vcmp.lt.s32.totalorder %v2358, 2
    %vm2379 = vcmp.lt.s32.totalorder %v2358, 3
    %vm2380 = vcmp.lt.s32.totalorder %v2358, 4
    %v2381 = vsel %vm2377, %v2361, %v2364
    %v2382 = vsel %vm2380, %v2370, 2102212464
    %v2383 = vsel %vm2379, %v2367, %v2382
    %v2384 = vsel %vm2378, %v2381, %v2383
    %v2385 = vsel %vm2377, %v2364, %v2367
    %v2386 = vsel %vm2380, %v2373, 920167782
    %v2387 = vsel %vm2379, %v2370, %v2386
    %v2388 = vsel %vm2378, %v2385, %v2387
    %v2389 = vsel %vm2377, %v2367, %v2370
    %v2390 = vsel %vm2380, %v2376, 1326507024
    %v2391 = vsel %vm2379, %v2373, %v2390
    %v2392 = vsel %vm2378, %v2389, %v2391
    %v2393 = vshll.u32 %v2353, 8
    %v2394 = vmul.u32.u64.compose %v2393, %v2392
    %v2395 = vextract.low.u32 %v2394
    %v2396 = vextract.high.u32 %v2394
    %v2397 = vmul.u32.u64.compose %v2393, %v2388
    %v2398 = vextract.low.u32 %v2397
    %v2399 = vextract.high.u32 %v2397
    %v2400 = vmul.u32 %v2393, %v2384
    %v2401 = vadd.s32 %v2396, %v2398
    %vm2402 = vc.u32 %v2396, %v2398
    %v2403 = vadd.s32 %v2399, 1
    %v2404 = vsel %vm2402, %v2403, %v2399
    %v2405 = vadd.s32 %v2400, %v2404
    %v2406 = vadd.s32 %v2405, 536870912
    %v2407 = vshrl.u32 %v2406, 30
    %v2408 = vshll.u32 %v2407, 30
    %v2409 = vsub.s32 %v2405, %v2408
    %vm2410 = vcmp.lt.s32.totalorder %v2409, 0
    %v2411 = vsub.s32 0, %v2409
    %v2412 = vsel %vm2410, %v2411, %v2409
    %v2413 = vclz %v2412
    %v2414 = vsub.s32 %v2413, 2
    %vm2415 = vcmp.gt.s32.totalorder 0, %v2414
    %v2416 = vsel %vm2415, 0, %v2414
    %v2417 = vsub.s32 32, %v2416
    %v2418 = vshll.u32 %v2409, %v2416
    %v2419 = vshrl.u32 %v2401, %v2417
    %v2420 = vor.u32 %v2418, %v2419
    %v2421 = vsub.s32 4294967266, %v2416
    %v2422 = vadd.s32 %v2421, 127
    %v2423 = vshll.u32 %v2422, 23
    %v2424 = vor.u32 4788187, %v2423
    %v2425 = vand.u32 2147483647, %v2424
    %v2427 = vcvt.s32.f32 %v2420
    %v2428 = vmul.f32 %v2427, %v2425
    %v2429 = vxor.u32 %v2428, 2147483648
    %v2430 = vsel %vm2347, %v2429, %v2428
    %v2431 = vsub.s32 4, %v2407
    %v2432 = vsel %vm2347, %v2431, %v2407
    %v2433 = vsel %vm2346, %v879, %v2430
    %v2434 = vsel %vm2346, 0, %v2432
    %v2435 = vcosq.f32.pop %v2433
    %v2436 = vsinq.f32.pop %v2433
    %vm2437 = vweird.f32 %v879
    %v2438 = vand.u32 %v2434, 3
    %vm2439 = vcmp.lt.s32.totalorder %v2438, 2
    %vm2440 = vcmp.eq.s32.totalorder %v2438, 0
    %v2441 = vxor.u32 %v2436, 2147483648
    %v2442 = vsel %vm2440, %v2435, %v2441
    %vm2443 = vcmp.eq.s32.totalorder %v2438, 2
    %v2444 = vxor.u32 %v2435, 2147483648
    %v2445 = vsel %vm2443, %v2444, %v2436
    %v2446 = vsel %vm2439, %v2442, %v2445
    %v2447 = vsel %vm2437, nan, %v2446
    %v2448 = vand.u32 2147483647, %v880
    %vm2449 = vcmp.le.f32.partialorder %v2448, 0.7853982
    %vm2450 = vcmp.lt.s32.totalorder %v880, 0
    %v2451 = vand.u32 %v880, 2139095040
    %v2452 = vshrl.u32 %v2451, 23
    %v2453 = vsub.s32 %v2452, 127
    %v2454 = vand.u32 2147483647, %v880
    %v2455 = vand.u32 %v2454, 8388607
    %v2456 = vor.u32 %v2455, 8388608
    %v2457 = vsub.s32 0, %v2456
    %v2458 = vadd.s32 %v2453, 1
    %vm2459 = vcmp.gt.s32.totalorder %v2458, 0
    %v2460 = vsel %vm2459, %v2458, 0
    %v2461 = vshrl.u32 %v2460, 5
    %v2462 = vand.u32 %v2460, 31
    %v2463 = vsub.s32 32, %v2462
    %v2464 = vshrl.u32 683565275, %v2463
    %v2465 = vshll.u32 683565275, %v2462
    %v2466 = vshrl.u32 2475754826, %v2463
    %v2467 = vor.u32 %v2465, %v2466
    %v2468 = vshll.u32 2475754826, %v2462
    %v2469 = vshrl.u32 2131351028, %v2463
    %v2470 = vor.u32 %v2468, %v2469
    %v2471 = vshll.u32 2131351028, %v2462
    %v2472 = vshrl.u32 2102212464, %v2463
    %v2473 = vor.u32 %v2471, %v2472
    %v2474 = vshll.u32 2102212464, %v2462
    %v2475 = vshrl.u32 920167782, %v2463
    %v2476 = vor.u32 %v2474, %v2475
    %v2477 = vshll.u32 920167782, %v2462
    %v2478 = vshrl.u32 1326507024, %v2463
    %v2479 = vor.u32 %v2477, %v2478
    %vm2480 = vcmp.lt.s32.totalorder %v2461, 1
    %vm2481 = vcmp.lt.s32.totalorder %v2461, 2
    %vm2482 = vcmp.lt.s32.totalorder %v2461, 3
    %vm2483 = vcmp.lt.s32.totalorder %v2461, 4
    %v2484 = vsel %vm2480, %v2464, %v2467
    %v2485 = vsel %vm2483, %v2473, 2102212464
    %v2486 = vsel %vm2482, %v2470, %v2485
    %v2487 = vsel %vm2481, %v2484, %v2486
    %v2488 = vsel %vm2480, %v2467, %v2470
    %v2489 = vsel %vm2483, %v2476, 920167782
    %v2490 = vsel %vm2482, %v2473, %v2489
    %v2491 = vsel %vm2481, %v2488, %v2490
    %v2492 = vsel %vm2480, %v2470, %v2473
    %v2493 = vsel %vm2483, %v2479, 1326507024
    %v2494 = vsel %vm2482, %v2476, %v2493
    %v2495 = vsel %vm2481, %v2492, %v2494
    %v2496 = vshll.u32 %v2456, 8
    %v2497 = vmul.u32.u64.compose %v2496, %v2495
    %v2498 = vextract.low.u32 %v2497
    %v2499 = vextract.high.u32 %v2497
    %v2500 = vmul.u32.u64.compose %v2496, %v2491
    %v2501 = vextract.low.u32 %v2500
    %v2502 = vextract.high.u32 %v2500
    %v2503 = vmul.u32 %v2496, %v2487
    %v2504 = vadd.s32 %v2499, %v2501
    %vm2505 = vc.u32 %v2499, %v2501
    %v2506 = vadd.s32 %v2502, 1
    %v2507 = vsel %vm2505, %v2506, %v2502
    %v2508 = vadd.s32 %v2503, %v2507
    %v2509 = vadd.s32 %v2508, 536870912
    %v2510 = vshrl.u32 %v2509, 30
    %v2511 = vshll.u32 %v2510, 30
    %v2512 = vsub.s32 %v2508, %v2511
    %vm2513 = vcmp.lt.s32.totalorder %v2512, 0
    %v2514 = vsub.s32 0, %v2512
    %v2515 = vsel %vm2513, %v2514, %v2512
    %v2516 = vclz %v2515
    %v2517 = vsub.s32 %v2516, 2
    %vm2518 = vcmp.gt.s32.totalorder 0, %v2517
    %v2519 = vsel %vm2518, 0, %v2517
    %v2520 = vsub.s32 32, %v2519
    %v2521 = vshll.u32 %v2512, %v2519
    %v2522 = vshrl.u32 %v2504, %v2520
    %v2523 = vor.u32 %v2521, %v2522
    %v2524 = vsub.s32 4294967266, %v2519
    %v2525 = vadd.s32 %v2524, 127
    %v2526 = vshll.u32 %v2525, 23
    %v2527 = vor.u32 4788187, %v2526
    %v2528 = vand.u32 2147483647, %v2527
    %v2530 = vcvt.s32.f32 %v2523
    %v2531 = vmul.f32 %v2530, %v2528
    %v2532 = vxor.u32 %v2531, 2147483648
    %v2533 = vsel %vm2450, %v2532, %v2531
    %v2534 = vsub.s32 4, %v2510
    %v2535 = vsel %vm2450, %v2534, %v2510
    %v2536 = vsel %vm2449, %v880, %v2533
    %v2537 = vsel %vm2449, 0, %v2535
    %v2538 = vcosq.f32.pop %v2536
    %v2539 = vsinq.f32.pop %v2536
    %vm2540 = vweird.f32 %v880
    %v2541 = vand.u32 %v2537, 3
    %vm2542 = vcmp.lt.s32.totalorder %v2541, 2
    %vm2543 = vcmp.eq.s32.totalorder %v2541, 0
    %v2544 = vxor.u32 %v2539, 2147483648
    %v2545 = vsel %vm2543, %v2538, %v2544
    %vm2546 = vcmp.eq.s32.totalorder %v2541, 2
    %v2547 = vxor.u32 %v2538, 2147483648
    %v2548 = vsel %vm2546, %v2547, %v2539
    %v2549 = vsel %vm2542, %v2545, %v2548
    %v2550 = vsel %vm2540, nan, %v2549
    %v2551 = vand.u32 2147483647, %v881
    %vm2552 = vcmp.le.f32.partialorder %v2551, 0.7853982
    %vm2553 = vcmp.lt.s32.totalorder %v881, 0
    %v2554 = vand.u32 %v881, 2139095040
    %v2555 = vshrl.u32 %v2554, 23
    %v2556 = vsub.s32 %v2555, 127
    %v2557 = vand.u32 2147483647, %v881
    %v2558 = vand.u32 %v2557, 8388607
    %v2559 = vor.u32 %v2558, 8388608
    %v2560 = vsub.s32 0, %v2559
    %v2561 = vadd.s32 %v2556, 1
    %vm2562 = vcmp.gt.s32.totalorder %v2561, 0
    %v2563 = vsel %vm2562, %v2561, 0
    %v2564 = vshrl.u32 %v2563, 5
    %v2565 = vand.u32 %v2563, 31
    %v2566 = vsub.s32 32, %v2565
    %v2567 = vshrl.u32 683565275, %v2566
    %v2568 = vshll.u32 683565275, %v2565
    %v2569 = vshrl.u32 2475754826, %v2566
    %v2570 = vor.u32 %v2568, %v2569
    %v2571 = vshll.u32 2475754826, %v2565
    %v2572 = vshrl.u32 2131351028, %v2566
    %v2573 = vor.u32 %v2571, %v2572
    %v2574 = vshll.u32 2131351028, %v2565
    %v2575 = vshrl.u32 2102212464, %v2566
    %v2576 = vor.u32 %v2574, %v2575
    %v2577 = vshll.u32 2102212464, %v2565
    %v2578 = vshrl.u32 920167782, %v2566
    %v2579 = vor.u32 %v2577, %v2578
    %v2580 = vshll.u32 920167782, %v2565
    %v2581 = vshrl.u32 1326507024, %v2566
    %v2582 = vor.u32 %v2580, %v2581
    %vm2583 = vcmp.lt.s32.totalorder %v2564, 1
    %vm2584 = vcmp.lt.s32.totalorder %v2564, 2
    %vm2585 = vcmp.lt.s32.totalorder %v2564, 3
    %vm2586 = vcmp.lt.s32.totalorder %v2564, 4
    %v2587 = vsel %vm2583, %v2567, %v2570
    %v2588 = vsel %vm2586, %v2576, 2102212464
    %v2589 = vsel %vm2585, %v2573, %v2588
    %v2590 = vsel %vm2584, %v2587, %v2589
    %v2591 = vsel %vm2583, %v2570, %v2573
    %v2592 = vsel %vm2586, %v2579, 920167782
    %v2593 = vsel %vm2585, %v2576, %v2592
    %v2594 = vsel %vm2584, %v2591, %v2593
    %v2595 = vsel %vm2583, %v2573, %v2576
    %v2596 = vsel %vm2586, %v2582, 1326507024
    %v2597 = vsel %vm2585, %v2579, %v2596
    %v2598 = vsel %vm2584, %v2595, %v2597
    %v2599 = vshll.u32 %v2559, 8
    %v2600 = vmul.u32.u64.compose %v2599, %v2598
    %v2601 = vextract.low.u32 %v2600
    %v2602 = vextract.high.u32 %v2600
    %v2603 = vmul.u32.u64.compose %v2599, %v2594
    %v2604 = vextract.low.u32 %v2603
    %v2605 = vextract.high.u32 %v2603
    %v2606 = vmul.u32 %v2599, %v2590
    %v2607 = vadd.s32 %v2602, %v2604
    %vm2608 = vc.u32 %v2602, %v2604
    %v2609 = vadd.s32 %v2605, 1
    %v2610 = vsel %vm2608, %v2609, %v2605
    %v2611 = vadd.s32 %v2606, %v2610
    %v2612 = vadd.s32 %v2611, 536870912
    %v2613 = vshrl.u32 %v2612, 30
    %v2614 = vshll.u32 %v2613, 30
    %v2615 = vsub.s32 %v2611, %v2614
    %vm2616 = vcmp.lt.s32.totalorder %v2615, 0
    %v2617 = vsub.s32 0, %v2615
    %v2618 = vsel %vm2616, %v2617, %v2615
    %v2619 = vclz %v2618
    %v2620 = vsub.s32 %v2619, 2
    %vm2621 = vcmp.gt.s32.totalorder 0, %v2620
    %v2622 = vsel %vm2621, 0, %v2620
    %v2623 = vsub.s32 32, %v2622
    %v2624 = vshll.u32 %v2615, %v2622
    %v2625 = vshrl.u32 %v2607, %v2623
    %v2626 = vor.u32 %v2624, %v2625
    %v2627 = vsub.s32 4294967266, %v2622
    %v2628 = vadd.s32 %v2627, 127
    %v2629 = vshll.u32 %v2628, 23
    %v2630 = vor.u32 4788187, %v2629
    %v2631 = vand.u32 2147483647, %v2630
    %v2633 = vcvt.s32.f32 %v2626
    %v2634 = vmul.f32 %v2633, %v2631
    %v2635 = vxor.u32 %v2634, 2147483648
    %v2636 = vsel %vm2553, %v2635, %v2634
    %v2637 = vsub.s32 4, %v2613
    %v2638 = vsel %vm2553, %v2637, %v2613
    %v2639 = vsel %vm2552, %v881, %v2636
    %v2640 = vsel %vm2552, 0, %v2638
    %v2641 = vcosq.f32.pop %v2639
    %v2642 = vsinq.f32.pop %v2639
    %vm2643 = vweird.f32 %v881
    %v2644 = vand.u32 %v2640, 3
    %vm2645 = vcmp.lt.s32.totalorder %v2644, 2
    %vm2646 = vcmp.eq.s32.totalorder %v2644, 0
    %v2647 = vxor.u32 %v2642, 2147483648
    %v2648 = vsel %vm2646, %v2641, %v2647
    %vm2649 = vcmp.eq.s32.totalorder %v2644, 2
    %v2650 = vxor.u32 %v2641, 2147483648
    %v2651 = vsel %vm2649, %v2650, %v2642
    %v2652 = vsel %vm2645, %v2648, %v2651
    %v2653 = vsel %vm2643, nan, %v2652
    %v2654 = vand.u32 2147483647, %v882
    %vm2655 = vcmp.le.f32.partialorder %v2654, 0.7853982
    %vm2656 = vcmp.lt.s32.totalorder %v882, 0
    %v2657 = vand.u32 %v882, 2139095040
    %v2658 = vshrl.u32 %v2657, 23
    %v2659 = vsub.s32 %v2658, 127
    %v2660 = vand.u32 2147483647, %v882
    %v2661 = vand.u32 %v2660, 8388607
    %v2662 = vor.u32 %v2661, 8388608
    %v2663 = vsub.s32 0, %v2662
    %v2664 = vadd.s32 %v2659, 1
    %vm2665 = vcmp.gt.s32.totalorder %v2664, 0
    %v2666 = vsel %vm2665, %v2664, 0
    %v2667 = vshrl.u32 %v2666, 5
    %v2668 = vand.u32 %v2666, 31
    %v2669 = vsub.s32 32, %v2668
    %v2670 = vshrl.u32 683565275, %v2669
    %v2671 = vshll.u32 683565275, %v2668
    %v2672 = vshrl.u32 2475754826, %v2669
    %v2673 = vor.u32 %v2671, %v2672
    %v2674 = vshll.u32 2475754826, %v2668
    %v2675 = vshrl.u32 2131351028, %v2669
    %v2676 = vor.u32 %v2674, %v2675
    %v2677 = vshll.u32 2131351028, %v2668
    %v2678 = vshrl.u32 2102212464, %v2669
    %v2679 = vor.u32 %v2677, %v2678
    %v2680 = vshll.u32 2102212464, %v2668
    %v2681 = vshrl.u32 920167782, %v2669
    %v2682 = vor.u32 %v2680, %v2681
    %v2683 = vshll.u32 920167782, %v2668
    %v2684 = vshrl.u32 1326507024, %v2669
    %v2685 = vor.u32 %v2683, %v2684
    %vm2686 = vcmp.lt.s32.totalorder %v2667, 1
    %vm2687 = vcmp.lt.s32.totalorder %v2667, 2
    %vm2688 = vcmp.lt.s32.totalorder %v2667, 3
    %vm2689 = vcmp.lt.s32.totalorder %v2667, 4
    %v2690 = vsel %vm2686, %v2670, %v2673
    %v2691 = vsel %vm2689, %v2679, 2102212464
    %v2692 = vsel %vm2688, %v2676, %v2691
    %v2693 = vsel %vm2687, %v2690, %v2692
    %v2694 = vsel %vm2686, %v2673, %v2676
    %v2695 = vsel %vm2689, %v2682, 920167782
    %v2696 = vsel %vm2688, %v2679, %v2695
    %v2697 = vsel %vm2687, %v2694, %v2696
    %v2698 = vsel %vm2686, %v2676, %v2679
    %v2699 = vsel %vm2689, %v2685, 1326507024
    %v2700 = vsel %vm2688, %v2682, %v2699
    %v2701 = vsel %vm2687, %v2698, %v2700
    %v2702 = vshll.u32 %v2662, 8
    %v2703 = vmul.u32.u64.compose %v2702, %v2701
    %v2704 = vextract.low.u32 %v2703
    %v2705 = vextract.high.u32 %v2703
    %v2706 = vmul.u32.u64.compose %v2702, %v2697
    %v2707 = vextract.low.u32 %v2706
    %v2708 = vextract.high.u32 %v2706
    %v2709 = vmul.u32 %v2702, %v2693
    %v2710 = vadd.s32 %v2705, %v2707
    %vm2711 = vc.u32 %v2705, %v2707
    %v2712 = vadd.s32 %v2708, 1
    %v2713 = vsel %vm2711, %v2712, %v2708
    %v2714 = vadd.s32 %v2709, %v2713
    %v2715 = vadd.s32 %v2714, 536870912
    %v2716 = vshrl.u32 %v2715, 30
    %v2717 = vshll.u32 %v2716, 30
    %v2718 = vsub.s32 %v2714, %v2717
    %vm2719 = vcmp.lt.s32.totalorder %v2718, 0
    %v2720 = vsub.s32 0, %v2718
    %v2721 = vsel %vm2719, %v2720, %v2718
    %v2722 = vclz %v2721
    %v2723 = vsub.s32 %v2722, 2
    %vm2724 = vcmp.gt.s32.totalorder 0, %v2723
    %v2725 = vsel %vm2724, 0, %v2723
    %v2726 = vsub.s32 32, %v2725
    %v2727 = vshll.u32 %v2718, %v2725
    %v2728 = vshrl.u32 %v2710, %v2726
    %v2729 = vor.u32 %v2727, %v2728
    %v2730 = vsub.s32 4294967266, %v2725
    %v2731 = vadd.s32 %v2730, 127
    %v2732 = vshll.u32 %v2731, 23
    %v2733 = vor.u32 4788187, %v2732
    %v2734 = vand.u32 2147483647, %v2733
    %v2736 = vcvt.s32.f32 %v2729
    %v2737 = vmul.f32 %v2736, %v2734
    %v2738 = vxor.u32 %v2737, 2147483648
    %v2739 = vsel %vm2656, %v2738, %v2737
    %v2740 = vsub.s32 4, %v2716
    %v2741 = vsel %vm2656, %v2740, %v2716
    %v2742 = vsel %vm2655, %v882, %v2739
    %v2743 = vsel %vm2655, 0, %v2741
    %v2744 = vcosq.f32.pop %v2742
    %v2745 = vsinq.f32.pop %v2742
    %vm2746 = vweird.f32 %v882
    %v2747 = vand.u32 %v2743, 3
    %vm2748 = vcmp.lt.s32.totalorder %v2747, 2
    %vm2749 = vcmp.eq.s32.totalorder %v2747, 0
    %v2750 = vxor.u32 %v2745, 2147483648
    %v2751 = vsel %vm2749, %v2744, %v2750
    %vm2752 = vcmp.eq.s32.totalorder %v2747, 2
    %v2753 = vxor.u32 %v2744, 2147483648
    %v2754 = vsel %vm2752, %v2753, %v2745
    %v2755 = vsel %vm2748, %v2751, %v2754
    %v2756 = vsel %vm2746, nan, %v2755
    %v2757 = vand.u32 2147483647, %v883
    %vm2758 = vcmp.le.f32.partialorder %v2757, 0.7853982
    %vm2759 = vcmp.lt.s32.totalorder %v883, 0
    %v2760 = vand.u32 %v883, 2139095040
    %v2761 = vshrl.u32 %v2760, 23
    %v2762 = vsub.s32 %v2761, 127
    %v2763 = vand.u32 2147483647, %v883
    %v2764 = vand.u32 %v2763, 8388607
    %v2765 = vor.u32 %v2764, 8388608
    %v2766 = vsub.s32 0, %v2765
    %v2767 = vadd.s32 %v2762, 1
    %vm2768 = vcmp.gt.s32.totalorder %v2767, 0
    %v2769 = vsel %vm2768, %v2767, 0
    %v2770 = vshrl.u32 %v2769, 5
    %v2771 = vand.u32 %v2769, 31
    %v2772 = vsub.s32 32, %v2771
    %v2773 = vshrl.u32 683565275, %v2772
    %v2774 = vshll.u32 683565275, %v2771
    %v2775 = vshrl.u32 2475754826, %v2772
    %v2776 = vor.u32 %v2774, %v2775
    %v2777 = vshll.u32 2475754826, %v2771
    %v2778 = vshrl.u32 2131351028, %v2772
    %v2779 = vor.u32 %v2777, %v2778
    %v2780 = vshll.u32 2131351028, %v2771
    %v2781 = vshrl.u32 2102212464, %v2772
    %v2782 = vor.u32 %v2780, %v2781
    %v2783 = vshll.u32 2102212464, %v2771
    %v2784 = vshrl.u32 920167782, %v2772
    %v2785 = vor.u32 %v2783, %v2784
    %v2786 = vshll.u32 920167782, %v2771
    %v2787 = vshrl.u32 1326507024, %v2772
    %v2788 = vor.u32 %v2786, %v2787
    %vm2789 = vcmp.lt.s32.totalorder %v2770, 1
    %vm2790 = vcmp.lt.s32.totalorder %v2770, 2
    %vm2791 = vcmp.lt.s32.totalorder %v2770, 3
    %vm2792 = vcmp.lt.s32.totalorder %v2770, 4
    %v2793 = vsel %vm2789, %v2773, %v2776
    %v2794 = vsel %vm2792, %v2782, 2102212464
    %v2795 = vsel %vm2791, %v2779, %v2794
    %v2796 = vsel %vm2790, %v2793, %v2795
    %v2797 = vsel %vm2789, %v2776, %v2779
    %v2798 = vsel %vm2792, %v2785, 920167782
    %v2799 = vsel %vm2791, %v2782, %v2798
    %v2800 = vsel %vm2790, %v2797, %v2799
    %v2801 = vsel %vm2789, %v2779, %v2782
    %v2802 = vsel %vm2792, %v2788, 1326507024
    %v2803 = vsel %vm2791, %v2785, %v2802
    %v2804 = vsel %vm2790, %v2801, %v2803
    %v2805 = vshll.u32 %v2765, 8
    %v2806 = vmul.u32.u64.compose %v2805, %v2804
    %v2807 = vextract.low.u32 %v2806
    %v2808 = vextract.high.u32 %v2806
    %v2809 = vmul.u32.u64.compose %v2805, %v2800
    %v2810 = vextract.low.u32 %v2809
    %v2811 = vextract.high.u32 %v2809
    %v2812 = vmul.u32 %v2805, %v2796
    %v2813 = vadd.s32 %v2808, %v2810
    %vm2814 = vc.u32 %v2808, %v2810
    %v2815 = vadd.s32 %v2811, 1
    %v2816 = vsel %vm2814, %v2815, %v2811
    %v2817 = vadd.s32 %v2812, %v2816
    %v2818 = vadd.s32 %v2817, 536870912
    %v2819 = vshrl.u32 %v2818, 30
    %v2820 = vshll.u32 %v2819, 30
    %v2821 = vsub.s32 %v2817, %v2820
    %vm2822 = vcmp.lt.s32.totalorder %v2821, 0
    %v2823 = vsub.s32 0, %v2821
    %v2824 = vsel %vm2822, %v2823, %v2821
    %v2825 = vclz %v2824
    %v2826 = vsub.s32 %v2825, 2
    %vm2827 = vcmp.gt.s32.totalorder 0, %v2826
    %v2828 = vsel %vm2827, 0, %v2826
    %v2829 = vsub.s32 32, %v2828
    %v2830 = vshll.u32 %v2821, %v2828
    %v2831 = vshrl.u32 %v2813, %v2829
    %v2832 = vor.u32 %v2830, %v2831
    %v2833 = vsub.s32 4294967266, %v2828
    %v2834 = vadd.s32 %v2833, 127
    %v2835 = vshll.u32 %v2834, 23
    %v2836 = vor.u32 4788187, %v2835
    %v2837 = vand.u32 2147483647, %v2836
    %v2839 = vcvt.s32.f32 %v2832
    %v2840 = vmul.f32 %v2839, %v2837
    %v2841 = vxor.u32 %v2840, 2147483648
    %v2842 = vsel %vm2759, %v2841, %v2840
    %v2843 = vsub.s32 4, %v2819
    %v2844 = vsel %vm2759, %v2843, %v2819
    %v2845 = vsel %vm2758, %v883, %v2842
    %v2846 = vsel %vm2758, 0, %v2844
    %v2847 = vcosq.f32.pop %v2845
    %v2848 = vsinq.f32.pop %v2845
    %vm2849 = vweird.f32 %v883
    %v2850 = vand.u32 %v2846, 3
    %vm2851 = vcmp.lt.s32.totalorder %v2850, 2
    %vm2852 = vcmp.eq.s32.totalorder %v2850, 0
    %v2853 = vxor.u32 %v2848, 2147483648
    %v2854 = vsel %vm2852, %v2847, %v2853
    %vm2855 = vcmp.eq.s32.totalorder %v2850, 2
    %v2856 = vxor.u32 %v2847, 2147483648
    %v2857 = vsel %vm2855, %v2856, %v2848
    %v2858 = vsel %vm2851, %v2854, %v2857
    %v2859 = vsel %vm2849, nan, %v2858
    %v2860 = vand.u32 2147483647, %v884
    %vm2861 = vcmp.le.f32.partialorder %v2860, 0.7853982
    %vm2862 = vcmp.lt.s32.totalorder %v884, 0
    %v2863 = vand.u32 %v884, 2139095040
    %v2864 = vshrl.u32 %v2863, 23
    %v2865 = vsub.s32 %v2864, 127
    %v2866 = vand.u32 2147483647, %v884
    %v2867 = vand.u32 %v2866, 8388607
    %v2868 = vor.u32 %v2867, 8388608
    %v2869 = vsub.s32 0, %v2868
    %v2870 = vadd.s32 %v2865, 1
    %vm2871 = vcmp.gt.s32.totalorder %v2870, 0
    %v2872 = vsel %vm2871, %v2870, 0
    %v2873 = vshrl.u32 %v2872, 5
    %v2874 = vand.u32 %v2872, 31
    %v2875 = vsub.s32 32, %v2874
    %v2876 = vshrl.u32 683565275, %v2875
    %v2877 = vshll.u32 683565275, %v2874
    %v2878 = vshrl.u32 2475754826, %v2875
    %v2879 = vor.u32 %v2877, %v2878
    %v2880 = vshll.u32 2475754826, %v2874
    %v2881 = vshrl.u32 2131351028, %v2875
    %v2882 = vor.u32 %v2880, %v2881
    %v2883 = vshll.u32 2131351028, %v2874
    %v2884 = vshrl.u32 2102212464, %v2875
    %v2885 = vor.u32 %v2883, %v2884
    %v2886 = vshll.u32 2102212464, %v2874
    %v2887 = vshrl.u32 920167782, %v2875
    %v2888 = vor.u32 %v2886, %v2887
    %v2889 = vshll.u32 920167782, %v2874
    %v2890 = vshrl.u32 1326507024, %v2875
    %v2891 = vor.u32 %v2889, %v2890
    %vm2892 = vcmp.lt.s32.totalorder %v2873, 1
    %vm2893 = vcmp.lt.s32.totalorder %v2873, 2
    %vm2894 = vcmp.lt.s32.totalorder %v2873, 3
    %vm2895 = vcmp.lt.s32.totalorder %v2873, 4
    %v2896 = vsel %vm2892, %v2876, %v2879
    %v2897 = vsel %vm2895, %v2885, 2102212464
    %v2898 = vsel %vm2894, %v2882, %v2897
    %v2899 = vsel %vm2893, %v2896, %v2898
    %v2900 = vsel %vm2892, %v2879, %v2882
    %v2901 = vsel %vm2895, %v2888, 920167782
    %v2902 = vsel %vm2894, %v2885, %v2901
    %v2903 = vsel %vm2893, %v2900, %v2902
    %v2904 = vsel %vm2892, %v2882, %v2885
    %v2905 = vsel %vm2895, %v2891, 1326507024
    %v2906 = vsel %vm2894, %v2888, %v2905
    %v2907 = vsel %vm2893, %v2904, %v2906
    %v2908 = vshll.u32 %v2868, 8
    %v2909 = vmul.u32.u64.compose %v2908, %v2907
    %v2910 = vextract.low.u32 %v2909
    %v2911 = vextract.high.u32 %v2909
    %v2912 = vmul.u32.u64.compose %v2908, %v2903
    %v2913 = vextract.low.u32 %v2912
    %v2914 = vextract.high.u32 %v2912
    %v2915 = vmul.u32 %v2908, %v2899
    %v2916 = vadd.s32 %v2911, %v2913
    %vm2917 = vc.u32 %v2911, %v2913
    %v2918 = vadd.s32 %v2914, 1
    %v2919 = vsel %vm2917, %v2918, %v2914
    %v2920 = vadd.s32 %v2915, %v2919
    %v2921 = vadd.s32 %v2920, 536870912
    %v2922 = vshrl.u32 %v2921, 30
    %v2923 = vshll.u32 %v2922, 30
    %v2924 = vsub.s32 %v2920, %v2923
    %vm2925 = vcmp.lt.s32.totalorder %v2924, 0
    %v2926 = vsub.s32 0, %v2924
    %v2927 = vsel %vm2925, %v2926, %v2924
    %v2928 = vclz %v2927
    %v2929 = vsub.s32 %v2928, 2
    %vm2930 = vcmp.gt.s32.totalorder 0, %v2929
    %v2931 = vsel %vm2930, 0, %v2929
    %v2932 = vsub.s32 32, %v2931
    %v2933 = vshll.u32 %v2924, %v2931
    %v2934 = vshrl.u32 %v2916, %v2932
    %v2935 = vor.u32 %v2933, %v2934
    %v2936 = vsub.s32 4294967266, %v2931
    %v2937 = vadd.s32 %v2936, 127
    %v2938 = vshll.u32 %v2937, 23
    %v2939 = vor.u32 4788187, %v2938
    %v2940 = vand.u32 2147483647, %v2939
    %v2942 = vcvt.s32.f32 %v2935
    %v2943 = vmul.f32 %v2942, %v2940
    %v2944 = vxor.u32 %v2943, 2147483648
    %v2945 = vsel %vm2862, %v2944, %v2943
    %v2946 = vsub.s32 4, %v2922
    %v2947 = vsel %vm2862, %v2946, %v2922
    %v2948 = vsel %vm2861, %v884, %v2945
    %v2949 = vsel %vm2861, 0, %v2947
    %v2950 = vcosq.f32.pop %v2948
    %v2951 = vsinq.f32.pop %v2948
    %vm2952 = vweird.f32 %v884
    %v2953 = vand.u32 %v2949, 3
    %vm2954 = vcmp.lt.s32.totalorder %v2953, 2
    %vm2955 = vcmp.eq.s32.totalorder %v2953, 0
    %v2956 = vxor.u32 %v2951, 2147483648
    %v2957 = vsel %vm2955, %v2950, %v2956
    %vm2958 = vcmp.eq.s32.totalorder %v2953, 2
    %v2959 = vxor.u32 %v2950, 2147483648
    %v2960 = vsel %vm2958, %v2959, %v2951
    %v2961 = vsel %vm2954, %v2957, %v2960
    %v2962 = vsel %vm2952, nan, %v2961
    %v2971 = vrot.slane %v2241, 7
    %v2972 = vrot.slane %v2344, 7
    %v2973 = vrot.slane %v2447, 7
    %v2974 = vrot.slane %v2550, 7
    %v2975 = vrot.slane %v2653, 7
    %v2976 = vrot.slane %v2756, 7
    %v2977 = vrot.slane %v2859, 7
    %v2978 = vrot.slane %v2962, 7
    %2987 = vst [vmem:[#allocation2 + $0x40] sm:$0xe] %v2971
    %2988 = vst [vmem:[#allocation2 + $0x48] sm:$0xe] %v2972
    %2989 = vst [vmem:[#allocation2 + $0x50] sm:$0xe] %v2973
    %2990 = vst [vmem:[#allocation2 + $0x58] sm:$0xe] %v2974
    %2991 = vst [vmem:[#allocation2 + $0x60] sm:$0xe] %v2975
    %2992 = vst [vmem:[#allocation2 + $0x68] sm:$0xe] %v2976
    %2993 = vst [vmem:[#allocation2 + $0x70] sm:$0xe] %v2977
    %2994 = vst [vmem:[#allocation2 + $0x78] sm:$0xe] %v2978
    %v2995 = vmul.f32 %v877, 2.0
    %v2996 = vmul.f32 %v878, 2.0
    %v2997 = vmul.f32 %v879, 2.0
    %v2998 = vmul.f32 %v880, 2.0
    %v2999 = vmul.f32 %v881, 2.0
    %v3000 = vmul.f32 %v882, 2.0
    %v3001 = vmul.f32 %v883, 2.0
    %v3002 = vmul.f32 %v884, 2.0
    %v3003 = vand.u32 2147483647, %v2995
    %vm3004 = vcmp.le.f32.partialorder %v3003, 0.7853982
    %vm3005 = vcmp.lt.s32.totalorder %v2995, 0
    %v3006 = vand.u32 %v2995, 2139095040
    %v3007 = vshrl.u32 %v3006, 23
    %v3008 = vsub.s32 %v3007, 127
    %v3009 = vand.u32 2147483647, %v2995
    %v3010 = vand.u32 %v3009, 8388607
    %v3011 = vor.u32 %v3010, 8388608
    %v3012 = vsub.s32 0, %v3011
    %v3013 = vadd.s32 %v3008, 1
    %vm3014 = vcmp.gt.s32.totalorder %v3013, 0
    %v3015 = vsel %vm3014, %v3013, 0
    %v3016 = vshrl.u32 %v3015, 5
    %v3017 = vand.u32 %v3015, 31
    %v3018 = vsub.s32 32, %v3017
    %v3019 = vshrl.u32 683565275, %v3018
    %v3020 = vshll.u32 683565275, %v3017
    %v3021 = vshrl.u32 2475754826, %v3018
    %v3022 = vor.u32 %v3020, %v3021
    %v3023 = vshll.u32 2475754826, %v3017
    %v3024 = vshrl.u32 2131351028, %v3018
    %v3025 = vor.u32 %v3023, %v3024
    %v3026 = vshll.u32 2131351028, %v3017
    %v3027 = vshrl.u32 2102212464, %v3018
    %v3028 = vor.u32 %v3026, %v3027
    %v3029 = vshll.u32 2102212464, %v3017
    %v3030 = vshrl.u32 920167782, %v3018
    %v3031 = vor.u32 %v3029, %v3030
    %v3032 = vshll.u32 920167782, %v3017
    %v3033 = vshrl.u32 1326507024, %v3018
    %v3034 = vor.u32 %v3032, %v3033
    %vm3035 = vcmp.lt.s32.totalorder %v3016, 1
    %vm3036 = vcmp.lt.s32.totalorder %v3016, 2
    %vm3037 = vcmp.lt.s32.totalorder %v3016, 3
    %vm3038 = vcmp.lt.s32.totalorder %v3016, 4
    %v3039 = vsel %vm3035, %v3019, %v3022
    %v3040 = vsel %vm3038, %v3028, 2102212464
    %v3041 = vsel %vm3037, %v3025, %v3040
    %v3042 = vsel %vm3036, %v3039, %v3041
    %v3043 = vsel %vm3035, %v3022, %v3025
    %v3044 = vsel %vm3038, %v3031, 920167782
    %v3045 = vsel %vm3037, %v3028, %v3044
    %v3046 = vsel %vm3036, %v3043, %v3045
    %v3047 = vsel %vm3035, %v3025, %v3028
    %v3048 = vsel %vm3038, %v3034, 1326507024
    %v3049 = vsel %vm3037, %v3031, %v3048
    %v3050 = vsel %vm3036, %v3047, %v3049
    %v3051 = vshll.u32 %v3011, 8
    %v3052 = vmul.u32.u64.compose %v3051, %v3050
    %v3053 = vextract.low.u32 %v3052
    %v3054 = vextract.high.u32 %v3052
    %v3055 = vmul.u32.u64.compose %v3051, %v3046
    %v3056 = vextract.low.u32 %v3055
    %v3057 = vextract.high.u32 %v3055
    %v3058 = vmul.u32 %v3051, %v3042
    %v3059 = vadd.s32 %v3054, %v3056
    %vm3060 = vc.u32 %v3054, %v3056
    %v3061 = vadd.s32 %v3057, 1
    %v3062 = vsel %vm3060, %v3061, %v3057
    %v3063 = vadd.s32 %v3058, %v3062
    %v3064 = vadd.s32 %v3063, 536870912
    %v3065 = vshrl.u32 %v3064, 30
    %v3066 = vshll.u32 %v3065, 30
    %v3067 = vsub.s32 %v3063, %v3066
    %vm3068 = vcmp.lt.s32.totalorder %v3067, 0
    %v3069 = vsub.s32 0, %v3067
    %v3070 = vsel %vm3068, %v3069, %v3067
    %v3071 = vclz %v3070
    %v3072 = vsub.s32 %v3071, 2
    %vm3073 = vcmp.gt.s32.totalorder 0, %v3072
    %v3074 = vsel %vm3073, 0, %v3072
    %v3075 = vsub.s32 32, %v3074
    %v3076 = vshll.u32 %v3067, %v3074
    %v3077 = vshrl.u32 %v3059, %v3075
    %v3078 = vor.u32 %v3076, %v3077
    %v3079 = vsub.s32 4294967266, %v3074
    %v3080 = vadd.s32 %v3079, 127
    %v3081 = vshll.u32 %v3080, 23
    %v3082 = vor.u32 4788187, %v3081
    %v3083 = vand.u32 2147483647, %v3082
    %v3085 = vcvt.s32.f32 %v3078
    %v3086 = vmul.f32 %v3085, %v3083
    %v3087 = vxor.u32 %v3086, 2147483648
    %v3088 = vsel %vm3005, %v3087, %v3086
    %v3089 = vsub.s32 4, %v3065
    %v3090 = vsel %vm3005, %v3089, %v3065
    %v3091 = vsel %vm3004, %v2995, %v3088
    %v3092 = vsel %vm3004, 0, %v3090
    %v3093 = vcosq.f32.pop %v3091
    %v3094 = vsinq.f32.pop %v3091
    %vm3095 = vweird.f32 %v2995
    %v3096 = vadd.s32 %v3092, 3
    %v3097 = vand.u32 %v3096, 3
    %vm3098 = vcmp.lt.s32.totalorder %v3097, 2
    %vm3099 = vcmp.eq.s32.totalorder %v3097, 0
    %v3100 = vxor.u32 %v3094, 2147483648
    %v3101 = vsel %vm3099, %v3093, %v3100
    %vm3102 = vcmp.eq.s32.totalorder %v3097, 2
    %v3103 = vxor.u32 %v3093, 2147483648
    %v3104 = vsel %vm3102, %v3103, %v3094
    %v3105 = vsel %vm3098, %v3101, %v3104
    %v3106 = vsel %vm3095, nan, %v3105
    %v3107 = vand.u32 2147483647, %v2996
    %vm3108 = vcmp.le.f32.partialorder %v3107, 0.7853982
    %vm3109 = vcmp.lt.s32.totalorder %v2996, 0
    %v3110 = vand.u32 %v2996, 2139095040
    %v3111 = vshrl.u32 %v3110, 23
    %v3112 = vsub.s32 %v3111, 127
    %v3113 = vand.u32 2147483647, %v2996
    %v3114 = vand.u32 %v3113, 8388607
    %v3115 = vor.u32 %v3114, 8388608
    %v3116 = vsub.s32 0, %v3115
    %v3117 = vadd.s32 %v3112, 1
    %vm3118 = vcmp.gt.s32.totalorder %v3117, 0
    %v3119 = vsel %vm3118, %v3117, 0
    %v3120 = vshrl.u32 %v3119, 5
    %v3121 = vand.u32 %v3119, 31
    %v3122 = vsub.s32 32, %v3121
    %v3123 = vshrl.u32 683565275, %v3122
    %v3124 = vshll.u32 683565275, %v3121
    %v3125 = vshrl.u32 2475754826, %v3122
    %v3126 = vor.u32 %v3124, %v3125
    %v3127 = vshll.u32 2475754826, %v3121
    %v3128 = vshrl.u32 2131351028, %v3122
    %v3129 = vor.u32 %v3127, %v3128
    %v3130 = vshll.u32 2131351028, %v3121
    %v3131 = vshrl.u32 2102212464, %v3122
    %v3132 = vor.u32 %v3130, %v3131
    %v3133 = vshll.u32 2102212464, %v3121
    %v3134 = vshrl.u32 920167782, %v3122
    %v3135 = vor.u32 %v3133, %v3134
    %v3136 = vshll.u32 920167782, %v3121
    %v3137 = vshrl.u32 1326507024, %v3122
    %v3138 = vor.u32 %v3136, %v3137
    %vm3139 = vcmp.lt.s32.totalorder %v3120, 1
    %vm3140 = vcmp.lt.s32.totalorder %v3120, 2
    %vm3141 = vcmp.lt.s32.totalorder %v3120, 3
    %vm3142 = vcmp.lt.s32.totalorder %v3120, 4
    %v3143 = vsel %vm3139, %v3123, %v3126
    %v3144 = vsel %vm3142, %v3132, 2102212464
    %v3145 = vsel %vm3141, %v3129, %v3144
    %v3146 = vsel %vm3140, %v3143, %v3145
    %v3147 = vsel %vm3139, %v3126, %v3129
    %v3148 = vsel %vm3142, %v3135, 920167782
    %v3149 = vsel %vm3141, %v3132, %v3148
    %v3150 = vsel %vm3140, %v3147, %v3149
    %v3151 = vsel %vm3139, %v3129, %v3132
    %v3152 = vsel %vm3142, %v3138, 1326507024
    %v3153 = vsel %vm3141, %v3135, %v3152
    %v3154 = vsel %vm3140, %v3151, %v3153
    %v3155 = vshll.u32 %v3115, 8
    %v3156 = vmul.u32.u64.compose %v3155, %v3154
    %v3157 = vextract.low.u32 %v3156
    %v3158 = vextract.high.u32 %v3156
    %v3159 = vmul.u32.u64.compose %v3155, %v3150
    %v3160 = vextract.low.u32 %v3159
    %v3161 = vextract.high.u32 %v3159
    %v3162 = vmul.u32 %v3155, %v3146
    %v3163 = vadd.s32 %v3158, %v3160
    %vm3164 = vc.u32 %v3158, %v3160
    %v3165 = vadd.s32 %v3161, 1
    %v3166 = vsel %vm3164, %v3165, %v3161
    %v3167 = vadd.s32 %v3162, %v3166
    %v3168 = vadd.s32 %v3167, 536870912
    %v3169 = vshrl.u32 %v3168, 30
    %v3170 = vshll.u32 %v3169, 30
    %v3171 = vsub.s32 %v3167, %v3170
    %vm3172 = vcmp.lt.s32.totalorder %v3171, 0
    %v3173 = vsub.s32 0, %v3171
    %v3174 = vsel %vm3172, %v3173, %v3171
    %v3175 = vclz %v3174
    %v3176 = vsub.s32 %v3175, 2
    %vm3177 = vcmp.gt.s32.totalorder 0, %v3176
    %v3178 = vsel %vm3177, 0, %v3176
    %v3179 = vsub.s32 32, %v3178
    %v3180 = vshll.u32 %v3171, %v3178
    %v3181 = vshrl.u32 %v3163, %v3179
    %v3182 = vor.u32 %v3180, %v3181
    %v3183 = vsub.s32 4294967266, %v3178
    %v3184 = vadd.s32 %v3183, 127
    %v3185 = vshll.u32 %v3184, 23
    %v3186 = vor.u32 4788187, %v3185
    %v3187 = vand.u32 2147483647, %v3186
    %v3189 = vcvt.s32.f32 %v3182
    %v3190 = vmul.f32 %v3189, %v3187
    %v3191 = vxor.u32 %v3190, 2147483648
    %v3192 = vsel %vm3109, %v3191, %v3190
    %v3193 = vsub.s32 4, %v3169
    %v3194 = vsel %vm3109, %v3193, %v3169
    %v3195 = vsel %vm3108, %v2996, %v3192
    %v3196 = vsel %vm3108, 0, %v3194
    %v3197 = vcosq.f32.pop %v3195
    %v3198 = vsinq.f32.pop %v3195
    %vm3199 = vweird.f32 %v2996
    %v3200 = vadd.s32 %v3196, 3
    %v3201 = vand.u32 %v3200, 3
    %vm3202 = vcmp.lt.s32.totalorder %v3201, 2
    %vm3203 = vcmp.eq.s32.totalorder %v3201, 0
    %v3204 = vxor.u32 %v3198, 2147483648
    %v3205 = vsel %vm3203, %v3197, %v3204
    %vm3206 = vcmp.eq.s32.totalorder %v3201, 2
    %v3207 = vxor.u32 %v3197, 2147483648
    %v3208 = vsel %vm3206, %v3207, %v3198
    %v3209 = vsel %vm3202, %v3205, %v3208
    %v3210 = vsel %vm3199, nan, %v3209
    %v3211 = vand.u32 2147483647, %v2997
    %vm3212 = vcmp.le.f32.partialorder %v3211, 0.7853982
    %vm3213 = vcmp.lt.s32.totalorder %v2997, 0
    %v3214 = vand.u32 %v2997, 2139095040
    %v3215 = vshrl.u32 %v3214, 23
    %v3216 = vsub.s32 %v3215, 127
    %v3217 = vand.u32 2147483647, %v2997
    %v3218 = vand.u32 %v3217, 8388607
    %v3219 = vor.u32 %v3218, 8388608
    %v3220 = vsub.s32 0, %v3219
    %v3221 = vadd.s32 %v3216, 1
    %vm3222 = vcmp.gt.s32.totalorder %v3221, 0
    %v3223 = vsel %vm3222, %v3221, 0
    %v3224 = vshrl.u32 %v3223, 5
    %v3225 = vand.u32 %v3223, 31
    %v3226 = vsub.s32 32, %v3225
    %v3227 = vshrl.u32 683565275, %v3226
    %v3228 = vshll.u32 683565275, %v3225
    %v3229 = vshrl.u32 2475754826, %v3226
    %v3230 = vor.u32 %v3228, %v3229
    %v3231 = vshll.u32 2475754826, %v3225
    %v3232 = vshrl.u32 2131351028, %v3226
    %v3233 = vor.u32 %v3231, %v3232
    %v3234 = vshll.u32 2131351028, %v3225
    %v3235 = vshrl.u32 2102212464, %v3226
    %v3236 = vor.u32 %v3234, %v3235
    %v3237 = vshll.u32 2102212464, %v3225
    %v3238 = vshrl.u32 920167782, %v3226
    %v3239 = vor.u32 %v3237, %v3238
    %v3240 = vshll.u32 920167782, %v3225
    %v3241 = vshrl.u32 1326507024, %v3226
    %v3242 = vor.u32 %v3240, %v3241
    %vm3243 = vcmp.lt.s32.totalorder %v3224, 1
    %vm3244 = vcmp.lt.s32.totalorder %v3224, 2
    %vm3245 = vcmp.lt.s32.totalorder %v3224, 3
    %vm3246 = vcmp.lt.s32.totalorder %v3224, 4
    %v3247 = vsel %vm3243, %v3227, %v3230
    %v3248 = vsel %vm3246, %v3236, 2102212464
    %v3249 = vsel %vm3245, %v3233, %v3248
    %v3250 = vsel %vm3244, %v3247, %v3249
    %v3251 = vsel %vm3243, %v3230, %v3233
    %v3252 = vsel %vm3246, %v3239, 920167782
    %v3253 = vsel %vm3245, %v3236, %v3252
    %v3254 = vsel %vm3244, %v3251, %v3253
    %v3255 = vsel %vm3243, %v3233, %v3236
    %v3256 = vsel %vm3246, %v3242, 1326507024
    %v3257 = vsel %vm3245, %v3239, %v3256
    %v3258 = vsel %vm3244, %v3255, %v3257
    %v3259 = vshll.u32 %v3219, 8
    %v3260 = vmul.u32.u64.compose %v3259, %v3258
    %v3261 = vextract.low.u32 %v3260
    %v3262 = vextract.high.u32 %v3260
    %v3263 = vmul.u32.u64.compose %v3259, %v3254
    %v3264 = vextract.low.u32 %v3263
    %v3265 = vextract.high.u32 %v3263
    %v3266 = vmul.u32 %v3259, %v3250
    %v3267 = vadd.s32 %v3262, %v3264
    %vm3268 = vc.u32 %v3262, %v3264
    %v3269 = vadd.s32 %v3265, 1
    %v3270 = vsel %vm3268, %v3269, %v3265
    %v3271 = vadd.s32 %v3266, %v3270
    %v3272 = vadd.s32 %v3271, 536870912
    %v3273 = vshrl.u32 %v3272, 30
    %v3274 = vshll.u32 %v3273, 30
    %v3275 = vsub.s32 %v3271, %v3274
    %vm3276 = vcmp.lt.s32.totalorder %v3275, 0
    %v3277 = vsub.s32 0, %v3275
    %v3278 = vsel %vm3276, %v3277, %v3275
    %v3279 = vclz %v3278
    %v3280 = vsub.s32 %v3279, 2
    %vm3281 = vcmp.gt.s32.totalorder 0, %v3280
    %v3282 = vsel %vm3281, 0, %v3280
    %v3283 = vsub.s32 32, %v3282
    %v3284 = vshll.u32 %v3275, %v3282
    %v3285 = vshrl.u32 %v3267, %v3283
    %v3286 = vor.u32 %v3284, %v3285
    %v3287 = vsub.s32 4294967266, %v3282
    %v3288 = vadd.s32 %v3287, 127
    %v3289 = vshll.u32 %v3288, 23
    %v3290 = vor.u32 4788187, %v3289
    %v3291 = vand.u32 2147483647, %v3290
    %v3293 = vcvt.s32.f32 %v3286
    %v3294 = vmul.f32 %v3293, %v3291
    %v3295 = vxor.u32 %v3294, 2147483648
    %v3296 = vsel %vm3213, %v3295, %v3294
    %v3297 = vsub.s32 4, %v3273
    %v3298 = vsel %vm3213, %v3297, %v3273
    %v3299 = vsel %vm3212, %v2997, %v3296
    %v3300 = vsel %vm3212, 0, %v3298
    %v3301 = vcosq.f32.pop %v3299
    %v3302 = vsinq.f32.pop %v3299
    %vm3303 = vweird.f32 %v2997
    %v3304 = vadd.s32 %v3300, 3
    %v3305 = vand.u32 %v3304, 3
    %vm3306 = vcmp.lt.s32.totalorder %v3305, 2
    %vm3307 = vcmp.eq.s32.totalorder %v3305, 0
    %v3308 = vxor.u32 %v3302, 2147483648
    %v3309 = vsel %vm3307, %v3301, %v3308
    %vm3310 = vcmp.eq.s32.totalorder %v3305, 2
    %v3311 = vxor.u32 %v3301, 2147483648
    %v3312 = vsel %vm3310, %v3311, %v3302
    %v3313 = vsel %vm3306, %v3309, %v3312
    %v3314 = vsel %vm3303, nan, %v3313
    %v3315 = vand.u32 2147483647, %v2998
    %vm3316 = vcmp.le.f32.partialorder %v3315, 0.7853982
    %vm3317 = vcmp.lt.s32.totalorder %v2998, 0
    %v3318 = vand.u32 %v2998, 2139095040
    %v3319 = vshrl.u32 %v3318, 23
    %v3320 = vsub.s32 %v3319, 127
    %v3321 = vand.u32 2147483647, %v2998
    %v3322 = vand.u32 %v3321, 8388607
    %v3323 = vor.u32 %v3322, 8388608
    %v3324 = vsub.s32 0, %v3323
    %v3325 = vadd.s32 %v3320, 1
    %vm3326 = vcmp.gt.s32.totalorder %v3325, 0
    %v3327 = vsel %vm3326, %v3325, 0
    %v3328 = vshrl.u32 %v3327, 5
    %v3329 = vand.u32 %v3327, 31
    %v3330 = vsub.s32 32, %v3329
    %v3331 = vshrl.u32 683565275, %v3330
    %v3332 = vshll.u32 683565275, %v3329
    %v3333 = vshrl.u32 2475754826, %v3330
    %v3334 = vor.u32 %v3332, %v3333
    %v3335 = vshll.u32 2475754826, %v3329
    %v3336 = vshrl.u32 2131351028, %v3330
    %v3337 = vor.u32 %v3335, %v3336
    %v3338 = vshll.u32 2131351028, %v3329
    %v3339 = vshrl.u32 2102212464, %v3330
    %v3340 = vor.u32 %v3338, %v3339
    %v3341 = vshll.u32 2102212464, %v3329
    %v3342 = vshrl.u32 920167782, %v3330
    %v3343 = vor.u32 %v3341, %v3342
    %v3344 = vshll.u32 920167782, %v3329
    %v3345 = vshrl.u32 1326507024, %v3330
    %v3346 = vor.u32 %v3344, %v3345
    %vm3347 = vcmp.lt.s32.totalorder %v3328, 1
    %vm3348 = vcmp.lt.s32.totalorder %v3328, 2
    %vm3349 = vcmp.lt.s32.totalorder %v3328, 3
    %vm3350 = vcmp.lt.s32.totalorder %v3328, 4
    %v3351 = vsel %vm3347, %v3331, %v3334
    %v3352 = vsel %vm3350, %v3340, 2102212464
    %v3353 = vsel %vm3349, %v3337, %v3352
    %v3354 = vsel %vm3348, %v3351, %v3353
    %v3355 = vsel %vm3347, %v3334, %v3337
    %v3356 = vsel %vm3350, %v3343, 920167782
    %v3357 = vsel %vm3349, %v3340, %v3356
    %v3358 = vsel %vm3348, %v3355, %v3357
    %v3359 = vsel %vm3347, %v3337, %v3340
    %v3360 = vsel %vm3350, %v3346, 1326507024
    %v3361 = vsel %vm3349, %v3343, %v3360
    %v3362 = vsel %vm3348, %v3359, %v3361
    %v3363 = vshll.u32 %v3323, 8
    %v3364 = vmul.u32.u64.compose %v3363, %v3362
    %v3365 = vextract.low.u32 %v3364
    %v3366 = vextract.high.u32 %v3364
    %v3367 = vmul.u32.u64.compose %v3363, %v3358
    %v3368 = vextract.low.u32 %v3367
    %v3369 = vextract.high.u32 %v3367
    %v3370 = vmul.u32 %v3363, %v3354
    %v3371 = vadd.s32 %v3366, %v3368
    %vm3372 = vc.u32 %v3366, %v3368
    %v3373 = vadd.s32 %v3369, 1
    %v3374 = vsel %vm3372, %v3373, %v3369
    %v3375 = vadd.s32 %v3370, %v3374
    %v3376 = vadd.s32 %v3375, 536870912
    %v3377 = vshrl.u32 %v3376, 30
    %v3378 = vshll.u32 %v3377, 30
    %v3379 = vsub.s32 %v3375, %v3378
    %vm3380 = vcmp.lt.s32.totalorder %v3379, 0
    %v3381 = vsub.s32 0, %v3379
    %v3382 = vsel %vm3380, %v3381, %v3379
    %v3383 = vclz %v3382
    %v3384 = vsub.s32 %v3383, 2
    %vm3385 = vcmp.gt.s32.totalorder 0, %v3384
    %v3386 = vsel %vm3385, 0, %v3384
    %v3387 = vsub.s32 32, %v3386
    %v3388 = vshll.u32 %v3379, %v3386
    %v3389 = vshrl.u32 %v3371, %v3387
    %v3390 = vor.u32 %v3388, %v3389
    %v3391 = vsub.s32 4294967266, %v3386
    %v3392 = vadd.s32 %v3391, 127
    %v3393 = vshll.u32 %v3392, 23
    %v3394 = vor.u32 4788187, %v3393
    %v3395 = vand.u32 2147483647, %v3394
    %v3397 = vcvt.s32.f32 %v3390
    %v3398 = vmul.f32 %v3397, %v3395
    %v3399 = vxor.u32 %v3398, 2147483648
    %v3400 = vsel %vm3317, %v3399, %v3398
    %v3401 = vsub.s32 4, %v3377
    %v3402 = vsel %vm3317, %v3401, %v3377
    %v3403 = vsel %vm3316, %v2998, %v3400
    %v3404 = vsel %vm3316, 0, %v3402
    %v3405 = vcosq.f32.pop %v3403
    %v3406 = vsinq.f32.pop %v3403
    %vm3407 = vweird.f32 %v2998
    %v3408 = vadd.s32 %v3404, 3
    %v3409 = vand.u32 %v3408, 3
    %vm3410 = vcmp.lt.s32.totalorder %v3409, 2
    %vm3411 = vcmp.eq.s32.totalorder %v3409, 0
    %v3412 = vxor.u32 %v3406, 2147483648
    %v3413 = vsel %vm3411, %v3405, %v3412
    %vm3414 = vcmp.eq.s32.totalorder %v3409, 2
    %v3415 = vxor.u32 %v3405, 2147483648
    %v3416 = vsel %vm3414, %v3415, %v3406
    %v3417 = vsel %vm3410, %v3413, %v3416
    %v3418 = vsel %vm3407, nan, %v3417
    %v3419 = vand.u32 2147483647, %v2999
    %vm3420 = vcmp.le.f32.partialorder %v3419, 0.7853982
    %vm3421 = vcmp.lt.s32.totalorder %v2999, 0
    %v3422 = vand.u32 %v2999, 2139095040
    %v3423 = vshrl.u32 %v3422, 23
    %v3424 = vsub.s32 %v3423, 127
    %v3425 = vand.u32 2147483647, %v2999
    %v3426 = vand.u32 %v3425, 8388607
    %v3427 = vor.u32 %v3426, 8388608
    %v3428 = vsub.s32 0, %v3427
    %v3429 = vadd.s32 %v3424, 1
    %vm3430 = vcmp.gt.s32.totalorder %v3429, 0
    %v3431 = vsel %vm3430, %v3429, 0
    %v3432 = vshrl.u32 %v3431, 5
    %v3433 = vand.u32 %v3431, 31
    %v3434 = vsub.s32 32, %v3433
    %v3435 = vshrl.u32 683565275, %v3434
    %v3436 = vshll.u32 683565275, %v3433
    %v3437 = vshrl.u32 2475754826, %v3434
    %v3438 = vor.u32 %v3436, %v3437
    %v3439 = vshll.u32 2475754826, %v3433
    %v3440 = vshrl.u32 2131351028, %v3434
    %v3441 = vor.u32 %v3439, %v3440
    %v3442 = vshll.u32 2131351028, %v3433
    %v3443 = vshrl.u32 2102212464, %v3434
    %v3444 = vor.u32 %v3442, %v3443
    %v3445 = vshll.u32 2102212464, %v3433
    %v3446 = vshrl.u32 920167782, %v3434
    %v3447 = vor.u32 %v3445, %v3446
    %v3448 = vshll.u32 920167782, %v3433
    %v3449 = vshrl.u32 1326507024, %v3434
    %v3450 = vor.u32 %v3448, %v3449
    %vm3451 = vcmp.lt.s32.totalorder %v3432, 1
    %vm3452 = vcmp.lt.s32.totalorder %v3432, 2
    %vm3453 = vcmp.lt.s32.totalorder %v3432, 3
    %vm3454 = vcmp.lt.s32.totalorder %v3432, 4
    %v3455 = vsel %vm3451, %v3435, %v3438
    %v3456 = vsel %vm3454, %v3444, 2102212464
    %v3457 = vsel %vm3453, %v3441, %v3456
    %v3458 = vsel %vm3452, %v3455, %v3457
    %v3459 = vsel %vm3451, %v3438, %v3441
    %v3460 = vsel %vm3454, %v3447, 920167782
    %v3461 = vsel %vm3453, %v3444, %v3460
    %v3462 = vsel %vm3452, %v3459, %v3461
    %v3463 = vsel %vm3451, %v3441, %v3444
    %v3464 = vsel %vm3454, %v3450, 1326507024
    %v3465 = vsel %vm3453, %v3447, %v3464
    %v3466 = vsel %vm3452, %v3463, %v3465
    %v3467 = vshll.u32 %v3427, 8
    %v3468 = vmul.u32.u64.compose %v3467, %v3466
    %v3469 = vextract.low.u32 %v3468
    %v3470 = vextract.high.u32 %v3468
    %v3471 = vmul.u32.u64.compose %v3467, %v3462
    %v3472 = vextract.low.u32 %v3471
    %v3473 = vextract.high.u32 %v3471
    %v3474 = vmul.u32 %v3467, %v3458
    %v3475 = vadd.s32 %v3470, %v3472
    %vm3476 = vc.u32 %v3470, %v3472
    %v3477 = vadd.s32 %v3473, 1
    %v3478 = vsel %vm3476, %v3477, %v3473
    %v3479 = vadd.s32 %v3474, %v3478
    %v3480 = vadd.s32 %v3479, 536870912
    %v3481 = vshrl.u32 %v3480, 30
    %v3482 = vshll.u32 %v3481, 30
    %v3483 = vsub.s32 %v3479, %v3482
    %vm3484 = vcmp.lt.s32.totalorder %v3483, 0
    %v3485 = vsub.s32 0, %v3483
    %v3486 = vsel %vm3484, %v3485, %v3483
    %v3487 = vclz %v3486
    %v3488 = vsub.s32 %v3487, 2
    %vm3489 = vcmp.gt.s32.totalorder 0, %v3488
    %v3490 = vsel %vm3489, 0, %v3488
    %v3491 = vsub.s32 32, %v3490
    %v3492 = vshll.u32 %v3483, %v3490
    %v3493 = vshrl.u32 %v3475, %v3491
    %v3494 = vor.u32 %v3492, %v3493
    %v3495 = vsub.s32 4294967266, %v3490
    %v3496 = vadd.s32 %v3495, 127
    %v3497 = vshll.u32 %v3496, 23
    %v3498 = vor.u32 4788187, %v3497
    %v3499 = vand.u32 2147483647, %v3498
    %v3501 = vcvt.s32.f32 %v3494
    %v3502 = vmul.f32 %v3501, %v3499
    %v3503 = vxor.u32 %v3502, 2147483648
    %v3504 = vsel %vm3421, %v3503, %v3502
    %v3505 = vsub.s32 4, %v3481
    %v3506 = vsel %vm3421, %v3505, %v3481
    %v3507 = vsel %vm3420, %v2999, %v3504
    %v3508 = vsel %vm3420, 0, %v3506
    %v3509 = vcosq.f32.pop %v3507
    %v3510 = vsinq.f32.pop %v3507
    %vm3511 = vweird.f32 %v2999
    %v3512 = vadd.s32 %v3508, 3
    %v3513 = vand.u32 %v3512, 3
    %vm3514 = vcmp.lt.s32.totalorder %v3513, 2
    %vm3515 = vcmp.eq.s32.totalorder %v3513, 0
    %v3516 = vxor.u32 %v3510, 2147483648
    %v3517 = vsel %vm3515, %v3509, %v3516
    %vm3518 = vcmp.eq.s32.totalorder %v3513, 2
    %v3519 = vxor.u32 %v3509, 2147483648
    %v3520 = vsel %vm3518, %v3519, %v3510
    %v3521 = vsel %vm3514, %v3517, %v3520
    %v3522 = vsel %vm3511, nan, %v3521
    %v3523 = vand.u32 2147483647, %v3000
    %vm3524 = vcmp.le.f32.partialorder %v3523, 0.7853982
    %vm3525 = vcmp.lt.s32.totalorder %v3000, 0
    %v3526 = vand.u32 %v3000, 2139095040
    %v3527 = vshrl.u32 %v3526, 23
    %v3528 = vsub.s32 %v3527, 127
    %v3529 = vand.u32 2147483647, %v3000
    %v3530 = vand.u32 %v3529, 8388607
    %v3531 = vor.u32 %v3530, 8388608
    %v3532 = vsub.s32 0, %v3531
    %v3533 = vadd.s32 %v3528, 1
    %vm3534 = vcmp.gt.s32.totalorder %v3533, 0
    %v3535 = vsel %vm3534, %v3533, 0
    %v3536 = vshrl.u32 %v3535, 5
    %v3537 = vand.u32 %v3535, 31
    %v3538 = vsub.s32 32, %v3537
    %v3539 = vshrl.u32 683565275, %v3538
    %v3540 = vshll.u32 683565275, %v3537
    %v3541 = vshrl.u32 2475754826, %v3538
    %v3542 = vor.u32 %v3540, %v3541
    %v3543 = vshll.u32 2475754826, %v3537
    %v3544 = vshrl.u32 2131351028, %v3538
    %v3545 = vor.u32 %v3543, %v3544
    %v3546 = vshll.u32 2131351028, %v3537
    %v3547 = vshrl.u32 2102212464, %v3538
    %v3548 = vor.u32 %v3546, %v3547
    %v3549 = vshll.u32 2102212464, %v3537
    %v3550 = vshrl.u32 920167782, %v3538
    %v3551 = vor.u32 %v3549, %v3550
    %v3552 = vshll.u32 920167782, %v3537
    %v3553 = vshrl.u32 1326507024, %v3538
    %v3554 = vor.u32 %v3552, %v3553
    %vm3555 = vcmp.lt.s32.totalorder %v3536, 1
    %vm3556 = vcmp.lt.s32.totalorder %v3536, 2
    %vm3557 = vcmp.lt.s32.totalorder %v3536, 3
    %vm3558 = vcmp.lt.s32.totalorder %v3536, 4
    %v3559 = vsel %vm3555, %v3539, %v3542
    %v3560 = vsel %vm3558, %v3548, 2102212464
    %v3561 = vsel %vm3557, %v3545, %v3560
    %v3562 = vsel %vm3556, %v3559, %v3561
    %v3563 = vsel %vm3555, %v3542, %v3545
    %v3564 = vsel %vm3558, %v3551, 920167782
    %v3565 = vsel %vm3557, %v3548, %v3564
    %v3566 = vsel %vm3556, %v3563, %v3565
    %v3567 = vsel %vm3555, %v3545, %v3548
    %v3568 = vsel %vm3558, %v3554, 1326507024
    %v3569 = vsel %vm3557, %v3551, %v3568
    %v3570 = vsel %vm3556, %v3567, %v3569
    %v3571 = vshll.u32 %v3531, 8
    %v3572 = vmul.u32.u64.compose %v3571, %v3570
    %v3573 = vextract.low.u32 %v3572
    %v3574 = vextract.high.u32 %v3572
    %v3575 = vmul.u32.u64.compose %v3571, %v3566
    %v3576 = vextract.low.u32 %v3575
    %v3577 = vextract.high.u32 %v3575
    %v3578 = vmul.u32 %v3571, %v3562
    %v3579 = vadd.s32 %v3574, %v3576
    %vm3580 = vc.u32 %v3574, %v3576
    %v3581 = vadd.s32 %v3577, 1
    %v3582 = vsel %vm3580, %v3581, %v3577
    %v3583 = vadd.s32 %v3578, %v3582
    %v3584 = vadd.s32 %v3583, 536870912
    %v3585 = vshrl.u32 %v3584, 30
    %v3586 = vshll.u32 %v3585, 30
    %v3587 = vsub.s32 %v3583, %v3586
    %vm3588 = vcmp.lt.s32.totalorder %v3587, 0
    %v3589 = vsub.s32 0, %v3587
    %v3590 = vsel %vm3588, %v3589, %v3587
    %v3591 = vclz %v3590
    %v3592 = vsub.s32 %v3591, 2
    %vm3593 = vcmp.gt.s32.totalorder 0, %v3592
    %v3594 = vsel %vm3593, 0, %v3592
    %v3595 = vsub.s32 32, %v3594
    %v3596 = vshll.u32 %v3587, %v3594
    %v3597 = vshrl.u32 %v3579, %v3595
    %v3598 = vor.u32 %v3596, %v3597
    %v3599 = vsub.s32 4294967266, %v3594
    %v3600 = vadd.s32 %v3599, 127
    %v3601 = vshll.u32 %v3600, 23
    %v3602 = vor.u32 4788187, %v3601
    %v3603 = vand.u32 2147483647, %v3602
    %v3605 = vcvt.s32.f32 %v3598
    %v3606 = vmul.f32 %v3605, %v3603
    %v3607 = vxor.u32 %v3606, 2147483648
    %v3608 = vsel %vm3525, %v3607, %v3606
    %v3609 = vsub.s32 4, %v3585
    %v3610 = vsel %vm3525, %v3609, %v3585
    %v3611 = vsel %vm3524, %v3000, %v3608
    %v3612 = vsel %vm3524, 0, %v3610
    %v3613 = vcosq.f32.pop %v3611
    %v3614 = vsinq.f32.pop %v3611
    %vm3615 = vweird.f32 %v3000
    %v3616 = vadd.s32 %v3612, 3
    %v3617 = vand.u32 %v3616, 3
    %vm3618 = vcmp.lt.s32.totalorder %v3617, 2
    %vm3619 = vcmp.eq.s32.totalorder %v3617, 0
    %v3620 = vxor.u32 %v3614, 2147483648
    %v3621 = vsel %vm3619, %v3613, %v3620
    %vm3622 = vcmp.eq.s32.totalorder %v3617, 2
    %v3623 = vxor.u32 %v3613, 2147483648
    %v3624 = vsel %vm3622, %v3623, %v3614
    %v3625 = vsel %vm3618, %v3621, %v3624
    %v3626 = vsel %vm3615, nan, %v3625
    %v3627 = vand.u32 2147483647, %v3001
    %vm3628 = vcmp.le.f32.partialorder %v3627, 0.7853982
    %vm3629 = vcmp.lt.s32.totalorder %v3001, 0
    %v3630 = vand.u32 %v3001, 2139095040
    %v3631 = vshrl.u32 %v3630, 23
    %v3632 = vsub.s32 %v3631, 127
    %v3633 = vand.u32 2147483647, %v3001
    %v3634 = vand.u32 %v3633, 8388607
    %v3635 = vor.u32 %v3634, 8388608
    %v3636 = vsub.s32 0, %v3635
    %v3637 = vadd.s32 %v3632, 1
    %vm3638 = vcmp.gt.s32.totalorder %v3637, 0
    %v3639 = vsel %vm3638, %v3637, 0
    %v3640 = vshrl.u32 %v3639, 5
    %v3641 = vand.u32 %v3639, 31
    %v3642 = vsub.s32 32, %v3641
    %v3643 = vshrl.u32 683565275, %v3642
    %v3644 = vshll.u32 683565275, %v3641
    %v3645 = vshrl.u32 2475754826, %v3642
    %v3646 = vor.u32 %v3644, %v3645
    %v3647 = vshll.u32 2475754826, %v3641
    %v3648 = vshrl.u32 2131351028, %v3642
    %v3649 = vor.u32 %v3647, %v3648
    %v3650 = vshll.u32 2131351028, %v3641
    %v3651 = vshrl.u32 2102212464, %v3642
    %v3652 = vor.u32 %v3650, %v3651
    %v3653 = vshll.u32 2102212464, %v3641
    %v3654 = vshrl.u32 920167782, %v3642
    %v3655 = vor.u32 %v3653, %v3654
    %v3656 = vshll.u32 920167782, %v3641
    %v3657 = vshrl.u32 1326507024, %v3642
    %v3658 = vor.u32 %v3656, %v3657
    %vm3659 = vcmp.lt.s32.totalorder %v3640, 1
    %vm3660 = vcmp.lt.s32.totalorder %v3640, 2
    %vm3661 = vcmp.lt.s32.totalorder %v3640, 3
    %vm3662 = vcmp.lt.s32.totalorder %v3640, 4
    %v3663 = vsel %vm3659, %v3643, %v3646
    %v3664 = vsel %vm3662, %v3652, 2102212464
    %v3665 = vsel %vm3661, %v3649, %v3664
    %v3666 = vsel %vm3660, %v3663, %v3665
    %v3667 = vsel %vm3659, %v3646, %v3649
    %v3668 = vsel %vm3662, %v3655, 920167782
    %v3669 = vsel %vm3661, %v3652, %v3668
    %v3670 = vsel %vm3660, %v3667, %v3669
    %v3671 = vsel %vm3659, %v3649, %v3652
    %v3672 = vsel %vm3662, %v3658, 1326507024
    %v3673 = vsel %vm3661, %v3655, %v3672
    %v3674 = vsel %vm3660, %v3671, %v3673
    %v3675 = vshll.u32 %v3635, 8
    %v3676 = vmul.u32.u64.compose %v3675, %v3674
    %v3677 = vextract.low.u32 %v3676
    %v3678 = vextract.high.u32 %v3676
    %v3679 = vmul.u32.u64.compose %v3675, %v3670
    %v3680 = vextract.low.u32 %v3679
    %v3681 = vextract.high.u32 %v3679
    %v3682 = vmul.u32 %v3675, %v3666
    %v3683 = vadd.s32 %v3678, %v3680
    %vm3684 = vc.u32 %v3678, %v3680
    %v3685 = vadd.s32 %v3681, 1
    %v3686 = vsel %vm3684, %v3685, %v3681
    %v3687 = vadd.s32 %v3682, %v3686
    %v3688 = vadd.s32 %v3687, 536870912
    %v3689 = vshrl.u32 %v3688, 30
    %v3690 = vshll.u32 %v3689, 30
    %v3691 = vsub.s32 %v3687, %v3690
    %vm3692 = vcmp.lt.s32.totalorder %v3691, 0
    %v3693 = vsub.s32 0, %v3691
    %v3694 = vsel %vm3692, %v3693, %v3691
    %v3695 = vclz %v3694
    %v3696 = vsub.s32 %v3695, 2
    %vm3697 = vcmp.gt.s32.totalorder 0, %v3696
    %v3698 = vsel %vm3697, 0, %v3696
    %v3699 = vsub.s32 32, %v3698
    %v3700 = vshll.u32 %v3691, %v3698
    %v3701 = vshrl.u32 %v3683, %v3699
    %v3702 = vor.u32 %v3700, %v3701
    %v3703 = vsub.s32 4294967266, %v3698
    %v3704 = vadd.s32 %v3703, 127
    %v3705 = vshll.u32 %v3704, 23
    %v3706 = vor.u32 4788187, %v3705
    %v3707 = vand.u32 2147483647, %v3706
    %v3709 = vcvt.s32.f32 %v3702
    %v3710 = vmul.f32 %v3709, %v3707
    %v3711 = vxor.u32 %v3710, 2147483648
    %v3712 = vsel %vm3629, %v3711, %v3710
    %v3713 = vsub.s32 4, %v3689
    %v3714 = vsel %vm3629, %v3713, %v3689
    %v3715 = vsel %vm3628, %v3001, %v3712
    %v3716 = vsel %vm3628, 0, %v3714
    %v3717 = vcosq.f32.pop %v3715
    %v3718 = vsinq.f32.pop %v3715
    %vm3719 = vweird.f32 %v3001
    %v3720 = vadd.s32 %v3716, 3
    %v3721 = vand.u32 %v3720, 3
    %vm3722 = vcmp.lt.s32.totalorder %v3721, 2
    %vm3723 = vcmp.eq.s32.totalorder %v3721, 0
    %v3724 = vxor.u32 %v3718, 2147483648
    %v3725 = vsel %vm3723, %v3717, %v3724
    %vm3726 = vcmp.eq.s32.totalorder %v3721, 2
    %v3727 = vxor.u32 %v3717, 2147483648
    %v3728 = vsel %vm3726, %v3727, %v3718
    %v3729 = vsel %vm3722, %v3725, %v3728
    %v3730 = vsel %vm3719, nan, %v3729
    %v3731 = vand.u32 2147483647, %v3002
    %vm3732 = vcmp.le.f32.partialorder %v3731, 0.7853982
    %vm3733 = vcmp.lt.s32.totalorder %v3002, 0
    %v3734 = vand.u32 %v3002, 2139095040
    %v3735 = vshrl.u32 %v3734, 23
    %v3736 = vsub.s32 %v3735, 127
    %v3737 = vand.u32 2147483647, %v3002
    %v3738 = vand.u32 %v3737, 8388607
    %v3739 = vor.u32 %v3738, 8388608
    %v3740 = vsub.s32 0, %v3739
    %v3741 = vadd.s32 %v3736, 1
    %vm3742 = vcmp.gt.s32.totalorder %v3741, 0
    %v3743 = vsel %vm3742, %v3741, 0
    %v3744 = vshrl.u32 %v3743, 5
    %v3745 = vand.u32 %v3743, 31
    %v3746 = vsub.s32 32, %v3745
    %v3747 = vshrl.u32 683565275, %v3746
    %v3748 = vshll.u32 683565275, %v3745
    %v3749 = vshrl.u32 2475754826, %v3746
    %v3750 = vor.u32 %v3748, %v3749
    %v3751 = vshll.u32 2475754826, %v3745
    %v3752 = vshrl.u32 2131351028, %v3746
    %v3753 = vor.u32 %v3751, %v3752
    %v3754 = vshll.u32 2131351028, %v3745
    %v3755 = vshrl.u32 2102212464, %v3746
    %v3756 = vor.u32 %v3754, %v3755
    %v3757 = vshll.u32 2102212464, %v3745
    %v3758 = vshrl.u32 920167782, %v3746
    %v3759 = vor.u32 %v3757, %v3758
    %v3760 = vshll.u32 920167782, %v3745
    %v3761 = vshrl.u32 1326507024, %v3746
    %v3762 = vor.u32 %v3760, %v3761
    %vm3763 = vcmp.lt.s32.totalorder %v3744, 1
    %vm3764 = vcmp.lt.s32.totalorder %v3744, 2
    %vm3765 = vcmp.lt.s32.totalorder %v3744, 3
    %vm3766 = vcmp.lt.s32.totalorder %v3744, 4
    %v3767 = vsel %vm3763, %v3747, %v3750
    %v3768 = vsel %vm3766, %v3756, 2102212464
    %v3769 = vsel %vm3765, %v3753, %v3768
    %v3770 = vsel %vm3764, %v3767, %v3769
    %v3771 = vsel %vm3763, %v3750, %v3753
    %v3772 = vsel %vm3766, %v3759, 920167782
    %v3773 = vsel %vm3765, %v3756, %v3772
    %v3774 = vsel %vm3764, %v3771, %v3773
    %v3775 = vsel %vm3763, %v3753, %v3756
    %v3776 = vsel %vm3766, %v3762, 1326507024
    %v3777 = vsel %vm3765, %v3759, %v3776
    %v3778 = vsel %vm3764, %v3775, %v3777
    %v3779 = vshll.u32 %v3739, 8
    %v3780 = vmul.u32.u64.compose %v3779, %v3778
    %v3781 = vextract.low.u32 %v3780
    %v3782 = vextract.high.u32 %v3780
    %v3783 = vmul.u32.u64.compose %v3779, %v3774
    %v3784 = vextract.low.u32 %v3783
    %v3785 = vextract.high.u32 %v3783
    %v3786 = vmul.u32 %v3779, %v3770
    %v3787 = vadd.s32 %v3782, %v3784
    %vm3788 = vc.u32 %v3782, %v3784
    %v3789 = vadd.s32 %v3785, 1
    %v3790 = vsel %vm3788, %v3789, %v3785
    %v3791 = vadd.s32 %v3786, %v3790
    %v3792 = vadd.s32 %v3791, 536870912
    %v3793 = vshrl.u32 %v3792, 30
    %v3794 = vshll.u32 %v3793, 30
    %v3795 = vsub.s32 %v3791, %v3794
    %vm3796 = vcmp.lt.s32.totalorder %v3795, 0
    %v3797 = vsub.s32 0, %v3795
    %v3798 = vsel %vm3796, %v3797, %v3795
    %v3799 = vclz %v3798
    %v3800 = vsub.s32 %v3799, 2
    %vm3801 = vcmp.gt.s32.totalorder 0, %v3800
    %v3802 = vsel %vm3801, 0, %v3800
    %v3803 = vsub.s32 32, %v3802
    %v3804 = vshll.u32 %v3795, %v3802
    %v3805 = vshrl.u32 %v3787, %v3803
    %v3806 = vor.u32 %v3804, %v3805
    %v3807 = vsub.s32 4294967266, %v3802
    %v3808 = vadd.s32 %v3807, 127
    %v3809 = vshll.u32 %v3808, 23
    %v3810 = vor.u32 4788187, %v3809
    %v3811 = vand.u32 2147483647, %v3810
    %v3813 = vcvt.s32.f32 %v3806
    %v3814 = vmul.f32 %v3813, %v3811
    %v3815 = vxor.u32 %v3814, 2147483648
    %v3816 = vsel %vm3733, %v3815, %v3814
    %v3817 = vsub.s32 4, %v3793
    %v3818 = vsel %vm3733, %v3817, %v3793
    %v3819 = vsel %vm3732, %v3002, %v3816
    %v3820 = vsel %vm3732, 0, %v3818
    %v3821 = vcosq.f32.pop %v3819
    %v3822 = vsinq.f32.pop %v3819
    %vm3823 = vweird.f32 %v3002
    %v3824 = vadd.s32 %v3820, 3
    %v3825 = vand.u32 %v3824, 3
    %vm3826 = vcmp.lt.s32.totalorder %v3825, 2
    %vm3827 = vcmp.eq.s32.totalorder %v3825, 0
    %v3828 = vxor.u32 %v3822, 2147483648
    %v3829 = vsel %vm3827, %v3821, %v3828
    %vm3830 = vcmp.eq.s32.totalorder %v3825, 2
    %v3831 = vxor.u32 %v3821, 2147483648
    %v3832 = vsel %vm3830, %v3831, %v3822
    %v3833 = vsel %vm3826, %v3829, %v3832
    %v3834 = vsel %vm3823, nan, %v3833
    %v3843 = vrot.slane %v3106, 4
    %v3844 = vrot.slane %v3210, 4
    %v3845 = vrot.slane %v3314, 4
    %v3846 = vrot.slane %v3418, 4
    %v3847 = vrot.slane %v3522, 4
    %v3848 = vrot.slane %v3626, 4
    %v3849 = vrot.slane %v3730, 4
    %v3850 = vrot.slane %v3834, 4
    %3859 = vst [vmem:[#allocation2 + $0x40] sm:$0x70] %v3843
    %3860 = vst [vmem:[#allocation2 + $0x48] sm:$0x70] %v3844
    %3861 = vst [vmem:[#allocation2 + $0x50] sm:$0x70] %v3845
    %3862 = vst [vmem:[#allocation2 + $0x58] sm:$0x70] %v3846
    %3863 = vst [vmem:[#allocation2 + $0x60] sm:$0x70] %v3847
    %3864 = vst [vmem:[#allocation2 + $0x68] sm:$0x70] %v3848
    %3865 = vst [vmem:[#allocation2 + $0x70] sm:$0x70] %v3849
    %3866 = vst [vmem:[#allocation2 + $0x78] sm:$0x70] %v3850
    %v3867 = vand.u32 2147483647, %v2995
    %vm3868 = vcmp.le.f32.partialorder %v3867, 0.7853982
    %vm3869 = vcmp.lt.s32.totalorder %v2995, 0
    %v3870 = vand.u32 %v2995, 2139095040
    %v3871 = vshrl.u32 %v3870, 23
    %v3872 = vsub.s32 %v3871, 127
    %v3873 = vand.u32 2147483647, %v2995
    %v3874 = vand.u32 %v3873, 8388607
    %v3875 = vor.u32 %v3874, 8388608
    %v3876 = vsub.s32 0, %v3875
    %v3877 = vadd.s32 %v3872, 1
    %vm3878 = vcmp.gt.s32.totalorder %v3877, 0
    %v3879 = vsel %vm3878, %v3877, 0
    %v3880 = vshrl.u32 %v3879, 5
    %v3881 = vand.u32 %v3879, 31
    %v3882 = vsub.s32 32, %v3881
    %v3883 = vshrl.u32 683565275, %v3882
    %v3884 = vshll.u32 683565275, %v3881
    %v3885 = vshrl.u32 2475754826, %v3882
    %v3886 = vor.u32 %v3884, %v3885
    %v3887 = vshll.u32 2475754826, %v3881
    %v3888 = vshrl.u32 2131351028, %v3882
    %v3889 = vor.u32 %v3887, %v3888
    %v3890 = vshll.u32 2131351028, %v3881
    %v3891 = vshrl.u32 2102212464, %v3882
    %v3892 = vor.u32 %v3890, %v3891
    %v3893 = vshll.u32 2102212464, %v3881
    %v3894 = vshrl.u32 920167782, %v3882
    %v3895 = vor.u32 %v3893, %v3894
    %v3896 = vshll.u32 920167782, %v3881
    %v3897 = vshrl.u32 1326507024, %v3882
    %v3898 = vor.u32 %v3896, %v3897
    %vm3899 = vcmp.lt.s32.totalorder %v3880, 1
    %vm3900 = vcmp.lt.s32.totalorder %v3880, 2
    %vm3901 = vcmp.lt.s32.totalorder %v3880, 3
    %vm3902 = vcmp.lt.s32.totalorder %v3880, 4
    %v3903 = vsel %vm3899, %v3883, %v3886
    %v3904 = vsel %vm3902, %v3892, 2102212464
    %v3905 = vsel %vm3901, %v3889, %v3904
    %v3906 = vsel %vm3900, %v3903, %v3905
    %v3907 = vsel %vm3899, %v3886, %v3889
    %v3908 = vsel %vm3902, %v3895, 920167782
    %v3909 = vsel %vm3901, %v3892, %v3908
    %v3910 = vsel %vm3900, %v3907, %v3909
    %v3911 = vsel %vm3899, %v3889, %v3892
    %v3912 = vsel %vm3902, %v3898, 1326507024
    %v3913 = vsel %vm3901, %v3895, %v3912
    %v3914 = vsel %vm3900, %v3911, %v3913
    %v3915 = vshll.u32 %v3875, 8
    %v3916 = vmul.u32.u64.compose %v3915, %v3914
    %v3917 = vextract.low.u32 %v3916
    %v3918 = vextract.high.u32 %v3916
    %v3919 = vmul.u32.u64.compose %v3915, %v3910
    %v3920 = vextract.low.u32 %v3919
    %v3921 = vextract.high.u32 %v3919
    %v3922 = vmul.u32 %v3915, %v3906
    %v3923 = vadd.s32 %v3918, %v3920
    %vm3924 = vc.u32 %v3918, %v3920
    %v3925 = vadd.s32 %v3921, 1
    %v3926 = vsel %vm3924, %v3925, %v3921
    %v3927 = vadd.s32 %v3922, %v3926
    %v3928 = vadd.s32 %v3927, 536870912
    %v3929 = vshrl.u32 %v3928, 30
    %v3930 = vshll.u32 %v3929, 30
    %v3931 = vsub.s32 %v3927, %v3930
    %vm3932 = vcmp.lt.s32.totalorder %v3931, 0
    %v3933 = vsub.s32 0, %v3931
    %v3934 = vsel %vm3932, %v3933, %v3931
    %v3935 = vclz %v3934
    %v3936 = vsub.s32 %v3935, 2
    %vm3937 = vcmp.gt.s32.totalorder 0, %v3936
    %v3938 = vsel %vm3937, 0, %v3936
    %v3939 = vsub.s32 32, %v3938
    %v3940 = vshll.u32 %v3931, %v3938
    %v3941 = vshrl.u32 %v3923, %v3939
    %v3942 = vor.u32 %v3940, %v3941
    %v3943 = vsub.s32 4294967266, %v3938
    %v3944 = vadd.s32 %v3943, 127
    %v3945 = vshll.u32 %v3944, 23
    %v3946 = vor.u32 4788187, %v3945
    %v3947 = vand.u32 2147483647, %v3946
    %v3949 = vcvt.s32.f32 %v3942
    %v3950 = vmul.f32 %v3949, %v3947
    %v3951 = vxor.u32 %v3950, 2147483648
    %v3952 = vsel %vm3869, %v3951, %v3950
    %v3953 = vsub.s32 4, %v3929
    %v3954 = vsel %vm3869, %v3953, %v3929
    %v3955 = vsel %vm3868, %v2995, %v3952
    %v3956 = vsel %vm3868, 0, %v3954
    %v3957 = vcosq.f32.pop %v3955
    %v3958 = vsinq.f32.pop %v3955
    %vm3959 = vweird.f32 %v2995
    %v3960 = vand.u32 %v3956, 3
    %vm3961 = vcmp.lt.s32.totalorder %v3960, 2
    %vm3962 = vcmp.eq.s32.totalorder %v3960, 0
    %v3963 = vxor.u32 %v3958, 2147483648
    %v3964 = vsel %vm3962, %v3957, %v3963
    %vm3965 = vcmp.eq.s32.totalorder %v3960, 2
    %v3966 = vxor.u32 %v3957, 2147483648
    %v3967 = vsel %vm3965, %v3966, %v3958
    %v3968 = vsel %vm3961, %v3964, %v3967
    %v3969 = vsel %vm3959, nan, %v3968
    %v3970 = vand.u32 2147483647, %v2996
    %vm3971 = vcmp.le.f32.partialorder %v3970, 0.7853982
    %vm3972 = vcmp.lt.s32.totalorder %v2996, 0
    %v3973 = vand.u32 %v2996, 2139095040
    %v3974 = vshrl.u32 %v3973, 23
    %v3975 = vsub.s32 %v3974, 127
    %v3976 = vand.u32 2147483647, %v2996
    %v3977 = vand.u32 %v3976, 8388607
    %v3978 = vor.u32 %v3977, 8388608
    %v3979 = vsub.s32 0, %v3978
    %v3980 = vadd.s32 %v3975, 1
    %vm3981 = vcmp.gt.s32.totalorder %v3980, 0
    %v3982 = vsel %vm3981, %v3980, 0
    %v3983 = vshrl.u32 %v3982, 5
    %v3984 = vand.u32 %v3982, 31
    %v3985 = vsub.s32 32, %v3984
    %v3986 = vshrl.u32 683565275, %v3985
    %v3987 = vshll.u32 683565275, %v3984
    %v3988 = vshrl.u32 2475754826, %v3985
    %v3989 = vor.u32 %v3987, %v3988
    %v3990 = vshll.u32 2475754826, %v3984
    %v3991 = vshrl.u32 2131351028, %v3985
    %v3992 = vor.u32 %v3990, %v3991
    %v3993 = vshll.u32 2131351028, %v3984
    %v3994 = vshrl.u32 2102212464, %v3985
    %v3995 = vor.u32 %v3993, %v3994
    %v3996 = vshll.u32 2102212464, %v3984
    %v3997 = vshrl.u32 920167782, %v3985
    %v3998 = vor.u32 %v3996, %v3997
    %v3999 = vshll.u32 920167782, %v3984
    %v4000 = vshrl.u32 1326507024, %v3985
    %v4001 = vor.u32 %v3999, %v4000
    %vm4002 = vcmp.lt.s32.totalorder %v3983, 1
    %vm4003 = vcmp.lt.s32.totalorder %v3983, 2
    %vm4004 = vcmp.lt.s32.totalorder %v3983, 3
    %vm4005 = vcmp.lt.s32.totalorder %v3983, 4
    %v4006 = vsel %vm4002, %v3986, %v3989
    %v4007 = vsel %vm4005, %v3995, 2102212464
    %v4008 = vsel %vm4004, %v3992, %v4007
    %v4009 = vsel %vm4003, %v4006, %v4008
    %v4010 = vsel %vm4002, %v3989, %v3992
    %v4011 = vsel %vm4005, %v3998, 920167782
    %v4012 = vsel %vm4004, %v3995, %v4011
    %v4013 = vsel %vm4003, %v4010, %v4012
    %v4014 = vsel %vm4002, %v3992, %v3995
    %v4015 = vsel %vm4005, %v4001, 1326507024
    %v4016 = vsel %vm4004, %v3998, %v4015
    %v4017 = vsel %vm4003, %v4014, %v4016
    %v4018 = vshll.u32 %v3978, 8
    %v4019 = vmul.u32.u64.compose %v4018, %v4017
    %v4020 = vextract.low.u32 %v4019
    %v4021 = vextract.high.u32 %v4019
    %v4022 = vmul.u32.u64.compose %v4018, %v4013
    %v4023 = vextract.low.u32 %v4022
    %v4024 = vextract.high.u32 %v4022
    %v4025 = vmul.u32 %v4018, %v4009
    %v4026 = vadd.s32 %v4021, %v4023
    %vm4027 = vc.u32 %v4021, %v4023
    %v4028 = vadd.s32 %v4024, 1
    %v4029 = vsel %vm4027, %v4028, %v4024
    %v4030 = vadd.s32 %v4025, %v4029
    %v4031 = vadd.s32 %v4030, 536870912
    %v4032 = vshrl.u32 %v4031, 30
    %v4033 = vshll.u32 %v4032, 30
    %v4034 = vsub.s32 %v4030, %v4033
    %vm4035 = vcmp.lt.s32.totalorder %v4034, 0
    %v4036 = vsub.s32 0, %v4034
    %v4037 = vsel %vm4035, %v4036, %v4034
    %v4038 = vclz %v4037
    %v4039 = vsub.s32 %v4038, 2
    %vm4040 = vcmp.gt.s32.totalorder 0, %v4039
    %v4041 = vsel %vm4040, 0, %v4039
    %v4042 = vsub.s32 32, %v4041
    %v4043 = vshll.u32 %v4034, %v4041
    %v4044 = vshrl.u32 %v4026, %v4042
    %v4045 = vor.u32 %v4043, %v4044
    %v4046 = vsub.s32 4294967266, %v4041
    %v4047 = vadd.s32 %v4046, 127
    %v4048 = vshll.u32 %v4047, 23
    %v4049 = vor.u32 4788187, %v4048
    %v4050 = vand.u32 2147483647, %v4049
    %v4052 = vcvt.s32.f32 %v4045
    %v4053 = vmul.f32 %v4052, %v4050
    %v4054 = vxor.u32 %v4053, 2147483648
    %v4055 = vsel %vm3972, %v4054, %v4053
    %v4056 = vsub.s32 4, %v4032
    %v4057 = vsel %vm3972, %v4056, %v4032
    %v4058 = vsel %vm3971, %v2996, %v4055
    %v4059 = vsel %vm3971, 0, %v4057
    %v4060 = vcosq.f32.pop %v4058
    %v4061 = vsinq.f32.pop %v4058
    %vm4062 = vweird.f32 %v2996
    %v4063 = vand.u32 %v4059, 3
    %vm4064 = vcmp.lt.s32.totalorder %v4063, 2
    %vm4065 = vcmp.eq.s32.totalorder %v4063, 0
    %v4066 = vxor.u32 %v4061, 2147483648
    %v4067 = vsel %vm4065, %v4060, %v4066
    %vm4068 = vcmp.eq.s32.totalorder %v4063, 2
    %v4069 = vxor.u32 %v4060, 2147483648
    %v4070 = vsel %vm4068, %v4069, %v4061
    %v4071 = vsel %vm4064, %v4067, %v4070
    %v4072 = vsel %vm4062, nan, %v4071
    %v4073 = vand.u32 2147483647, %v2997
    %vm4074 = vcmp.le.f32.partialorder %v4073, 0.7853982
    %vm4075 = vcmp.lt.s32.totalorder %v2997, 0
    %v4076 = vand.u32 %v2997, 2139095040
    %v4077 = vshrl.u32 %v4076, 23
    %v4078 = vsub.s32 %v4077, 127
    %v4079 = vand.u32 2147483647, %v2997
    %v4080 = vand.u32 %v4079, 8388607
    %v4081 = vor.u32 %v4080, 8388608
    %v4082 = vsub.s32 0, %v4081
    %v4083 = vadd.s32 %v4078, 1
    %vm4084 = vcmp.gt.s32.totalorder %v4083, 0
    %v4085 = vsel %vm4084, %v4083, 0
    %v4086 = vshrl.u32 %v4085, 5
    %v4087 = vand.u32 %v4085, 31
    %v4088 = vsub.s32 32, %v4087
    %v4089 = vshrl.u32 683565275, %v4088
    %v4090 = vshll.u32 683565275, %v4087
    %v4091 = vshrl.u32 2475754826, %v4088
    %v4092 = vor.u32 %v4090, %v4091
    %v4093 = vshll.u32 2475754826, %v4087
    %v4094 = vshrl.u32 2131351028, %v4088
    %v4095 = vor.u32 %v4093, %v4094
    %v4096 = vshll.u32 2131351028, %v4087
    %v4097 = vshrl.u32 2102212464, %v4088
    %v4098 = vor.u32 %v4096, %v4097
    %v4099 = vshll.u32 2102212464, %v4087
    %v4100 = vshrl.u32 920167782, %v4088
    %v4101 = vor.u32 %v4099, %v4100
    %v4102 = vshll.u32 920167782, %v4087
    %v4103 = vshrl.u32 1326507024, %v4088
    %v4104 = vor.u32 %v4102, %v4103
    %vm4105 = vcmp.lt.s32.totalorder %v4086, 1
    %vm4106 = vcmp.lt.s32.totalorder %v4086, 2
    %vm4107 = vcmp.lt.s32.totalorder %v4086, 3
    %vm4108 = vcmp.lt.s32.totalorder %v4086, 4
    %v4109 = vsel %vm4105, %v4089, %v4092
    %v4110 = vsel %vm4108, %v4098, 2102212464
    %v4111 = vsel %vm4107, %v4095, %v4110
    %v4112 = vsel %vm4106, %v4109, %v4111
    %v4113 = vsel %vm4105, %v4092, %v4095
    %v4114 = vsel %vm4108, %v4101, 920167782
    %v4115 = vsel %vm4107, %v4098, %v4114
    %v4116 = vsel %vm4106, %v4113, %v4115
    %v4117 = vsel %vm4105, %v4095, %v4098
    %v4118 = vsel %vm4108, %v4104, 1326507024
    %v4119 = vsel %vm4107, %v4101, %v4118
    %v4120 = vsel %vm4106, %v4117, %v4119
    %v4121 = vshll.u32 %v4081, 8
    %v4122 = vmul.u32.u64.compose %v4121, %v4120
    %v4123 = vextract.low.u32 %v4122
    %v4124 = vextract.high.u32 %v4122
    %v4125 = vmul.u32.u64.compose %v4121, %v4116
    %v4126 = vextract.low.u32 %v4125
    %v4127 = vextract.high.u32 %v4125
    %v4128 = vmul.u32 %v4121, %v4112
    %v4129 = vadd.s32 %v4124, %v4126
    %vm4130 = vc.u32 %v4124, %v4126
    %v4131 = vadd.s32 %v4127, 1
    %v4132 = vsel %vm4130, %v4131, %v4127
    %v4133 = vadd.s32 %v4128, %v4132
    %v4134 = vadd.s32 %v4133, 536870912
    %v4135 = vshrl.u32 %v4134, 30
    %v4136 = vshll.u32 %v4135, 30
    %v4137 = vsub.s32 %v4133, %v4136
    %vm4138 = vcmp.lt.s32.totalorder %v4137, 0
    %v4139 = vsub.s32 0, %v4137
    %v4140 = vsel %vm4138, %v4139, %v4137
    %v4141 = vclz %v4140
    %v4142 = vsub.s32 %v4141, 2
    %vm4143 = vcmp.gt.s32.totalorder 0, %v4142
    %v4144 = vsel %vm4143, 0, %v4142
    %v4145 = vsub.s32 32, %v4144
    %v4146 = vshll.u32 %v4137, %v4144
    %v4147 = vshrl.u32 %v4129, %v4145
    %v4148 = vor.u32 %v4146, %v4147
    %v4149 = vsub.s32 4294967266, %v4144
    %v4150 = vadd.s32 %v4149, 127
    %v4151 = vshll.u32 %v4150, 23
    %v4152 = vor.u32 4788187, %v4151
    %v4153 = vand.u32 2147483647, %v4152
    %v4155 = vcvt.s32.f32 %v4148
    %v4156 = vmul.f32 %v4155, %v4153
    %v4157 = vxor.u32 %v4156, 2147483648
    %v4158 = vsel %vm4075, %v4157, %v4156
    %v4159 = vsub.s32 4, %v4135
    %v4160 = vsel %vm4075, %v4159, %v4135
    %v4161 = vsel %vm4074, %v2997, %v4158
    %v4162 = vsel %vm4074, 0, %v4160
    %v4163 = vcosq.f32.pop %v4161
    %v4164 = vsinq.f32.pop %v4161
    %vm4165 = vweird.f32 %v2997
    %v4166 = vand.u32 %v4162, 3
    %vm4167 = vcmp.lt.s32.totalorder %v4166, 2
    %vm4168 = vcmp.eq.s32.totalorder %v4166, 0
    %v4169 = vxor.u32 %v4164, 2147483648
    %v4170 = vsel %vm4168, %v4163, %v4169
    %vm4171 = vcmp.eq.s32.totalorder %v4166, 2
    %v4172 = vxor.u32 %v4163, 2147483648
    %v4173 = vsel %vm4171, %v4172, %v4164
    %v4174 = vsel %vm4167, %v4170, %v4173
    %v4175 = vsel %vm4165, nan, %v4174
    %v4176 = vand.u32 2147483647, %v2998
    %vm4177 = vcmp.le.f32.partialorder %v4176, 0.7853982
    %vm4178 = vcmp.lt.s32.totalorder %v2998, 0
    %v4179 = vand.u32 %v2998, 2139095040
    %v4180 = vshrl.u32 %v4179, 23
    %v4181 = vsub.s32 %v4180, 127
    %v4182 = vand.u32 2147483647, %v2998
    %v4183 = vand.u32 %v4182, 8388607
    %v4184 = vor.u32 %v4183, 8388608
    %v4185 = vsub.s32 0, %v4184
    %v4186 = vadd.s32 %v4181, 1
    %vm4187 = vcmp.gt.s32.totalorder %v4186, 0
    %v4188 = vsel %vm4187, %v4186, 0
    %v4189 = vshrl.u32 %v4188, 5
    %v4190 = vand.u32 %v4188, 31
    %v4191 = vsub.s32 32, %v4190
    %v4192 = vshrl.u32 683565275, %v4191
    %v4193 = vshll.u32 683565275, %v4190
    %v4194 = vshrl.u32 2475754826, %v4191
    %v4195 = vor.u32 %v4193, %v4194
    %v4196 = vshll.u32 2475754826, %v4190
    %v4197 = vshrl.u32 2131351028, %v4191
    %v4198 = vor.u32 %v4196, %v4197
    %v4199 = vshll.u32 2131351028, %v4190
    %v4200 = vshrl.u32 2102212464, %v4191
    %v4201 = vor.u32 %v4199, %v4200
    %v4202 = vshll.u32 2102212464, %v4190
    %v4203 = vshrl.u32 920167782, %v4191
    %v4204 = vor.u32 %v4202, %v4203
    %v4205 = vshll.u32 920167782, %v4190
    %v4206 = vshrl.u32 1326507024, %v4191
    %v4207 = vor.u32 %v4205, %v4206
    %vm4208 = vcmp.lt.s32.totalorder %v4189, 1
    %vm4209 = vcmp.lt.s32.totalorder %v4189, 2
    %vm4210 = vcmp.lt.s32.totalorder %v4189, 3
    %vm4211 = vcmp.lt.s32.totalorder %v4189, 4
    %v4212 = vsel %vm4208, %v4192, %v4195
    %v4213 = vsel %vm4211, %v4201, 2102212464
    %v4214 = vsel %vm4210, %v4198, %v4213
    %v4215 = vsel %vm4209, %v4212, %v4214
    %v4216 = vsel %vm4208, %v4195, %v4198
    %v4217 = vsel %vm4211, %v4204, 920167782
    %v4218 = vsel %vm4210, %v4201, %v4217
    %v4219 = vsel %vm4209, %v4216, %v4218
    %v4220 = vsel %vm4208, %v4198, %v4201
    %v4221 = vsel %vm4211, %v4207, 1326507024
    %v4222 = vsel %vm4210, %v4204, %v4221
    %v4223 = vsel %vm4209, %v4220, %v4222
    %v4224 = vshll.u32 %v4184, 8
    %v4225 = vmul.u32.u64.compose %v4224, %v4223
    %v4226 = vextract.low.u32 %v4225
    %v4227 = vextract.high.u32 %v4225
    %v4228 = vmul.u32.u64.compose %v4224, %v4219
    %v4229 = vextract.low.u32 %v4228
    %v4230 = vextract.high.u32 %v4228
    %v4231 = vmul.u32 %v4224, %v4215
    %v4232 = vadd.s32 %v4227, %v4229
    %vm4233 = vc.u32 %v4227, %v4229
    %v4234 = vadd.s32 %v4230, 1
    %v4235 = vsel %vm4233, %v4234, %v4230
    %v4236 = vadd.s32 %v4231, %v4235
    %v4237 = vadd.s32 %v4236, 536870912
    %v4238 = vshrl.u32 %v4237, 30
    %v4239 = vshll.u32 %v4238, 30
    %v4240 = vsub.s32 %v4236, %v4239
    %vm4241 = vcmp.lt.s32.totalorder %v4240, 0
    %v4242 = vsub.s32 0, %v4240
    %v4243 = vsel %vm4241, %v4242, %v4240
    %v4244 = vclz %v4243
    %v4245 = vsub.s32 %v4244, 2
    %vm4246 = vcmp.gt.s32.totalorder 0, %v4245
    %v4247 = vsel %vm4246, 0, %v4245
    %v4248 = vsub.s32 32, %v4247
    %v4249 = vshll.u32 %v4240, %v4247
    %v4250 = vshrl.u32 %v4232, %v4248
    %v4251 = vor.u32 %v4249, %v4250
    %v4252 = vsub.s32 4294967266, %v4247
    %v4253 = vadd.s32 %v4252, 127
    %v4254 = vshll.u32 %v4253, 23
    %v4255 = vor.u32 4788187, %v4254
    %v4256 = vand.u32 2147483647, %v4255
    %v4258 = vcvt.s32.f32 %v4251
    %v4259 = vmul.f32 %v4258, %v4256
    %v4260 = vxor.u32 %v4259, 2147483648
    %v4261 = vsel %vm4178, %v4260, %v4259
    %v4262 = vsub.s32 4, %v4238
    %v4263 = vsel %vm4178, %v4262, %v4238
    %v4264 = vsel %vm4177, %v2998, %v4261
    %v4265 = vsel %vm4177, 0, %v4263
    %v4266 = vcosq.f32.pop %v4264
    %v4267 = vsinq.f32.pop %v4264
    %vm4268 = vweird.f32 %v2998
    %v4269 = vand.u32 %v4265, 3
    %vm4270 = vcmp.lt.s32.totalorder %v4269, 2
    %vm4271 = vcmp.eq.s32.totalorder %v4269, 0
    %v4272 = vxor.u32 %v4267, 2147483648
    %v4273 = vsel %vm4271, %v4266, %v4272
    %vm4274 = vcmp.eq.s32.totalorder %v4269, 2
    %v4275 = vxor.u32 %v4266, 2147483648
    %v4276 = vsel %vm4274, %v4275, %v4267
    %v4277 = vsel %vm4270, %v4273, %v4276
    %v4278 = vsel %vm4268, nan, %v4277
    %v4279 = vand.u32 2147483647, %v2999
    %vm4280 = vcmp.le.f32.partialorder %v4279, 0.7853982
    %vm4281 = vcmp.lt.s32.totalorder %v2999, 0
    %v4282 = vand.u32 %v2999, 2139095040
    %v4283 = vshrl.u32 %v4282, 23
    %v4284 = vsub.s32 %v4283, 127
    %v4285 = vand.u32 2147483647, %v2999
    %v4286 = vand.u32 %v4285, 8388607
    %v4287 = vor.u32 %v4286, 8388608
    %v4288 = vsub.s32 0, %v4287
    %v4289 = vadd.s32 %v4284, 1
    %vm4290 = vcmp.gt.s32.totalorder %v4289, 0
    %v4291 = vsel %vm4290, %v4289, 0
    %v4292 = vshrl.u32 %v4291, 5
    %v4293 = vand.u32 %v4291, 31
    %v4294 = vsub.s32 32, %v4293
    %v4295 = vshrl.u32 683565275, %v4294
    %v4296 = vshll.u32 683565275, %v4293
    %v4297 = vshrl.u32 2475754826, %v4294
    %v4298 = vor.u32 %v4296, %v4297
    %v4299 = vshll.u32 2475754826, %v4293
    %v4300 = vshrl.u32 2131351028, %v4294
    %v4301 = vor.u32 %v4299, %v4300
    %v4302 = vshll.u32 2131351028, %v4293
    %v4303 = vshrl.u32 2102212464, %v4294
    %v4304 = vor.u32 %v4302, %v4303
    %v4305 = vshll.u32 2102212464, %v4293
    %v4306 = vshrl.u32 920167782, %v4294
    %v4307 = vor.u32 %v4305, %v4306
    %v4308 = vshll.u32 920167782, %v4293
    %v4309 = vshrl.u32 1326507024, %v4294
    %v4310 = vor.u32 %v4308, %v4309
    %vm4311 = vcmp.lt.s32.totalorder %v4292, 1
    %vm4312 = vcmp.lt.s32.totalorder %v4292, 2
    %vm4313 = vcmp.lt.s32.totalorder %v4292, 3
    %vm4314 = vcmp.lt.s32.totalorder %v4292, 4
    %v4315 = vsel %vm4311, %v4295, %v4298
    %v4316 = vsel %vm4314, %v4304, 2102212464
    %v4317 = vsel %vm4313, %v4301, %v4316
    %v4318 = vsel %vm4312, %v4315, %v4317
    %v4319 = vsel %vm4311, %v4298, %v4301
    %v4320 = vsel %vm4314, %v4307, 920167782
    %v4321 = vsel %vm4313, %v4304, %v4320
    %v4322 = vsel %vm4312, %v4319, %v4321
    %v4323 = vsel %vm4311, %v4301, %v4304
    %v4324 = vsel %vm4314, %v4310, 1326507024
    %v4325 = vsel %vm4313, %v4307, %v4324
    %v4326 = vsel %vm4312, %v4323, %v4325
    %v4327 = vshll.u32 %v4287, 8
    %v4328 = vmul.u32.u64.compose %v4327, %v4326
    %v4329 = vextract.low.u32 %v4328
    %v4330 = vextract.high.u32 %v4328
    %v4331 = vmul.u32.u64.compose %v4327, %v4322
    %v4332 = vextract.low.u32 %v4331
    %v4333 = vextract.high.u32 %v4331
    %v4334 = vmul.u32 %v4327, %v4318
    %v4335 = vadd.s32 %v4330, %v4332
    %vm4336 = vc.u32 %v4330, %v4332
    %v4337 = vadd.s32 %v4333, 1
    %v4338 = vsel %vm4336, %v4337, %v4333
    %v4339 = vadd.s32 %v4334, %v4338
    %v4340 = vadd.s32 %v4339, 536870912
    %v4341 = vshrl.u32 %v4340, 30
    %v4342 = vshll.u32 %v4341, 30
    %v4343 = vsub.s32 %v4339, %v4342
    %vm4344 = vcmp.lt.s32.totalorder %v4343, 0
    %v4345 = vsub.s32 0, %v4343
    %v4346 = vsel %vm4344, %v4345, %v4343
    %v4347 = vclz %v4346
    %v4348 = vsub.s32 %v4347, 2
    %vm4349 = vcmp.gt.s32.totalorder 0, %v4348
    %v4350 = vsel %vm4349, 0, %v4348
    %v4351 = vsub.s32 32, %v4350
    %v4352 = vshll.u32 %v4343, %v4350
    %v4353 = vshrl.u32 %v4335, %v4351
    %v4354 = vor.u32 %v4352, %v4353
    %v4355 = vsub.s32 4294967266, %v4350
    %v4356 = vadd.s32 %v4355, 127
    %v4357 = vshll.u32 %v4356, 23
    %v4358 = vor.u32 4788187, %v4357
    %v4359 = vand.u32 2147483647, %v4358
    %v4361 = vcvt.s32.f32 %v4354
    %v4362 = vmul.f32 %v4361, %v4359
    %v4363 = vxor.u32 %v4362, 2147483648
    %v4364 = vsel %vm4281, %v4363, %v4362
    %v4365 = vsub.s32 4, %v4341
    %v4366 = vsel %vm4281, %v4365, %v4341
    %v4367 = vsel %vm4280, %v2999, %v4364
    %v4368 = vsel %vm4280, 0, %v4366
    %v4369 = vcosq.f32.pop %v4367
    %v4370 = vsinq.f32.pop %v4367
    %vm4371 = vweird.f32 %v2999
    %v4372 = vand.u32 %v4368, 3
    %vm4373 = vcmp.lt.s32.totalorder %v4372, 2
    %vm4374 = vcmp.eq.s32.totalorder %v4372, 0
    %v4375 = vxor.u32 %v4370, 2147483648
    %v4376 = vsel %vm4374, %v4369, %v4375
    %vm4377 = vcmp.eq.s32.totalorder %v4372, 2
    %v4378 = vxor.u32 %v4369, 2147483648
    %v4379 = vsel %vm4377, %v4378, %v4370
    %v4380 = vsel %vm4373, %v4376, %v4379
    %v4381 = vsel %vm4371, nan, %v4380
    %v4382 = vand.u32 2147483647, %v3000
    %vm4383 = vcmp.le.f32.partialorder %v4382, 0.7853982
    %vm4384 = vcmp.lt.s32.totalorder %v3000, 0
    %v4385 = vand.u32 %v3000, 2139095040
    %v4386 = vshrl.u32 %v4385, 23
    %v4387 = vsub.s32 %v4386, 127
    %v4388 = vand.u32 2147483647, %v3000
    %v4389 = vand.u32 %v4388, 8388607
    %v4390 = vor.u32 %v4389, 8388608
    %v4391 = vsub.s32 0, %v4390
    %v4392 = vadd.s32 %v4387, 1
    %vm4393 = vcmp.gt.s32.totalorder %v4392, 0
    %v4394 = vsel %vm4393, %v4392, 0
    %v4395 = vshrl.u32 %v4394, 5
    %v4396 = vand.u32 %v4394, 31
    %v4397 = vsub.s32 32, %v4396
    %v4398 = vshrl.u32 683565275, %v4397
    %v4399 = vshll.u32 683565275, %v4396
    %v4400 = vshrl.u32 2475754826, %v4397
    %v4401 = vor.u32 %v4399, %v4400
    %v4402 = vshll.u32 2475754826, %v4396
    %v4403 = vshrl.u32 2131351028, %v4397
    %v4404 = vor.u32 %v4402, %v4403
    %v4405 = vshll.u32 2131351028, %v4396
    %v4406 = vshrl.u32 2102212464, %v4397
    %v4407 = vor.u32 %v4405, %v4406
    %v4408 = vshll.u32 2102212464, %v4396
    %v4409 = vshrl.u32 920167782, %v4397
    %v4410 = vor.u32 %v4408, %v4409
    %v4411 = vshll.u32 920167782, %v4396
    %v4412 = vshrl.u32 1326507024, %v4397
    %v4413 = vor.u32 %v4411, %v4412
    %vm4414 = vcmp.lt.s32.totalorder %v4395, 1
    %vm4415 = vcmp.lt.s32.totalorder %v4395, 2
    %vm4416 = vcmp.lt.s32.totalorder %v4395, 3
    %vm4417 = vcmp.lt.s32.totalorder %v4395, 4
    %v4418 = vsel %vm4414, %v4398, %v4401
    %v4419 = vsel %vm4417, %v4407, 2102212464
    %v4420 = vsel %vm4416, %v4404, %v4419
    %v4421 = vsel %vm4415, %v4418, %v4420
    %v4422 = vsel %vm4414, %v4401, %v4404
    %v4423 = vsel %vm4417, %v4410, 920167782
    %v4424 = vsel %vm4416, %v4407, %v4423
    %v4425 = vsel %vm4415, %v4422, %v4424
    %v4426 = vsel %vm4414, %v4404, %v4407
    %v4427 = vsel %vm4417, %v4413, 1326507024
    %v4428 = vsel %vm4416, %v4410, %v4427
    %v4429 = vsel %vm4415, %v4426, %v4428
    %v4430 = vshll.u32 %v4390, 8
    %v4431 = vmul.u32.u64.compose %v4430, %v4429
    %v4432 = vextract.low.u32 %v4431
    %v4433 = vextract.high.u32 %v4431
    %v4434 = vmul.u32.u64.compose %v4430, %v4425
    %v4435 = vextract.low.u32 %v4434
    %v4436 = vextract.high.u32 %v4434
    %v4437 = vmul.u32 %v4430, %v4421
    %v4438 = vadd.s32 %v4433, %v4435
    %vm4439 = vc.u32 %v4433, %v4435
    %v4440 = vadd.s32 %v4436, 1
    %v4441 = vsel %vm4439, %v4440, %v4436
    %v4442 = vadd.s32 %v4437, %v4441
    %v4443 = vadd.s32 %v4442, 536870912
    %v4444 = vshrl.u32 %v4443, 30
    %v4445 = vshll.u32 %v4444, 30
    %v4446 = vsub.s32 %v4442, %v4445
    %vm4447 = vcmp.lt.s32.totalorder %v4446, 0
    %v4448 = vsub.s32 0, %v4446
    %v4449 = vsel %vm4447, %v4448, %v4446
    %v4450 = vclz %v4449
    %v4451 = vsub.s32 %v4450, 2
    %vm4452 = vcmp.gt.s32.totalorder 0, %v4451
    %v4453 = vsel %vm4452, 0, %v4451
    %v4454 = vsub.s32 32, %v4453
    %v4455 = vshll.u32 %v4446, %v4453
    %v4456 = vshrl.u32 %v4438, %v4454
    %v4457 = vor.u32 %v4455, %v4456
    %v4458 = vsub.s32 4294967266, %v4453
    %v4459 = vadd.s32 %v4458, 127
    %v4460 = vshll.u32 %v4459, 23
    %v4461 = vor.u32 4788187, %v4460
    %v4462 = vand.u32 2147483647, %v4461
    %v4464 = vcvt.s32.f32 %v4457
    %v4465 = vmul.f32 %v4464, %v4462
    %v4466 = vxor.u32 %v4465, 2147483648
    %v4467 = vsel %vm4384, %v4466, %v4465
    %v4468 = vsub.s32 4, %v4444
    %v4469 = vsel %vm4384, %v4468, %v4444
    %v4470 = vsel %vm4383, %v3000, %v4467
    %v4471 = vsel %vm4383, 0, %v4469
    %v4472 = vcosq.f32.pop %v4470
    %v4473 = vsinq.f32.pop %v4470
    %vm4474 = vweird.f32 %v3000
    %v4475 = vand.u32 %v4471, 3
    %vm4476 = vcmp.lt.s32.totalorder %v4475, 2
    %vm4477 = vcmp.eq.s32.totalorder %v4475, 0
    %v4478 = vxor.u32 %v4473, 2147483648
    %v4479 = vsel %vm4477, %v4472, %v4478
    %vm4480 = vcmp.eq.s32.totalorder %v4475, 2
    %v4481 = vxor.u32 %v4472, 2147483648
    %v4482 = vsel %vm4480, %v4481, %v4473
    %v4483 = vsel %vm4476, %v4479, %v4482
    %v4484 = vsel %vm4474, nan, %v4483
    %v4485 = vand.u32 2147483647, %v3001
    %vm4486 = vcmp.le.f32.partialorder %v4485, 0.7853982
    %vm4487 = vcmp.lt.s32.totalorder %v3001, 0
    %v4488 = vand.u32 %v3001, 2139095040
    %v4489 = vshrl.u32 %v4488, 23
    %v4490 = vsub.s32 %v4489, 127
    %v4491 = vand.u32 2147483647, %v3001
    %v4492 = vand.u32 %v4491, 8388607
    %v4493 = vor.u32 %v4492, 8388608
    %v4494 = vsub.s32 0, %v4493
    %v4495 = vadd.s32 %v4490, 1
    %vm4496 = vcmp.gt.s32.totalorder %v4495, 0
    %v4497 = vsel %vm4496, %v4495, 0
    %v4498 = vshrl.u32 %v4497, 5
    %v4499 = vand.u32 %v4497, 31
    %v4500 = vsub.s32 32, %v4499
    %v4501 = vshrl.u32 683565275, %v4500
    %v4502 = vshll.u32 683565275, %v4499
    %v4503 = vshrl.u32 2475754826, %v4500
    %v4504 = vor.u32 %v4502, %v4503
    %v4505 = vshll.u32 2475754826, %v4499
    %v4506 = vshrl.u32 2131351028, %v4500
    %v4507 = vor.u32 %v4505, %v4506
    %v4508 = vshll.u32 2131351028, %v4499
    %v4509 = vshrl.u32 2102212464, %v4500
    %v4510 = vor.u32 %v4508, %v4509
    %v4511 = vshll.u32 2102212464, %v4499
    %v4512 = vshrl.u32 920167782, %v4500
    %v4513 = vor.u32 %v4511, %v4512
    %v4514 = vshll.u32 920167782, %v4499
    %v4515 = vshrl.u32 1326507024, %v4500
    %v4516 = vor.u32 %v4514, %v4515
    %vm4517 = vcmp.lt.s32.totalorder %v4498, 1
    %vm4518 = vcmp.lt.s32.totalorder %v4498, 2
    %vm4519 = vcmp.lt.s32.totalorder %v4498, 3
    %vm4520 = vcmp.lt.s32.totalorder %v4498, 4
    %v4521 = vsel %vm4517, %v4501, %v4504
    %v4522 = vsel %vm4520, %v4510, 2102212464
    %v4523 = vsel %vm4519, %v4507, %v4522
    %v4524 = vsel %vm4518, %v4521, %v4523
    %v4525 = vsel %vm4517, %v4504, %v4507
    %v4526 = vsel %vm4520, %v4513, 920167782
    %v4527 = vsel %vm4519, %v4510, %v4526
    %v4528 = vsel %vm4518, %v4525, %v4527
    %v4529 = vsel %vm4517, %v4507, %v4510
    %v4530 = vsel %vm4520, %v4516, 1326507024
    %v4531 = vsel %vm4519, %v4513, %v4530
    %v4532 = vsel %vm4518, %v4529, %v4531
    %v4533 = vshll.u32 %v4493, 8
    %v4534 = vmul.u32.u64.compose %v4533, %v4532
    %v4535 = vextract.low.u32 %v4534
    %v4536 = vextract.high.u32 %v4534
    %v4537 = vmul.u32.u64.compose %v4533, %v4528
    %v4538 = vextract.low.u32 %v4537
    %v4539 = vextract.high.u32 %v4537
    %v4540 = vmul.u32 %v4533, %v4524
    %v4541 = vadd.s32 %v4536, %v4538
    %vm4542 = vc.u32 %v4536, %v4538
    %v4543 = vadd.s32 %v4539, 1
    %v4544 = vsel %vm4542, %v4543, %v4539
    %v4545 = vadd.s32 %v4540, %v4544
    %v4546 = vadd.s32 %v4545, 536870912
    %v4547 = vshrl.u32 %v4546, 30
    %v4548 = vshll.u32 %v4547, 30
    %v4549 = vsub.s32 %v4545, %v4548
    %vm4550 = vcmp.lt.s32.totalorder %v4549, 0
    %v4551 = vsub.s32 0, %v4549
    %v4552 = vsel %vm4550, %v4551, %v4549
    %v4553 = vclz %v4552
    %v4554 = vsub.s32 %v4553, 2
    %vm4555 = vcmp.gt.s32.totalorder 0, %v4554
    %v4556 = vsel %vm4555, 0, %v4554
    %v4557 = vsub.s32 32, %v4556
    %v4558 = vshll.u32 %v4549, %v4556
    %v4559 = vshrl.u32 %v4541, %v4557
    %v4560 = vor.u32 %v4558, %v4559
    %v4561 = vsub.s32 4294967266, %v4556
    %v4562 = vadd.s32 %v4561, 127
    %v4563 = vshll.u32 %v4562, 23
    %v4564 = vor.u32 4788187, %v4563
    %v4565 = vand.u32 2147483647, %v4564
    %v4567 = vcvt.s32.f32 %v4560
    %v4568 = vmul.f32 %v4567, %v4565
    %v4569 = vxor.u32 %v4568, 2147483648
    %v4570 = vsel %vm4487, %v4569, %v4568
    %v4571 = vsub.s32 4, %v4547
    %v4572 = vsel %vm4487, %v4571, %v4547
    %v4573 = vsel %vm4486, %v3001, %v4570
    %v4574 = vsel %vm4486, 0, %v4572
    %v4575 = vcosq.f32.pop %v4573
    %v4576 = vsinq.f32.pop %v4573
    %vm4577 = vweird.f32 %v3001
    %v4578 = vand.u32 %v4574, 3
    %vm4579 = vcmp.lt.s32.totalorder %v4578, 2
    %vm4580 = vcmp.eq.s32.totalorder %v4578, 0
    %v4581 = vxor.u32 %v4576, 2147483648
    %v4582 = vsel %vm4580, %v4575, %v4581
    %vm4583 = vcmp.eq.s32.totalorder %v4578, 2
    %v4584 = vxor.u32 %v4575, 2147483648
    %v4585 = vsel %vm4583, %v4584, %v4576
    %v4586 = vsel %vm4579, %v4582, %v4585
    %v4587 = vsel %vm4577, nan, %v4586
    %v4588 = vand.u32 2147483647, %v3002
    %vm4589 = vcmp.le.f32.partialorder %v4588, 0.7853982
    %vm4590 = vcmp.lt.s32.totalorder %v3002, 0
    %v4591 = vand.u32 %v3002, 2139095040
    %v4592 = vshrl.u32 %v4591, 23
    %v4593 = vsub.s32 %v4592, 127
    %v4594 = vand.u32 2147483647, %v3002
    %v4595 = vand.u32 %v4594, 8388607
    %v4596 = vor.u32 %v4595, 8388608
    %v4597 = vsub.s32 0, %v4596
    %v4598 = vadd.s32 %v4593, 1
    %vm4599 = vcmp.gt.s32.totalorder %v4598, 0
    %v4600 = vsel %vm4599, %v4598, 0
    %v4601 = vshrl.u32 %v4600, 5
    %v4602 = vand.u32 %v4600, 31
    %v4603 = vsub.s32 32, %v4602
    %v4604 = vshrl.u32 683565275, %v4603
    %v4605 = vshll.u32 683565275, %v4602
    %v4606 = vshrl.u32 2475754826, %v4603
    %v4607 = vor.u32 %v4605, %v4606
    %v4608 = vshll.u32 2475754826, %v4602
    %v4609 = vshrl.u32 2131351028, %v4603
    %v4610 = vor.u32 %v4608, %v4609
    %v4611 = vshll.u32 2131351028, %v4602
    %v4612 = vshrl.u32 2102212464, %v4603
    %v4613 = vor.u32 %v4611, %v4612
    %v4614 = vshll.u32 2102212464, %v4602
    %v4615 = vshrl.u32 920167782, %v4603
    %v4616 = vor.u32 %v4614, %v4615
    %v4617 = vshll.u32 920167782, %v4602
    %v4618 = vshrl.u32 1326507024, %v4603
    %v4619 = vor.u32 %v4617, %v4618
    %vm4620 = vcmp.lt.s32.totalorder %v4601, 1
    %vm4621 = vcmp.lt.s32.totalorder %v4601, 2
    %vm4622 = vcmp.lt.s32.totalorder %v4601, 3
    %vm4623 = vcmp.lt.s32.totalorder %v4601, 4
    %v4624 = vsel %vm4620, %v4604, %v4607
    %v4625 = vsel %vm4623, %v4613, 2102212464
    %v4626 = vsel %vm4622, %v4610, %v4625
    %v4627 = vsel %vm4621, %v4624, %v4626
    %v4628 = vsel %vm4620, %v4607, %v4610
    %v4629 = vsel %vm4623, %v4616, 920167782
    %v4630 = vsel %vm4622, %v4613, %v4629
    %v4631 = vsel %vm4621, %v4628, %v4630
    %v4632 = vsel %vm4620, %v4610, %v4613
    %v4633 = vsel %vm4623, %v4619, 1326507024
    %v4634 = vsel %vm4622, %v4616, %v4633
    %v4635 = vsel %vm4621, %v4632, %v4634
    %v4636 = vshll.u32 %v4596, 8
    %v4637 = vmul.u32.u64.compose %v4636, %v4635
    %v4638 = vextract.low.u32 %v4637
    %v4639 = vextract.high.u32 %v4637
    %v4640 = vmul.u32.u64.compose %v4636, %v4631
    %v4641 = vextract.low.u32 %v4640
    %v4642 = vextract.high.u32 %v4640
    %v4643 = vmul.u32 %v4636, %v4627
    %v4644 = vadd.s32 %v4639, %v4641
    %vm4645 = vc.u32 %v4639, %v4641
    %v4646 = vadd.s32 %v4642, 1
    %v4647 = vsel %vm4645, %v4646, %v4642
    %v4648 = vadd.s32 %v4643, %v4647
    %v4649 = vadd.s32 %v4648, 536870912
    %v4650 = vshrl.u32 %v4649, 30
    %v4651 = vshll.u32 %v4650, 30
    %v4652 = vsub.s32 %v4648, %v4651
    %vm4653 = vcmp.lt.s32.totalorder %v4652, 0
    %v4654 = vsub.s32 0, %v4652
    %v4655 = vsel %vm4653, %v4654, %v4652
    %v4656 = vclz %v4655
    %v4657 = vsub.s32 %v4656, 2
    %vm4658 = vcmp.gt.s32.totalorder 0, %v4657
    %v4659 = vsel %vm4658, 0, %v4657
    %v4660 = vsub.s32 32, %v4659
    %v4661 = vshll.u32 %v4652, %v4659
    %v4662 = vshrl.u32 %v4644, %v4660
    %v4663 = vor.u32 %v4661, %v4662
    %v4664 = vsub.s32 4294967266, %v4659
    %v4665 = vadd.s32 %v4664, 127
    %v4666 = vshll.u32 %v4665, 23
    %v4667 = vor.u32 4788187, %v4666
    %v4668 = vand.u32 2147483647, %v4667
    %v4670 = vcvt.s32.f32 %v4663
    %v4671 = vmul.f32 %v4670, %v4668
    %v4672 = vxor.u32 %v4671, 2147483648
    %v4673 = vsel %vm4590, %v4672, %v4671
    %v4674 = vsub.s32 4, %v4650
    %v4675 = vsel %vm4590, %v4674, %v4650
    %v4676 = vsel %vm4589, %v3002, %v4673
    %v4677 = vsel %vm4589, 0, %v4675
    %v4678 = vcosq.f32.pop %v4676
    %v4679 = vsinq.f32.pop %v4676
    %vm4680 = vweird.f32 %v3002
    %v4681 = vand.u32 %v4677, 3
    %vm4682 = vcmp.lt.s32.totalorder %v4681, 2
    %vm4683 = vcmp.eq.s32.totalorder %v4681, 0
    %v4684 = vxor.u32 %v4679, 2147483648
    %v4685 = vsel %vm4683, %v4678, %v4684
    %vm4686 = vcmp.eq.s32.totalorder %v4681, 2
    %v4687 = vxor.u32 %v4678, 2147483648
    %v4688 = vsel %vm4686, %v4687, %v4679
    %v4689 = vsel %vm4682, %v4685, %v4688
    %v4690 = vsel %vm4680, nan, %v4689
    %v4699 = vrot.slane %v3969, 1
    %v4700 = vrot.slane %v4072, 1
    %v4701 = vrot.slane %v4175, 1
    %v4702 = vrot.slane %v4278, 1
    %v4703 = vrot.slane %v4381, 1
    %v4704 = vrot.slane %v4484, 1
    %v4705 = vrot.slane %v4587, 1
    %v4706 = vrot.slane %v4690, 1
    %4715 = vst [vmem:[#allocation2 + $0x40] sm:$0x80] %v4699
    %4716 = vst [vmem:[#allocation2 + $0x48] sm:$0x80] %v4700
    %4717 = vst [vmem:[#allocation2 + $0x50] sm:$0x80] %v4701
    %4718 = vst [vmem:[#allocation2 + $0x58] sm:$0x80] %v4702
    %4719 = vst [vmem:[#allocation2 + $0x60] sm:$0x80] %v4703
    %4720 = vst [vmem:[#allocation2 + $0x68] sm:$0x80] %v4704
    %4721 = vst [vmem:[#allocation2 + $0x70] sm:$0x80] %v4705
    %4722 = vst [vmem:[#allocation2 + $0x78] sm:$0x80] %v4706
    %4723 = vst [vmem:[#allocation2 + $0x80] sm:$0x3] %v4699
    %4724 = vst [vmem:[#allocation2 + $0x88] sm:$0x3] %v4700
    %4725 = vst [vmem:[#allocation2 + $0x90] sm:$0x3] %v4701
    %4726 = vst [vmem:[#allocation2 + $0x98] sm:$0x3] %v4702
    %4727 = vst [vmem:[#allocation2 + $0xa0] sm:$0x3] %v4703
    %4728 = vst [vmem:[#allocation2 + $0xa8] sm:$0x3] %v4704
    %4729 = vst [vmem:[#allocation2 + $0xb0] sm:$0x3] %v4705
    %4730 = vst [vmem:[#allocation2 + $0xb8] sm:$0x3] %v4706
    %v4731 = vmul.f32 %v877, 4.0
    %v4732 = vmul.f32 %v878, 4.0
    %v4733 = vmul.f32 %v879, 4.0
    %v4734 = vmul.f32 %v880, 4.0
    %v4735 = vmul.f32 %v881, 4.0
    %v4736 = vmul.f32 %v882, 4.0
    %v4737 = vmul.f32 %v883, 4.0
    %v4738 = vmul.f32 %v884, 4.0
    %v4739 = vand.u32 2147483647, %v4731
    %vm4740 = vcmp.le.f32.partialorder %v4739, 0.7853982
    %vm4741 = vcmp.lt.s32.totalorder %v4731, 0
    %v4742 = vand.u32 %v4731, 2139095040
    %v4743 = vshrl.u32 %v4742, 23
    %v4744 = vsub.s32 %v4743, 127
    %v4745 = vand.u32 2147483647, %v4731
    %v4746 = vand.u32 %v4745, 8388607
    %v4747 = vor.u32 %v4746, 8388608
    %v4748 = vsub.s32 0, %v4747
    %v4749 = vadd.s32 %v4744, 1
    %vm4750 = vcmp.gt.s32.totalorder %v4749, 0
    %v4751 = vsel %vm4750, %v4749, 0
    %v4752 = vshrl.u32 %v4751, 5
    %v4753 = vand.u32 %v4751, 31
    %v4754 = vsub.s32 32, %v4753
    %v4755 = vshrl.u32 683565275, %v4754
    %v4756 = vshll.u32 683565275, %v4753
    %v4757 = vshrl.u32 2475754826, %v4754
    %v4758 = vor.u32 %v4756, %v4757
    %v4759 = vshll.u32 2475754826, %v4753
    %v4760 = vshrl.u32 2131351028, %v4754
    %v4761 = vor.u32 %v4759, %v4760
    %v4762 = vshll.u32 2131351028, %v4753
    %v4763 = vshrl.u32 2102212464, %v4754
    %v4764 = vor.u32 %v4762, %v4763
    %v4765 = vshll.u32 2102212464, %v4753
    %v4766 = vshrl.u32 920167782, %v4754
    %v4767 = vor.u32 %v4765, %v4766
    %v4768 = vshll.u32 920167782, %v4753
    %v4769 = vshrl.u32 1326507024, %v4754
    %v4770 = vor.u32 %v4768, %v4769
    %vm4771 = vcmp.lt.s32.totalorder %v4752, 1
    %vm4772 = vcmp.lt.s32.totalorder %v4752, 2
    %vm4773 = vcmp.lt.s32.totalorder %v4752, 3
    %vm4774 = vcmp.lt.s32.totalorder %v4752, 4
    %v4775 = vsel %vm4771, %v4755, %v4758
    %v4776 = vsel %vm4774, %v4764, 2102212464
    %v4777 = vsel %vm4773, %v4761, %v4776
    %v4778 = vsel %vm4772, %v4775, %v4777
    %v4779 = vsel %vm4771, %v4758, %v4761
    %v4780 = vsel %vm4774, %v4767, 920167782
    %v4781 = vsel %vm4773, %v4764, %v4780
    %v4782 = vsel %vm4772, %v4779, %v4781
    %v4783 = vsel %vm4771, %v4761, %v4764
    %v4784 = vsel %vm4774, %v4770, 1326507024
    %v4785 = vsel %vm4773, %v4767, %v4784
    %v4786 = vsel %vm4772, %v4783, %v4785
    %v4787 = vshll.u32 %v4747, 8
    %v4788 = vmul.u32.u64.compose %v4787, %v4786
    %v4789 = vextract.low.u32 %v4788
    %v4790 = vextract.high.u32 %v4788
    %v4791 = vmul.u32.u64.compose %v4787, %v4782
    %v4792 = vextract.low.u32 %v4791
    %v4793 = vextract.high.u32 %v4791
    %v4794 = vmul.u32 %v4787, %v4778
    %v4795 = vadd.s32 %v4790, %v4792
    %vm4796 = vc.u32 %v4790, %v4792
    %v4797 = vadd.s32 %v4793, 1
    %v4798 = vsel %vm4796, %v4797, %v4793
    %v4799 = vadd.s32 %v4794, %v4798
    %v4800 = vadd.s32 %v4799, 536870912
    %v4801 = vshrl.u32 %v4800, 30
    %v4802 = vshll.u32 %v4801, 30
    %v4803 = vsub.s32 %v4799, %v4802
    %vm4804 = vcmp.lt.s32.totalorder %v4803, 0
    %v4805 = vsub.s32 0, %v4803
    %v4806 = vsel %vm4804, %v4805, %v4803
    %v4807 = vclz %v4806
    %v4808 = vsub.s32 %v4807, 2
    %vm4809 = vcmp.gt.s32.totalorder 0, %v4808
    %v4810 = vsel %vm4809, 0, %v4808
    %v4811 = vsub.s32 32, %v4810
    %v4812 = vshll.u32 %v4803, %v4810
    %v4813 = vshrl.u32 %v4795, %v4811
    %v4814 = vor.u32 %v4812, %v4813
    %v4815 = vsub.s32 4294967266, %v4810
    %v4816 = vadd.s32 %v4815, 127
    %v4817 = vshll.u32 %v4816, 23
    %v4818 = vor.u32 4788187, %v4817
    %v4819 = vand.u32 2147483647, %v4818
    %v4821 = vcvt.s32.f32 %v4814
    %v4822 = vmul.f32 %v4821, %v4819
    %v4823 = vxor.u32 %v4822, 2147483648
    %v4824 = vsel %vm4741, %v4823, %v4822
    %v4825 = vsub.s32 4, %v4801
    %v4826 = vsel %vm4741, %v4825, %v4801
    %v4827 = vsel %vm4740, %v4731, %v4824
    %v4828 = vsel %vm4740, 0, %v4826
    %v4829 = vcosq.f32.pop %v4827
    %v4830 = vsinq.f32.pop %v4827
    %vm4831 = vweird.f32 %v4731
    %v4832 = vadd.s32 %v4828, 3
    %v4833 = vand.u32 %v4832, 3
    %vm4834 = vcmp.lt.s32.totalorder %v4833, 2
    %vm4835 = vcmp.eq.s32.totalorder %v4833, 0
    %v4836 = vxor.u32 %v4830, 2147483648
    %v4837 = vsel %vm4835, %v4829, %v4836
    %vm4838 = vcmp.eq.s32.totalorder %v4833, 2
    %v4839 = vxor.u32 %v4829, 2147483648
    %v4840 = vsel %vm4838, %v4839, %v4830
    %v4841 = vsel %vm4834, %v4837, %v4840
    %v4842 = vsel %vm4831, nan, %v4841
    %v4843 = vand.u32 2147483647, %v4732
    %vm4844 = vcmp.le.f32.partialorder %v4843, 0.7853982
    %vm4845 = vcmp.lt.s32.totalorder %v4732, 0
    %v4846 = vand.u32 %v4732, 2139095040
    %v4847 = vshrl.u32 %v4846, 23
    %v4848 = vsub.s32 %v4847, 127
    %v4849 = vand.u32 2147483647, %v4732
    %v4850 = vand.u32 %v4849, 8388607
    %v4851 = vor.u32 %v4850, 8388608
    %v4852 = vsub.s32 0, %v4851
    %v4853 = vadd.s32 %v4848, 1
    %vm4854 = vcmp.gt.s32.totalorder %v4853, 0
    %v4855 = vsel %vm4854, %v4853, 0
    %v4856 = vshrl.u32 %v4855, 5
    %v4857 = vand.u32 %v4855, 31
    %v4858 = vsub.s32 32, %v4857
    %v4859 = vshrl.u32 683565275, %v4858
    %v4860 = vshll.u32 683565275, %v4857
    %v4861 = vshrl.u32 2475754826, %v4858
    %v4862 = vor.u32 %v4860, %v4861
    %v4863 = vshll.u32 2475754826, %v4857
    %v4864 = vshrl.u32 2131351028, %v4858
    %v4865 = vor.u32 %v4863, %v4864
    %v4866 = vshll.u32 2131351028, %v4857
    %v4867 = vshrl.u32 2102212464, %v4858
    %v4868 = vor.u32 %v4866, %v4867
    %v4869 = vshll.u32 2102212464, %v4857
    %v4870 = vshrl.u32 920167782, %v4858
    %v4871 = vor.u32 %v4869, %v4870
    %v4872 = vshll.u32 920167782, %v4857
    %v4873 = vshrl.u32 1326507024, %v4858
    %v4874 = vor.u32 %v4872, %v4873
    %vm4875 = vcmp.lt.s32.totalorder %v4856, 1
    %vm4876 = vcmp.lt.s32.totalorder %v4856, 2
    %vm4877 = vcmp.lt.s32.totalorder %v4856, 3
    %vm4878 = vcmp.lt.s32.totalorder %v4856, 4
    %v4879 = vsel %vm4875, %v4859, %v4862
    %v4880 = vsel %vm4878, %v4868, 2102212464
    %v4881 = vsel %vm4877, %v4865, %v4880
    %v4882 = vsel %vm4876, %v4879, %v4881
    %v4883 = vsel %vm4875, %v4862, %v4865
    %v4884 = vsel %vm4878, %v4871, 920167782
    %v4885 = vsel %vm4877, %v4868, %v4884
    %v4886 = vsel %vm4876, %v4883, %v4885
    %v4887 = vsel %vm4875, %v4865, %v4868
    %v4888 = vsel %vm4878, %v4874, 1326507024
    %v4889 = vsel %vm4877, %v4871, %v4888
    %v4890 = vsel %vm4876, %v4887, %v4889
    %v4891 = vshll.u32 %v4851, 8
    %v4892 = vmul.u32.u64.compose %v4891, %v4890
    %v4893 = vextract.low.u32 %v4892
    %v4894 = vextract.high.u32 %v4892
    %v4895 = vmul.u32.u64.compose %v4891, %v4886
    %v4896 = vextract.low.u32 %v4895
    %v4897 = vextract.high.u32 %v4895
    %v4898 = vmul.u32 %v4891, %v4882
    %v4899 = vadd.s32 %v4894, %v4896
    %vm4900 = vc.u32 %v4894, %v4896
    %v4901 = vadd.s32 %v4897, 1
    %v4902 = vsel %vm4900, %v4901, %v4897
    %v4903 = vadd.s32 %v4898, %v4902
    %v4904 = vadd.s32 %v4903, 536870912
    %v4905 = vshrl.u32 %v4904, 30
    %v4906 = vshll.u32 %v4905, 30
    %v4907 = vsub.s32 %v4903, %v4906
    %vm4908 = vcmp.lt.s32.totalorder %v4907, 0
    %v4909 = vsub.s32 0, %v4907
    %v4910 = vsel %vm4908, %v4909, %v4907
    %v4911 = vclz %v4910
    %v4912 = vsub.s32 %v4911, 2
    %vm4913 = vcmp.gt.s32.totalorder 0, %v4912
    %v4914 = vsel %vm4913, 0, %v4912
    %v4915 = vsub.s32 32, %v4914
    %v4916 = vshll.u32 %v4907, %v4914
    %v4917 = vshrl.u32 %v4899, %v4915
    %v4918 = vor.u32 %v4916, %v4917
    %v4919 = vsub.s32 4294967266, %v4914
    %v4920 = vadd.s32 %v4919, 127
    %v4921 = vshll.u32 %v4920, 23
    %v4922 = vor.u32 4788187, %v4921
    %v4923 = vand.u32 2147483647, %v4922
    %v4925 = vcvt.s32.f32 %v4918
    %v4926 = vmul.f32 %v4925, %v4923
    %v4927 = vxor.u32 %v4926, 2147483648
    %v4928 = vsel %vm4845, %v4927, %v4926
    %v4929 = vsub.s32 4, %v4905
    %v4930 = vsel %vm4845, %v4929, %v4905
    %v4931 = vsel %vm4844, %v4732, %v4928
    %v4932 = vsel %vm4844, 0, %v4930
    %v4933 = vcosq.f32.pop %v4931
    %v4934 = vsinq.f32.pop %v4931
    %vm4935 = vweird.f32 %v4732
    %v4936 = vadd.s32 %v4932, 3
    %v4937 = vand.u32 %v4936, 3
    %vm4938 = vcmp.lt.s32.totalorder %v4937, 2
    %vm4939 = vcmp.eq.s32.totalorder %v4937, 0
    %v4940 = vxor.u32 %v4934, 2147483648
    %v4941 = vsel %vm4939, %v4933, %v4940
    %vm4942 = vcmp.eq.s32.totalorder %v4937, 2
    %v4943 = vxor.u32 %v4933, 2147483648
    %v4944 = vsel %vm4942, %v4943, %v4934
    %v4945 = vsel %vm4938, %v4941, %v4944
    %v4946 = vsel %vm4935, nan, %v4945
    %v4947 = vand.u32 2147483647, %v4733
    %vm4948 = vcmp.le.f32.partialorder %v4947, 0.7853982
    %vm4949 = vcmp.lt.s32.totalorder %v4733, 0
    %v4950 = vand.u32 %v4733, 2139095040
    %v4951 = vshrl.u32 %v4950, 23
    %v4952 = vsub.s32 %v4951, 127
    %v4953 = vand.u32 2147483647, %v4733
    %v4954 = vand.u32 %v4953, 8388607
    %v4955 = vor.u32 %v4954, 8388608
    %v4956 = vsub.s32 0, %v4955
    %v4957 = vadd.s32 %v4952, 1
    %vm4958 = vcmp.gt.s32.totalorder %v4957, 0
    %v4959 = vsel %vm4958, %v4957, 0
    %v4960 = vshrl.u32 %v4959, 5
    %v4961 = vand.u32 %v4959, 31
    %v4962 = vsub.s32 32, %v4961
    %v4963 = vshrl.u32 683565275, %v4962
    %v4964 = vshll.u32 683565275, %v4961
    %v4965 = vshrl.u32 2475754826, %v4962
    %v4966 = vor.u32 %v4964, %v4965
    %v4967 = vshll.u32 2475754826, %v4961
    %v4968 = vshrl.u32 2131351028, %v4962
    %v4969 = vor.u32 %v4967, %v4968
    %v4970 = vshll.u32 2131351028, %v4961
    %v4971 = vshrl.u32 2102212464, %v4962
    %v4972 = vor.u32 %v4970, %v4971
    %v4973 = vshll.u32 2102212464, %v4961
    %v4974 = vshrl.u32 920167782, %v4962
    %v4975 = vor.u32 %v4973, %v4974
    %v4976 = vshll.u32 920167782, %v4961
    %v4977 = vshrl.u32 1326507024, %v4962
    %v4978 = vor.u32 %v4976, %v4977
    %vm4979 = vcmp.lt.s32.totalorder %v4960, 1
    %vm4980 = vcmp.lt.s32.totalorder %v4960, 2
    %vm4981 = vcmp.lt.s32.totalorder %v4960, 3
    %vm4982 = vcmp.lt.s32.totalorder %v4960, 4
    %v4983 = vsel %vm4979, %v4963, %v4966
    %v4984 = vsel %vm4982, %v4972, 2102212464
    %v4985 = vsel %vm4981, %v4969, %v4984
    %v4986 = vsel %vm4980, %v4983, %v4985
    %v4987 = vsel %vm4979, %v4966, %v4969
    %v4988 = vsel %vm4982, %v4975, 920167782
    %v4989 = vsel %vm4981, %v4972, %v4988
    %v4990 = vsel %vm4980, %v4987, %v4989
    %v4991 = vsel %vm4979, %v4969, %v4972
    %v4992 = vsel %vm4982, %v4978, 1326507024
    %v4993 = vsel %vm4981, %v4975, %v4992
    %v4994 = vsel %vm4980, %v4991, %v4993
    %v4995 = vshll.u32 %v4955, 8
    %v4996 = vmul.u32.u64.compose %v4995, %v4994
    %v4997 = vextract.low.u32 %v4996
    %v4998 = vextract.high.u32 %v4996
    %v4999 = vmul.u32.u64.compose %v4995, %v4990
    %v5000 = vextract.low.u32 %v4999
    %v5001 = vextract.high.u32 %v4999
    %v5002 = vmul.u32 %v4995, %v4986
    %v5003 = vadd.s32 %v4998, %v5000
    %vm5004 = vc.u32 %v4998, %v5000
    %v5005 = vadd.s32 %v5001, 1
    %v5006 = vsel %vm5004, %v5005, %v5001
    %v5007 = vadd.s32 %v5002, %v5006
    %v5008 = vadd.s32 %v5007, 536870912
    %v5009 = vshrl.u32 %v5008, 30
    %v5010 = vshll.u32 %v5009, 30
    %v5011 = vsub.s32 %v5007, %v5010
    %vm5012 = vcmp.lt.s32.totalorder %v5011, 0
    %v5013 = vsub.s32 0, %v5011
    %v5014 = vsel %vm5012, %v5013, %v5011
    %v5015 = vclz %v5014
    %v5016 = vsub.s32 %v5015, 2
    %vm5017 = vcmp.gt.s32.totalorder 0, %v5016
    %v5018 = vsel %vm5017, 0, %v5016
    %v5019 = vsub.s32 32, %v5018
    %v5020 = vshll.u32 %v5011, %v5018
    %v5021 = vshrl.u32 %v5003, %v5019
    %v5022 = vor.u32 %v5020, %v5021
    %v5023 = vsub.s32 4294967266, %v5018
    %v5024 = vadd.s32 %v5023, 127
    %v5025 = vshll.u32 %v5024, 23
    %v5026 = vor.u32 4788187, %v5025
    %v5027 = vand.u32 2147483647, %v5026
    %v5029 = vcvt.s32.f32 %v5022
    %v5030 = vmul.f32 %v5029, %v5027
    %v5031 = vxor.u32 %v5030, 2147483648
    %v5032 = vsel %vm4949, %v5031, %v5030
    %v5033 = vsub.s32 4, %v5009
    %v5034 = vsel %vm4949, %v5033, %v5009
    %v5035 = vsel %vm4948, %v4733, %v5032
    %v5036 = vsel %vm4948, 0, %v5034
    %v5037 = vcosq.f32.pop %v5035
    %v5038 = vsinq.f32.pop %v5035
    %vm5039 = vweird.f32 %v4733
    %v5040 = vadd.s32 %v5036, 3
    %v5041 = vand.u32 %v5040, 3
    %vm5042 = vcmp.lt.s32.totalorder %v5041, 2
    %vm5043 = vcmp.eq.s32.totalorder %v5041, 0
    %v5044 = vxor.u32 %v5038, 2147483648
    %v5045 = vsel %vm5043, %v5037, %v5044
    %vm5046 = vcmp.eq.s32.totalorder %v5041, 2
    %v5047 = vxor.u32 %v5037, 2147483648
    %v5048 = vsel %vm5046, %v5047, %v5038
    %v5049 = vsel %vm5042, %v5045, %v5048
    %v5050 = vsel %vm5039, nan, %v5049
    %v5051 = vand.u32 2147483647, %v4734
    %vm5052 = vcmp.le.f32.partialorder %v5051, 0.7853982
    %vm5053 = vcmp.lt.s32.totalorder %v4734, 0
    %v5054 = vand.u32 %v4734, 2139095040
    %v5055 = vshrl.u32 %v5054, 23
    %v5056 = vsub.s32 %v5055, 127
    %v5057 = vand.u32 2147483647, %v4734
    %v5058 = vand.u32 %v5057, 8388607
    %v5059 = vor.u32 %v5058, 8388608
    %v5060 = vsub.s32 0, %v5059
    %v5061 = vadd.s32 %v5056, 1
    %vm5062 = vcmp.gt.s32.totalorder %v5061, 0
    %v5063 = vsel %vm5062, %v5061, 0
    %v5064 = vshrl.u32 %v5063, 5
    %v5065 = vand.u32 %v5063, 31
    %v5066 = vsub.s32 32, %v5065
    %v5067 = vshrl.u32 683565275, %v5066
    %v5068 = vshll.u32 683565275, %v5065
    %v5069 = vshrl.u32 2475754826, %v5066
    %v5070 = vor.u32 %v5068, %v5069
    %v5071 = vshll.u32 2475754826, %v5065
    %v5072 = vshrl.u32 2131351028, %v5066
    %v5073 = vor.u32 %v5071, %v5072
    %v5074 = vshll.u32 2131351028, %v5065
    %v5075 = vshrl.u32 2102212464, %v5066
    %v5076 = vor.u32 %v5074, %v5075
    %v5077 = vshll.u32 2102212464, %v5065
    %v5078 = vshrl.u32 920167782, %v5066
    %v5079 = vor.u32 %v5077, %v5078
    %v5080 = vshll.u32 920167782, %v5065
    %v5081 = vshrl.u32 1326507024, %v5066
    %v5082 = vor.u32 %v5080, %v5081
    %vm5083 = vcmp.lt.s32.totalorder %v5064, 1
    %vm5084 = vcmp.lt.s32.totalorder %v5064, 2
    %vm5085 = vcmp.lt.s32.totalorder %v5064, 3
    %vm5086 = vcmp.lt.s32.totalorder %v5064, 4
    %v5087 = vsel %vm5083, %v5067, %v5070
    %v5088 = vsel %vm5086, %v5076, 2102212464
    %v5089 = vsel %vm5085, %v5073, %v5088
    %v5090 = vsel %vm5084, %v5087, %v5089
    %v5091 = vsel %vm5083, %v5070, %v5073
    %v5092 = vsel %vm5086, %v5079, 920167782
    %v5093 = vsel %vm5085, %v5076, %v5092
    %v5094 = vsel %vm5084, %v5091, %v5093
    %v5095 = vsel %vm5083, %v5073, %v5076
    %v5096 = vsel %vm5086, %v5082, 1326507024
    %v5097 = vsel %vm5085, %v5079, %v5096
    %v5098 = vsel %vm5084, %v5095, %v5097
    %v5099 = vshll.u32 %v5059, 8
    %v5100 = vmul.u32.u64.compose %v5099, %v5098
    %v5101 = vextract.low.u32 %v5100
    %v5102 = vextract.high.u32 %v5100
    %v5103 = vmul.u32.u64.compose %v5099, %v5094
    %v5104 = vextract.low.u32 %v5103
    %v5105 = vextract.high.u32 %v5103
    %v5106 = vmul.u32 %v5099, %v5090
    %v5107 = vadd.s32 %v5102, %v5104
    %vm5108 = vc.u32 %v5102, %v5104
    %v5109 = vadd.s32 %v5105, 1
    %v5110 = vsel %vm5108, %v5109, %v5105
    %v5111 = vadd.s32 %v5106, %v5110
    %v5112 = vadd.s32 %v5111, 536870912
    %v5113 = vshrl.u32 %v5112, 30
    %v5114 = vshll.u32 %v5113, 30
    %v5115 = vsub.s32 %v5111, %v5114
    %vm5116 = vcmp.lt.s32.totalorder %v5115, 0
    %v5117 = vsub.s32 0, %v5115
    %v5118 = vsel %vm5116, %v5117, %v5115
    %v5119 = vclz %v5118
    %v5120 = vsub.s32 %v5119, 2
    %vm5121 = vcmp.gt.s32.totalorder 0, %v5120
    %v5122 = vsel %vm5121, 0, %v5120
    %v5123 = vsub.s32 32, %v5122
    %v5124 = vshll.u32 %v5115, %v5122
    %v5125 = vshrl.u32 %v5107, %v5123
    %v5126 = vor.u32 %v5124, %v5125
    %v5127 = vsub.s32 4294967266, %v5122
    %v5128 = vadd.s32 %v5127, 127
    %v5129 = vshll.u32 %v5128, 23
    %v5130 = vor.u32 4788187, %v5129
    %v5131 = vand.u32 2147483647, %v5130
    %v5133 = vcvt.s32.f32 %v5126
    %v5134 = vmul.f32 %v5133, %v5131
    %v5135 = vxor.u32 %v5134, 2147483648
    %v5136 = vsel %vm5053, %v5135, %v5134
    %v5137 = vsub.s32 4, %v5113
    %v5138 = vsel %vm5053, %v5137, %v5113
    %v5139 = vsel %vm5052, %v4734, %v5136
    %v5140 = vsel %vm5052, 0, %v5138
    %v5141 = vcosq.f32.pop %v5139
    %v5142 = vsinq.f32.pop %v5139
    %vm5143 = vweird.f32 %v4734
    %v5144 = vadd.s32 %v5140, 3
    %v5145 = vand.u32 %v5144, 3
    %vm5146 = vcmp.lt.s32.totalorder %v5145, 2
    %vm5147 = vcmp.eq.s32.totalorder %v5145, 0
    %v5148 = vxor.u32 %v5142, 2147483648
    %v5149 = vsel %vm5147, %v5141, %v5148
    %vm5150 = vcmp.eq.s32.totalorder %v5145, 2
    %v5151 = vxor.u32 %v5141, 2147483648
    %v5152 = vsel %vm5150, %v5151, %v5142
    %v5153 = vsel %vm5146, %v5149, %v5152
    %v5154 = vsel %vm5143, nan, %v5153
    %v5155 = vand.u32 2147483647, %v4735
    %vm5156 = vcmp.le.f32.partialorder %v5155, 0.7853982
    %vm5157 = vcmp.lt.s32.totalorder %v4735, 0
    %v5158 = vand.u32 %v4735, 2139095040
    %v5159 = vshrl.u32 %v5158, 23
    %v5160 = vsub.s32 %v5159, 127
    %v5161 = vand.u32 2147483647, %v4735
    %v5162 = vand.u32 %v5161, 8388607
    %v5163 = vor.u32 %v5162, 8388608
    %v5164 = vsub.s32 0, %v5163
    %v5165 = vadd.s32 %v5160, 1
    %vm5166 = vcmp.gt.s32.totalorder %v5165, 0
    %v5167 = vsel %vm5166, %v5165, 0
    %v5168 = vshrl.u32 %v5167, 5
    %v5169 = vand.u32 %v5167, 31
    %v5170 = vsub.s32 32, %v5169
    %v5171 = vshrl.u32 683565275, %v5170
    %v5172 = vshll.u32 683565275, %v5169
    %v5173 = vshrl.u32 2475754826, %v5170
    %v5174 = vor.u32 %v5172, %v5173
    %v5175 = vshll.u32 2475754826, %v5169
    %v5176 = vshrl.u32 2131351028, %v5170
    %v5177 = vor.u32 %v5175, %v5176
    %v5178 = vshll.u32 2131351028, %v5169
    %v5179 = vshrl.u32 2102212464, %v5170
    %v5180 = vor.u32 %v5178, %v5179
    %v5181 = vshll.u32 2102212464, %v5169
    %v5182 = vshrl.u32 920167782, %v5170
    %v5183 = vor.u32 %v5181, %v5182
    %v5184 = vshll.u32 920167782, %v5169
    %v5185 = vshrl.u32 1326507024, %v5170
    %v5186 = vor.u32 %v5184, %v5185
    %vm5187 = vcmp.lt.s32.totalorder %v5168, 1
    %vm5188 = vcmp.lt.s32.totalorder %v5168, 2
    %vm5189 = vcmp.lt.s32.totalorder %v5168, 3
    %vm5190 = vcmp.lt.s32.totalorder %v5168, 4
    %v5191 = vsel %vm5187, %v5171, %v5174
    %v5192 = vsel %vm5190, %v5180, 2102212464
    %v5193 = vsel %vm5189, %v5177, %v5192
    %v5194 = vsel %vm5188, %v5191, %v5193
    %v5195 = vsel %vm5187, %v5174, %v5177
    %v5196 = vsel %vm5190, %v5183, 920167782
    %v5197 = vsel %vm5189, %v5180, %v5196
    %v5198 = vsel %vm5188, %v5195, %v5197
    %v5199 = vsel %vm5187, %v5177, %v5180
    %v5200 = vsel %vm5190, %v5186, 1326507024
    %v5201 = vsel %vm5189, %v5183, %v5200
    %v5202 = vsel %vm5188, %v5199, %v5201
    %v5203 = vshll.u32 %v5163, 8
    %v5204 = vmul.u32.u64.compose %v5203, %v5202
    %v5205 = vextract.low.u32 %v5204
    %v5206 = vextract.high.u32 %v5204
    %v5207 = vmul.u32.u64.compose %v5203, %v5198
    %v5208 = vextract.low.u32 %v5207
    %v5209 = vextract.high.u32 %v5207
    %v5210 = vmul.u32 %v5203, %v5194
    %v5211 = vadd.s32 %v5206, %v5208
    %vm5212 = vc.u32 %v5206, %v5208
    %v5213 = vadd.s32 %v5209, 1
    %v5214 = vsel %vm5212, %v5213, %v5209
    %v5215 = vadd.s32 %v5210, %v5214
    %v5216 = vadd.s32 %v5215, 536870912
    %v5217 = vshrl.u32 %v5216, 30
    %v5218 = vshll.u32 %v5217, 30
    %v5219 = vsub.s32 %v5215, %v5218
    %vm5220 = vcmp.lt.s32.totalorder %v5219, 0
    %v5221 = vsub.s32 0, %v5219
    %v5222 = vsel %vm5220, %v5221, %v5219
    %v5223 = vclz %v5222
    %v5224 = vsub.s32 %v5223, 2
    %vm5225 = vcmp.gt.s32.totalorder 0, %v5224
    %v5226 = vsel %vm5225, 0, %v5224
    %v5227 = vsub.s32 32, %v5226
    %v5228 = vshll.u32 %v5219, %v5226
    %v5229 = vshrl.u32 %v5211, %v5227
    %v5230 = vor.u32 %v5228, %v5229
    %v5231 = vsub.s32 4294967266, %v5226
    %v5232 = vadd.s32 %v5231, 127
    %v5233 = vshll.u32 %v5232, 23
    %v5234 = vor.u32 4788187, %v5233
    %v5235 = vand.u32 2147483647, %v5234
    %v5237 = vcvt.s32.f32 %v5230
    %v5238 = vmul.f32 %v5237, %v5235
    %v5239 = vxor.u32 %v5238, 2147483648
    %v5240 = vsel %vm5157, %v5239, %v5238
    %v5241 = vsub.s32 4, %v5217
    %v5242 = vsel %vm5157, %v5241, %v5217
    %v5243 = vsel %vm5156, %v4735, %v5240
    %v5244 = vsel %vm5156, 0, %v5242
    %v5245 = vcosq.f32.pop %v5243
    %v5246 = vsinq.f32.pop %v5243
    %vm5247 = vweird.f32 %v4735
    %v5248 = vadd.s32 %v5244, 3
    %v5249 = vand.u32 %v5248, 3
    %vm5250 = vcmp.lt.s32.totalorder %v5249, 2
    %vm5251 = vcmp.eq.s32.totalorder %v5249, 0
    %v5252 = vxor.u32 %v5246, 2147483648
    %v5253 = vsel %vm5251, %v5245, %v5252
    %vm5254 = vcmp.eq.s32.totalorder %v5249, 2
    %v5255 = vxor.u32 %v5245, 2147483648
    %v5256 = vsel %vm5254, %v5255, %v5246
    %v5257 = vsel %vm5250, %v5253, %v5256
    %v5258 = vsel %vm5247, nan, %v5257
    %v5259 = vand.u32 2147483647, %v4736
    %vm5260 = vcmp.le.f32.partialorder %v5259, 0.7853982
    %vm5261 = vcmp.lt.s32.totalorder %v4736, 0
    %v5262 = vand.u32 %v4736, 2139095040
    %v5263 = vshrl.u32 %v5262, 23
    %v5264 = vsub.s32 %v5263, 127
    %v5265 = vand.u32 2147483647, %v4736
    %v5266 = vand.u32 %v5265, 8388607
    %v5267 = vor.u32 %v5266, 8388608
    %v5268 = vsub.s32 0, %v5267
    %v5269 = vadd.s32 %v5264, 1
    %vm5270 = vcmp.gt.s32.totalorder %v5269, 0
    %v5271 = vsel %vm5270, %v5269, 0
    %v5272 = vshrl.u32 %v5271, 5
    %v5273 = vand.u32 %v5271, 31
    %v5274 = vsub.s32 32, %v5273
    %v5275 = vshrl.u32 683565275, %v5274
    %v5276 = vshll.u32 683565275, %v5273
    %v5277 = vshrl.u32 2475754826, %v5274
    %v5278 = vor.u32 %v5276, %v5277
    %v5279 = vshll.u32 2475754826, %v5273
    %v5280 = vshrl.u32 2131351028, %v5274
    %v5281 = vor.u32 %v5279, %v5280
    %v5282 = vshll.u32 2131351028, %v5273
    %v5283 = vshrl.u32 2102212464, %v5274
    %v5284 = vor.u32 %v5282, %v5283
    %v5285 = vshll.u32 2102212464, %v5273
    %v5286 = vshrl.u32 920167782, %v5274
    %v5287 = vor.u32 %v5285, %v5286
    %v5288 = vshll.u32 920167782, %v5273
    %v5289 = vshrl.u32 1326507024, %v5274
    %v5290 = vor.u32 %v5288, %v5289
    %vm5291 = vcmp.lt.s32.totalorder %v5272, 1
    %vm5292 = vcmp.lt.s32.totalorder %v5272, 2
    %vm5293 = vcmp.lt.s32.totalorder %v5272, 3
    %vm5294 = vcmp.lt.s32.totalorder %v5272, 4
    %v5295 = vsel %vm5291, %v5275, %v5278
    %v5296 = vsel %vm5294, %v5284, 2102212464
    %v5297 = vsel %vm5293, %v5281, %v5296
    %v5298 = vsel %vm5292, %v5295, %v5297
    %v5299 = vsel %vm5291, %v5278, %v5281
    %v5300 = vsel %vm5294, %v5287, 920167782
    %v5301 = vsel %vm5293, %v5284, %v5300
    %v5302 = vsel %vm5292, %v5299, %v5301
    %v5303 = vsel %vm5291, %v5281, %v5284
    %v5304 = vsel %vm5294, %v5290, 1326507024
    %v5305 = vsel %vm5293, %v5287, %v5304
    %v5306 = vsel %vm5292, %v5303, %v5305
    %v5307 = vshll.u32 %v5267, 8
    %v5308 = vmul.u32.u64.compose %v5307, %v5306
    %v5309 = vextract.low.u32 %v5308
    %v5310 = vextract.high.u32 %v5308
    %v5311 = vmul.u32.u64.compose %v5307, %v5302
    %v5312 = vextract.low.u32 %v5311
    %v5313 = vextract.high.u32 %v5311
    %v5314 = vmul.u32 %v5307, %v5298
    %v5315 = vadd.s32 %v5310, %v5312
    %vm5316 = vc.u32 %v5310, %v5312
    %v5317 = vadd.s32 %v5313, 1
    %v5318 = vsel %vm5316, %v5317, %v5313
    %v5319 = vadd.s32 %v5314, %v5318
    %v5320 = vadd.s32 %v5319, 536870912
    %v5321 = vshrl.u32 %v5320, 30
    %v5322 = vshll.u32 %v5321, 30
    %v5323 = vsub.s32 %v5319, %v5322
    %vm5324 = vcmp.lt.s32.totalorder %v5323, 0
    %v5325 = vsub.s32 0, %v5323
    %v5326 = vsel %vm5324, %v5325, %v5323
    %v5327 = vclz %v5326
    %v5328 = vsub.s32 %v5327, 2
    %vm5329 = vcmp.gt.s32.totalorder 0, %v5328
    %v5330 = vsel %vm5329, 0, %v5328
    %v5331 = vsub.s32 32, %v5330
    %v5332 = vshll.u32 %v5323, %v5330
    %v5333 = vshrl.u32 %v5315, %v5331
    %v5334 = vor.u32 %v5332, %v5333
    %v5335 = vsub.s32 4294967266, %v5330
    %v5336 = vadd.s32 %v5335, 127
    %v5337 = vshll.u32 %v5336, 23
    %v5338 = vor.u32 4788187, %v5337
    %v5339 = vand.u32 2147483647, %v5338
    %v5341 = vcvt.s32.f32 %v5334
    %v5342 = vmul.f32 %v5341, %v5339
    %v5343 = vxor.u32 %v5342, 2147483648
    %v5344 = vsel %vm5261, %v5343, %v5342
    %v5345 = vsub.s32 4, %v5321
    %v5346 = vsel %vm5261, %v5345, %v5321
    %v5347 = vsel %vm5260, %v4736, %v5344
    %v5348 = vsel %vm5260, 0, %v5346
    %v5349 = vcosq.f32.pop %v5347
    %v5350 = vsinq.f32.pop %v5347
    %vm5351 = vweird.f32 %v4736
    %v5352 = vadd.s32 %v5348, 3
    %v5353 = vand.u32 %v5352, 3
    %vm5354 = vcmp.lt.s32.totalorder %v5353, 2
    %vm5355 = vcmp.eq.s32.totalorder %v5353, 0
    %v5356 = vxor.u32 %v5350, 2147483648
    %v5357 = vsel %vm5355, %v5349, %v5356
    %vm5358 = vcmp.eq.s32.totalorder %v5353, 2
    %v5359 = vxor.u32 %v5349, 2147483648
    %v5360 = vsel %vm5358, %v5359, %v5350
    %v5361 = vsel %vm5354, %v5357, %v5360
    %v5362 = vsel %vm5351, nan, %v5361
    %v5363 = vand.u32 2147483647, %v4737
    %vm5364 = vcmp.le.f32.partialorder %v5363, 0.7853982
    %vm5365 = vcmp.lt.s32.totalorder %v4737, 0
    %v5366 = vand.u32 %v4737, 2139095040
    %v5367 = vshrl.u32 %v5366, 23
    %v5368 = vsub.s32 %v5367, 127
    %v5369 = vand.u32 2147483647, %v4737
    %v5370 = vand.u32 %v5369, 8388607
    %v5371 = vor.u32 %v5370, 8388608
    %v5372 = vsub.s32 0, %v5371
    %v5373 = vadd.s32 %v5368, 1
    %vm5374 = vcmp.gt.s32.totalorder %v5373, 0
    %v5375 = vsel %vm5374, %v5373, 0
    %v5376 = vshrl.u32 %v5375, 5
    %v5377 = vand.u32 %v5375, 31
    %v5378 = vsub.s32 32, %v5377
    %v5379 = vshrl.u32 683565275, %v5378
    %v5380 = vshll.u32 683565275, %v5377
    %v5381 = vshrl.u32 2475754826, %v5378
    %v5382 = vor.u32 %v5380, %v5381
    %v5383 = vshll.u32 2475754826, %v5377
    %v5384 = vshrl.u32 2131351028, %v5378
    %v5385 = vor.u32 %v5383, %v5384
    %v5386 = vshll.u32 2131351028, %v5377
    %v5387 = vshrl.u32 2102212464, %v5378
    %v5388 = vor.u32 %v5386, %v5387
    %v5389 = vshll.u32 2102212464, %v5377
    %v5390 = vshrl.u32 920167782, %v5378
    %v5391 = vor.u32 %v5389, %v5390
    %v5392 = vshll.u32 920167782, %v5377
    %v5393 = vshrl.u32 1326507024, %v5378
    %v5394 = vor.u32 %v5392, %v5393
    %vm5395 = vcmp.lt.s32.totalorder %v5376, 1
    %vm5396 = vcmp.lt.s32.totalorder %v5376, 2
    %vm5397 = vcmp.lt.s32.totalorder %v5376, 3
    %vm5398 = vcmp.lt.s32.totalorder %v5376, 4
    %v5399 = vsel %vm5395, %v5379, %v5382
    %v5400 = vsel %vm5398, %v5388, 2102212464
    %v5401 = vsel %vm5397, %v5385, %v5400
    %v5402 = vsel %vm5396, %v5399, %v5401
    %v5403 = vsel %vm5395, %v5382, %v5385
    %v5404 = vsel %vm5398, %v5391, 920167782
    %v5405 = vsel %vm5397, %v5388, %v5404
    %v5406 = vsel %vm5396, %v5403, %v5405
    %v5407 = vsel %vm5395, %v5385, %v5388
    %v5408 = vsel %vm5398, %v5394, 1326507024
    %v5409 = vsel %vm5397, %v5391, %v5408
    %v5410 = vsel %vm5396, %v5407, %v5409
    %v5411 = vshll.u32 %v5371, 8
    %v5412 = vmul.u32.u64.compose %v5411, %v5410
    %v5413 = vextract.low.u32 %v5412
    %v5414 = vextract.high.u32 %v5412
    %v5415 = vmul.u32.u64.compose %v5411, %v5406
    %v5416 = vextract.low.u32 %v5415
    %v5417 = vextract.high.u32 %v5415
    %v5418 = vmul.u32 %v5411, %v5402
    %v5419 = vadd.s32 %v5414, %v5416
    %vm5420 = vc.u32 %v5414, %v5416
    %v5421 = vadd.s32 %v5417, 1
    %v5422 = vsel %vm5420, %v5421, %v5417
    %v5423 = vadd.s32 %v5418, %v5422
    %v5424 = vadd.s32 %v5423, 536870912
    %v5425 = vshrl.u32 %v5424, 30
    %v5426 = vshll.u32 %v5425, 30
    %v5427 = vsub.s32 %v5423, %v5426
    %vm5428 = vcmp.lt.s32.totalorder %v5427, 0
    %v5429 = vsub.s32 0, %v5427
    %v5430 = vsel %vm5428, %v5429, %v5427
    %v5431 = vclz %v5430
    %v5432 = vsub.s32 %v5431, 2
    %vm5433 = vcmp.gt.s32.totalorder 0, %v5432
    %v5434 = vsel %vm5433, 0, %v5432
    %v5435 = vsub.s32 32, %v5434
    %v5436 = vshll.u32 %v5427, %v5434
    %v5437 = vshrl.u32 %v5419, %v5435
    %v5438 = vor.u32 %v5436, %v5437
    %v5439 = vsub.s32 4294967266, %v5434
    %v5440 = vadd.s32 %v5439, 127
    %v5441 = vshll.u32 %v5440, 23
    %v5442 = vor.u32 4788187, %v5441
    %v5443 = vand.u32 2147483647, %v5442
    %v5445 = vcvt.s32.f32 %v5438
    %v5446 = vmul.f32 %v5445, %v5443
    %v5447 = vxor.u32 %v5446, 2147483648
    %v5448 = vsel %vm5365, %v5447, %v5446
    %v5449 = vsub.s32 4, %v5425
    %v5450 = vsel %vm5365, %v5449, %v5425
    %v5451 = vsel %vm5364, %v4737, %v5448
    %v5452 = vsel %vm5364, 0, %v5450
    %v5453 = vcosq.f32.pop %v5451
    %v5454 = vsinq.f32.pop %v5451
    %vm5455 = vweird.f32 %v4737
    %v5456 = vadd.s32 %v5452, 3
    %v5457 = vand.u32 %v5456, 3
    %vm5458 = vcmp.lt.s32.totalorder %v5457, 2
    %vm5459 = vcmp.eq.s32.totalorder %v5457, 0
    %v5460 = vxor.u32 %v5454, 2147483648
    %v5461 = vsel %vm5459, %v5453, %v5460
    %vm5462 = vcmp.eq.s32.totalorder %v5457, 2
    %v5463 = vxor.u32 %v5453, 2147483648
    %v5464 = vsel %vm5462, %v5463, %v5454
    %v5465 = vsel %vm5458, %v5461, %v5464
    %v5466 = vsel %vm5455, nan, %v5465
    %v5467 = vand.u32 2147483647, %v4738
    %vm5468 = vcmp.le.f32.partialorder %v5467, 0.7853982
    %vm5469 = vcmp.lt.s32.totalorder %v4738, 0
    %v5470 = vand.u32 %v4738, 2139095040
    %v5471 = vshrl.u32 %v5470, 23
    %v5472 = vsub.s32 %v5471, 127
    %v5473 = vand.u32 2147483647, %v4738
    %v5474 = vand.u32 %v5473, 8388607
    %v5475 = vor.u32 %v5474, 8388608
    %v5476 = vsub.s32 0, %v5475
    %v5477 = vadd.s32 %v5472, 1
    %vm5478 = vcmp.gt.s32.totalorder %v5477, 0
    %v5479 = vsel %vm5478, %v5477, 0
    %v5480 = vshrl.u32 %v5479, 5
    %v5481 = vand.u32 %v5479, 31
    %v5482 = vsub.s32 32, %v5481
    %v5483 = vshrl.u32 683565275, %v5482
    %v5484 = vshll.u32 683565275, %v5481
    %v5485 = vshrl.u32 2475754826, %v5482
    %v5486 = vor.u32 %v5484, %v5485
    %v5487 = vshll.u32 2475754826, %v5481
    %v5488 = vshrl.u32 2131351028, %v5482
    %v5489 = vor.u32 %v5487, %v5488
    %v5490 = vshll.u32 2131351028, %v5481
    %v5491 = vshrl.u32 2102212464, %v5482
    %v5492 = vor.u32 %v5490, %v5491
    %v5493 = vshll.u32 2102212464, %v5481
    %v5494 = vshrl.u32 920167782, %v5482
    %v5495 = vor.u32 %v5493, %v5494
    %v5496 = vshll.u32 920167782, %v5481
    %v5497 = vshrl.u32 1326507024, %v5482
    %v5498 = vor.u32 %v5496, %v5497
    %vm5499 = vcmp.lt.s32.totalorder %v5480, 1
    %vm5500 = vcmp.lt.s32.totalorder %v5480, 2
    %vm5501 = vcmp.lt.s32.totalorder %v5480, 3
    %vm5502 = vcmp.lt.s32.totalorder %v5480, 4
    %v5503 = vsel %vm5499, %v5483, %v5486
    %v5504 = vsel %vm5502, %v5492, 2102212464
    %v5505 = vsel %vm5501, %v5489, %v5504
    %v5506 = vsel %vm5500, %v5503, %v5505
    %v5507 = vsel %vm5499, %v5486, %v5489
    %v5508 = vsel %vm5502, %v5495, 920167782
    %v5509 = vsel %vm5501, %v5492, %v5508
    %v5510 = vsel %vm5500, %v5507, %v5509
    %v5511 = vsel %vm5499, %v5489, %v5492
    %v5512 = vsel %vm5502, %v5498, 1326507024
    %v5513 = vsel %vm5501, %v5495, %v5512
    %v5514 = vsel %vm5500, %v5511, %v5513
    %v5515 = vshll.u32 %v5475, 8
    %v5516 = vmul.u32.u64.compose %v5515, %v5514
    %v5517 = vextract.low.u32 %v5516
    %v5518 = vextract.high.u32 %v5516
    %v5519 = vmul.u32.u64.compose %v5515, %v5510
    %v5520 = vextract.low.u32 %v5519
    %v5521 = vextract.high.u32 %v5519
    %v5522 = vmul.u32 %v5515, %v5506
    %v5523 = vadd.s32 %v5518, %v5520
    %vm5524 = vc.u32 %v5518, %v5520
    %v5525 = vadd.s32 %v5521, 1
    %v5526 = vsel %vm5524, %v5525, %v5521
    %v5527 = vadd.s32 %v5522, %v5526
    %v5528 = vadd.s32 %v5527, 536870912
    %v5529 = vshrl.u32 %v5528, 30
    %v5530 = vshll.u32 %v5529, 30
    %v5531 = vsub.s32 %v5527, %v5530
    %vm5532 = vcmp.lt.s32.totalorder %v5531, 0
    %v5533 = vsub.s32 0, %v5531
    %v5534 = vsel %vm5532, %v5533, %v5531
    %v5535 = vclz %v5534
    %v5536 = vsub.s32 %v5535, 2
    %vm5537 = vcmp.gt.s32.totalorder 0, %v5536
    %v5538 = vsel %vm5537, 0, %v5536
    %v5539 = vsub.s32 32, %v5538
    %v5540 = vshll.u32 %v5531, %v5538
    %v5541 = vshrl.u32 %v5523, %v5539
    %v5542 = vor.u32 %v5540, %v5541
    %v5543 = vsub.s32 4294967266, %v5538
    %v5544 = vadd.s32 %v5543, 127
    %v5545 = vshll.u32 %v5544, 23
    %v5546 = vor.u32 4788187, %v5545
    %v5547 = vand.u32 2147483647, %v5546
    %v5549 = vcvt.s32.f32 %v5542
    %v5550 = vmul.f32 %v5549, %v5547
    %v5551 = vxor.u32 %v5550, 2147483648
    %v5552 = vsel %vm5469, %v5551, %v5550
    %v5553 = vsub.s32 4, %v5529
    %v5554 = vsel %vm5469, %v5553, %v5529
    %v5555 = vsel %vm5468, %v4738, %v5552
    %v5556 = vsel %vm5468, 0, %v5554
    %v5557 = vcosq.f32.pop %v5555
    %v5558 = vsinq.f32.pop %v5555
    %vm5559 = vweird.f32 %v4738
    %v5560 = vadd.s32 %v5556, 3
    %v5561 = vand.u32 %v5560, 3
    %vm5562 = vcmp.lt.s32.totalorder %v5561, 2
    %vm5563 = vcmp.eq.s32.totalorder %v5561, 0
    %v5564 = vxor.u32 %v5558, 2147483648
    %v5565 = vsel %vm5563, %v5557, %v5564
    %vm5566 = vcmp.eq.s32.totalorder %v5561, 2
    %v5567 = vxor.u32 %v5557, 2147483648
    %v5568 = vsel %vm5566, %v5567, %v5558
    %v5569 = vsel %vm5562, %v5565, %v5568
    %v5570 = vsel %vm5559, nan, %v5569
    %v5579 = vrot.slane %v4842, 6
    %v5580 = vrot.slane %v4946, 6
    %v5581 = vrot.slane %v5050, 6
    %v5582 = vrot.slane %v5154, 6
    %v5583 = vrot.slane %v5258, 6
    %v5584 = vrot.slane %v5362, 6
    %v5585 = vrot.slane %v5466, 6
    %v5586 = vrot.slane %v5570, 6
    %5595 = vst [vmem:[#allocation2 + $0x80] sm:$0x1c] %v5579
    %5596 = vst [vmem:[#allocation2 + $0x88] sm:$0x1c] %v5580
    %5597 = vst [vmem:[#allocation2 + $0x90] sm:$0x1c] %v5581
    %5598 = vst [vmem:[#allocation2 + $0x98] sm:$0x1c] %v5582
    %5599 = vst [vmem:[#allocation2 + $0xa0] sm:$0x1c] %v5583
    %5600 = vst [vmem:[#allocation2 + $0xa8] sm:$0x1c] %v5584
    %5601 = vst [vmem:[#allocation2 + $0xb0] sm:$0x1c] %v5585
    %5602 = vst [vmem:[#allocation2 + $0xb8] sm:$0x1c] %v5586
    %v5603 = vand.u32 2147483647, %v4731
    %vm5604 = vcmp.le.f32.partialorder %v5603, 0.7853982
    %vm5605 = vcmp.lt.s32.totalorder %v4731, 0
    %v5606 = vand.u32 %v4731, 2139095040
    %v5607 = vshrl.u32 %v5606, 23
    %v5608 = vsub.s32 %v5607, 127
    %v5609 = vand.u32 2147483647, %v4731
    %v5610 = vand.u32 %v5609, 8388607
    %v5611 = vor.u32 %v5610, 8388608
    %v5612 = vsub.s32 0, %v5611
    %v5613 = vadd.s32 %v5608, 1
    %vm5614 = vcmp.gt.s32.totalorder %v5613, 0
    %v5615 = vsel %vm5614, %v5613, 0
    %v5616 = vshrl.u32 %v5615, 5
    %v5617 = vand.u32 %v5615, 31
    %v5618 = vsub.s32 32, %v5617
    %v5619 = vshrl.u32 683565275, %v5618
    %v5620 = vshll.u32 683565275, %v5617
    %v5621 = vshrl.u32 2475754826, %v5618
    %v5622 = vor.u32 %v5620, %v5621
    %v5623 = vshll.u32 2475754826, %v5617
    %v5624 = vshrl.u32 2131351028, %v5618
    %v5625 = vor.u32 %v5623, %v5624
    %v5626 = vshll.u32 2131351028, %v5617
    %v5627 = vshrl.u32 2102212464, %v5618
    %v5628 = vor.u32 %v5626, %v5627
    %v5629 = vshll.u32 2102212464, %v5617
    %v5630 = vshrl.u32 920167782, %v5618
    %v5631 = vor.u32 %v5629, %v5630
    %v5632 = vshll.u32 920167782, %v5617
    %v5633 = vshrl.u32 1326507024, %v5618
    %v5634 = vor.u32 %v5632, %v5633
    %vm5635 = vcmp.lt.s32.totalorder %v5616, 1
    %vm5636 = vcmp.lt.s32.totalorder %v5616, 2
    %vm5637 = vcmp.lt.s32.totalorder %v5616, 3
    %vm5638 = vcmp.lt.s32.totalorder %v5616, 4
    %v5639 = vsel %vm5635, %v5619, %v5622
    %v5640 = vsel %vm5638, %v5628, 2102212464
    %v5641 = vsel %vm5637, %v5625, %v5640
    %v5642 = vsel %vm5636, %v5639, %v5641
    %v5643 = vsel %vm5635, %v5622, %v5625
    %v5644 = vsel %vm5638, %v5631, 920167782
    %v5645 = vsel %vm5637, %v5628, %v5644
    %v5646 = vsel %vm5636, %v5643, %v5645
    %v5647 = vsel %vm5635, %v5625, %v5628
    %v5648 = vsel %vm5638, %v5634, 1326507024
    %v5649 = vsel %vm5637, %v5631, %v5648
    %v5650 = vsel %vm5636, %v5647, %v5649
    %v5651 = vshll.u32 %v5611, 8
    %v5652 = vmul.u32.u64.compose %v5651, %v5650
    %v5653 = vextract.low.u32 %v5652
    %v5654 = vextract.high.u32 %v5652
    %v5655 = vmul.u32.u64.compose %v5651, %v5646
    %v5656 = vextract.low.u32 %v5655
    %v5657 = vextract.high.u32 %v5655
    %v5658 = vmul.u32 %v5651, %v5642
    %v5659 = vadd.s32 %v5654, %v5656
    %vm5660 = vc.u32 %v5654, %v5656
    %v5661 = vadd.s32 %v5657, 1
    %v5662 = vsel %vm5660, %v5661, %v5657
    %v5663 = vadd.s32 %v5658, %v5662
    %v5664 = vadd.s32 %v5663, 536870912
    %v5665 = vshrl.u32 %v5664, 30
    %v5666 = vshll.u32 %v5665, 30
    %v5667 = vsub.s32 %v5663, %v5666
    %vm5668 = vcmp.lt.s32.totalorder %v5667, 0
    %v5669 = vsub.s32 0, %v5667
    %v5670 = vsel %vm5668, %v5669, %v5667
    %v5671 = vclz %v5670
    %v5672 = vsub.s32 %v5671, 2
    %vm5673 = vcmp.gt.s32.totalorder 0, %v5672
    %v5674 = vsel %vm5673, 0, %v5672
    %v5675 = vsub.s32 32, %v5674
    %v5676 = vshll.u32 %v5667, %v5674
    %v5677 = vshrl.u32 %v5659, %v5675
    %v5678 = vor.u32 %v5676, %v5677
    %v5679 = vsub.s32 4294967266, %v5674
    %v5680 = vadd.s32 %v5679, 127
    %v5681 = vshll.u32 %v5680, 23
    %v5682 = vor.u32 4788187, %v5681
    %v5683 = vand.u32 2147483647, %v5682
    %v5685 = vcvt.s32.f32 %v5678
    %v5686 = vmul.f32 %v5685, %v5683
    %v5687 = vxor.u32 %v5686, 2147483648
    %v5688 = vsel %vm5605, %v5687, %v5686
    %v5689 = vsub.s32 4, %v5665
    %v5690 = vsel %vm5605, %v5689, %v5665
    %v5691 = vsel %vm5604, %v4731, %v5688
    %v5692 = vsel %vm5604, 0, %v5690
    %v5693 = vcosq.f32.pop %v5691
    %v5694 = vsinq.f32.pop %v5691
    %vm5695 = vweird.f32 %v4731
    %v5696 = vand.u32 %v5692, 3
    %vm5697 = vcmp.lt.s32.totalorder %v5696, 2
    %vm5698 = vcmp.eq.s32.totalorder %v5696, 0
    %v5699 = vxor.u32 %v5694, 2147483648
    %v5700 = vsel %vm5698, %v5693, %v5699
    %vm5701 = vcmp.eq.s32.totalorder %v5696, 2
    %v5702 = vxor.u32 %v5693, 2147483648
    %v5703 = vsel %vm5701, %v5702, %v5694
    %v5704 = vsel %vm5697, %v5700, %v5703
    %v5705 = vsel %vm5695, nan, %v5704
    %v5706 = vand.u32 2147483647, %v4732
    %vm5707 = vcmp.le.f32.partialorder %v5706, 0.7853982
    %vm5708 = vcmp.lt.s32.totalorder %v4732, 0
    %v5709 = vand.u32 %v4732, 2139095040
    %v5710 = vshrl.u32 %v5709, 23
    %v5711 = vsub.s32 %v5710, 127
    %v5712 = vand.u32 2147483647, %v4732
    %v5713 = vand.u32 %v5712, 8388607
    %v5714 = vor.u32 %v5713, 8388608
    %v5715 = vsub.s32 0, %v5714
    %v5716 = vadd.s32 %v5711, 1
    %vm5717 = vcmp.gt.s32.totalorder %v5716, 0
    %v5718 = vsel %vm5717, %v5716, 0
    %v5719 = vshrl.u32 %v5718, 5
    %v5720 = vand.u32 %v5718, 31
    %v5721 = vsub.s32 32, %v5720
    %v5722 = vshrl.u32 683565275, %v5721
    %v5723 = vshll.u32 683565275, %v5720
    %v5724 = vshrl.u32 2475754826, %v5721
    %v5725 = vor.u32 %v5723, %v5724
    %v5726 = vshll.u32 2475754826, %v5720
    %v5727 = vshrl.u32 2131351028, %v5721
    %v5728 = vor.u32 %v5726, %v5727
    %v5729 = vshll.u32 2131351028, %v5720
    %v5730 = vshrl.u32 2102212464, %v5721
    %v5731 = vor.u32 %v5729, %v5730
    %v5732 = vshll.u32 2102212464, %v5720
    %v5733 = vshrl.u32 920167782, %v5721
    %v5734 = vor.u32 %v5732, %v5733
    %v5735 = vshll.u32 920167782, %v5720
    %v5736 = vshrl.u32 1326507024, %v5721
    %v5737 = vor.u32 %v5735, %v5736
    %vm5738 = vcmp.lt.s32.totalorder %v5719, 1
    %vm5739 = vcmp.lt.s32.totalorder %v5719, 2
    %vm5740 = vcmp.lt.s32.totalorder %v5719, 3
    %vm5741 = vcmp.lt.s32.totalorder %v5719, 4
    %v5742 = vsel %vm5738, %v5722, %v5725
    %v5743 = vsel %vm5741, %v5731, 2102212464
    %v5744 = vsel %vm5740, %v5728, %v5743
    %v5745 = vsel %vm5739, %v5742, %v5744
    %v5746 = vsel %vm5738, %v5725, %v5728
    %v5747 = vsel %vm5741, %v5734, 920167782
    %v5748 = vsel %vm5740, %v5731, %v5747
    %v5749 = vsel %vm5739, %v5746, %v5748
    %v5750 = vsel %vm5738, %v5728, %v5731
    %v5751 = vsel %vm5741, %v5737, 1326507024
    %v5752 = vsel %vm5740, %v5734, %v5751
    %v5753 = vsel %vm5739, %v5750, %v5752
    %v5754 = vshll.u32 %v5714, 8
    %v5755 = vmul.u32.u64.compose %v5754, %v5753
    %v5756 = vextract.low.u32 %v5755
    %v5757 = vextract.high.u32 %v5755
    %v5758 = vmul.u32.u64.compose %v5754, %v5749
    %v5759 = vextract.low.u32 %v5758
    %v5760 = vextract.high.u32 %v5758
    %v5761 = vmul.u32 %v5754, %v5745
    %v5762 = vadd.s32 %v5757, %v5759
    %vm5763 = vc.u32 %v5757, %v5759
    %v5764 = vadd.s32 %v5760, 1
    %v5765 = vsel %vm5763, %v5764, %v5760
    %v5766 = vadd.s32 %v5761, %v5765
    %v5767 = vadd.s32 %v5766, 536870912
    %v5768 = vshrl.u32 %v5767, 30
    %v5769 = vshll.u32 %v5768, 30
    %v5770 = vsub.s32 %v5766, %v5769
    %vm5771 = vcmp.lt.s32.totalorder %v5770, 0
    %v5772 = vsub.s32 0, %v5770
    %v5773 = vsel %vm5771, %v5772, %v5770
    %v5774 = vclz %v5773
    %v5775 = vsub.s32 %v5774, 2
    %vm5776 = vcmp.gt.s32.totalorder 0, %v5775
    %v5777 = vsel %vm5776, 0, %v5775
    %v5778 = vsub.s32 32, %v5777
    %v5779 = vshll.u32 %v5770, %v5777
    %v5780 = vshrl.u32 %v5762, %v5778
    %v5781 = vor.u32 %v5779, %v5780
    %v5782 = vsub.s32 4294967266, %v5777
    %v5783 = vadd.s32 %v5782, 127
    %v5784 = vshll.u32 %v5783, 23
    %v5785 = vor.u32 4788187, %v5784
    %v5786 = vand.u32 2147483647, %v5785
    %v5788 = vcvt.s32.f32 %v5781
    %v5789 = vmul.f32 %v5788, %v5786
    %v5790 = vxor.u32 %v5789, 2147483648
    %v5791 = vsel %vm5708, %v5790, %v5789
    %v5792 = vsub.s32 4, %v5768
    %v5793 = vsel %vm5708, %v5792, %v5768
    %v5794 = vsel %vm5707, %v4732, %v5791
    %v5795 = vsel %vm5707, 0, %v5793
    %v5796 = vcosq.f32.pop %v5794
    %v5797 = vsinq.f32.pop %v5794
    %vm5798 = vweird.f32 %v4732
    %v5799 = vand.u32 %v5795, 3
    %vm5800 = vcmp.lt.s32.totalorder %v5799, 2
    %vm5801 = vcmp.eq.s32.totalorder %v5799, 0
    %v5802 = vxor.u32 %v5797, 2147483648
    %v5803 = vsel %vm5801, %v5796, %v5802
    %vm5804 = vcmp.eq.s32.totalorder %v5799, 2
    %v5805 = vxor.u32 %v5796, 2147483648
    %v5806 = vsel %vm5804, %v5805, %v5797
    %v5807 = vsel %vm5800, %v5803, %v5806
    %v5808 = vsel %vm5798, nan, %v5807
    %v5809 = vand.u32 2147483647, %v4733
    %vm5810 = vcmp.le.f32.partialorder %v5809, 0.7853982
    %vm5811 = vcmp.lt.s32.totalorder %v4733, 0
    %v5812 = vand.u32 %v4733, 2139095040
    %v5813 = vshrl.u32 %v5812, 23
    %v5814 = vsub.s32 %v5813, 127
    %v5815 = vand.u32 2147483647, %v4733
    %v5816 = vand.u32 %v5815, 8388607
    %v5817 = vor.u32 %v5816, 8388608
    %v5818 = vsub.s32 0, %v5817
    %v5819 = vadd.s32 %v5814, 1
    %vm5820 = vcmp.gt.s32.totalorder %v5819, 0
    %v5821 = vsel %vm5820, %v5819, 0
    %v5822 = vshrl.u32 %v5821, 5
    %v5823 = vand.u32 %v5821, 31
    %v5824 = vsub.s32 32, %v5823
    %v5825 = vshrl.u32 683565275, %v5824
    %v5826 = vshll.u32 683565275, %v5823
    %v5827 = vshrl.u32 2475754826, %v5824
    %v5828 = vor.u32 %v5826, %v5827
    %v5829 = vshll.u32 2475754826, %v5823
    %v5830 = vshrl.u32 2131351028, %v5824
    %v5831 = vor.u32 %v5829, %v5830
    %v5832 = vshll.u32 2131351028, %v5823
    %v5833 = vshrl.u32 2102212464, %v5824
    %v5834 = vor.u32 %v5832, %v5833
    %v5835 = vshll.u32 2102212464, %v5823
    %v5836 = vshrl.u32 920167782, %v5824
    %v5837 = vor.u32 %v5835, %v5836
    %v5838 = vshll.u32 920167782, %v5823
    %v5839 = vshrl.u32 1326507024, %v5824
    %v5840 = vor.u32 %v5838, %v5839
    %vm5841 = vcmp.lt.s32.totalorder %v5822, 1
    %vm5842 = vcmp.lt.s32.totalorder %v5822, 2
    %vm5843 = vcmp.lt.s32.totalorder %v5822, 3
    %vm5844 = vcmp.lt.s32.totalorder %v5822, 4
    %v5845 = vsel %vm5841, %v5825, %v5828
    %v5846 = vsel %vm5844, %v5834, 2102212464
    %v5847 = vsel %vm5843, %v5831, %v5846
    %v5848 = vsel %vm5842, %v5845, %v5847
    %v5849 = vsel %vm5841, %v5828, %v5831
    %v5850 = vsel %vm5844, %v5837, 920167782
    %v5851 = vsel %vm5843, %v5834, %v5850
    %v5852 = vsel %vm5842, %v5849, %v5851
    %v5853 = vsel %vm5841, %v5831, %v5834
    %v5854 = vsel %vm5844, %v5840, 1326507024
    %v5855 = vsel %vm5843, %v5837, %v5854
    %v5856 = vsel %vm5842, %v5853, %v5855
    %v5857 = vshll.u32 %v5817, 8
    %v5858 = vmul.u32.u64.compose %v5857, %v5856
    %v5859 = vextract.low.u32 %v5858
    %v5860 = vextract.high.u32 %v5858
    %v5861 = vmul.u32.u64.compose %v5857, %v5852
    %v5862 = vextract.low.u32 %v5861
    %v5863 = vextract.high.u32 %v5861
    %v5864 = vmul.u32 %v5857, %v5848
    %v5865 = vadd.s32 %v5860, %v5862
    %vm5866 = vc.u32 %v5860, %v5862
    %v5867 = vadd.s32 %v5863, 1
    %v5868 = vsel %vm5866, %v5867, %v5863
    %v5869 = vadd.s32 %v5864, %v5868
    %v5870 = vadd.s32 %v5869, 536870912
    %v5871 = vshrl.u32 %v5870, 30
    %v5872 = vshll.u32 %v5871, 30
    %v5873 = vsub.s32 %v5869, %v5872
    %vm5874 = vcmp.lt.s32.totalorder %v5873, 0
    %v5875 = vsub.s32 0, %v5873
    %v5876 = vsel %vm5874, %v5875, %v5873
    %v5877 = vclz %v5876
    %v5878 = vsub.s32 %v5877, 2
    %vm5879 = vcmp.gt.s32.totalorder 0, %v5878
    %v5880 = vsel %vm5879, 0, %v5878
    %v5881 = vsub.s32 32, %v5880
    %v5882 = vshll.u32 %v5873, %v5880
    %v5883 = vshrl.u32 %v5865, %v5881
    %v5884 = vor.u32 %v5882, %v5883
    %v5885 = vsub.s32 4294967266, %v5880
    %v5886 = vadd.s32 %v5885, 127
    %v5887 = vshll.u32 %v5886, 23
    %v5888 = vor.u32 4788187, %v5887
    %v5889 = vand.u32 2147483647, %v5888
    %v5891 = vcvt.s32.f32 %v5884
    %v5892 = vmul.f32 %v5891, %v5889
    %v5893 = vxor.u32 %v5892, 2147483648
    %v5894 = vsel %vm5811, %v5893, %v5892
    %v5895 = vsub.s32 4, %v5871
    %v5896 = vsel %vm5811, %v5895, %v5871
    %v5897 = vsel %vm5810, %v4733, %v5894
    %v5898 = vsel %vm5810, 0, %v5896
    %v5899 = vcosq.f32.pop %v5897
    %v5900 = vsinq.f32.pop %v5897
    %vm5901 = vweird.f32 %v4733
    %v5902 = vand.u32 %v5898, 3
    %vm5903 = vcmp.lt.s32.totalorder %v5902, 2
    %vm5904 = vcmp.eq.s32.totalorder %v5902, 0
    %v5905 = vxor.u32 %v5900, 2147483648
    %v5906 = vsel %vm5904, %v5899, %v5905
    %vm5907 = vcmp.eq.s32.totalorder %v5902, 2
    %v5908 = vxor.u32 %v5899, 2147483648
    %v5909 = vsel %vm5907, %v5908, %v5900
    %v5910 = vsel %vm5903, %v5906, %v5909
    %v5911 = vsel %vm5901, nan, %v5910
    %v5912 = vand.u32 2147483647, %v4734
    %vm5913 = vcmp.le.f32.partialorder %v5912, 0.7853982
    %vm5914 = vcmp.lt.s32.totalorder %v4734, 0
    %v5915 = vand.u32 %v4734, 2139095040
    %v5916 = vshrl.u32 %v5915, 23
    %v5917 = vsub.s32 %v5916, 127
    %v5918 = vand.u32 2147483647, %v4734
    %v5919 = vand.u32 %v5918, 8388607
    %v5920 = vor.u32 %v5919, 8388608
    %v5921 = vsub.s32 0, %v5920
    %v5922 = vadd.s32 %v5917, 1
    %vm5923 = vcmp.gt.s32.totalorder %v5922, 0
    %v5924 = vsel %vm5923, %v5922, 0
    %v5925 = vshrl.u32 %v5924, 5
    %v5926 = vand.u32 %v5924, 31
    %v5927 = vsub.s32 32, %v5926
    %v5928 = vshrl.u32 683565275, %v5927
    %v5929 = vshll.u32 683565275, %v5926
    %v5930 = vshrl.u32 2475754826, %v5927
    %v5931 = vor.u32 %v5929, %v5930
    %v5932 = vshll.u32 2475754826, %v5926
    %v5933 = vshrl.u32 2131351028, %v5927
    %v5934 = vor.u32 %v5932, %v5933
    %v5935 = vshll.u32 2131351028, %v5926
    %v5936 = vshrl.u32 2102212464, %v5927
    %v5937 = vor.u32 %v5935, %v5936
    %v5938 = vshll.u32 2102212464, %v5926
    %v5939 = vshrl.u32 920167782, %v5927
    %v5940 = vor.u32 %v5938, %v5939
    %v5941 = vshll.u32 920167782, %v5926
    %v5942 = vshrl.u32 1326507024, %v5927
    %v5943 = vor.u32 %v5941, %v5942
    %vm5944 = vcmp.lt.s32.totalorder %v5925, 1
    %vm5945 = vcmp.lt.s32.totalorder %v5925, 2
    %vm5946 = vcmp.lt.s32.totalorder %v5925, 3
    %vm5947 = vcmp.lt.s32.totalorder %v5925, 4
    %v5948 = vsel %vm5944, %v5928, %v5931
    %v5949 = vsel %vm5947, %v5937, 2102212464
    %v5950 = vsel %vm5946, %v5934, %v5949
    %v5951 = vsel %vm5945, %v5948, %v5950
    %v5952 = vsel %vm5944, %v5931, %v5934
    %v5953 = vsel %vm5947, %v5940, 920167782
    %v5954 = vsel %vm5946, %v5937, %v5953
    %v5955 = vsel %vm5945, %v5952, %v5954
    %v5956 = vsel %vm5944, %v5934, %v5937
    %v5957 = vsel %vm5947, %v5943, 1326507024
    %v5958 = vsel %vm5946, %v5940, %v5957
    %v5959 = vsel %vm5945, %v5956, %v5958
    %v5960 = vshll.u32 %v5920, 8
    %v5961 = vmul.u32.u64.compose %v5960, %v5959
    %v5962 = vextract.low.u32 %v5961
    %v5963 = vextract.high.u32 %v5961
    %v5964 = vmul.u32.u64.compose %v5960, %v5955
    %v5965 = vextract.low.u32 %v5964
    %v5966 = vextract.high.u32 %v5964
    %v5967 = vmul.u32 %v5960, %v5951
    %v5968 = vadd.s32 %v5963, %v5965
    %vm5969 = vc.u32 %v5963, %v5965
    %v5970 = vadd.s32 %v5966, 1
    %v5971 = vsel %vm5969, %v5970, %v5966
    %v5972 = vadd.s32 %v5967, %v5971
    %v5973 = vadd.s32 %v5972, 536870912
    %v5974 = vshrl.u32 %v5973, 30
    %v5975 = vshll.u32 %v5974, 30
    %v5976 = vsub.s32 %v5972, %v5975
    %vm5977 = vcmp.lt.s32.totalorder %v5976, 0
    %v5978 = vsub.s32 0, %v5976
    %v5979 = vsel %vm5977, %v5978, %v5976
    %v5980 = vclz %v5979
    %v5981 = vsub.s32 %v5980, 2
    %vm5982 = vcmp.gt.s32.totalorder 0, %v5981
    %v5983 = vsel %vm5982, 0, %v5981
    %v5984 = vsub.s32 32, %v5983
    %v5985 = vshll.u32 %v5976, %v5983
    %v5986 = vshrl.u32 %v5968, %v5984
    %v5987 = vor.u32 %v5985, %v5986
    %v5988 = vsub.s32 4294967266, %v5983
    %v5989 = vadd.s32 %v5988, 127
    %v5990 = vshll.u32 %v5989, 23
    %v5991 = vor.u32 4788187, %v5990
    %v5992 = vand.u32 2147483647, %v5991
    %v5994 = vcvt.s32.f32 %v5987
    %v5995 = vmul.f32 %v5994, %v5992
    %v5996 = vxor.u32 %v5995, 2147483648
    %v5997 = vsel %vm5914, %v5996, %v5995
    %v5998 = vsub.s32 4, %v5974
    %v5999 = vsel %vm5914, %v5998, %v5974
    %v6000 = vsel %vm5913, %v4734, %v5997
    %v6001 = vsel %vm5913, 0, %v5999
    %v6002 = vcosq.f32.pop %v6000
    %v6003 = vsinq.f32.pop %v6000
    %vm6004 = vweird.f32 %v4734
    %v6005 = vand.u32 %v6001, 3
    %vm6006 = vcmp.lt.s32.totalorder %v6005, 2
    %vm6007 = vcmp.eq.s32.totalorder %v6005, 0
    %v6008 = vxor.u32 %v6003, 2147483648
    %v6009 = vsel %vm6007, %v6002, %v6008
    %vm6010 = vcmp.eq.s32.totalorder %v6005, 2
    %v6011 = vxor.u32 %v6002, 2147483648
    %v6012 = vsel %vm6010, %v6011, %v6003
    %v6013 = vsel %vm6006, %v6009, %v6012
    %v6014 = vsel %vm6004, nan, %v6013
    %v6015 = vand.u32 2147483647, %v4735
    %vm6016 = vcmp.le.f32.partialorder %v6015, 0.7853982
    %vm6017 = vcmp.lt.s32.totalorder %v4735, 0
    %v6018 = vand.u32 %v4735, 2139095040
    %v6019 = vshrl.u32 %v6018, 23
    %v6020 = vsub.s32 %v6019, 127
    %v6021 = vand.u32 2147483647, %v4735
    %v6022 = vand.u32 %v6021, 8388607
    %v6023 = vor.u32 %v6022, 8388608
    %v6024 = vsub.s32 0, %v6023
    %v6025 = vadd.s32 %v6020, 1
    %vm6026 = vcmp.gt.s32.totalorder %v6025, 0
    %v6027 = vsel %vm6026, %v6025, 0
    %v6028 = vshrl.u32 %v6027, 5
    %v6029 = vand.u32 %v6027, 31
    %v6030 = vsub.s32 32, %v6029
    %v6031 = vshrl.u32 683565275, %v6030
    %v6032 = vshll.u32 683565275, %v6029
    %v6033 = vshrl.u32 2475754826, %v6030
    %v6034 = vor.u32 %v6032, %v6033
    %v6035 = vshll.u32 2475754826, %v6029
    %v6036 = vshrl.u32 2131351028, %v6030
    %v6037 = vor.u32 %v6035, %v6036
    %v6038 = vshll.u32 2131351028, %v6029
    %v6039 = vshrl.u32 2102212464, %v6030
    %v6040 = vor.u32 %v6038, %v6039
    %v6041 = vshll.u32 2102212464, %v6029
    %v6042 = vshrl.u32 920167782, %v6030
    %v6043 = vor.u32 %v6041, %v6042
    %v6044 = vshll.u32 920167782, %v6029
    %v6045 = vshrl.u32 1326507024, %v6030
    %v6046 = vor.u32 %v6044, %v6045
    %vm6047 = vcmp.lt.s32.totalorder %v6028, 1
    %vm6048 = vcmp.lt.s32.totalorder %v6028, 2
    %vm6049 = vcmp.lt.s32.totalorder %v6028, 3
    %vm6050 = vcmp.lt.s32.totalorder %v6028, 4
    %v6051 = vsel %vm6047, %v6031, %v6034
    %v6052 = vsel %vm6050, %v6040, 2102212464
    %v6053 = vsel %vm6049, %v6037, %v6052
    %v6054 = vsel %vm6048, %v6051, %v6053
    %v6055 = vsel %vm6047, %v6034, %v6037
    %v6056 = vsel %vm6050, %v6043, 920167782
    %v6057 = vsel %vm6049, %v6040, %v6056
    %v6058 = vsel %vm6048, %v6055, %v6057
    %v6059 = vsel %vm6047, %v6037, %v6040
    %v6060 = vsel %vm6050, %v6046, 1326507024
    %v6061 = vsel %vm6049, %v6043, %v6060
    %v6062 = vsel %vm6048, %v6059, %v6061
    %v6063 = vshll.u32 %v6023, 8
    %v6064 = vmul.u32.u64.compose %v6063, %v6062
    %v6065 = vextract.low.u32 %v6064
    %v6066 = vextract.high.u32 %v6064
    %v6067 = vmul.u32.u64.compose %v6063, %v6058
    %v6068 = vextract.low.u32 %v6067
    %v6069 = vextract.high.u32 %v6067
    %v6070 = vmul.u32 %v6063, %v6054
    %v6071 = vadd.s32 %v6066, %v6068
    %vm6072 = vc.u32 %v6066, %v6068
    %v6073 = vadd.s32 %v6069, 1
    %v6074 = vsel %vm6072, %v6073, %v6069
    %v6075 = vadd.s32 %v6070, %v6074
    %v6076 = vadd.s32 %v6075, 536870912
    %v6077 = vshrl.u32 %v6076, 30
    %v6078 = vshll.u32 %v6077, 30
    %v6079 = vsub.s32 %v6075, %v6078
    %vm6080 = vcmp.lt.s32.totalorder %v6079, 0
    %v6081 = vsub.s32 0, %v6079
    %v6082 = vsel %vm6080, %v6081, %v6079
    %v6083 = vclz %v6082
    %v6084 = vsub.s32 %v6083, 2
    %vm6085 = vcmp.gt.s32.totalorder 0, %v6084
    %v6086 = vsel %vm6085, 0, %v6084
    %v6087 = vsub.s32 32, %v6086
    %v6088 = vshll.u32 %v6079, %v6086
    %v6089 = vshrl.u32 %v6071, %v6087
    %v6090 = vor.u32 %v6088, %v6089
    %v6091 = vsub.s32 4294967266, %v6086
    %v6092 = vadd.s32 %v6091, 127
    %v6093 = vshll.u32 %v6092, 23
    %v6094 = vor.u32 4788187, %v6093
    %v6095 = vand.u32 2147483647, %v6094
    %v6097 = vcvt.s32.f32 %v6090
    %v6098 = vmul.f32 %v6097, %v6095
    %v6099 = vxor.u32 %v6098, 2147483648
    %v6100 = vsel %vm6017, %v6099, %v6098
    %v6101 = vsub.s32 4, %v6077
    %v6102 = vsel %vm6017, %v6101, %v6077
    %v6103 = vsel %vm6016, %v4735, %v6100
    %v6104 = vsel %vm6016, 0, %v6102
    %v6105 = vcosq.f32.pop %v6103
    %v6106 = vsinq.f32.pop %v6103
    %vm6107 = vweird.f32 %v4735
    %v6108 = vand.u32 %v6104, 3
    %vm6109 = vcmp.lt.s32.totalorder %v6108, 2
    %vm6110 = vcmp.eq.s32.totalorder %v6108, 0
    %v6111 = vxor.u32 %v6106, 2147483648
    %v6112 = vsel %vm6110, %v6105, %v6111
    %vm6113 = vcmp.eq.s32.totalorder %v6108, 2
    %v6114 = vxor.u32 %v6105, 2147483648
    %v6115 = vsel %vm6113, %v6114, %v6106
    %v6116 = vsel %vm6109, %v6112, %v6115
    %v6117 = vsel %vm6107, nan, %v6116
    %v6118 = vand.u32 2147483647, %v4736
    %vm6119 = vcmp.le.f32.partialorder %v6118, 0.7853982
    %vm6120 = vcmp.lt.s32.totalorder %v4736, 0
    %v6121 = vand.u32 %v4736, 2139095040
    %v6122 = vshrl.u32 %v6121, 23
    %v6123 = vsub.s32 %v6122, 127
    %v6124 = vand.u32 2147483647, %v4736
    %v6125 = vand.u32 %v6124, 8388607
    %v6126 = vor.u32 %v6125, 8388608
    %v6127 = vsub.s32 0, %v6126
    %v6128 = vadd.s32 %v6123, 1
    %vm6129 = vcmp.gt.s32.totalorder %v6128, 0
    %v6130 = vsel %vm6129, %v6128, 0
    %v6131 = vshrl.u32 %v6130, 5
    %v6132 = vand.u32 %v6130, 31
    %v6133 = vsub.s32 32, %v6132
    %v6134 = vshrl.u32 683565275, %v6133
    %v6135 = vshll.u32 683565275, %v6132
    %v6136 = vshrl.u32 2475754826, %v6133
    %v6137 = vor.u32 %v6135, %v6136
    %v6138 = vshll.u32 2475754826, %v6132
    %v6139 = vshrl.u32 2131351028, %v6133
    %v6140 = vor.u32 %v6138, %v6139
    %v6141 = vshll.u32 2131351028, %v6132
    %v6142 = vshrl.u32 2102212464, %v6133
    %v6143 = vor.u32 %v6141, %v6142
    %v6144 = vshll.u32 2102212464, %v6132
    %v6145 = vshrl.u32 920167782, %v6133
    %v6146 = vor.u32 %v6144, %v6145
    %v6147 = vshll.u32 920167782, %v6132
    %v6148 = vshrl.u32 1326507024, %v6133
    %v6149 = vor.u32 %v6147, %v6148
    %vm6150 = vcmp.lt.s32.totalorder %v6131, 1
    %vm6151 = vcmp.lt.s32.totalorder %v6131, 2
    %vm6152 = vcmp.lt.s32.totalorder %v6131, 3
    %vm6153 = vcmp.lt.s32.totalorder %v6131, 4
    %v6154 = vsel %vm6150, %v6134, %v6137
    %v6155 = vsel %vm6153, %v6143, 2102212464
    %v6156 = vsel %vm6152, %v6140, %v6155
    %v6157 = vsel %vm6151, %v6154, %v6156
    %v6158 = vsel %vm6150, %v6137, %v6140
    %v6159 = vsel %vm6153, %v6146, 920167782
    %v6160 = vsel %vm6152, %v6143, %v6159
    %v6161 = vsel %vm6151, %v6158, %v6160
    %v6162 = vsel %vm6150, %v6140, %v6143
    %v6163 = vsel %vm6153, %v6149, 1326507024
    %v6164 = vsel %vm6152, %v6146, %v6163
    %v6165 = vsel %vm6151, %v6162, %v6164
    %v6166 = vshll.u32 %v6126, 8
    %v6167 = vmul.u32.u64.compose %v6166, %v6165
    %v6168 = vextract.low.u32 %v6167
    %v6169 = vextract.high.u32 %v6167
    %v6170 = vmul.u32.u64.compose %v6166, %v6161
    %v6171 = vextract.low.u32 %v6170
    %v6172 = vextract.high.u32 %v6170
    %v6173 = vmul.u32 %v6166, %v6157
    %v6174 = vadd.s32 %v6169, %v6171
    %vm6175 = vc.u32 %v6169, %v6171
    %v6176 = vadd.s32 %v6172, 1
    %v6177 = vsel %vm6175, %v6176, %v6172
    %v6178 = vadd.s32 %v6173, %v6177
    %v6179 = vadd.s32 %v6178, 536870912
    %v6180 = vshrl.u32 %v6179, 30
    %v6181 = vshll.u32 %v6180, 30
    %v6182 = vsub.s32 %v6178, %v6181
    %vm6183 = vcmp.lt.s32.totalorder %v6182, 0
    %v6184 = vsub.s32 0, %v6182
    %v6185 = vsel %vm6183, %v6184, %v6182
    %v6186 = vclz %v6185
    %v6187 = vsub.s32 %v6186, 2
    %vm6188 = vcmp.gt.s32.totalorder 0, %v6187
    %v6189 = vsel %vm6188, 0, %v6187
    %v6190 = vsub.s32 32, %v6189
    %v6191 = vshll.u32 %v6182, %v6189
    %v6192 = vshrl.u32 %v6174, %v6190
    %v6193 = vor.u32 %v6191, %v6192
    %v6194 = vsub.s32 4294967266, %v6189
    %v6195 = vadd.s32 %v6194, 127
    %v6196 = vshll.u32 %v6195, 23
    %v6197 = vor.u32 4788187, %v6196
    %v6198 = vand.u32 2147483647, %v6197
    %v6200 = vcvt.s32.f32 %v6193
    %v6201 = vmul.f32 %v6200, %v6198
    %v6202 = vxor.u32 %v6201, 2147483648
    %v6203 = vsel %vm6120, %v6202, %v6201
    %v6204 = vsub.s32 4, %v6180
    %v6205 = vsel %vm6120, %v6204, %v6180
    %v6206 = vsel %vm6119, %v4736, %v6203
    %v6207 = vsel %vm6119, 0, %v6205
    %v6208 = vcosq.f32.pop %v6206
    %v6209 = vsinq.f32.pop %v6206
    %vm6210 = vweird.f32 %v4736
    %v6211 = vand.u32 %v6207, 3
    %vm6212 = vcmp.lt.s32.totalorder %v6211, 2
    %vm6213 = vcmp.eq.s32.totalorder %v6211, 0
    %v6214 = vxor.u32 %v6209, 2147483648
    %v6215 = vsel %vm6213, %v6208, %v6214
    %vm6216 = vcmp.eq.s32.totalorder %v6211, 2
    %v6217 = vxor.u32 %v6208, 2147483648
    %v6218 = vsel %vm6216, %v6217, %v6209
    %v6219 = vsel %vm6212, %v6215, %v6218
    %v6220 = vsel %vm6210, nan, %v6219
    %v6221 = vand.u32 2147483647, %v4737
    %vm6222 = vcmp.le.f32.partialorder %v6221, 0.7853982
    %vm6223 = vcmp.lt.s32.totalorder %v4737, 0
    %v6224 = vand.u32 %v4737, 2139095040
    %v6225 = vshrl.u32 %v6224, 23
    %v6226 = vsub.s32 %v6225, 127
    %v6227 = vand.u32 2147483647, %v4737
    %v6228 = vand.u32 %v6227, 8388607
    %v6229 = vor.u32 %v6228, 8388608
    %v6230 = vsub.s32 0, %v6229
    %v6231 = vadd.s32 %v6226, 1
    %vm6232 = vcmp.gt.s32.totalorder %v6231, 0
    %v6233 = vsel %vm6232, %v6231, 0
    %v6234 = vshrl.u32 %v6233, 5
    %v6235 = vand.u32 %v6233, 31
    %v6236 = vsub.s32 32, %v6235
    %v6237 = vshrl.u32 683565275, %v6236
    %v6238 = vshll.u32 683565275, %v6235
    %v6239 = vshrl.u32 2475754826, %v6236
    %v6240 = vor.u32 %v6238, %v6239
    %v6241 = vshll.u32 2475754826, %v6235
    %v6242 = vshrl.u32 2131351028, %v6236
    %v6243 = vor.u32 %v6241, %v6242
    %v6244 = vshll.u32 2131351028, %v6235
    %v6245 = vshrl.u32 2102212464, %v6236
    %v6246 = vor.u32 %v6244, %v6245
    %v6247 = vshll.u32 2102212464, %v6235
    %v6248 = vshrl.u32 920167782, %v6236
    %v6249 = vor.u32 %v6247, %v6248
    %v6250 = vshll.u32 920167782, %v6235
    %v6251 = vshrl.u32 1326507024, %v6236
    %v6252 = vor.u32 %v6250, %v6251
    %vm6253 = vcmp.lt.s32.totalorder %v6234, 1
    %vm6254 = vcmp.lt.s32.totalorder %v6234, 2
    %vm6255 = vcmp.lt.s32.totalorder %v6234, 3
    %vm6256 = vcmp.lt.s32.totalorder %v6234, 4
    %v6257 = vsel %vm6253, %v6237, %v6240
    %v6258 = vsel %vm6256, %v6246, 2102212464
    %v6259 = vsel %vm6255, %v6243, %v6258
    %v6260 = vsel %vm6254, %v6257, %v6259
    %v6261 = vsel %vm6253, %v6240, %v6243
    %v6262 = vsel %vm6256, %v6249, 920167782
    %v6263 = vsel %vm6255, %v6246, %v6262
    %v6264 = vsel %vm6254, %v6261, %v6263
    %v6265 = vsel %vm6253, %v6243, %v6246
    %v6266 = vsel %vm6256, %v6252, 1326507024
    %v6267 = vsel %vm6255, %v6249, %v6266
    %v6268 = vsel %vm6254, %v6265, %v6267
    %v6269 = vshll.u32 %v6229, 8
    %v6270 = vmul.u32.u64.compose %v6269, %v6268
    %v6271 = vextract.low.u32 %v6270
    %v6272 = vextract.high.u32 %v6270
    %v6273 = vmul.u32.u64.compose %v6269, %v6264
    %v6274 = vextract.low.u32 %v6273
    %v6275 = vextract.high.u32 %v6273
    %v6276 = vmul.u32 %v6269, %v6260
    %v6277 = vadd.s32 %v6272, %v6274
    %vm6278 = vc.u32 %v6272, %v6274
    %v6279 = vadd.s32 %v6275, 1
    %v6280 = vsel %vm6278, %v6279, %v6275
    %v6281 = vadd.s32 %v6276, %v6280
    %v6282 = vadd.s32 %v6281, 536870912
    %v6283 = vshrl.u32 %v6282, 30
    %v6284 = vshll.u32 %v6283, 30
    %v6285 = vsub.s32 %v6281, %v6284
    %vm6286 = vcmp.lt.s32.totalorder %v6285, 0
    %v6287 = vsub.s32 0, %v6285
    %v6288 = vsel %vm6286, %v6287, %v6285
    %v6289 = vclz %v6288
    %v6290 = vsub.s32 %v6289, 2
    %vm6291 = vcmp.gt.s32.totalorder 0, %v6290
    %v6292 = vsel %vm6291, 0, %v6290
    %v6293 = vsub.s32 32, %v6292
    %v6294 = vshll.u32 %v6285, %v6292
    %v6295 = vshrl.u32 %v6277, %v6293
    %v6296 = vor.u32 %v6294, %v6295
    %v6297 = vsub.s32 4294967266, %v6292
    %v6298 = vadd.s32 %v6297, 127
    %v6299 = vshll.u32 %v6298, 23
    %v6300 = vor.u32 4788187, %v6299
    %v6301 = vand.u32 2147483647, %v6300
    %v6303 = vcvt.s32.f32 %v6296
    %v6304 = vmul.f32 %v6303, %v6301
    %v6305 = vxor.u32 %v6304, 2147483648
    %v6306 = vsel %vm6223, %v6305, %v6304
    %v6307 = vsub.s32 4, %v6283
    %v6308 = vsel %vm6223, %v6307, %v6283
    %v6309 = vsel %vm6222, %v4737, %v6306
    %v6310 = vsel %vm6222, 0, %v6308
    %v6311 = vcosq.f32.pop %v6309
    %v6312 = vsinq.f32.pop %v6309
    %vm6313 = vweird.f32 %v4737
    %v6314 = vand.u32 %v6310, 3
    %vm6315 = vcmp.lt.s32.totalorder %v6314, 2
    %vm6316 = vcmp.eq.s32.totalorder %v6314, 0
    %v6317 = vxor.u32 %v6312, 2147483648
    %v6318 = vsel %vm6316, %v6311, %v6317
    %vm6319 = vcmp.eq.s32.totalorder %v6314, 2
    %v6320 = vxor.u32 %v6311, 2147483648
    %v6321 = vsel %vm6319, %v6320, %v6312
    %v6322 = vsel %vm6315, %v6318, %v6321
    %v6323 = vsel %vm6313, nan, %v6322
    %v6324 = vand.u32 2147483647, %v4738
    %vm6325 = vcmp.le.f32.partialorder %v6324, 0.7853982
    %vm6326 = vcmp.lt.s32.totalorder %v4738, 0
    %v6327 = vand.u32 %v4738, 2139095040
    %v6328 = vshrl.u32 %v6327, 23
    %v6329 = vsub.s32 %v6328, 127
    %v6330 = vand.u32 2147483647, %v4738
    %v6331 = vand.u32 %v6330, 8388607
    %v6332 = vor.u32 %v6331, 8388608
    %v6333 = vsub.s32 0, %v6332
    %v6334 = vadd.s32 %v6329, 1
    %vm6335 = vcmp.gt.s32.totalorder %v6334, 0
    %v6336 = vsel %vm6335, %v6334, 0
    %v6337 = vshrl.u32 %v6336, 5
    %v6338 = vand.u32 %v6336, 31
    %v6339 = vsub.s32 32, %v6338
    %v6340 = vshrl.u32 683565275, %v6339
    %v6341 = vshll.u32 683565275, %v6338
    %v6342 = vshrl.u32 2475754826, %v6339
    %v6343 = vor.u32 %v6341, %v6342
    %v6344 = vshll.u32 2475754826, %v6338
    %v6345 = vshrl.u32 2131351028, %v6339
    %v6346 = vor.u32 %v6344, %v6345
    %v6347 = vshll.u32 2131351028, %v6338
    %v6348 = vshrl.u32 2102212464, %v6339
    %v6349 = vor.u32 %v6347, %v6348
    %v6350 = vshll.u32 2102212464, %v6338
    %v6351 = vshrl.u32 920167782, %v6339
    %v6352 = vor.u32 %v6350, %v6351
    %v6353 = vshll.u32 920167782, %v6338
    %v6354 = vshrl.u32 1326507024, %v6339
    %v6355 = vor.u32 %v6353, %v6354
    %vm6356 = vcmp.lt.s32.totalorder %v6337, 1
    %vm6357 = vcmp.lt.s32.totalorder %v6337, 2
    %vm6358 = vcmp.lt.s32.totalorder %v6337, 3
    %vm6359 = vcmp.lt.s32.totalorder %v6337, 4
    %v6360 = vsel %vm6356, %v6340, %v6343
    %v6361 = vsel %vm6359, %v6349, 2102212464
    %v6362 = vsel %vm6358, %v6346, %v6361
    %v6363 = vsel %vm6357, %v6360, %v6362
    %v6364 = vsel %vm6356, %v6343, %v6346
    %v6365 = vsel %vm6359, %v6352, 920167782
    %v6366 = vsel %vm6358, %v6349, %v6365
    %v6367 = vsel %vm6357, %v6364, %v6366
    %v6368 = vsel %vm6356, %v6346, %v6349
    %v6369 = vsel %vm6359, %v6355, 1326507024
    %v6370 = vsel %vm6358, %v6352, %v6369
    %v6371 = vsel %vm6357, %v6368, %v6370
    %v6372 = vshll.u32 %v6332, 8
    %v6373 = vmul.u32.u64.compose %v6372, %v6371
    %v6374 = vextract.low.u32 %v6373
    %v6375 = vextract.high.u32 %v6373
    %v6376 = vmul.u32.u64.compose %v6372, %v6367
    %v6377 = vextract.low.u32 %v6376
    %v6378 = vextract.high.u32 %v6376
    %v6379 = vmul.u32 %v6372, %v6363
    %v6380 = vadd.s32 %v6375, %v6377
    %vm6381 = vc.u32 %v6375, %v6377
    %v6382 = vadd.s32 %v6378, 1
    %v6383 = vsel %vm6381, %v6382, %v6378
    %v6384 = vadd.s32 %v6379, %v6383
    %v6385 = vadd.s32 %v6384, 536870912
    %v6386 = vshrl.u32 %v6385, 30
    %v6387 = vshll.u32 %v6386, 30
    %v6388 = vsub.s32 %v6384, %v6387
    %vm6389 = vcmp.lt.s32.totalorder %v6388, 0
    %v6390 = vsub.s32 0, %v6388
    %v6391 = vsel %vm6389, %v6390, %v6388
    %v6392 = vclz %v6391
    %v6393 = vsub.s32 %v6392, 2
    %vm6394 = vcmp.gt.s32.totalorder 0, %v6393
    %v6395 = vsel %vm6394, 0, %v6393
    %v6396 = vsub.s32 32, %v6395
    %v6397 = vshll.u32 %v6388, %v6395
    %v6398 = vshrl.u32 %v6380, %v6396
    %v6399 = vor.u32 %v6397, %v6398
    %v6400 = vsub.s32 4294967266, %v6395
    %v6401 = vadd.s32 %v6400, 127
    %v6402 = vshll.u32 %v6401, 23
    %v6403 = vor.u32 4788187, %v6402
    %v6404 = vand.u32 2147483647, %v6403
    %v6406 = vcvt.s32.f32 %v6399
    %v6407 = vmul.f32 %v6406, %v6404
    %v6408 = vxor.u32 %v6407, 2147483648
    %v6409 = vsel %vm6326, %v6408, %v6407
    %v6410 = vsub.s32 4, %v6386
    %v6411 = vsel %vm6326, %v6410, %v6386
    %v6412 = vsel %vm6325, %v4738, %v6409
    %v6413 = vsel %vm6325, 0, %v6411
    %v6414 = vcosq.f32.pop %v6412
    %v6415 = vsinq.f32.pop %v6412
    %vm6416 = vweird.f32 %v4738
    %v6417 = vand.u32 %v6413, 3
    %vm6418 = vcmp.lt.s32.totalorder %v6417, 2
    %vm6419 = vcmp.eq.s32.totalorder %v6417, 0
    %v6420 = vxor.u32 %v6415, 2147483648
    %v6421 = vsel %vm6419, %v6414, %v6420
    %vm6422 = vcmp.eq.s32.totalorder %v6417, 2
    %v6423 = vxor.u32 %v6414, 2147483648
    %v6424 = vsel %vm6422, %v6423, %v6415
    %v6425 = vsel %vm6418, %v6421, %v6424
    %v6426 = vsel %vm6416, nan, %v6425
    %v6435 = vrot.slane %v5705, 3
    %v6436 = vrot.slane %v5808, 3
    %v6437 = vrot.slane %v5911, 3
    %v6438 = vrot.slane %v6014, 3
    %v6439 = vrot.slane %v6117, 3
    %v6440 = vrot.slane %v6220, 3
    %v6441 = vrot.slane %v6323, 3
    %v6442 = vrot.slane %v6426, 3
    %6451 = vst [vmem:[#allocation2 + $0x80] sm:$0xe0] %v6435
    %6452 = vst [vmem:[#allocation2 + $0x88] sm:$0xe0] %v6436
    %6453 = vst [vmem:[#allocation2 + $0x90] sm:$0xe0] %v6437
    %6454 = vst [vmem:[#allocation2 + $0x98] sm:$0xe0] %v6438
    %6455 = vst [vmem:[#allocation2 + $0xa0] sm:$0xe0] %v6439
    %6456 = vst [vmem:[#allocation2 + $0xa8] sm:$0xe0] %v6440
    %6457 = vst [vmem:[#allocation2 + $0xb0] sm:$0xe0] %v6441
    %6458 = vst [vmem:[#allocation2 + $0xb8] sm:$0xe0] %v6442
    %v6459 = vmul.f32 %v877, 8.0
    %v6460 = vmul.f32 %v878, 8.0
    %v6461 = vmul.f32 %v879, 8.0
    %v6462 = vmul.f32 %v880, 8.0
    %v6463 = vmul.f32 %v881, 8.0
    %v6464 = vmul.f32 %v882, 8.0
    %v6465 = vmul.f32 %v883, 8.0
    %v6466 = vmul.f32 %v884, 8.0
    %v6467 = vand.u32 2147483647, %v6459
    %vm6468 = vcmp.le.f32.partialorder %v6467, 0.7853982
    %vm6469 = vcmp.lt.s32.totalorder %v6459, 0
    %v6470 = vand.u32 %v6459, 2139095040
    %v6471 = vshrl.u32 %v6470, 23
    %v6472 = vsub.s32 %v6471, 127
    %v6473 = vand.u32 2147483647, %v6459
    %v6474 = vand.u32 %v6473, 8388607
    %v6475 = vor.u32 %v6474, 8388608
    %v6476 = vsub.s32 0, %v6475
    %v6477 = vadd.s32 %v6472, 1
    %vm6478 = vcmp.gt.s32.totalorder %v6477, 0
    %v6479 = vsel %vm6478, %v6477, 0
    %v6480 = vshrl.u32 %v6479, 5
    %v6481 = vand.u32 %v6479, 31
    %v6482 = vsub.s32 32, %v6481
    %v6483 = vshrl.u32 683565275, %v6482
    %v6484 = vshll.u32 683565275, %v6481
    %v6485 = vshrl.u32 2475754826, %v6482
    %v6486 = vor.u32 %v6484, %v6485
    %v6487 = vshll.u32 2475754826, %v6481
    %v6488 = vshrl.u32 2131351028, %v6482
    %v6489 = vor.u32 %v6487, %v6488
    %v6490 = vshll.u32 2131351028, %v6481
    %v6491 = vshrl.u32 2102212464, %v6482
    %v6492 = vor.u32 %v6490, %v6491
    %v6493 = vshll.u32 2102212464, %v6481
    %v6494 = vshrl.u32 920167782, %v6482
    %v6495 = vor.u32 %v6493, %v6494
    %v6496 = vshll.u32 920167782, %v6481
    %v6497 = vshrl.u32 1326507024, %v6482
    %v6498 = vor.u32 %v6496, %v6497
    %vm6499 = vcmp.lt.s32.totalorder %v6480, 1
    %vm6500 = vcmp.lt.s32.totalorder %v6480, 2
    %vm6501 = vcmp.lt.s32.totalorder %v6480, 3
    %vm6502 = vcmp.lt.s32.totalorder %v6480, 4
    %v6503 = vsel %vm6499, %v6483, %v6486
    %v6504 = vsel %vm6502, %v6492, 2102212464
    %v6505 = vsel %vm6501, %v6489, %v6504
    %v6506 = vsel %vm6500, %v6503, %v6505
    %v6507 = vsel %vm6499, %v6486, %v6489
    %v6508 = vsel %vm6502, %v6495, 920167782
    %v6509 = vsel %vm6501, %v6492, %v6508
    %v6510 = vsel %vm6500, %v6507, %v6509
    %v6511 = vsel %vm6499, %v6489, %v6492
    %v6512 = vsel %vm6502, %v6498, 1326507024
    %v6513 = vsel %vm6501, %v6495, %v6512
    %v6514 = vsel %vm6500, %v6511, %v6513
    %v6515 = vshll.u32 %v6475, 8
    %v6516 = vmul.u32.u64.compose %v6515, %v6514
    %v6517 = vextract.low.u32 %v6516
    %v6518 = vextract.high.u32 %v6516
    %v6519 = vmul.u32.u64.compose %v6515, %v6510
    %v6520 = vextract.low.u32 %v6519
    %v6521 = vextract.high.u32 %v6519
    %v6522 = vmul.u32 %v6515, %v6506
    %v6523 = vadd.s32 %v6518, %v6520
    %vm6524 = vc.u32 %v6518, %v6520
    %v6525 = vadd.s32 %v6521, 1
    %v6526 = vsel %vm6524, %v6525, %v6521
    %v6527 = vadd.s32 %v6522, %v6526
    %v6528 = vadd.s32 %v6527, 536870912
    %v6529 = vshrl.u32 %v6528, 30
    %v6530 = vshll.u32 %v6529, 30
    %v6531 = vsub.s32 %v6527, %v6530
    %vm6532 = vcmp.lt.s32.totalorder %v6531, 0
    %v6533 = vsub.s32 0, %v6531
    %v6534 = vsel %vm6532, %v6533, %v6531
    %v6535 = vclz %v6534
    %v6536 = vsub.s32 %v6535, 2
    %vm6537 = vcmp.gt.s32.totalorder 0, %v6536
    %v6538 = vsel %vm6537, 0, %v6536
    %v6539 = vsub.s32 32, %v6538
    %v6540 = vshll.u32 %v6531, %v6538
    %v6541 = vshrl.u32 %v6523, %v6539
    %v6542 = vor.u32 %v6540, %v6541
    %v6543 = vsub.s32 4294967266, %v6538
    %v6544 = vadd.s32 %v6543, 127
    %v6545 = vshll.u32 %v6544, 23
    %v6546 = vor.u32 4788187, %v6545
    %v6547 = vand.u32 2147483647, %v6546
    %v6549 = vcvt.s32.f32 %v6542
    %v6550 = vmul.f32 %v6549, %v6547
    %v6551 = vxor.u32 %v6550, 2147483648
    %v6552 = vsel %vm6469, %v6551, %v6550
    %v6553 = vsub.s32 4, %v6529
    %v6554 = vsel %vm6469, %v6553, %v6529
    %v6555 = vsel %vm6468, %v6459, %v6552
    %v6556 = vsel %vm6468, 0, %v6554
    %v6557 = vcosq.f32.pop %v6555
    %v6558 = vsinq.f32.pop %v6555
    %vm6559 = vweird.f32 %v6459
    %v6560 = vadd.s32 %v6556, 3
    %v6561 = vand.u32 %v6560, 3
    %vm6562 = vcmp.lt.s32.totalorder %v6561, 2
    %vm6563 = vcmp.eq.s32.totalorder %v6561, 0
    %v6564 = vxor.u32 %v6558, 2147483648
    %v6565 = vsel %vm6563, %v6557, %v6564
    %vm6566 = vcmp.eq.s32.totalorder %v6561, 2
    %v6567 = vxor.u32 %v6557, 2147483648
    %v6568 = vsel %vm6566, %v6567, %v6558
    %v6569 = vsel %vm6562, %v6565, %v6568
    %v6570 = vsel %vm6559, nan, %v6569
    %v6571 = vand.u32 2147483647, %v6460
    %vm6572 = vcmp.le.f32.partialorder %v6571, 0.7853982
    %vm6573 = vcmp.lt.s32.totalorder %v6460, 0
    %v6574 = vand.u32 %v6460, 2139095040
    %v6575 = vshrl.u32 %v6574, 23
    %v6576 = vsub.s32 %v6575, 127
    %v6577 = vand.u32 2147483647, %v6460
    %v6578 = vand.u32 %v6577, 8388607
    %v6579 = vor.u32 %v6578, 8388608
    %v6580 = vsub.s32 0, %v6579
    %v6581 = vadd.s32 %v6576, 1
    %vm6582 = vcmp.gt.s32.totalorder %v6581, 0
    %v6583 = vsel %vm6582, %v6581, 0
    %v6584 = vshrl.u32 %v6583, 5
    %v6585 = vand.u32 %v6583, 31
    %v6586 = vsub.s32 32, %v6585
    %v6587 = vshrl.u32 683565275, %v6586
    %v6588 = vshll.u32 683565275, %v6585
    %v6589 = vshrl.u32 2475754826, %v6586
    %v6590 = vor.u32 %v6588, %v6589
    %v6591 = vshll.u32 2475754826, %v6585
    %v6592 = vshrl.u32 2131351028, %v6586
    %v6593 = vor.u32 %v6591, %v6592
    %v6594 = vshll.u32 2131351028, %v6585
    %v6595 = vshrl.u32 2102212464, %v6586
    %v6596 = vor.u32 %v6594, %v6595
    %v6597 = vshll.u32 2102212464, %v6585
    %v6598 = vshrl.u32 920167782, %v6586
    %v6599 = vor.u32 %v6597, %v6598
    %v6600 = vshll.u32 920167782, %v6585
    %v6601 = vshrl.u32 1326507024, %v6586
    %v6602 = vor.u32 %v6600, %v6601
    %vm6603 = vcmp.lt.s32.totalorder %v6584, 1
    %vm6604 = vcmp.lt.s32.totalorder %v6584, 2
    %vm6605 = vcmp.lt.s32.totalorder %v6584, 3
    %vm6606 = vcmp.lt.s32.totalorder %v6584, 4
    %v6607 = vsel %vm6603, %v6587, %v6590
    %v6608 = vsel %vm6606, %v6596, 2102212464
    %v6609 = vsel %vm6605, %v6593, %v6608
    %v6610 = vsel %vm6604, %v6607, %v6609
    %v6611 = vsel %vm6603, %v6590, %v6593
    %v6612 = vsel %vm6606, %v6599, 920167782
    %v6613 = vsel %vm6605, %v6596, %v6612
    %v6614 = vsel %vm6604, %v6611, %v6613
    %v6615 = vsel %vm6603, %v6593, %v6596
    %v6616 = vsel %vm6606, %v6602, 1326507024
    %v6617 = vsel %vm6605, %v6599, %v6616
    %v6618 = vsel %vm6604, %v6615, %v6617
    %v6619 = vshll.u32 %v6579, 8
    %v6620 = vmul.u32.u64.compose %v6619, %v6618
    %v6621 = vextract.low.u32 %v6620
    %v6622 = vextract.high.u32 %v6620
    %v6623 = vmul.u32.u64.compose %v6619, %v6614
    %v6624 = vextract.low.u32 %v6623
    %v6625 = vextract.high.u32 %v6623
    %v6626 = vmul.u32 %v6619, %v6610
    %v6627 = vadd.s32 %v6622, %v6624
    %vm6628 = vc.u32 %v6622, %v6624
    %v6629 = vadd.s32 %v6625, 1
    %v6630 = vsel %vm6628, %v6629, %v6625
    %v6631 = vadd.s32 %v6626, %v6630
    %v6632 = vadd.s32 %v6631, 536870912
    %v6633 = vshrl.u32 %v6632, 30
    %v6634 = vshll.u32 %v6633, 30
    %v6635 = vsub.s32 %v6631, %v6634
    %vm6636 = vcmp.lt.s32.totalorder %v6635, 0
    %v6637 = vsub.s32 0, %v6635
    %v6638 = vsel %vm6636, %v6637, %v6635
    %v6639 = vclz %v6638
    %v6640 = vsub.s32 %v6639, 2
    %vm6641 = vcmp.gt.s32.totalorder 0, %v6640
    %v6642 = vsel %vm6641, 0, %v6640
    %v6643 = vsub.s32 32, %v6642
    %v6644 = vshll.u32 %v6635, %v6642
    %v6645 = vshrl.u32 %v6627, %v6643
    %v6646 = vor.u32 %v6644, %v6645
    %v6647 = vsub.s32 4294967266, %v6642
    %v6648 = vadd.s32 %v6647, 127
    %v6649 = vshll.u32 %v6648, 23
    %v6650 = vor.u32 4788187, %v6649
    %v6651 = vand.u32 2147483647, %v6650
    %v6653 = vcvt.s32.f32 %v6646
    %v6654 = vmul.f32 %v6653, %v6651
    %v6655 = vxor.u32 %v6654, 2147483648
    %v6656 = vsel %vm6573, %v6655, %v6654
    %v6657 = vsub.s32 4, %v6633
    %v6658 = vsel %vm6573, %v6657, %v6633
    %v6659 = vsel %vm6572, %v6460, %v6656
    %v6660 = vsel %vm6572, 0, %v6658
    %v6661 = vcosq.f32.pop %v6659
    %v6662 = vsinq.f32.pop %v6659
    %vm6663 = vweird.f32 %v6460
    %v6664 = vadd.s32 %v6660, 3
    %v6665 = vand.u32 %v6664, 3
    %vm6666 = vcmp.lt.s32.totalorder %v6665, 2
    %vm6667 = vcmp.eq.s32.totalorder %v6665, 0
    %v6668 = vxor.u32 %v6662, 2147483648
    %v6669 = vsel %vm6667, %v6661, %v6668
    %vm6670 = vcmp.eq.s32.totalorder %v6665, 2
    %v6671 = vxor.u32 %v6661, 2147483648
    %v6672 = vsel %vm6670, %v6671, %v6662
    %v6673 = vsel %vm6666, %v6669, %v6672
    %v6674 = vsel %vm6663, nan, %v6673
    %v6675 = vand.u32 2147483647, %v6461
    %vm6676 = vcmp.le.f32.partialorder %v6675, 0.7853982
    %vm6677 = vcmp.lt.s32.totalorder %v6461, 0
    %v6678 = vand.u32 %v6461, 2139095040
    %v6679 = vshrl.u32 %v6678, 23
    %v6680 = vsub.s32 %v6679, 127
    %v6681 = vand.u32 2147483647, %v6461
    %v6682 = vand.u32 %v6681, 8388607
    %v6683 = vor.u32 %v6682, 8388608
    %v6684 = vsub.s32 0, %v6683
    %v6685 = vadd.s32 %v6680, 1
    %vm6686 = vcmp.gt.s32.totalorder %v6685, 0
    %v6687 = vsel %vm6686, %v6685, 0
    %v6688 = vshrl.u32 %v6687, 5
    %v6689 = vand.u32 %v6687, 31
    %v6690 = vsub.s32 32, %v6689
    %v6691 = vshrl.u32 683565275, %v6690
    %v6692 = vshll.u32 683565275, %v6689
    %v6693 = vshrl.u32 2475754826, %v6690
    %v6694 = vor.u32 %v6692, %v6693
    %v6695 = vshll.u32 2475754826, %v6689
    %v6696 = vshrl.u32 2131351028, %v6690
    %v6697 = vor.u32 %v6695, %v6696
    %v6698 = vshll.u32 2131351028, %v6689
    %v6699 = vshrl.u32 2102212464, %v6690
    %v6700 = vor.u32 %v6698, %v6699
    %v6701 = vshll.u32 2102212464, %v6689
    %v6702 = vshrl.u32 920167782, %v6690
    %v6703 = vor.u32 %v6701, %v6702
    %v6704 = vshll.u32 920167782, %v6689
    %v6705 = vshrl.u32 1326507024, %v6690
    %v6706 = vor.u32 %v6704, %v6705
    %vm6707 = vcmp.lt.s32.totalorder %v6688, 1
    %vm6708 = vcmp.lt.s32.totalorder %v6688, 2
    %vm6709 = vcmp.lt.s32.totalorder %v6688, 3
    %vm6710 = vcmp.lt.s32.totalorder %v6688, 4
    %v6711 = vsel %vm6707, %v6691, %v6694
    %v6712 = vsel %vm6710, %v6700, 2102212464
    %v6713 = vsel %vm6709, %v6697, %v6712
    %v6714 = vsel %vm6708, %v6711, %v6713
    %v6715 = vsel %vm6707, %v6694, %v6697
    %v6716 = vsel %vm6710, %v6703, 920167782
    %v6717 = vsel %vm6709, %v6700, %v6716
    %v6718 = vsel %vm6708, %v6715, %v6717
    %v6719 = vsel %vm6707, %v6697, %v6700
    %v6720 = vsel %vm6710, %v6706, 1326507024
    %v6721 = vsel %vm6709, %v6703, %v6720
    %v6722 = vsel %vm6708, %v6719, %v6721
    %v6723 = vshll.u32 %v6683, 8
    %v6724 = vmul.u32.u64.compose %v6723, %v6722
    %v6725 = vextract.low.u32 %v6724
    %v6726 = vextract.high.u32 %v6724
    %v6727 = vmul.u32.u64.compose %v6723, %v6718
    %v6728 = vextract.low.u32 %v6727
    %v6729 = vextract.high.u32 %v6727
    %v6730 = vmul.u32 %v6723, %v6714
    %v6731 = vadd.s32 %v6726, %v6728
    %vm6732 = vc.u32 %v6726, %v6728
    %v6733 = vadd.s32 %v6729, 1
    %v6734 = vsel %vm6732, %v6733, %v6729
    %v6735 = vadd.s32 %v6730, %v6734
    %v6736 = vadd.s32 %v6735, 536870912
    %v6737 = vshrl.u32 %v6736, 30
    %v6738 = vshll.u32 %v6737, 30
    %v6739 = vsub.s32 %v6735, %v6738
    %vm6740 = vcmp.lt.s32.totalorder %v6739, 0
    %v6741 = vsub.s32 0, %v6739
    %v6742 = vsel %vm6740, %v6741, %v6739
    %v6743 = vclz %v6742
    %v6744 = vsub.s32 %v6743, 2
    %vm6745 = vcmp.gt.s32.totalorder 0, %v6744
    %v6746 = vsel %vm6745, 0, %v6744
    %v6747 = vsub.s32 32, %v6746
    %v6748 = vshll.u32 %v6739, %v6746
    %v6749 = vshrl.u32 %v6731, %v6747
    %v6750 = vor.u32 %v6748, %v6749
    %v6751 = vsub.s32 4294967266, %v6746
    %v6752 = vadd.s32 %v6751, 127
    %v6753 = vshll.u32 %v6752, 23
    %v6754 = vor.u32 4788187, %v6753
    %v6755 = vand.u32 2147483647, %v6754
    %v6757 = vcvt.s32.f32 %v6750
    %v6758 = vmul.f32 %v6757, %v6755
    %v6759 = vxor.u32 %v6758, 2147483648
    %v6760 = vsel %vm6677, %v6759, %v6758
    %v6761 = vsub.s32 4, %v6737
    %v6762 = vsel %vm6677, %v6761, %v6737
    %v6763 = vsel %vm6676, %v6461, %v6760
    %v6764 = vsel %vm6676, 0, %v6762
    %v6765 = vcosq.f32.pop %v6763
    %v6766 = vsinq.f32.pop %v6763
    %vm6767 = vweird.f32 %v6461
    %v6768 = vadd.s32 %v6764, 3
    %v6769 = vand.u32 %v6768, 3
    %vm6770 = vcmp.lt.s32.totalorder %v6769, 2
    %vm6771 = vcmp.eq.s32.totalorder %v6769, 0
    %v6772 = vxor.u32 %v6766, 2147483648
    %v6773 = vsel %vm6771, %v6765, %v6772
    %vm6774 = vcmp.eq.s32.totalorder %v6769, 2
    %v6775 = vxor.u32 %v6765, 2147483648
    %v6776 = vsel %vm6774, %v6775, %v6766
    %v6777 = vsel %vm6770, %v6773, %v6776
    %v6778 = vsel %vm6767, nan, %v6777
    %v6779 = vand.u32 2147483647, %v6462
    %vm6780 = vcmp.le.f32.partialorder %v6779, 0.7853982
    %vm6781 = vcmp.lt.s32.totalorder %v6462, 0
    %v6782 = vand.u32 %v6462, 2139095040
    %v6783 = vshrl.u32 %v6782, 23
    %v6784 = vsub.s32 %v6783, 127
    %v6785 = vand.u32 2147483647, %v6462
    %v6786 = vand.u32 %v6785, 8388607
    %v6787 = vor.u32 %v6786, 8388608
    %v6788 = vsub.s32 0, %v6787
    %v6789 = vadd.s32 %v6784, 1
    %vm6790 = vcmp.gt.s32.totalorder %v6789, 0
    %v6791 = vsel %vm6790, %v6789, 0
    %v6792 = vshrl.u32 %v6791, 5
    %v6793 = vand.u32 %v6791, 31
    %v6794 = vsub.s32 32, %v6793
    %v6795 = vshrl.u32 683565275, %v6794
    %v6796 = vshll.u32 683565275, %v6793
    %v6797 = vshrl.u32 2475754826, %v6794
    %v6798 = vor.u32 %v6796, %v6797
    %v6799 = vshll.u32 2475754826, %v6793
    %v6800 = vshrl.u32 2131351028, %v6794
    %v6801 = vor.u32 %v6799, %v6800
    %v6802 = vshll.u32 2131351028, %v6793
    %v6803 = vshrl.u32 2102212464, %v6794
    %v6804 = vor.u32 %v6802, %v6803
    %v6805 = vshll.u32 2102212464, %v6793
    %v6806 = vshrl.u32 920167782, %v6794
    %v6807 = vor.u32 %v6805, %v6806
    %v6808 = vshll.u32 920167782, %v6793
    %v6809 = vshrl.u32 1326507024, %v6794
    %v6810 = vor.u32 %v6808, %v6809
    %vm6811 = vcmp.lt.s32.totalorder %v6792, 1
    %vm6812 = vcmp.lt.s32.totalorder %v6792, 2
    %vm6813 = vcmp.lt.s32.totalorder %v6792, 3
    %vm6814 = vcmp.lt.s32.totalorder %v6792, 4
    %v6815 = vsel %vm6811, %v6795, %v6798
    %v6816 = vsel %vm6814, %v6804, 2102212464
    %v6817 = vsel %vm6813, %v6801, %v6816
    %v6818 = vsel %vm6812, %v6815, %v6817
    %v6819 = vsel %vm6811, %v6798, %v6801
    %v6820 = vsel %vm6814, %v6807, 920167782
    %v6821 = vsel %vm6813, %v6804, %v6820
    %v6822 = vsel %vm6812, %v6819, %v6821
    %v6823 = vsel %vm6811, %v6801, %v6804
    %v6824 = vsel %vm6814, %v6810, 1326507024
    %v6825 = vsel %vm6813, %v6807, %v6824
    %v6826 = vsel %vm6812, %v6823, %v6825
    %v6827 = vshll.u32 %v6787, 8
    %v6828 = vmul.u32.u64.compose %v6827, %v6826
    %v6829 = vextract.low.u32 %v6828
    %v6830 = vextract.high.u32 %v6828
    %v6831 = vmul.u32.u64.compose %v6827, %v6822
    %v6832 = vextract.low.u32 %v6831
    %v6833 = vextract.high.u32 %v6831
    %v6834 = vmul.u32 %v6827, %v6818
    %v6835 = vadd.s32 %v6830, %v6832
    %vm6836 = vc.u32 %v6830, %v6832
    %v6837 = vadd.s32 %v6833, 1
    %v6838 = vsel %vm6836, %v6837, %v6833
    %v6839 = vadd.s32 %v6834, %v6838
    %v6840 = vadd.s32 %v6839, 536870912
    %v6841 = vshrl.u32 %v6840, 30
    %v6842 = vshll.u32 %v6841, 30
    %v6843 = vsub.s32 %v6839, %v6842
    %vm6844 = vcmp.lt.s32.totalorder %v6843, 0
    %v6845 = vsub.s32 0, %v6843
    %v6846 = vsel %vm6844, %v6845, %v6843
    %v6847 = vclz %v6846
    %v6848 = vsub.s32 %v6847, 2
    %vm6849 = vcmp.gt.s32.totalorder 0, %v6848
    %v6850 = vsel %vm6849, 0, %v6848
    %v6851 = vsub.s32 32, %v6850
    %v6852 = vshll.u32 %v6843, %v6850
    %v6853 = vshrl.u32 %v6835, %v6851
    %v6854 = vor.u32 %v6852, %v6853
    %v6855 = vsub.s32 4294967266, %v6850
    %v6856 = vadd.s32 %v6855, 127
    %v6857 = vshll.u32 %v6856, 23
    %v6858 = vor.u32 4788187, %v6857
    %v6859 = vand.u32 2147483647, %v6858
    %v6861 = vcvt.s32.f32 %v6854
    %v6862 = vmul.f32 %v6861, %v6859
    %v6863 = vxor.u32 %v6862, 2147483648
    %v6864 = vsel %vm6781, %v6863, %v6862
    %v6865 = vsub.s32 4, %v6841
    %v6866 = vsel %vm6781, %v6865, %v6841
    %v6867 = vsel %vm6780, %v6462, %v6864
    %v6868 = vsel %vm6780, 0, %v6866
    %v6869 = vcosq.f32.pop %v6867
    %v6870 = vsinq.f32.pop %v6867
    %vm6871 = vweird.f32 %v6462
    %v6872 = vadd.s32 %v6868, 3
    %v6873 = vand.u32 %v6872, 3
    %vm6874 = vcmp.lt.s32.totalorder %v6873, 2
    %vm6875 = vcmp.eq.s32.totalorder %v6873, 0
    %v6876 = vxor.u32 %v6870, 2147483648
    %v6877 = vsel %vm6875, %v6869, %v6876
    %vm6878 = vcmp.eq.s32.totalorder %v6873, 2
    %v6879 = vxor.u32 %v6869, 2147483648
    %v6880 = vsel %vm6878, %v6879, %v6870
    %v6881 = vsel %vm6874, %v6877, %v6880
    %v6882 = vsel %vm6871, nan, %v6881
    %v6883 = vand.u32 2147483647, %v6463
    %vm6884 = vcmp.le.f32.partialorder %v6883, 0.7853982
    %vm6885 = vcmp.lt.s32.totalorder %v6463, 0
    %v6886 = vand.u32 %v6463, 2139095040
    %v6887 = vshrl.u32 %v6886, 23
    %v6888 = vsub.s32 %v6887, 127
    %v6889 = vand.u32 2147483647, %v6463
    %v6890 = vand.u32 %v6889, 8388607
    %v6891 = vor.u32 %v6890, 8388608
    %v6892 = vsub.s32 0, %v6891
    %v6893 = vadd.s32 %v6888, 1
    %vm6894 = vcmp.gt.s32.totalorder %v6893, 0
    %v6895 = vsel %vm6894, %v6893, 0
    %v6896 = vshrl.u32 %v6895, 5
    %v6897 = vand.u32 %v6895, 31
    %v6898 = vsub.s32 32, %v6897
    %v6899 = vshrl.u32 683565275, %v6898
    %v6900 = vshll.u32 683565275, %v6897
    %v6901 = vshrl.u32 2475754826, %v6898
    %v6902 = vor.u32 %v6900, %v6901
    %v6903 = vshll.u32 2475754826, %v6897
    %v6904 = vshrl.u32 2131351028, %v6898
    %v6905 = vor.u32 %v6903, %v6904
    %v6906 = vshll.u32 2131351028, %v6897
    %v6907 = vshrl.u32 2102212464, %v6898
    %v6908 = vor.u32 %v6906, %v6907
    %v6909 = vshll.u32 2102212464, %v6897
    %v6910 = vshrl.u32 920167782, %v6898
    %v6911 = vor.u32 %v6909, %v6910
    %v6912 = vshll.u32 920167782, %v6897
    %v6913 = vshrl.u32 1326507024, %v6898
    %v6914 = vor.u32 %v6912, %v6913
    %vm6915 = vcmp.lt.s32.totalorder %v6896, 1
    %vm6916 = vcmp.lt.s32.totalorder %v6896, 2
    %vm6917 = vcmp.lt.s32.totalorder %v6896, 3
    %vm6918 = vcmp.lt.s32.totalorder %v6896, 4
    %v6919 = vsel %vm6915, %v6899, %v6902
    %v6920 = vsel %vm6918, %v6908, 2102212464
    %v6921 = vsel %vm6917, %v6905, %v6920
    %v6922 = vsel %vm6916, %v6919, %v6921
    %v6923 = vsel %vm6915, %v6902, %v6905
    %v6924 = vsel %vm6918, %v6911, 920167782
    %v6925 = vsel %vm6917, %v6908, %v6924
    %v6926 = vsel %vm6916, %v6923, %v6925
    %v6927 = vsel %vm6915, %v6905, %v6908
    %v6928 = vsel %vm6918, %v6914, 1326507024
    %v6929 = vsel %vm6917, %v6911, %v6928
    %v6930 = vsel %vm6916, %v6927, %v6929
    %v6931 = vshll.u32 %v6891, 8
    %v6932 = vmul.u32.u64.compose %v6931, %v6930
    %v6933 = vextract.low.u32 %v6932
    %v6934 = vextract.high.u32 %v6932
    %v6935 = vmul.u32.u64.compose %v6931, %v6926
    %v6936 = vextract.low.u32 %v6935
    %v6937 = vextract.high.u32 %v6935
    %v6938 = vmul.u32 %v6931, %v6922
    %v6939 = vadd.s32 %v6934, %v6936
    %vm6940 = vc.u32 %v6934, %v6936
    %v6941 = vadd.s32 %v6937, 1
    %v6942 = vsel %vm6940, %v6941, %v6937
    %v6943 = vadd.s32 %v6938, %v6942
    %v6944 = vadd.s32 %v6943, 536870912
    %v6945 = vshrl.u32 %v6944, 30
    %v6946 = vshll.u32 %v6945, 30
    %v6947 = vsub.s32 %v6943, %v6946
    %vm6948 = vcmp.lt.s32.totalorder %v6947, 0
    %v6949 = vsub.s32 0, %v6947
    %v6950 = vsel %vm6948, %v6949, %v6947
    %v6951 = vclz %v6950
    %v6952 = vsub.s32 %v6951, 2
    %vm6953 = vcmp.gt.s32.totalorder 0, %v6952
    %v6954 = vsel %vm6953, 0, %v6952
    %v6955 = vsub.s32 32, %v6954
    %v6956 = vshll.u32 %v6947, %v6954
    %v6957 = vshrl.u32 %v6939, %v6955
    %v6958 = vor.u32 %v6956, %v6957
    %v6959 = vsub.s32 4294967266, %v6954
    %v6960 = vadd.s32 %v6959, 127
    %v6961 = vshll.u32 %v6960, 23
    %v6962 = vor.u32 4788187, %v6961
    %v6963 = vand.u32 2147483647, %v6962
    %v6965 = vcvt.s32.f32 %v6958
    %v6966 = vmul.f32 %v6965, %v6963
    %v6967 = vxor.u32 %v6966, 2147483648
    %v6968 = vsel %vm6885, %v6967, %v6966
    %v6969 = vsub.s32 4, %v6945
    %v6970 = vsel %vm6885, %v6969, %v6945
    %v6971 = vsel %vm6884, %v6463, %v6968
    %v6972 = vsel %vm6884, 0, %v6970
    %v6973 = vcosq.f32.pop %v6971
    %v6974 = vsinq.f32.pop %v6971
    %vm6975 = vweird.f32 %v6463
    %v6976 = vadd.s32 %v6972, 3
    %v6977 = vand.u32 %v6976, 3
    %vm6978 = vcmp.lt.s32.totalorder %v6977, 2
    %vm6979 = vcmp.eq.s32.totalorder %v6977, 0
    %v6980 = vxor.u32 %v6974, 2147483648
    %v6981 = vsel %vm6979, %v6973, %v6980
    %vm6982 = vcmp.eq.s32.totalorder %v6977, 2
    %v6983 = vxor.u32 %v6973, 2147483648
    %v6984 = vsel %vm6982, %v6983, %v6974
    %v6985 = vsel %vm6978, %v6981, %v6984
    %v6986 = vsel %vm6975, nan, %v6985
    %v6987 = vand.u32 2147483647, %v6464
    %vm6988 = vcmp.le.f32.partialorder %v6987, 0.7853982
    %vm6989 = vcmp.lt.s32.totalorder %v6464, 0
    %v6990 = vand.u32 %v6464, 2139095040
    %v6991 = vshrl.u32 %v6990, 23
    %v6992 = vsub.s32 %v6991, 127
    %v6993 = vand.u32 2147483647, %v6464
    %v6994 = vand.u32 %v6993, 8388607
    %v6995 = vor.u32 %v6994, 8388608
    %v6996 = vsub.s32 0, %v6995
    %v6997 = vadd.s32 %v6992, 1
    %vm6998 = vcmp.gt.s32.totalorder %v6997, 0
    %v6999 = vsel %vm6998, %v6997, 0
    %v7000 = vshrl.u32 %v6999, 5
    %v7001 = vand.u32 %v6999, 31
    %v7002 = vsub.s32 32, %v7001
    %v7003 = vshrl.u32 683565275, %v7002
    %v7004 = vshll.u32 683565275, %v7001
    %v7005 = vshrl.u32 2475754826, %v7002
    %v7006 = vor.u32 %v7004, %v7005
    %v7007 = vshll.u32 2475754826, %v7001
    %v7008 = vshrl.u32 2131351028, %v7002
    %v7009 = vor.u32 %v7007, %v7008
    %v7010 = vshll.u32 2131351028, %v7001
    %v7011 = vshrl.u32 2102212464, %v7002
    %v7012 = vor.u32 %v7010, %v7011
    %v7013 = vshll.u32 2102212464, %v7001
    %v7014 = vshrl.u32 920167782, %v7002
    %v7015 = vor.u32 %v7013, %v7014
    %v7016 = vshll.u32 920167782, %v7001
    %v7017 = vshrl.u32 1326507024, %v7002
    %v7018 = vor.u32 %v7016, %v7017
    %vm7019 = vcmp.lt.s32.totalorder %v7000, 1
    %vm7020 = vcmp.lt.s32.totalorder %v7000, 2
    %vm7021 = vcmp.lt.s32.totalorder %v7000, 3
    %vm7022 = vcmp.lt.s32.totalorder %v7000, 4
    %v7023 = vsel %vm7019, %v7003, %v7006
    %v7024 = vsel %vm7022, %v7012, 2102212464
    %v7025 = vsel %vm7021, %v7009, %v7024
    %v7026 = vsel %vm7020, %v7023, %v7025
    %v7027 = vsel %vm7019, %v7006, %v7009
    %v7028 = vsel %vm7022, %v7015, 920167782
    %v7029 = vsel %vm7021, %v7012, %v7028
    %v7030 = vsel %vm7020, %v7027, %v7029
    %v7031 = vsel %vm7019, %v7009, %v7012
    %v7032 = vsel %vm7022, %v7018, 1326507024
    %v7033 = vsel %vm7021, %v7015, %v7032
    %v7034 = vsel %vm7020, %v7031, %v7033
    %v7035 = vshll.u32 %v6995, 8
    %v7036 = vmul.u32.u64.compose %v7035, %v7034
    %v7037 = vextract.low.u32 %v7036
    %v7038 = vextract.high.u32 %v7036
    %v7039 = vmul.u32.u64.compose %v7035, %v7030
    %v7040 = vextract.low.u32 %v7039
    %v7041 = vextract.high.u32 %v7039
    %v7042 = vmul.u32 %v7035, %v7026
    %v7043 = vadd.s32 %v7038, %v7040
    %vm7044 = vc.u32 %v7038, %v7040
    %v7045 = vadd.s32 %v7041, 1
    %v7046 = vsel %vm7044, %v7045, %v7041
    %v7047 = vadd.s32 %v7042, %v7046
    %v7048 = vadd.s32 %v7047, 536870912
    %v7049 = vshrl.u32 %v7048, 30
    %v7050 = vshll.u32 %v7049, 30
    %v7051 = vsub.s32 %v7047, %v7050
    %vm7052 = vcmp.lt.s32.totalorder %v7051, 0
    %v7053 = vsub.s32 0, %v7051
    %v7054 = vsel %vm7052, %v7053, %v7051
    %v7055 = vclz %v7054
    %v7056 = vsub.s32 %v7055, 2
    %vm7057 = vcmp.gt.s32.totalorder 0, %v7056
    %v7058 = vsel %vm7057, 0, %v7056
    %v7059 = vsub.s32 32, %v7058
    %v7060 = vshll.u32 %v7051, %v7058
    %v7061 = vshrl.u32 %v7043, %v7059
    %v7062 = vor.u32 %v7060, %v7061
    %v7063 = vsub.s32 4294967266, %v7058
    %v7064 = vadd.s32 %v7063, 127
    %v7065 = vshll.u32 %v7064, 23
    %v7066 = vor.u32 4788187, %v7065
    %v7067 = vand.u32 2147483647, %v7066
    %v7069 = vcvt.s32.f32 %v7062
    %v7070 = vmul.f32 %v7069, %v7067
    %v7071 = vxor.u32 %v7070, 2147483648
    %v7072 = vsel %vm6989, %v7071, %v7070
    %v7073 = vsub.s32 4, %v7049
    %v7074 = vsel %vm6989, %v7073, %v7049
    %v7075 = vsel %vm6988, %v6464, %v7072
    %v7076 = vsel %vm6988, 0, %v7074
    %v7077 = vcosq.f32.pop %v7075
    %v7078 = vsinq.f32.pop %v7075
    %vm7079 = vweird.f32 %v6464
    %v7080 = vadd.s32 %v7076, 3
    %v7081 = vand.u32 %v7080, 3
    %vm7082 = vcmp.lt.s32.totalorder %v7081, 2
    %vm7083 = vcmp.eq.s32.totalorder %v7081, 0
    %v7084 = vxor.u32 %v7078, 2147483648
    %v7085 = vsel %vm7083, %v7077, %v7084
    %vm7086 = vcmp.eq.s32.totalorder %v7081, 2
    %v7087 = vxor.u32 %v7077, 2147483648
    %v7088 = vsel %vm7086, %v7087, %v7078
    %v7089 = vsel %vm7082, %v7085, %v7088
    %v7090 = vsel %vm7079, nan, %v7089
    %v7091 = vand.u32 2147483647, %v6465
    %vm7092 = vcmp.le.f32.partialorder %v7091, 0.7853982
    %vm7093 = vcmp.lt.s32.totalorder %v6465, 0
    %v7094 = vand.u32 %v6465, 2139095040
    %v7095 = vshrl.u32 %v7094, 23
    %v7096 = vsub.s32 %v7095, 127
    %v7097 = vand.u32 2147483647, %v6465
    %v7098 = vand.u32 %v7097, 8388607
    %v7099 = vor.u32 %v7098, 8388608
    %v7100 = vsub.s32 0, %v7099
    %v7101 = vadd.s32 %v7096, 1
    %vm7102 = vcmp.gt.s32.totalorder %v7101, 0
    %v7103 = vsel %vm7102, %v7101, 0
    %v7104 = vshrl.u32 %v7103, 5
    %v7105 = vand.u32 %v7103, 31
    %v7106 = vsub.s32 32, %v7105
    %v7107 = vshrl.u32 683565275, %v7106
    %v7108 = vshll.u32 683565275, %v7105
    %v7109 = vshrl.u32 2475754826, %v7106
    %v7110 = vor.u32 %v7108, %v7109
    %v7111 = vshll.u32 2475754826, %v7105
    %v7112 = vshrl.u32 2131351028, %v7106
    %v7113 = vor.u32 %v7111, %v7112
    %v7114 = vshll.u32 2131351028, %v7105
    %v7115 = vshrl.u32 2102212464, %v7106
    %v7116 = vor.u32 %v7114, %v7115
    %v7117 = vshll.u32 2102212464, %v7105
    %v7118 = vshrl.u32 920167782, %v7106
    %v7119 = vor.u32 %v7117, %v7118
    %v7120 = vshll.u32 920167782, %v7105
    %v7121 = vshrl.u32 1326507024, %v7106
    %v7122 = vor.u32 %v7120, %v7121
    %vm7123 = vcmp.lt.s32.totalorder %v7104, 1
    %vm7124 = vcmp.lt.s32.totalorder %v7104, 2
    %vm7125 = vcmp.lt.s32.totalorder %v7104, 3
    %vm7126 = vcmp.lt.s32.totalorder %v7104, 4
    %v7127 = vsel %vm7123, %v7107, %v7110
    %v7128 = vsel %vm7126, %v7116, 2102212464
    %v7129 = vsel %vm7125, %v7113, %v7128
    %v7130 = vsel %vm7124, %v7127, %v7129
    %v7131 = vsel %vm7123, %v7110, %v7113
    %v7132 = vsel %vm7126, %v7119, 920167782
    %v7133 = vsel %vm7125, %v7116, %v7132
    %v7134 = vsel %vm7124, %v7131, %v7133
    %v7135 = vsel %vm7123, %v7113, %v7116
    %v7136 = vsel %vm7126, %v7122, 1326507024
    %v7137 = vsel %vm7125, %v7119, %v7136
    %v7138 = vsel %vm7124, %v7135, %v7137
    %v7139 = vshll.u32 %v7099, 8
    %v7140 = vmul.u32.u64.compose %v7139, %v7138
    %v7141 = vextract.low.u32 %v7140
    %v7142 = vextract.high.u32 %v7140
    %v7143 = vmul.u32.u64.compose %v7139, %v7134
    %v7144 = vextract.low.u32 %v7143
    %v7145 = vextract.high.u32 %v7143
    %v7146 = vmul.u32 %v7139, %v7130
    %v7147 = vadd.s32 %v7142, %v7144
    %vm7148 = vc.u32 %v7142, %v7144
    %v7149 = vadd.s32 %v7145, 1
    %v7150 = vsel %vm7148, %v7149, %v7145
    %v7151 = vadd.s32 %v7146, %v7150
    %v7152 = vadd.s32 %v7151, 536870912
    %v7153 = vshrl.u32 %v7152, 30
    %v7154 = vshll.u32 %v7153, 30
    %v7155 = vsub.s32 %v7151, %v7154
    %vm7156 = vcmp.lt.s32.totalorder %v7155, 0
    %v7157 = vsub.s32 0, %v7155
    %v7158 = vsel %vm7156, %v7157, %v7155
    %v7159 = vclz %v7158
    %v7160 = vsub.s32 %v7159, 2
    %vm7161 = vcmp.gt.s32.totalorder 0, %v7160
    %v7162 = vsel %vm7161, 0, %v7160
    %v7163 = vsub.s32 32, %v7162
    %v7164 = vshll.u32 %v7155, %v7162
    %v7165 = vshrl.u32 %v7147, %v7163
    %v7166 = vor.u32 %v7164, %v7165
    %v7167 = vsub.s32 4294967266, %v7162
    %v7168 = vadd.s32 %v7167, 127
    %v7169 = vshll.u32 %v7168, 23
    %v7170 = vor.u32 4788187, %v7169
    %v7171 = vand.u32 2147483647, %v7170
    %v7173 = vcvt.s32.f32 %v7166
    %v7174 = vmul.f32 %v7173, %v7171
    %v7175 = vxor.u32 %v7174, 2147483648
    %v7176 = vsel %vm7093, %v7175, %v7174
    %v7177 = vsub.s32 4, %v7153
    %v7178 = vsel %vm7093, %v7177, %v7153
    %v7179 = vsel %vm7092, %v6465, %v7176
    %v7180 = vsel %vm7092, 0, %v7178
    %v7181 = vcosq.f32.pop %v7179
    %v7182 = vsinq.f32.pop %v7179
    %vm7183 = vweird.f32 %v6465
    %v7184 = vadd.s32 %v7180, 3
    %v7185 = vand.u32 %v7184, 3
    %vm7186 = vcmp.lt.s32.totalorder %v7185, 2
    %vm7187 = vcmp.eq.s32.totalorder %v7185, 0
    %v7188 = vxor.u32 %v7182, 2147483648
    %v7189 = vsel %vm7187, %v7181, %v7188
    %vm7190 = vcmp.eq.s32.totalorder %v7185, 2
    %v7191 = vxor.u32 %v7181, 2147483648
    %v7192 = vsel %vm7190, %v7191, %v7182
    %v7193 = vsel %vm7186, %v7189, %v7192
    %v7194 = vsel %vm7183, nan, %v7193
    %v7195 = vand.u32 2147483647, %v6466
    %vm7196 = vcmp.le.f32.partialorder %v7195, 0.7853982
    %vm7197 = vcmp.lt.s32.totalorder %v6466, 0
    %v7198 = vand.u32 %v6466, 2139095040
    %v7199 = vshrl.u32 %v7198, 23
    %v7200 = vsub.s32 %v7199, 127
    %v7201 = vand.u32 2147483647, %v6466
    %v7202 = vand.u32 %v7201, 8388607
    %v7203 = vor.u32 %v7202, 8388608
    %v7204 = vsub.s32 0, %v7203
    %v7205 = vadd.s32 %v7200, 1
    %vm7206 = vcmp.gt.s32.totalorder %v7205, 0
    %v7207 = vsel %vm7206, %v7205, 0
    %v7208 = vshrl.u32 %v7207, 5
    %v7209 = vand.u32 %v7207, 31
    %v7210 = vsub.s32 32, %v7209
    %v7211 = vshrl.u32 683565275, %v7210
    %v7212 = vshll.u32 683565275, %v7209
    %v7213 = vshrl.u32 2475754826, %v7210
    %v7214 = vor.u32 %v7212, %v7213
    %v7215 = vshll.u32 2475754826, %v7209
    %v7216 = vshrl.u32 2131351028, %v7210
    %v7217 = vor.u32 %v7215, %v7216
    %v7218 = vshll.u32 2131351028, %v7209
    %v7219 = vshrl.u32 2102212464, %v7210
    %v7220 = vor.u32 %v7218, %v7219
    %v7221 = vshll.u32 2102212464, %v7209
    %v7222 = vshrl.u32 920167782, %v7210
    %v7223 = vor.u32 %v7221, %v7222
    %v7224 = vshll.u32 920167782, %v7209
    %v7225 = vshrl.u32 1326507024, %v7210
    %v7226 = vor.u32 %v7224, %v7225
    %vm7227 = vcmp.lt.s32.totalorder %v7208, 1
    %vm7228 = vcmp.lt.s32.totalorder %v7208, 2
    %vm7229 = vcmp.lt.s32.totalorder %v7208, 3
    %vm7230 = vcmp.lt.s32.totalorder %v7208, 4
    %v7231 = vsel %vm7227, %v7211, %v7214
    %v7232 = vsel %vm7230, %v7220, 2102212464
    %v7233 = vsel %vm7229, %v7217, %v7232
    %v7234 = vsel %vm7228, %v7231, %v7233
    %v7235 = vsel %vm7227, %v7214, %v7217
    %v7236 = vsel %vm7230, %v7223, 920167782
    %v7237 = vsel %vm7229, %v7220, %v7236
    %v7238 = vsel %vm7228, %v7235, %v7237
    %v7239 = vsel %vm7227, %v7217, %v7220
    %v7240 = vsel %vm7230, %v7226, 1326507024
    %v7241 = vsel %vm7229, %v7223, %v7240
    %v7242 = vsel %vm7228, %v7239, %v7241
    %v7243 = vshll.u32 %v7203, 8
    %v7244 = vmul.u32.u64.compose %v7243, %v7242
    %v7245 = vextract.low.u32 %v7244
    %v7246 = vextract.high.u32 %v7244
    %v7247 = vmul.u32.u64.compose %v7243, %v7238
    %v7248 = vextract.low.u32 %v7247
    %v7249 = vextract.high.u32 %v7247
    %v7250 = vmul.u32 %v7243, %v7234
    %v7251 = vadd.s32 %v7246, %v7248
    %vm7252 = vc.u32 %v7246, %v7248
    %v7253 = vadd.s32 %v7249, 1
    %v7254 = vsel %vm7252, %v7253, %v7249
    %v7255 = vadd.s32 %v7250, %v7254
    %v7256 = vadd.s32 %v7255, 536870912
    %v7257 = vshrl.u32 %v7256, 30
    %v7258 = vshll.u32 %v7257, 30
    %v7259 = vsub.s32 %v7255, %v7258
    %vm7260 = vcmp.lt.s32.totalorder %v7259, 0
    %v7261 = vsub.s32 0, %v7259
    %v7262 = vsel %vm7260, %v7261, %v7259
    %v7263 = vclz %v7262
    %v7264 = vsub.s32 %v7263, 2
    %vm7265 = vcmp.gt.s32.totalorder 0, %v7264
    %v7266 = vsel %vm7265, 0, %v7264
    %v7267 = vsub.s32 32, %v7266
    %v7268 = vshll.u32 %v7259, %v7266
    %v7269 = vshrl.u32 %v7251, %v7267
    %v7270 = vor.u32 %v7268, %v7269
    %v7271 = vsub.s32 4294967266, %v7266
    %v7272 = vadd.s32 %v7271, 127
    %v7273 = vshll.u32 %v7272, 23
    %v7274 = vor.u32 4788187, %v7273
    %v7275 = vand.u32 2147483647, %v7274
    %v7277 = vcvt.s32.f32 %v7270
    %v7278 = vmul.f32 %v7277, %v7275
    %v7279 = vxor.u32 %v7278, 2147483648
    %v7280 = vsel %vm7197, %v7279, %v7278
    %v7281 = vsub.s32 4, %v7257
    %v7282 = vsel %vm7197, %v7281, %v7257
    %v7283 = vsel %vm7196, %v6466, %v7280
    %v7284 = vsel %vm7196, 0, %v7282
    %v7285 = vcosq.f32.pop %v7283
    %v7286 = vsinq.f32.pop %v7283
    %vm7287 = vweird.f32 %v6466
    %v7288 = vadd.s32 %v7284, 3
    %v7289 = vand.u32 %v7288, 3
    %vm7290 = vcmp.lt.s32.totalorder %v7289, 2
    %vm7291 = vcmp.eq.s32.totalorder %v7289, 0
    %v7292 = vxor.u32 %v7286, 2147483648
    %v7293 = vsel %vm7291, %v7285, %v7292
    %vm7294 = vcmp.eq.s32.totalorder %v7289, 2
    %v7295 = vxor.u32 %v7285, 2147483648
    %v7296 = vsel %vm7294, %v7295, %v7286
    %v7297 = vsel %vm7290, %v7293, %v7296
    %v7298 = vsel %vm7287, nan, %v7297
    %7299 = vst [vmem:[#allocation2 + $0xc0] sm:$0x7] %v6570
    %7300 = vst [vmem:[#allocation2 + $0xc8] sm:$0x7] %v6674
    %7301 = vst [vmem:[#allocation2 + $0xd0] sm:$0x7] %v6778
    %7302 = vst [vmem:[#allocation2 + $0xd8] sm:$0x7] %v6882
    %7303 = vst [vmem:[#allocation2 + $0xe0] sm:$0x7] %v6986
    %7304 = vst [vmem:[#allocation2 + $0xe8] sm:$0x7] %v7090
    %7305 = vst [vmem:[#allocation2 + $0xf0] sm:$0x7] %v7194
    %7306 = vst [vmem:[#allocation2 + $0xf8] sm:$0x7] %v7298
    %v7307 = vand.u32 2147483647, %v6459
    %vm7308 = vcmp.le.f32.partialorder %v7307, 0.7853982
    %vm7309 = vcmp.lt.s32.totalorder %v6459, 0
    %v7310 = vand.u32 %v6459, 2139095040
    %v7311 = vshrl.u32 %v7310, 23
    %v7312 = vsub.s32 %v7311, 127
    %v7313 = vand.u32 2147483647, %v6459
    %v7314 = vand.u32 %v7313, 8388607
    %v7315 = vor.u32 %v7314, 8388608
    %v7316 = vsub.s32 0, %v7315
    %v7317 = vadd.s32 %v7312, 1
    %vm7318 = vcmp.gt.s32.totalorder %v7317, 0
    %v7319 = vsel %vm7318, %v7317, 0
    %v7320 = vshrl.u32 %v7319, 5
    %v7321 = vand.u32 %v7319, 31
    %v7322 = vsub.s32 32, %v7321
    %v7323 = vshrl.u32 683565275, %v7322
    %v7324 = vshll.u32 683565275, %v7321
    %v7325 = vshrl.u32 2475754826, %v7322
    %v7326 = vor.u32 %v7324, %v7325
    %v7327 = vshll.u32 2475754826, %v7321
    %v7328 = vshrl.u32 2131351028, %v7322
    %v7329 = vor.u32 %v7327, %v7328
    %v7330 = vshll.u32 2131351028, %v7321
    %v7331 = vshrl.u32 2102212464, %v7322
    %v7332 = vor.u32 %v7330, %v7331
    %v7333 = vshll.u32 2102212464, %v7321
    %v7334 = vshrl.u32 920167782, %v7322
    %v7335 = vor.u32 %v7333, %v7334
    %v7336 = vshll.u32 920167782, %v7321
    %v7337 = vshrl.u32 1326507024, %v7322
    %v7338 = vor.u32 %v7336, %v7337
    %vm7339 = vcmp.lt.s32.totalorder %v7320, 1
    %vm7340 = vcmp.lt.s32.totalorder %v7320, 2
    %vm7341 = vcmp.lt.s32.totalorder %v7320, 3
    %vm7342 = vcmp.lt.s32.totalorder %v7320, 4
    %v7343 = vsel %vm7339, %v7323, %v7326
    %v7344 = vsel %vm7342, %v7332, 2102212464
    %v7345 = vsel %vm7341, %v7329, %v7344
    %v7346 = vsel %vm7340, %v7343, %v7345
    %v7347 = vsel %vm7339, %v7326, %v7329
    %v7348 = vsel %vm7342, %v7335, 920167782
    %v7349 = vsel %vm7341, %v7332, %v7348
    %v7350 = vsel %vm7340, %v7347, %v7349
    %v7351 = vsel %vm7339, %v7329, %v7332
    %v7352 = vsel %vm7342, %v7338, 1326507024
    %v7353 = vsel %vm7341, %v7335, %v7352
    %v7354 = vsel %vm7340, %v7351, %v7353
    %v7355 = vshll.u32 %v7315, 8
    %v7356 = vmul.u32.u64.compose %v7355, %v7354
    %v7357 = vextract.low.u32 %v7356
    %v7358 = vextract.high.u32 %v7356
    %v7359 = vmul.u32.u64.compose %v7355, %v7350
    %v7360 = vextract.low.u32 %v7359
    %v7361 = vextract.high.u32 %v7359
    %v7362 = vmul.u32 %v7355, %v7346
    %v7363 = vadd.s32 %v7358, %v7360
    %vm7364 = vc.u32 %v7358, %v7360
    %v7365 = vadd.s32 %v7361, 1
    %v7366 = vsel %vm7364, %v7365, %v7361
    %v7367 = vadd.s32 %v7362, %v7366
    %v7368 = vadd.s32 %v7367, 536870912
    %v7369 = vshrl.u32 %v7368, 30
    %v7370 = vshll.u32 %v7369, 30
    %v7371 = vsub.s32 %v7367, %v7370
    %vm7372 = vcmp.lt.s32.totalorder %v7371, 0
    %v7373 = vsub.s32 0, %v7371
    %v7374 = vsel %vm7372, %v7373, %v7371
    %v7375 = vclz %v7374
    %v7376 = vsub.s32 %v7375, 2
    %vm7377 = vcmp.gt.s32.totalorder 0, %v7376
    %v7378 = vsel %vm7377, 0, %v7376
    %v7379 = vsub.s32 32, %v7378
    %v7380 = vshll.u32 %v7371, %v7378
    %v7381 = vshrl.u32 %v7363, %v7379
    %v7382 = vor.u32 %v7380, %v7381
    %v7383 = vsub.s32 4294967266, %v7378
    %v7384 = vadd.s32 %v7383, 127
    %v7385 = vshll.u32 %v7384, 23
    %v7386 = vor.u32 4788187, %v7385
    %v7387 = vand.u32 2147483647, %v7386
    %v7389 = vcvt.s32.f32 %v7382
    %v7390 = vmul.f32 %v7389, %v7387
    %v7391 = vxor.u32 %v7390, 2147483648
    %v7392 = vsel %vm7309, %v7391, %v7390
    %v7393 = vsub.s32 4, %v7369
    %v7394 = vsel %vm7309, %v7393, %v7369
    %v7395 = vsel %vm7308, %v6459, %v7392
    %v7396 = vsel %vm7308, 0, %v7394
    %v7397 = vcosq.f32.pop %v7395
    %v7398 = vsinq.f32.pop %v7395
    %vm7399 = vweird.f32 %v6459
    %v7400 = vand.u32 %v7396, 3
    %vm7401 = vcmp.lt.s32.totalorder %v7400, 2
    %vm7402 = vcmp.eq.s32.totalorder %v7400, 0
    %v7403 = vxor.u32 %v7398, 2147483648
    %v7404 = vsel %vm7402, %v7397, %v7403
    %vm7405 = vcmp.eq.s32.totalorder %v7400, 2
    %v7406 = vxor.u32 %v7397, 2147483648
    %v7407 = vsel %vm7405, %v7406, %v7398
    %v7408 = vsel %vm7401, %v7404, %v7407
    %v7409 = vsel %vm7399, nan, %v7408
    %v7410 = vand.u32 2147483647, %v6460
    %vm7411 = vcmp.le.f32.partialorder %v7410, 0.7853982
    %vm7412 = vcmp.lt.s32.totalorder %v6460, 0
    %v7413 = vand.u32 %v6460, 2139095040
    %v7414 = vshrl.u32 %v7413, 23
    %v7415 = vsub.s32 %v7414, 127
    %v7416 = vand.u32 2147483647, %v6460
    %v7417 = vand.u32 %v7416, 8388607
    %v7418 = vor.u32 %v7417, 8388608
    %v7419 = vsub.s32 0, %v7418
    %v7420 = vadd.s32 %v7415, 1
    %vm7421 = vcmp.gt.s32.totalorder %v7420, 0
    %v7422 = vsel %vm7421, %v7420, 0
    %v7423 = vshrl.u32 %v7422, 5
    %v7424 = vand.u32 %v7422, 31
    %v7425 = vsub.s32 32, %v7424
    %v7426 = vshrl.u32 683565275, %v7425
    %v7427 = vshll.u32 683565275, %v7424
    %v7428 = vshrl.u32 2475754826, %v7425
    %v7429 = vor.u32 %v7427, %v7428
    %v7430 = vshll.u32 2475754826, %v7424
    %v7431 = vshrl.u32 2131351028, %v7425
    %v7432 = vor.u32 %v7430, %v7431
    %v7433 = vshll.u32 2131351028, %v7424
    %v7434 = vshrl.u32 2102212464, %v7425
    %v7435 = vor.u32 %v7433, %v7434
    %v7436 = vshll.u32 2102212464, %v7424
    %v7437 = vshrl.u32 920167782, %v7425
    %v7438 = vor.u32 %v7436, %v7437
    %v7439 = vshll.u32 920167782, %v7424
    %v7440 = vshrl.u32 1326507024, %v7425
    %v7441 = vor.u32 %v7439, %v7440
    %vm7442 = vcmp.lt.s32.totalorder %v7423, 1
    %vm7443 = vcmp.lt.s32.totalorder %v7423, 2
    %vm7444 = vcmp.lt.s32.totalorder %v7423, 3
    %vm7445 = vcmp.lt.s32.totalorder %v7423, 4
    %v7446 = vsel %vm7442, %v7426, %v7429
    %v7447 = vsel %vm7445, %v7435, 2102212464
    %v7448 = vsel %vm7444, %v7432, %v7447
    %v7449 = vsel %vm7443, %v7446, %v7448
    %v7450 = vsel %vm7442, %v7429, %v7432
    %v7451 = vsel %vm7445, %v7438, 920167782
    %v7452 = vsel %vm7444, %v7435, %v7451
    %v7453 = vsel %vm7443, %v7450, %v7452
    %v7454 = vsel %vm7442, %v7432, %v7435
    %v7455 = vsel %vm7445, %v7441, 1326507024
    %v7456 = vsel %vm7444, %v7438, %v7455
    %v7457 = vsel %vm7443, %v7454, %v7456
    %v7458 = vshll.u32 %v7418, 8
    %v7459 = vmul.u32.u64.compose %v7458, %v7457
    %v7460 = vextract.low.u32 %v7459
    %v7461 = vextract.high.u32 %v7459
    %v7462 = vmul.u32.u64.compose %v7458, %v7453
    %v7463 = vextract.low.u32 %v7462
    %v7464 = vextract.high.u32 %v7462
    %v7465 = vmul.u32 %v7458, %v7449
    %v7466 = vadd.s32 %v7461, %v7463
    %vm7467 = vc.u32 %v7461, %v7463
    %v7468 = vadd.s32 %v7464, 1
    %v7469 = vsel %vm7467, %v7468, %v7464
    %v7470 = vadd.s32 %v7465, %v7469
    %v7471 = vadd.s32 %v7470, 536870912
    %v7472 = vshrl.u32 %v7471, 30
    %v7473 = vshll.u32 %v7472, 30
    %v7474 = vsub.s32 %v7470, %v7473
    %vm7475 = vcmp.lt.s32.totalorder %v7474, 0
    %v7476 = vsub.s32 0, %v7474
    %v7477 = vsel %vm7475, %v7476, %v7474
    %v7478 = vclz %v7477
    %v7479 = vsub.s32 %v7478, 2
    %vm7480 = vcmp.gt.s32.totalorder 0, %v7479
    %v7481 = vsel %vm7480, 0, %v7479
    %v7482 = vsub.s32 32, %v7481
    %v7483 = vshll.u32 %v7474, %v7481
    %v7484 = vshrl.u32 %v7466, %v7482
    %v7485 = vor.u32 %v7483, %v7484
    %v7486 = vsub.s32 4294967266, %v7481
    %v7487 = vadd.s32 %v7486, 127
    %v7488 = vshll.u32 %v7487, 23
    %v7489 = vor.u32 4788187, %v7488
    %v7490 = vand.u32 2147483647, %v7489
    %v7492 = vcvt.s32.f32 %v7485
    %v7493 = vmul.f32 %v7492, %v7490
    %v7494 = vxor.u32 %v7493, 2147483648
    %v7495 = vsel %vm7412, %v7494, %v7493
    %v7496 = vsub.s32 4, %v7472
    %v7497 = vsel %vm7412, %v7496, %v7472
    %v7498 = vsel %vm7411, %v6460, %v7495
    %v7499 = vsel %vm7411, 0, %v7497
    %v7500 = vcosq.f32.pop %v7498
    %v7501 = vsinq.f32.pop %v7498
    %vm7502 = vweird.f32 %v6460
    %v7503 = vand.u32 %v7499, 3
    %vm7504 = vcmp.lt.s32.totalorder %v7503, 2
    %vm7505 = vcmp.eq.s32.totalorder %v7503, 0
    %v7506 = vxor.u32 %v7501, 2147483648
    %v7507 = vsel %vm7505, %v7500, %v7506
    %vm7508 = vcmp.eq.s32.totalorder %v7503, 2
    %v7509 = vxor.u32 %v7500, 2147483648
    %v7510 = vsel %vm7508, %v7509, %v7501
    %v7511 = vsel %vm7504, %v7507, %v7510
    %v7512 = vsel %vm7502, nan, %v7511
    %v7513 = vand.u32 2147483647, %v6461
    %vm7514 = vcmp.le.f32.partialorder %v7513, 0.7853982
    %vm7515 = vcmp.lt.s32.totalorder %v6461, 0
    %v7516 = vand.u32 %v6461, 2139095040
    %v7517 = vshrl.u32 %v7516, 23
    %v7518 = vsub.s32 %v7517, 127
    %v7519 = vand.u32 2147483647, %v6461
    %v7520 = vand.u32 %v7519, 8388607
    %v7521 = vor.u32 %v7520, 8388608
    %v7522 = vsub.s32 0, %v7521
    %v7523 = vadd.s32 %v7518, 1
    %vm7524 = vcmp.gt.s32.totalorder %v7523, 0
    %v7525 = vsel %vm7524, %v7523, 0
    %v7526 = vshrl.u32 %v7525, 5
    %v7527 = vand.u32 %v7525, 31
    %v7528 = vsub.s32 32, %v7527
    %v7529 = vshrl.u32 683565275, %v7528
    %v7530 = vshll.u32 683565275, %v7527
    %v7531 = vshrl.u32 2475754826, %v7528
    %v7532 = vor.u32 %v7530, %v7531
    %v7533 = vshll.u32 2475754826, %v7527
    %v7534 = vshrl.u32 2131351028, %v7528
    %v7535 = vor.u32 %v7533, %v7534
    %v7536 = vshll.u32 2131351028, %v7527
    %v7537 = vshrl.u32 2102212464, %v7528
    %v7538 = vor.u32 %v7536, %v7537
    %v7539 = vshll.u32 2102212464, %v7527
    %v7540 = vshrl.u32 920167782, %v7528
    %v7541 = vor.u32 %v7539, %v7540
    %v7542 = vshll.u32 920167782, %v7527
    %v7543 = vshrl.u32 1326507024, %v7528
    %v7544 = vor.u32 %v7542, %v7543
    %vm7545 = vcmp.lt.s32.totalorder %v7526, 1
    %vm7546 = vcmp.lt.s32.totalorder %v7526, 2
    %vm7547 = vcmp.lt.s32.totalorder %v7526, 3
    %vm7548 = vcmp.lt.s32.totalorder %v7526, 4
    %v7549 = vsel %vm7545, %v7529, %v7532
    %v7550 = vsel %vm7548, %v7538, 2102212464
    %v7551 = vsel %vm7547, %v7535, %v7550
    %v7552 = vsel %vm7546, %v7549, %v7551
    %v7553 = vsel %vm7545, %v7532, %v7535
    %v7554 = vsel %vm7548, %v7541, 920167782
    %v7555 = vsel %vm7547, %v7538, %v7554
    %v7556 = vsel %vm7546, %v7553, %v7555
    %v7557 = vsel %vm7545, %v7535, %v7538
    %v7558 = vsel %vm7548, %v7544, 1326507024
    %v7559 = vsel %vm7547, %v7541, %v7558
    %v7560 = vsel %vm7546, %v7557, %v7559
    %v7561 = vshll.u32 %v7521, 8
    %v7562 = vmul.u32.u64.compose %v7561, %v7560
    %v7563 = vextract.low.u32 %v7562
    %v7564 = vextract.high.u32 %v7562
    %v7565 = vmul.u32.u64.compose %v7561, %v7556
    %v7566 = vextract.low.u32 %v7565
    %v7567 = vextract.high.u32 %v7565
    %v7568 = vmul.u32 %v7561, %v7552
    %v7569 = vadd.s32 %v7564, %v7566
    %vm7570 = vc.u32 %v7564, %v7566
    %v7571 = vadd.s32 %v7567, 1
    %v7572 = vsel %vm7570, %v7571, %v7567
    %v7573 = vadd.s32 %v7568, %v7572
    %v7574 = vadd.s32 %v7573, 536870912
    %v7575 = vshrl.u32 %v7574, 30
    %v7576 = vshll.u32 %v7575, 30
    %v7577 = vsub.s32 %v7573, %v7576
    %vm7578 = vcmp.lt.s32.totalorder %v7577, 0
    %v7579 = vsub.s32 0, %v7577
    %v7580 = vsel %vm7578, %v7579, %v7577
    %v7581 = vclz %v7580
    %v7582 = vsub.s32 %v7581, 2
    %vm7583 = vcmp.gt.s32.totalorder 0, %v7582
    %v7584 = vsel %vm7583, 0, %v7582
    %v7585 = vsub.s32 32, %v7584
    %v7586 = vshll.u32 %v7577, %v7584
    %v7587 = vshrl.u32 %v7569, %v7585
    %v7588 = vor.u32 %v7586, %v7587
    %v7589 = vsub.s32 4294967266, %v7584
    %v7590 = vadd.s32 %v7589, 127
    %v7591 = vshll.u32 %v7590, 23
    %v7592 = vor.u32 4788187, %v7591
    %v7593 = vand.u32 2147483647, %v7592
    %v7595 = vcvt.s32.f32 %v7588
    %v7596 = vmul.f32 %v7595, %v7593
    %v7597 = vxor.u32 %v7596, 2147483648
    %v7598 = vsel %vm7515, %v7597, %v7596
    %v7599 = vsub.s32 4, %v7575
    %v7600 = vsel %vm7515, %v7599, %v7575
    %v7601 = vsel %vm7514, %v6461, %v7598
    %v7602 = vsel %vm7514, 0, %v7600
    %v7603 = vcosq.f32.pop %v7601
    %v7604 = vsinq.f32.pop %v7601
    %vm7605 = vweird.f32 %v6461
    %v7606 = vand.u32 %v7602, 3
    %vm7607 = vcmp.lt.s32.totalorder %v7606, 2
    %vm7608 = vcmp.eq.s32.totalorder %v7606, 0
    %v7609 = vxor.u32 %v7604, 2147483648
    %v7610 = vsel %vm7608, %v7603, %v7609
    %vm7611 = vcmp.eq.s32.totalorder %v7606, 2
    %v7612 = vxor.u32 %v7603, 2147483648
    %v7613 = vsel %vm7611, %v7612, %v7604
    %v7614 = vsel %vm7607, %v7610, %v7613
    %v7615 = vsel %vm7605, nan, %v7614
    %v7616 = vand.u32 2147483647, %v6462
    %vm7617 = vcmp.le.f32.partialorder %v7616, 0.7853982
    %vm7618 = vcmp.lt.s32.totalorder %v6462, 0
    %v7619 = vand.u32 %v6462, 2139095040
    %v7620 = vshrl.u32 %v7619, 23
    %v7621 = vsub.s32 %v7620, 127
    %v7622 = vand.u32 2147483647, %v6462
    %v7623 = vand.u32 %v7622, 8388607
    %v7624 = vor.u32 %v7623, 8388608
    %v7625 = vsub.s32 0, %v7624
    %v7626 = vadd.s32 %v7621, 1
    %vm7627 = vcmp.gt.s32.totalorder %v7626, 0
    %v7628 = vsel %vm7627, %v7626, 0
    %v7629 = vshrl.u32 %v7628, 5
    %v7630 = vand.u32 %v7628, 31
    %v7631 = vsub.s32 32, %v7630
    %v7632 = vshrl.u32 683565275, %v7631
    %v7633 = vshll.u32 683565275, %v7630
    %v7634 = vshrl.u32 2475754826, %v7631
    %v7635 = vor.u32 %v7633, %v7634
    %v7636 = vshll.u32 2475754826, %v7630
    %v7637 = vshrl.u32 2131351028, %v7631
    %v7638 = vor.u32 %v7636, %v7637
    %v7639 = vshll.u32 2131351028, %v7630
    %v7640 = vshrl.u32 2102212464, %v7631
    %v7641 = vor.u32 %v7639, %v7640
    %v7642 = vshll.u32 2102212464, %v7630
    %v7643 = vshrl.u32 920167782, %v7631
    %v7644 = vor.u32 %v7642, %v7643
    %v7645 = vshll.u32 920167782, %v7630
    %v7646 = vshrl.u32 1326507024, %v7631
    %v7647 = vor.u32 %v7645, %v7646
    %vm7648 = vcmp.lt.s32.totalorder %v7629, 1
    %vm7649 = vcmp.lt.s32.totalorder %v7629, 2
    %vm7650 = vcmp.lt.s32.totalorder %v7629, 3
    %vm7651 = vcmp.lt.s32.totalorder %v7629, 4
    %v7652 = vsel %vm7648, %v7632, %v7635
    %v7653 = vsel %vm7651, %v7641, 2102212464
    %v7654 = vsel %vm7650, %v7638, %v7653
    %v7655 = vsel %vm7649, %v7652, %v7654
    %v7656 = vsel %vm7648, %v7635, %v7638
    %v7657 = vsel %vm7651, %v7644, 920167782
    %v7658 = vsel %vm7650, %v7641, %v7657
    %v7659 = vsel %vm7649, %v7656, %v7658
    %v7660 = vsel %vm7648, %v7638, %v7641
    %v7661 = vsel %vm7651, %v7647, 1326507024
    %v7662 = vsel %vm7650, %v7644, %v7661
    %v7663 = vsel %vm7649, %v7660, %v7662
    %v7664 = vshll.u32 %v7624, 8
    %v7665 = vmul.u32.u64.compose %v7664, %v7663
    %v7666 = vextract.low.u32 %v7665
    %v7667 = vextract.high.u32 %v7665
    %v7668 = vmul.u32.u64.compose %v7664, %v7659
    %v7669 = vextract.low.u32 %v7668
    %v7670 = vextract.high.u32 %v7668
    %v7671 = vmul.u32 %v7664, %v7655
    %v7672 = vadd.s32 %v7667, %v7669
    %vm7673 = vc.u32 %v7667, %v7669
    %v7674 = vadd.s32 %v7670, 1
    %v7675 = vsel %vm7673, %v7674, %v7670
    %v7676 = vadd.s32 %v7671, %v7675
    %v7677 = vadd.s32 %v7676, 536870912
    %v7678 = vshrl.u32 %v7677, 30
    %v7679 = vshll.u32 %v7678, 30
    %v7680 = vsub.s32 %v7676, %v7679
    %vm7681 = vcmp.lt.s32.totalorder %v7680, 0
    %v7682 = vsub.s32 0, %v7680
    %v7683 = vsel %vm7681, %v7682, %v7680
    %v7684 = vclz %v7683
    %v7685 = vsub.s32 %v7684, 2
    %vm7686 = vcmp.gt.s32.totalorder 0, %v7685
    %v7687 = vsel %vm7686, 0, %v7685
    %v7688 = vsub.s32 32, %v7687
    %v7689 = vshll.u32 %v7680, %v7687
    %v7690 = vshrl.u32 %v7672, %v7688
    %v7691 = vor.u32 %v7689, %v7690
    %v7692 = vsub.s32 4294967266, %v7687
    %v7693 = vadd.s32 %v7692, 127
    %v7694 = vshll.u32 %v7693, 23
    %v7695 = vor.u32 4788187, %v7694
    %v7696 = vand.u32 2147483647, %v7695
    %v7698 = vcvt.s32.f32 %v7691
    %v7699 = vmul.f32 %v7698, %v7696
    %v7700 = vxor.u32 %v7699, 2147483648
    %v7701 = vsel %vm7618, %v7700, %v7699
    %v7702 = vsub.s32 4, %v7678
    %v7703 = vsel %vm7618, %v7702, %v7678
    %v7704 = vsel %vm7617, %v6462, %v7701
    %v7705 = vsel %vm7617, 0, %v7703
    %v7706 = vcosq.f32.pop %v7704
    %v7707 = vsinq.f32.pop %v7704
    %vm7708 = vweird.f32 %v6462
    %v7709 = vand.u32 %v7705, 3
    %vm7710 = vcmp.lt.s32.totalorder %v7709, 2
    %vm7711 = vcmp.eq.s32.totalorder %v7709, 0
    %v7712 = vxor.u32 %v7707, 2147483648
    %v7713 = vsel %vm7711, %v7706, %v7712
    %vm7714 = vcmp.eq.s32.totalorder %v7709, 2
    %v7715 = vxor.u32 %v7706, 2147483648
    %v7716 = vsel %vm7714, %v7715, %v7707
    %v7717 = vsel %vm7710, %v7713, %v7716
    %v7718 = vsel %vm7708, nan, %v7717
    %v7719 = vand.u32 2147483647, %v6463
    %vm7720 = vcmp.le.f32.partialorder %v7719, 0.7853982
    %vm7721 = vcmp.lt.s32.totalorder %v6463, 0
    %v7722 = vand.u32 %v6463, 2139095040
    %v7723 = vshrl.u32 %v7722, 23
    %v7724 = vsub.s32 %v7723, 127
    %v7725 = vand.u32 2147483647, %v6463
    %v7726 = vand.u32 %v7725, 8388607
    %v7727 = vor.u32 %v7726, 8388608
    %v7728 = vsub.s32 0, %v7727
    %v7729 = vadd.s32 %v7724, 1
    %vm7730 = vcmp.gt.s32.totalorder %v7729, 0
    %v7731 = vsel %vm7730, %v7729, 0
    %v7732 = vshrl.u32 %v7731, 5
    %v7733 = vand.u32 %v7731, 31
    %v7734 = vsub.s32 32, %v7733
    %v7735 = vshrl.u32 683565275, %v7734
    %v7736 = vshll.u32 683565275, %v7733
    %v7737 = vshrl.u32 2475754826, %v7734
    %v7738 = vor.u32 %v7736, %v7737
    %v7739 = vshll.u32 2475754826, %v7733
    %v7740 = vshrl.u32 2131351028, %v7734
    %v7741 = vor.u32 %v7739, %v7740
    %v7742 = vshll.u32 2131351028, %v7733
    %v7743 = vshrl.u32 2102212464, %v7734
    %v7744 = vor.u32 %v7742, %v7743
    %v7745 = vshll.u32 2102212464, %v7733
    %v7746 = vshrl.u32 920167782, %v7734
    %v7747 = vor.u32 %v7745, %v7746
    %v7748 = vshll.u32 920167782, %v7733
    %v7749 = vshrl.u32 1326507024, %v7734
    %v7750 = vor.u32 %v7748, %v7749
    %vm7751 = vcmp.lt.s32.totalorder %v7732, 1
    %vm7752 = vcmp.lt.s32.totalorder %v7732, 2
    %vm7753 = vcmp.lt.s32.totalorder %v7732, 3
    %vm7754 = vcmp.lt.s32.totalorder %v7732, 4
    %v7755 = vsel %vm7751, %v7735, %v7738
    %v7756 = vsel %vm7754, %v7744, 2102212464
    %v7757 = vsel %vm7753, %v7741, %v7756
    %v7758 = vsel %vm7752, %v7755, %v7757
    %v7759 = vsel %vm7751, %v7738, %v7741
    %v7760 = vsel %vm7754, %v7747, 920167782
    %v7761 = vsel %vm7753, %v7744, %v7760
    %v7762 = vsel %vm7752, %v7759, %v7761
    %v7763 = vsel %vm7751, %v7741, %v7744
    %v7764 = vsel %vm7754, %v7750, 1326507024
    %v7765 = vsel %vm7753, %v7747, %v7764
    %v7766 = vsel %vm7752, %v7763, %v7765
    %v7767 = vshll.u32 %v7727, 8
    %v7768 = vmul.u32.u64.compose %v7767, %v7766
    %v7769 = vextract.low.u32 %v7768
    %v7770 = vextract.high.u32 %v7768
    %v7771 = vmul.u32.u64.compose %v7767, %v7762
    %v7772 = vextract.low.u32 %v7771
    %v7773 = vextract.high.u32 %v7771
    %v7774 = vmul.u32 %v7767, %v7758
    %v7775 = vadd.s32 %v7770, %v7772
    %vm7776 = vc.u32 %v7770, %v7772
    %v7777 = vadd.s32 %v7773, 1
    %v7778 = vsel %vm7776, %v7777, %v7773
    %v7779 = vadd.s32 %v7774, %v7778
    %v7780 = vadd.s32 %v7779, 536870912
    %v7781 = vshrl.u32 %v7780, 30
    %v7782 = vshll.u32 %v7781, 30
    %v7783 = vsub.s32 %v7779, %v7782
    %vm7784 = vcmp.lt.s32.totalorder %v7783, 0
    %v7785 = vsub.s32 0, %v7783
    %v7786 = vsel %vm7784, %v7785, %v7783
    %v7787 = vclz %v7786
    %v7788 = vsub.s32 %v7787, 2
    %vm7789 = vcmp.gt.s32.totalorder 0, %v7788
    %v7790 = vsel %vm7789, 0, %v7788
    %v7791 = vsub.s32 32, %v7790
    %v7792 = vshll.u32 %v7783, %v7790
    %v7793 = vshrl.u32 %v7775, %v7791
    %v7794 = vor.u32 %v7792, %v7793
    %v7795 = vsub.s32 4294967266, %v7790
    %v7796 = vadd.s32 %v7795, 127
    %v7797 = vshll.u32 %v7796, 23
    %v7798 = vor.u32 4788187, %v7797
    %v7799 = vand.u32 2147483647, %v7798
    %v7801 = vcvt.s32.f32 %v7794
    %v7802 = vmul.f32 %v7801, %v7799
    %v7803 = vxor.u32 %v7802, 2147483648
    %v7804 = vsel %vm7721, %v7803, %v7802
    %v7805 = vsub.s32 4, %v7781
    %v7806 = vsel %vm7721, %v7805, %v7781
    %v7807 = vsel %vm7720, %v6463, %v7804
    %v7808 = vsel %vm7720, 0, %v7806
    %v7809 = vcosq.f32.pop %v7807
    %v7810 = vsinq.f32.pop %v7807
    %vm7811 = vweird.f32 %v6463
    %v7812 = vand.u32 %v7808, 3
    %vm7813 = vcmp.lt.s32.totalorder %v7812, 2
    %vm7814 = vcmp.eq.s32.totalorder %v7812, 0
    %v7815 = vxor.u32 %v7810, 2147483648
    %v7816 = vsel %vm7814, %v7809, %v7815
    %vm7817 = vcmp.eq.s32.totalorder %v7812, 2
    %v7818 = vxor.u32 %v7809, 2147483648
    %v7819 = vsel %vm7817, %v7818, %v7810
    %v7820 = vsel %vm7813, %v7816, %v7819
    %v7821 = vsel %vm7811, nan, %v7820
    %v7822 = vand.u32 2147483647, %v6464
    %vm7823 = vcmp.le.f32.partialorder %v7822, 0.7853982
    %vm7824 = vcmp.lt.s32.totalorder %v6464, 0
    %v7825 = vand.u32 %v6464, 2139095040
    %v7826 = vshrl.u32 %v7825, 23
    %v7827 = vsub.s32 %v7826, 127
    %v7828 = vand.u32 2147483647, %v6464
    %v7829 = vand.u32 %v7828, 8388607
    %v7830 = vor.u32 %v7829, 8388608
    %v7831 = vsub.s32 0, %v7830
    %v7832 = vadd.s32 %v7827, 1
    %vm7833 = vcmp.gt.s32.totalorder %v7832, 0
    %v7834 = vsel %vm7833, %v7832, 0
    %v7835 = vshrl.u32 %v7834, 5
    %v7836 = vand.u32 %v7834, 31
    %v7837 = vsub.s32 32, %v7836
    %v7838 = vshrl.u32 683565275, %v7837
    %v7839 = vshll.u32 683565275, %v7836
    %v7840 = vshrl.u32 2475754826, %v7837
    %v7841 = vor.u32 %v7839, %v7840
    %v7842 = vshll.u32 2475754826, %v7836
    %v7843 = vshrl.u32 2131351028, %v7837
    %v7844 = vor.u32 %v7842, %v7843
    %v7845 = vshll.u32 2131351028, %v7836
    %v7846 = vshrl.u32 2102212464, %v7837
    %v7847 = vor.u32 %v7845, %v7846
    %v7848 = vshll.u32 2102212464, %v7836
    %v7849 = vshrl.u32 920167782, %v7837
    %v7850 = vor.u32 %v7848, %v7849
    %v7851 = vshll.u32 920167782, %v7836
    %v7852 = vshrl.u32 1326507024, %v7837
    %v7853 = vor.u32 %v7851, %v7852
    %vm7854 = vcmp.lt.s32.totalorder %v7835, 1
    %vm7855 = vcmp.lt.s32.totalorder %v7835, 2
    %vm7856 = vcmp.lt.s32.totalorder %v7835, 3
    %vm7857 = vcmp.lt.s32.totalorder %v7835, 4
    %v7858 = vsel %vm7854, %v7838, %v7841
    %v7859 = vsel %vm7857, %v7847, 2102212464
    %v7860 = vsel %vm7856, %v7844, %v7859
    %v7861 = vsel %vm7855, %v7858, %v7860
    %v7862 = vsel %vm7854, %v7841, %v7844
    %v7863 = vsel %vm7857, %v7850, 920167782
    %v7864 = vsel %vm7856, %v7847, %v7863
    %v7865 = vsel %vm7855, %v7862, %v7864
    %v7866 = vsel %vm7854, %v7844, %v7847
    %v7867 = vsel %vm7857, %v7853, 1326507024
    %v7868 = vsel %vm7856, %v7850, %v7867
    %v7869 = vsel %vm7855, %v7866, %v7868
    %v7870 = vshll.u32 %v7830, 8
    %v7871 = vmul.u32.u64.compose %v7870, %v7869
    %v7872 = vextract.low.u32 %v7871
    %v7873 = vextract.high.u32 %v7871
    %v7874 = vmul.u32.u64.compose %v7870, %v7865
    %v7875 = vextract.low.u32 %v7874
    %v7876 = vextract.high.u32 %v7874
    %v7877 = vmul.u32 %v7870, %v7861
    %v7878 = vadd.s32 %v7873, %v7875
    %vm7879 = vc.u32 %v7873, %v7875
    %v7880 = vadd.s32 %v7876, 1
    %v7881 = vsel %vm7879, %v7880, %v7876
    %v7882 = vadd.s32 %v7877, %v7881
    %v7883 = vadd.s32 %v7882, 536870912
    %v7884 = vshrl.u32 %v7883, 30
    %v7885 = vshll.u32 %v7884, 30
    %v7886 = vsub.s32 %v7882, %v7885
    %vm7887 = vcmp.lt.s32.totalorder %v7886, 0
    %v7888 = vsub.s32 0, %v7886
    %v7889 = vsel %vm7887, %v7888, %v7886
    %v7890 = vclz %v7889
    %v7891 = vsub.s32 %v7890, 2
    %vm7892 = vcmp.gt.s32.totalorder 0, %v7891
    %v7893 = vsel %vm7892, 0, %v7891
    %v7894 = vsub.s32 32, %v7893
    %v7895 = vshll.u32 %v7886, %v7893
    %v7896 = vshrl.u32 %v7878, %v7894
    %v7897 = vor.u32 %v7895, %v7896
    %v7898 = vsub.s32 4294967266, %v7893
    %v7899 = vadd.s32 %v7898, 127
    %v7900 = vshll.u32 %v7899, 23
    %v7901 = vor.u32 4788187, %v7900
    %v7902 = vand.u32 2147483647, %v7901
    %v7904 = vcvt.s32.f32 %v7897
    %v7905 = vmul.f32 %v7904, %v7902
    %v7906 = vxor.u32 %v7905, 2147483648
    %v7907 = vsel %vm7824, %v7906, %v7905
    %v7908 = vsub.s32 4, %v7884
    %v7909 = vsel %vm7824, %v7908, %v7884
    %v7910 = vsel %vm7823, %v6464, %v7907
    %v7911 = vsel %vm7823, 0, %v7909
    %v7912 = vcosq.f32.pop %v7910
    %v7913 = vsinq.f32.pop %v7910
    %vm7914 = vweird.f32 %v6464
    %v7915 = vand.u32 %v7911, 3
    %vm7916 = vcmp.lt.s32.totalorder %v7915, 2
    %vm7917 = vcmp.eq.s32.totalorder %v7915, 0
    %v7918 = vxor.u32 %v7913, 2147483648
    %v7919 = vsel %vm7917, %v7912, %v7918
    %vm7920 = vcmp.eq.s32.totalorder %v7915, 2
    %v7921 = vxor.u32 %v7912, 2147483648
    %v7922 = vsel %vm7920, %v7921, %v7913
    %v7923 = vsel %vm7916, %v7919, %v7922
    %v7924 = vsel %vm7914, nan, %v7923
    %v7925 = vand.u32 2147483647, %v6465
    %vm7926 = vcmp.le.f32.partialorder %v7925, 0.7853982
    %vm7927 = vcmp.lt.s32.totalorder %v6465, 0
    %v7928 = vand.u32 %v6465, 2139095040
    %v7929 = vshrl.u32 %v7928, 23
    %v7930 = vsub.s32 %v7929, 127
    %v7931 = vand.u32 2147483647, %v6465
    %v7932 = vand.u32 %v7931, 8388607
    %v7933 = vor.u32 %v7932, 8388608
    %v7934 = vsub.s32 0, %v7933
    %v7935 = vadd.s32 %v7930, 1
    %vm7936 = vcmp.gt.s32.totalorder %v7935, 0
    %v7937 = vsel %vm7936, %v7935, 0
    %v7938 = vshrl.u32 %v7937, 5
    %v7939 = vand.u32 %v7937, 31
    %v7940 = vsub.s32 32, %v7939
    %v7941 = vshrl.u32 683565275, %v7940
    %v7942 = vshll.u32 683565275, %v7939
    %v7943 = vshrl.u32 2475754826, %v7940
    %v7944 = vor.u32 %v7942, %v7943
    %v7945 = vshll.u32 2475754826, %v7939
    %v7946 = vshrl.u32 2131351028, %v7940
    %v7947 = vor.u32 %v7945, %v7946
    %v7948 = vshll.u32 2131351028, %v7939
    %v7949 = vshrl.u32 2102212464, %v7940
    %v7950 = vor.u32 %v7948, %v7949
    %v7951 = vshll.u32 2102212464, %v7939
    %v7952 = vshrl.u32 920167782, %v7940
    %v7953 = vor.u32 %v7951, %v7952
    %v7954 = vshll.u32 920167782, %v7939
    %v7955 = vshrl.u32 1326507024, %v7940
    %v7956 = vor.u32 %v7954, %v7955
    %vm7957 = vcmp.lt.s32.totalorder %v7938, 1
    %vm7958 = vcmp.lt.s32.totalorder %v7938, 2
    %vm7959 = vcmp.lt.s32.totalorder %v7938, 3
    %vm7960 = vcmp.lt.s32.totalorder %v7938, 4
    %v7961 = vsel %vm7957, %v7941, %v7944
    %v7962 = vsel %vm7960, %v7950, 2102212464
    %v7963 = vsel %vm7959, %v7947, %v7962
    %v7964 = vsel %vm7958, %v7961, %v7963
    %v7965 = vsel %vm7957, %v7944, %v7947
    %v7966 = vsel %vm7960, %v7953, 920167782
    %v7967 = vsel %vm7959, %v7950, %v7966
    %v7968 = vsel %vm7958, %v7965, %v7967
    %v7969 = vsel %vm7957, %v7947, %v7950
    %v7970 = vsel %vm7960, %v7956, 1326507024
    %v7971 = vsel %vm7959, %v7953, %v7970
    %v7972 = vsel %vm7958, %v7969, %v7971
    %v7973 = vshll.u32 %v7933, 8
    %v7974 = vmul.u32.u64.compose %v7973, %v7972
    %v7975 = vextract.low.u32 %v7974
    %v7976 = vextract.high.u32 %v7974
    %v7977 = vmul.u32.u64.compose %v7973, %v7968
    %v7978 = vextract.low.u32 %v7977
    %v7979 = vextract.high.u32 %v7977
    %v7980 = vmul.u32 %v7973, %v7964
    %v7981 = vadd.s32 %v7976, %v7978
    %vm7982 = vc.u32 %v7976, %v7978
    %v7983 = vadd.s32 %v7979, 1
    %v7984 = vsel %vm7982, %v7983, %v7979
    %v7985 = vadd.s32 %v7980, %v7984
    %v7986 = vadd.s32 %v7985, 536870912
    %v7987 = vshrl.u32 %v7986, 30
    %v7988 = vshll.u32 %v7987, 30
    %v7989 = vsub.s32 %v7985, %v7988
    %vm7990 = vcmp.lt.s32.totalorder %v7989, 0
    %v7991 = vsub.s32 0, %v7989
    %v7992 = vsel %vm7990, %v7991, %v7989
    %v7993 = vclz %v7992
    %v7994 = vsub.s32 %v7993, 2
    %vm7995 = vcmp.gt.s32.totalorder 0, %v7994
    %v7996 = vsel %vm7995, 0, %v7994
    %v7997 = vsub.s32 32, %v7996
    %v7998 = vshll.u32 %v7989, %v7996
    %v7999 = vshrl.u32 %v7981, %v7997
    %v8000 = vor.u32 %v7998, %v7999
    %v8001 = vsub.s32 4294967266, %v7996
    %v8002 = vadd.s32 %v8001, 127
    %v8003 = vshll.u32 %v8002, 23
    %v8004 = vor.u32 4788187, %v8003
    %v8005 = vand.u32 2147483647, %v8004
    %v8007 = vcvt.s32.f32 %v8000
    %v8008 = vmul.f32 %v8007, %v8005
    %v8009 = vxor.u32 %v8008, 2147483648
    %v8010 = vsel %vm7927, %v8009, %v8008
    %v8011 = vsub.s32 4, %v7987
    %v8012 = vsel %vm7927, %v8011, %v7987
    %v8013 = vsel %vm7926, %v6465, %v8010
    %v8014 = vsel %vm7926, 0, %v8012
    %v8015 = vcosq.f32.pop %v8013
    %v8016 = vsinq.f32.pop %v8013
    %vm8017 = vweird.f32 %v6465
    %v8018 = vand.u32 %v8014, 3
    %vm8019 = vcmp.lt.s32.totalorder %v8018, 2
    %vm8020 = vcmp.eq.s32.totalorder %v8018, 0
    %v8021 = vxor.u32 %v8016, 2147483648
    %v8022 = vsel %vm8020, %v8015, %v8021
    %vm8023 = vcmp.eq.s32.totalorder %v8018, 2
    %v8024 = vxor.u32 %v8015, 2147483648
    %v8025 = vsel %vm8023, %v8024, %v8016
    %v8026 = vsel %vm8019, %v8022, %v8025
    %v8027 = vsel %vm8017, nan, %v8026
    %v8028 = vand.u32 2147483647, %v6466
    %vm8029 = vcmp.le.f32.partialorder %v8028, 0.7853982
    %vm8030 = vcmp.lt.s32.totalorder %v6466, 0
    %v8031 = vand.u32 %v6466, 2139095040
    %v8032 = vshrl.u32 %v8031, 23
    %v8033 = vsub.s32 %v8032, 127
    %v8034 = vand.u32 2147483647, %v6466
    %v8035 = vand.u32 %v8034, 8388607
    %v8036 = vor.u32 %v8035, 8388608
    %v8037 = vsub.s32 0, %v8036
    %v8038 = vadd.s32 %v8033, 1
    %vm8039 = vcmp.gt.s32.totalorder %v8038, 0
    %v8040 = vsel %vm8039, %v8038, 0
    %v8041 = vshrl.u32 %v8040, 5
    %v8042 = vand.u32 %v8040, 31
    %v8043 = vsub.s32 32, %v8042
    %v8044 = vshrl.u32 683565275, %v8043
    %v8045 = vshll.u32 683565275, %v8042
    %v8046 = vshrl.u32 2475754826, %v8043
    %v8047 = vor.u32 %v8045, %v8046
    %v8048 = vshll.u32 2475754826, %v8042
    %v8049 = vshrl.u32 2131351028, %v8043
    %v8050 = vor.u32 %v8048, %v8049
    %v8051 = vshll.u32 2131351028, %v8042
    %v8052 = vshrl.u32 2102212464, %v8043
    %v8053 = vor.u32 %v8051, %v8052
    %v8054 = vshll.u32 2102212464, %v8042
    %v8055 = vshrl.u32 920167782, %v8043
    %v8056 = vor.u32 %v8054, %v8055
    %v8057 = vshll.u32 920167782, %v8042
    %v8058 = vshrl.u32 1326507024, %v8043
    %v8059 = vor.u32 %v8057, %v8058
    %vm8060 = vcmp.lt.s32.totalorder %v8041, 1
    %vm8061 = vcmp.lt.s32.totalorder %v8041, 2
    %vm8062 = vcmp.lt.s32.totalorder %v8041, 3
    %vm8063 = vcmp.lt.s32.totalorder %v8041, 4
    %v8064 = vsel %vm8060, %v8044, %v8047
    %v8065 = vsel %vm8063, %v8053, 2102212464
    %v8066 = vsel %vm8062, %v8050, %v8065
    %v8067 = vsel %vm8061, %v8064, %v8066
    %v8068 = vsel %vm8060, %v8047, %v8050
    %v8069 = vsel %vm8063, %v8056, 920167782
    %v8070 = vsel %vm8062, %v8053, %v8069
    %v8071 = vsel %vm8061, %v8068, %v8070
    %v8072 = vsel %vm8060, %v8050, %v8053
    %v8073 = vsel %vm8063, %v8059, 1326507024
    %v8074 = vsel %vm8062, %v8056, %v8073
    %v8075 = vsel %vm8061, %v8072, %v8074
    %v8076 = vshll.u32 %v8036, 8
    %v8077 = vmul.u32.u64.compose %v8076, %v8075
    %v8078 = vextract.low.u32 %v8077
    %v8079 = vextract.high.u32 %v8077
    %v8080 = vmul.u32.u64.compose %v8076, %v8071
    %v8081 = vextract.low.u32 %v8080
    %v8082 = vextract.high.u32 %v8080
    %v8083 = vmul.u32 %v8076, %v8067
    %v8084 = vadd.s32 %v8079, %v8081
    %vm8085 = vc.u32 %v8079, %v8081
    %v8086 = vadd.s32 %v8082, 1
    %v8087 = vsel %vm8085, %v8086, %v8082
    %v8088 = vadd.s32 %v8083, %v8087
    %v8089 = vadd.s32 %v8088, 536870912
    %v8090 = vshrl.u32 %v8089, 30
    %v8091 = vshll.u32 %v8090, 30
    %v8092 = vsub.s32 %v8088, %v8091
    %vm8093 = vcmp.lt.s32.totalorder %v8092, 0
    %v8094 = vsub.s32 0, %v8092
    %v8095 = vsel %vm8093, %v8094, %v8092
    %v8096 = vclz %v8095
    %v8097 = vsub.s32 %v8096, 2
    %vm8098 = vcmp.gt.s32.totalorder 0, %v8097
    %v8099 = vsel %vm8098, 0, %v8097
    %v8100 = vsub.s32 32, %v8099
    %v8101 = vshll.u32 %v8092, %v8099
    %v8102 = vshrl.u32 %v8084, %v8100
    %v8103 = vor.u32 %v8101, %v8102
    %v8104 = vsub.s32 4294967266, %v8099
    %v8105 = vadd.s32 %v8104, 127
    %v8106 = vshll.u32 %v8105, 23
    %v8107 = vor.u32 4788187, %v8106
    %v8108 = vand.u32 2147483647, %v8107
    %v8110 = vcvt.s32.f32 %v8103
    %v8111 = vmul.f32 %v8110, %v8108
    %v8112 = vxor.u32 %v8111, 2147483648
    %v8113 = vsel %vm8030, %v8112, %v8111
    %v8114 = vsub.s32 4, %v8090
    %v8115 = vsel %vm8030, %v8114, %v8090
    %v8116 = vsel %vm8029, %v6466, %v8113
    %v8117 = vsel %vm8029, 0, %v8115
    %v8118 = vcosq.f32.pop %v8116
    %v8119 = vsinq.f32.pop %v8116
    %vm8120 = vweird.f32 %v6466
    %v8121 = vand.u32 %v8117, 3
    %vm8122 = vcmp.lt.s32.totalorder %v8121, 2
    %vm8123 = vcmp.eq.s32.totalorder %v8121, 0
    %v8124 = vxor.u32 %v8119, 2147483648
    %v8125 = vsel %vm8123, %v8118, %v8124
    %vm8126 = vcmp.eq.s32.totalorder %v8121, 2
    %v8127 = vxor.u32 %v8118, 2147483648
    %v8128 = vsel %vm8126, %v8127, %v8119
    %v8129 = vsel %vm8122, %v8125, %v8128
    %v8130 = vsel %vm8120, nan, %v8129
    %v8139 = vrot.slane %v7409, 5
    %v8140 = vrot.slane %v7512, 5
    %v8141 = vrot.slane %v7615, 5
    %v8142 = vrot.slane %v7718, 5
    %v8143 = vrot.slane %v7821, 5
    %v8144 = vrot.slane %v7924, 5
    %v8145 = vrot.slane %v8027, 5
    %v8146 = vrot.slane %v8130, 5
    %8155 = vst [vmem:[#allocation2 + $0xc0] sm:$0x38] %v8139
    %8156 = vst [vmem:[#allocation2 + $0xc8] sm:$0x38] %v8140
    %8157 = vst [vmem:[#allocation2 + $0xd0] sm:$0x38] %v8141
    %8158 = vst [vmem:[#allocation2 + $0xd8] sm:$0x38] %v8142
    %8159 = vst [vmem:[#allocation2 + $0xe0] sm:$0x38] %v8143
    %8160 = vst [vmem:[#allocation2 + $0xe8] sm:$0x38] %v8144
    %8161 = vst [vmem:[#allocation2 + $0xf0] sm:$0x38] %v8145
    %8162 = vst [vmem:[#allocation2 + $0xf8] sm:$0x38] %v8146
    %8163 = vst [vmem:[#allocation2 + $0xc0] sm:$0xc0] 0.0
    %8164 = vst [vmem:[#allocation2 + $0xc8] sm:$0xc0] 0.0
    %8165 = vst [vmem:[#allocation2 + $0xd0] sm:$0xc0] 0.0
    %8166 = vst [vmem:[#allocation2 + $0xd8] sm:$0xc0] 0.0
    %8167 = vst [vmem:[#allocation2 + $0xe0] sm:$0xc0] 0.0
    %8168 = vst [vmem:[#allocation2 + $0xe8] sm:$0xc0] 0.0
    %8169 = vst [vmem:[#allocation2 + $0xf0] sm:$0xc0] 0.0
    %8170 = vst [vmem:[#allocation2 + $0xf8] sm:$0xc0] 0.0
    %v8171 = vld [vmem:[#allocation2] sm:$0xff]
    %v8172 = vld [vmem:[#allocation2 + $0x8] sm:$0xff]
    %v8173 = vld [vmem:[#allocation2 + $0x10] sm:$0xff]
    %v8174 = vld [vmem:[#allocation2 + $0x18] sm:$0xff]
    %v8175 = vld [vmem:[#allocation2 + $0x20] sm:$0xff]
    %v8176 = vld [vmem:[#allocation2 + $0x28] sm:$0xff]
    %v8177 = vld [vmem:[#allocation2 + $0x30] sm:$0xff]
    %v8178 = vld [vmem:[#allocation2 + $0x38] sm:$0xff]
    %v8179 = vld [vmem:[#allocation2 + $0x40] sm:$0xff]
    %v8180 = vld [vmem:[#allocation2 + $0x48] sm:$0xff]
    %v8181 = vld [vmem:[#allocation2 + $0x50] sm:$0xff]
    %v8182 = vld [vmem:[#allocation2 + $0x58] sm:$0xff]
    %v8183 = vld [vmem:[#allocation2 + $0x60] sm:$0xff]
    %v8184 = vld [vmem:[#allocation2 + $0x68] sm:$0xff]
    %v8185 = vld [vmem:[#allocation2 + $0x70] sm:$0xff]
    %v8186 = vld [vmem:[#allocation2 + $0x78] sm:$0xff]
    %v8187 = vld [vmem:[#allocation2 + $0x80] sm:$0xff]
    %v8188 = vld [vmem:[#allocation2 + $0x88] sm:$0xff]
    %v8189 = vld [vmem:[#allocation2 + $0x90] sm:$0xff]
    %v8190 = vld [vmem:[#allocation2 + $0x98] sm:$0xff]
    %v8191 = vld [vmem:[#allocation2 + $0xa0] sm:$0xff]
    %v8192 = vld [vmem:[#allocation2 + $0xa8] sm:$0xff]
    %v8193 = vld [vmem:[#allocation2 + $0xb0] sm:$0xff]
    %v8194 = vld [vmem:[#allocation2 + $0xb8] sm:$0xff]
    %v8195 = vld [vmem:[#allocation2 + $0xc0] sm:$0xff]
    %v8196 = vld [vmem:[#allocation2 + $0xc8] sm:$0xff]
    %v8197 = vld [vmem:[#allocation2 + $0xd0] sm:$0xff]
    %v8198 = vld [vmem:[#allocation2 + $0xd8] sm:$0xff]
    %v8199 = vld [vmem:[#allocation2 + $0xe0] sm:$0xff]
    %v8200 = vld [vmem:[#allocation2 + $0xe8] sm:$0xff]
    %v8201 = vld [vmem:[#allocation2 + $0xf0] sm:$0xff]
    %v8202 = vld [vmem:[#allocation2 + $0xf8] sm:$0xff]
    %v8203 = vpack.c.bf16 %v8179, %v8171
    %v8204 = vpack.c.bf16 %v8180, %v8172
    %v8205 = vpack.c.bf16 %v8181, %v8173
    %v8206 = vpack.c.bf16 %v8182, %v8174
    %v8207 = vpack.c.bf16 %v8183, %v8175
    %v8208 = vpack.c.bf16 %v8184, %v8176
    %v8209 = vpack.c.bf16 %v8185, %v8177
    %v8210 = vpack.c.bf16 %v8186, %v8178
    %v8211 = vpack.c.bf16 %v8195, %v8187
    %v8212 = vpack.c.bf16 %v8196, %v8188
    %v8213 = vpack.c.bf16 %v8197, %v8189
    %v8214 = vpack.c.bf16 %v8198, %v8190
    %v8215 = vpack.c.bf16 %v8199, %v8191
    %v8216 = vpack.c.bf16 %v8200, %v8192
    %v8217 = vpack.c.bf16 %v8201, %v8193
    %v8218 = vpack.c.bf16 %v8202, %v8194
    %v8219 = vld [vmem:[%s1] sm:$0xf]
    %v8220 = vld [vmem:[%s1 + $0x4] sm:$0xf]
    %v8221 = vld [vmem:[%s1 + $0x8] sm:$0xf]
    %v8222 = vld [vmem:[%s1 + $0xc] sm:$0xf]
    %v8223 = vld [vmem:[%s1 + $0x10] sm:$0xf]
    %v8224 = vld [vmem:[%s1 + $0x14] sm:$0xf]
    %v8225 = vld [vmem:[%s1 + $0x18] sm:$0xf]
    %v8226 = vld [vmem:[%s1 + $0x1c] sm:$0xf]
    %v8227 = vld [vmem:[%s2] sm:$0xff]
    %v8228 = vld [vmem:[%s2 + $0x8] sm:$0xff]
    %v8229 = vld [vmem:[%s2 + $0x10] sm:$0xff]
    %v8230 = vld [vmem:[%s2 + $0x18] sm:$0xff]
    %v8231 = vld [vmem:[%s2 + $0x20] sm:$0xff]
    %v8232 = vld [vmem:[%s2 + $0x28] sm:$0xff]
    %v8233 = vld [vmem:[%s2 + $0x30] sm:$0xff]
    %v8234 = vld [vmem:[%s2 + $0x38] sm:$0xff]
    %8236 = vset.pattern.permute.xlu0 0
    %8237 = vperm.xlu0 %8236, %v8227
    %v8238 = vpop.permute.xlu0 %8237
    %8241 = vset.pattern.permute.xlu0 0
    %8242 = vperm.xlu0 %8241, %v8228
    %v8243 = vpop.permute.xlu0 %8242
    %8246 = vset.pattern.permute.xlu0 0
    %8247 = vperm.xlu0 %8246, %v8229
    %v8248 = vpop.permute.xlu0 %8247
    %8251 = vset.pattern.permute.xlu0 0
    %8252 = vperm.xlu0 %8251, %v8230
    %v8253 = vpop.permute.xlu0 %8252
    %8256 = vset.pattern.permute.xlu0 0
    %8257 = vperm.xlu0 %8256, %v8231
    %v8258 = vpop.permute.xlu0 %8257
    %8261 = vset.pattern.permute.xlu0 0
    %8262 = vperm.xlu0 %8261, %v8232
    %v8263 = vpop.permute.xlu0 %8262
    %8266 = vset.pattern.permute.xlu0 0
    %8267 = vperm.xlu0 %8266, %v8233
    %v8268 = vpop.permute.xlu0 %8267
    %8271 = vset.pattern.permute.xlu0 0
    %8272 = vperm.xlu0 %8271, %v8234
    %v8273 = vpop.permute.xlu0 %8272
    %v8283 = vunpack.c.l.b16 %v8219
    %v8284 = vunpack.c.l.b16 %v8220
    %v8285 = vunpack.c.l.b16 %v8221
    %v8286 = vunpack.c.l.b16 %v8222
    %v8287 = vunpack.c.l.b16 %v8223
    %v8288 = vunpack.c.l.b16 %v8224
    %v8289 = vunpack.c.l.b16 %v8225
    %v8290 = vunpack.c.l.b16 %v8226
    %v8291 = vpack.c.b16 %v8284, %v8283
    %v8292 = vpack.c.b16 %v8286, %v8285
    %v8293 = vpack.c.b16 %v8288, %v8287
    %v8294 = vpack.c.b16 %v8290, %v8289
    %vm8295 = vcmask 261120
    %v8297 = vsel %vm8295, %v8291, 0
    %v8300 = vsel %vm8295, %v8292, 0
    %v8303 = vsel %vm8295, %v8293, 0
    %v8306 = vsel %vm8295, %v8294, 0
    %8308 = vmatprep.subr.bf16.mxu0 %v8204
    %8309 = vmatpush1.bf16.msra.mxu0 %v8203
    %8310 = vmatprep.subr.bf16.mxu0 %v8212
    %8311 = vmatpush1.bf16.msra.mxu0 %v8211
    %8312 = vmatprep.subr.bf16.mxu0 0
    %8313 = vmatpush1.bf16.msra.mxu0 0
    %8314 = vmatprep.subr.bf16.mxu0 0
    %8315 = vmatpush1.bf16.msra.mxu0 0
    %8316 = vmatprep.subr.bf16.mxu0 0
    %8317 = vmatpush1.bf16.msra.mxu0 0
    %8318 = vmatprep.subr.bf16.mxu0 0
    %8319 = vmatpush1.bf16.msra.mxu0 0
    %8320 = vmatprep.subr.bf16.mxu0 0
    %8321 = vmatpush1.bf16.msra.mxu0 0
    %8322 = vmatprep.subr.bf16.mxu0 0
    %8323 = vmatpush1.bf16.msra.mxu0 0
    %8324 = vmatprep.subr.bf16.mxu0 0
    %8325 = vmatpush1.bf16.msra.mxu0 0
    %8326 = vmatprep.subr.bf16.mxu0 0
    %8327 = vmatpush1.bf16.msra.mxu0 0
    %8328 = vmatprep.subr.bf16.mxu0 0
    %8329 = vmatpush1.bf16.msra.mxu0 0
    %8330 = vmatprep.subr.bf16.mxu0 0
    %8331 = vmatpush1.bf16.msra.mxu0 0
    %8332 = vmatprep.subr.bf16.mxu0 0
    %8333 = vmatpush1.bf16.msra.mxu0 0
    %8334 = vmatprep.subr.bf16.mxu0 0
    %8335 = vmatpush1.bf16.msra.mxu0 0
    %8336 = vmatprep.subr.bf16.mxu0 0
    %8337 = vmatpush1.bf16.msra.mxu0 0
    %8338 = vmatprep.subr.bf16.mxu0 0
    %8339 = vmatpush1.bf16.msra.mxu0 0
    %8340 = vmatprep.mubr.bf16.mxu0 0
    %8341 = vmatmul.mubr.bf16.gmra.mrb[0].mxu0 %v8297
    %v8342 = vpop.f32.mrb[0].mxu0
    %v8343 = vadd.f32 %v8238, %v8342
    %v8344 = vpop.f32.mrb[0].mxu0
    %v8345 = vadd.f32 %v8238, %v8344
    %v8346 = vpop.f32.mrb[0].mxu0
    %v8347 = vadd.f32 %v8243, %v8346
    %v8348 = vpop.f32.mrb[0].mxu0
    %v8349 = vadd.f32 %v8243, %v8348
    %8350 = vmatprep.mubr.bf16.mxu0 0
    %8351 = vmatmul.mubr.bf16.gmra.mrb[0].mxu0 %v8300
    %v8352 = vpop.f32.mrb[0].mxu0
    %v8353 = vadd.f32 %v8248, %v8352
    %v8354 = vpop.f32.mrb[0].mxu0
    %v8355 = vadd.f32 %v8248, %v8354
    %v8356 = vpop.f32.mrb[0].mxu0
    %v8357 = vadd.f32 %v8253, %v8356
    %v8358 = vpop.f32.mrb[0].mxu0
    %v8359 = vadd.f32 %v8253, %v8358
    %8360 = vmatprep.mubr.bf16.mxu0 0
    %8361 = vmatmul.mubr.bf16.gmra.mrb[0].mxu0 %v8303
    %v8362 = vpop.f32.mrb[0].mxu0
    %v8363 = vadd.f32 %v8258, %v8362
    %v8364 = vpop.f32.mrb[0].mxu0
    %v8365 = vadd.f32 %v8258, %v8364
    %v8366 = vpop.f32.mrb[0].mxu0
    %v8367 = vadd.f32 %v8263, %v8366
    %v8368 = vpop.f32.mrb[0].mxu0
    %v8369 = vadd.f32 %v8263, %v8368
    %8370 = vmatprep.mubr.bf16.mxu0 0
    %8371 = vmatmul.mubr.bf16.gmra.mrb[0].mxu0 %v8306
    %v8372 = vpop.f32.mrb[0].mxu0
    %v8373 = vadd.f32 %v8268, %v8372
    %v8374 = vpop.f32.mrb[0].mxu0
    %v8375 = vadd.f32 %v8268, %v8374
    %v8376 = vpop.f32.mrb[0].mxu0
    %v8377 = vadd.f32 %v8273, %v8376
    %v8378 = vpop.f32.mrb[0].mxu0
    %v8379 = vadd.f32 %v8273, %v8378
    %8380 = vdwg.mxu0
    %8381 = vmatprep.subr.bf16.mxu0 %v8206
    %8382 = vmatpush1.bf16.msra.mxu0 %v8205
    %8383 = vmatprep.subr.bf16.mxu0 %v8214
    %8384 = vmatpush1.bf16.msra.mxu0 %v8213
    %8385 = vmatprep.subr.bf16.mxu0 0
    %8386 = vmatpush1.bf16.msra.mxu0 0
    %8387 = vmatprep.subr.bf16.mxu0 0
    %8388 = vmatpush1.bf16.msra.mxu0 0
    %8389 = vmatprep.subr.bf16.mxu0 0
    %8390 = vmatpush1.bf16.msra.mxu0 0
    %8391 = vmatprep.subr.bf16.mxu0 0
    %8392 = vmatpush1.bf16.msra.mxu0 0
    %8393 = vmatprep.subr.bf16.mxu0 0
    %8394 = vmatpush1.bf16.msra.mxu0 0
    %8395 = vmatprep.subr.bf16.mxu0 0
    %8396 = vmatpush1.bf16.msra.mxu0 0
    %8397 = vmatprep.subr.bf16.mxu0 0
    %8398 = vmatpush1.bf16.msra.mxu0 0
    %8399 = vmatprep.subr.bf16.mxu0 0
    %8400 = vmatpush1.bf16.msra.mxu0 0
    %8401 = vmatprep.subr.bf16.mxu0 0
    %8402 = vmatpush1.bf16.msra.mxu0 0
    %8403 = vmatprep.subr.bf16.mxu0 0
    %8404 = vmatpush1.bf16.msra.mxu0 0
    %8405 = vmatprep.subr.bf16.mxu0 0
    %8406 = vmatpush1.bf16.msra.mxu0 0
    %8407 = vmatprep.subr.bf16.mxu0 0
    %8408 = vmatpush1.bf16.msra.mxu0 0
    %8409 = vmatprep.subr.bf16.mxu0 0
    %8410 = vmatpush1.bf16.msra.mxu0 0
    %8411 = vmatprep.subr.bf16.mxu0 0
    %8412 = vmatpush1.bf16.msra.mxu0 0
    %8413 = vmatprep.mubr.bf16.mxu0 0
    %8414 = vmatmul.mubr.bf16.gmra.mrb[0].mxu0 %v8297
    %v8415 = vpop.f32.mrb[0].mxu0
    %v8416 = vadd.f32 %v8238, %v8415
    %v8417 = vpop.f32.mrb[0].mxu0
    %v8418 = vadd.f32 %v8238, %v8417
    %v8419 = vpop.f32.mrb[0].mxu0
    %v8420 = vadd.f32 %v8243, %v8419
    %v8421 = vpop.f32.mrb[0].mxu0
    %v8422 = vadd.f32 %v8243, %v8421
    %8423 = vmatprep.mubr.bf16.mxu0 0
    %8424 = vmatmul.mubr.bf16.gmra.mrb[0].mxu0 %v8300
    %v8425 = vpop.f32.mrb[0].mxu0
    %v8426 = vadd.f32 %v8248, %v8425
    %v8427 = vpop.f32.mrb[0].mxu0
    %v8428 = vadd.f32 %v8248, %v8427
    %v8429 = vpop.f32.mrb[0].mxu0
    %v8430 = vadd.f32 %v8253, %v8429
    %v8431 = vpop.f32.mrb[0].mxu0
    %v8432 = vadd.f32 %v8253, %v8431
    %8433 = vmatprep.mubr.bf16.mxu0 0
    %8434 = vmatmul.mubr.bf16.gmra.mrb[0].mxu0 %v8303
    %v8435 = vpop.f32.mrb[0].mxu0
    %v8436 = vadd.f32 %v8258, %v8435
    %v8437 = vpop.f32.mrb[0].mxu0
    %v8438 = vadd.f32 %v8258, %v8437
    %v8439 = vpop.f32.mrb[0].mxu0
    %v8440 = vadd.f32 %v8263, %v8439
    %v8441 = vpop.f32.mrb[0].mxu0
    %v8442 = vadd.f32 %v8263, %v8441
    %8443 = vmatprep.mubr.bf16.mxu0 0
    %8444 = vmatmul.mubr.bf16.gmra.mrb[0].mxu0 %v8306
    %v8445 = vpop.f32.mrb[0].mxu0
    %v8446 = vadd.f32 %v8268, %v8445
    %v8447 = vpop.f32.mrb[0].mxu0
    %v8448 = vadd.f32 %v8268, %v8447
    %v8449 = vpop.f32.mrb[0].mxu0
    %v8450 = vadd.f32 %v8273, %v8449
    %v8451 = vpop.f32.mrb[0].mxu0
    %v8452 = vadd.f32 %v8273, %v8451
    %8453 = vdwg.mxu0
    %8454 = vmatprep.subr.bf16.mxu0 %v8208
    %8455 = vmatpush1.bf16.msra.mxu0 %v8207
    %8456 = vmatprep.subr.bf16.mxu0 %v8216
    %8457 = vmatpush1.bf16.msra.mxu0 %v8215
    %8458 = vmatprep.subr.bf16.mxu0 0
    %8459 = vmatpush1.bf16.msra.mxu0 0
    %8460 = vmatprep.subr.bf16.mxu0 0
    %8461 = vmatpush1.bf16.msra.mxu0 0
    %8462 = vmatprep.subr.bf16.mxu0 0
    %8463 = vmatpush1.bf16.msra.mxu0 0
    %8464 = vmatprep.subr.bf16.mxu0 0
    %8465 = vmatpush1.bf16.msra.mxu0 0
    %8466 = vmatprep.subr.bf16.mxu0 0
    %8467 = vmatpush1.bf16.msra.mxu0 0
    %8468 = vmatprep.subr.bf16.mxu0 0
    %8469 = vmatpush1.bf16.msra.mxu0 0
    %8470 = vmatprep.subr.bf16.mxu0 0
    %8471 = vmatpush1.bf16.msra.mxu0 0
    %8472 = vmatprep.subr.bf16.mxu0 0
    %8473 = vmatpush1.bf16.msra.mxu0 0
    %8474 = vmatprep.subr.bf16.mxu0 0
    %8475 = vmatpush1.bf16.msra.mxu0 0
    %8476 = vmatprep.subr.bf16.mxu0 0
    %8477 = vmatpush1.bf16.msra.mxu0 0
    %8478 = vmatprep.subr.bf16.mxu0 0
    %8479 = vmatpush1.bf16.msra.mxu0 0
    %8480 = vmatprep.subr.bf16.mxu0 0
    %8481 = vmatpush1.bf16.msra.mxu0 0
    %8482 = vmatprep.subr.bf16.mxu0 0
    %8483 = vmatpush1.bf16.msra.mxu0 0
    %8484 = vmatprep.subr.bf16.mxu0 0
    %8485 = vmatpush1.bf16.msra.mxu0 0
    %8486 = vmatprep.mubr.bf16.mxu0 0
    %8487 = vmatmul.mubr.bf16.gmra.mrb[0].mxu0 %v8297
    %v8488 = vpop.f32.mrb[0].mxu0
    %v8489 = vadd.f32 %v8238, %v8488
    %v8490 = vpop.f32.mrb[0].mxu0
    %v8491 = vadd.f32 %v8238, %v8490
    %v8492 = vpop.f32.mrb[0].mxu0
    %v8493 = vadd.f32 %v8243, %v8492
    %v8494 = vpop.f32.mrb[0].mxu0
    %v8495 = vadd.f32 %v8243, %v8494
    %8496 = vmatprep.mubr.bf16.mxu0 0
    %8497 = vmatmul.mubr.bf16.gmra.mrb[0].mxu0 %v8300
    %v8498 = vpop.f32.mrb[0].mxu0
    %v8499 = vadd.f32 %v8248, %v8498
    %v8500 = vpop.f32.mrb[0].mxu0
    %v8501 = vadd.f32 %v8248, %v8500
    %v8502 = vpop.f32.mrb[0].mxu0
    %v8503 = vadd.f32 %v8253, %v8502
    %v8504 = vpop.f32.mrb[0].mxu0
    %v8505 = vadd.f32 %v8253, %v8504
    %8506 = vmatprep.mubr.bf16.mxu0 0
    %8507 = vmatmul.mubr.bf16.gmra.mrb[0].mxu0 %v8303
    %v8508 = vpop.f32.mrb[0].mxu0
    %v8509 = vadd.f32 %v8258, %v8508
    %v8510 = vpop.f32.mrb[0].mxu0
    %v8511 = vadd.f32 %v8258, %v8510
    %v8512 = vpop.f32.mrb[0].mxu0
    %v8513 = vadd.f32 %v8263, %v8512
    %v8514 = vpop.f32.mrb[0].mxu0
    %v8515 = vadd.f32 %v8263, %v8514
    %8516 = vmatprep.mubr.bf16.mxu0 0
    %8517 = vmatmul.mubr.bf16.gmra.mrb[0].mxu0 %v8306
    %v8518 = vpop.f32.mrb[0].mxu0
    %v8519 = vadd.f32 %v8268, %v8518
    %v8520 = vpop.f32.mrb[0].mxu0
    %v8521 = vadd.f32 %v8268, %v8520
    %v8522 = vpop.f32.mrb[0].mxu0
    %v8523 = vadd.f32 %v8273, %v8522
    %v8524 = vpop.f32.mrb[0].mxu0
    %v8525 = vadd.f32 %v8273, %v8524
    %8526 = vdwg.mxu0
    %8527 = vmatprep.subr.bf16.mxu0 %v8210
    %8528 = vmatpush1.bf16.msra.mxu0 %v8209
    %8529 = vmatprep.subr.bf16.mxu0 %v8218
    %8530 = vmatpush1.bf16.msra.mxu0 %v8217
    %8531 = vmatprep.subr.bf16.mxu0 0
    %8532 = vmatpush1.bf16.msra.mxu0 0
    %8533 = vmatprep.subr.bf16.mxu0 0
    %8534 = vmatpush1.bf16.msra.mxu0 0
    %8535 = vmatprep.subr.bf16.mxu0 0
    %8536 = vmatpush1.bf16.msra.mxu0 0
    %8537 = vmatprep.subr.bf16.mxu0 0
    %8538 = vmatpush1.bf16.msra.mxu0 0
    %8539 = vmatprep.subr.bf16.mxu0 0
    %8540 = vmatpush1.bf16.msra.mxu0 0
    %8541 = vmatprep.subr.bf16.mxu0 0
    %8542 = vmatpush1.bf16.msra.mxu0 0
    %8543 = vmatprep.subr.bf16.mxu0 0
    %8544 = vmatpush1.bf16.msra.mxu0 0
    %8545 = vmatprep.subr.bf16.mxu0 0
    %8546 = vmatpush1.bf16.msra.mxu0 0
    %8547 = vmatprep.subr.bf16.mxu0 0
    %8548 = vmatpush1.bf16.msra.mxu0 0
    %8549 = vmatprep.subr.bf16.mxu0 0
    %8550 = vmatpush1.bf16.msra.mxu0 0
    %8551 = vmatprep.subr.bf16.mxu0 0
    %8552 = vmatpush1.bf16.msra.mxu0 0
    %8553 = vmatprep.subr.bf16.mxu0 0
    %8554 = vmatpush1.bf16.msra.mxu0 0
    %8555 = vmatprep.subr.bf16.mxu0 0
    %8556 = vmatpush1.bf16.msra.mxu0 0
    %8557 = vmatprep.subr.bf16.mxu0 0
    %8558 = vmatpush1.bf16.msra.mxu0 0
    %8559 = vmatprep.mubr.bf16.mxu0 0
    %8560 = vmatmul.mubr.bf16.gmra.mrb[0].mxu0 %v8297
    %v8561 = vpop.f32.mrb[0].mxu0
    %v8562 = vadd.f32 %v8238, %v8561
    %v8563 = vpop.f32.mrb[0].mxu0
    %v8564 = vadd.f32 %v8238, %v8563
    %v8565 = vpop.f32.mrb[0].mxu0
    %v8566 = vadd.f32 %v8243, %v8565
    %v8567 = vpop.f32.mrb[0].mxu0
    %v8568 = vadd.f32 %v8243, %v8567
    %8569 = vmatprep.mubr.bf16.mxu0 0
    %8570 = vmatmul.mubr.bf16.gmra.mrb[0].mxu0 %v8300
    %v8571 = vpop.f32.mrb[0].mxu0
    %v8572 = vadd.f32 %v8248, %v8571
    %v8573 = vpop.f32.mrb[0].mxu0
    %v8574 = vadd.f32 %v8248, %v8573
    %v8575 = vpop.f32.mrb[0].mxu0
    %v8576 = vadd.f32 %v8253, %v8575
    %v8577 = vpop.f32.mrb[0].mxu0
    %v8578 = vadd.f32 %v8253, %v8577
    %8579 = vmatprep.mubr.bf16.mxu0 0
    %8580 = vmatmul.mubr.bf16.gmra.mrb[0].mxu0 %v8303
    %v8581 = vpop.f32.mrb[0].mxu0
    %v8582 = vadd.f32 %v8258, %v8581
    %v8583 = vpop.f32.mrb[0].mxu0
    %v8584 = vadd.f32 %v8258, %v8583
    %v8585 = vpop.f32.mrb[0].mxu0
    %v8586 = vadd.f32 %v8263, %v8585
    %v8587 = vpop.f32.mrb[0].mxu0
    %v8588 = vadd.f32 %v8263, %v8587
    %8589 = vmatprep.mubr.bf16.mxu0 0
    %8590 = vmatmul.mubr.bf16.gmra.mrb[0].mxu0 %v8306
    %v8591 = vpop.f32.mrb[0].mxu0
    %v8592 = vadd.f32 %v8268, %v8591
    %v8593 = vpop.f32.mrb[0].mxu0
    %v8594 = vadd.f32 %v8268, %v8593
    %v8595 = vpop.f32.mrb[0].mxu0
    %v8596 = vadd.f32 %v8273, %v8595
    %v8597 = vpop.f32.mrb[0].mxu0
    %v8598 = vadd.f32 %v8273, %v8597
    %8599 = vdwg.mxu0
    %v8600 = vmax.f32 %v8343, 0.0
    %v8601 = vmax.f32 %v8345, 0.0
    %v8602 = vmax.f32 %v8416, 0.0
    %v8603 = vmax.f32 %v8418, 0.0
    %v8604 = vmax.f32 %v8489, 0.0
    %v8605 = vmax.f32 %v8491, 0.0
    %v8606 = vmax.f32 %v8562, 0.0
    %v8607 = vmax.f32 %v8564, 0.0
    %v8608 = vmax.f32 %v8347, 0.0
    %v8609 = vmax.f32 %v8349, 0.0
    %v8610 = vmax.f32 %v8420, 0.0
    %v8611 = vmax.f32 %v8422, 0.0
    %v8612 = vmax.f32 %v8493, 0.0
    %v8613 = vmax.f32 %v8495, 0.0
    %v8614 = vmax.f32 %v8566, 0.0
    %v8615 = vmax.f32 %v8568, 0.0
    %v8616 = vmax.f32 %v8353, 0.0
    %v8617 = vmax.f32 %v8355, 0.0
    %v8618 = vmax.f32 %v8426, 0.0
    %v8619 = vmax.f32 %v8428, 0.0
    %v8620 = vmax.f32 %v8499, 0.0
    %v8621 = vmax.f32 %v8501, 0.0
    %v8622 = vmax.f32 %v8572, 0.0
    %v8623 = vmax.f32 %v8574, 0.0
    %v8624 = vmax.f32 %v8357, 0.0
    %v8625 = vmax.f32 %v8359, 0.0
    %v8626 = vmax.f32 %v8430, 0.0
    %v8627 = vmax.f32 %v8432, 0.0
    %v8628 = vmax.f32 %v8503, 0.0
    %v8629 = vmax.f32 %v8505, 0.0
    %v8630 = vmax.f32 %v8576, 0.0
    %v8631 = vmax.f32 %v8578, 0.0
    %v8632 = vmax.f32 %v8363, 0.0
    %v8633 = vmax.f32 %v8365, 0.0
    %v8634 = vmax.f32 %v8436, 0.0
    %v8635 = vmax.f32 %v8438, 0.0
    %v8636 = vmax.f32 %v8509, 0.0
    %v8637 = vmax.f32 %v8511, 0.0
    %v8638 = vmax.f32 %v8582, 0.0
    %v8639 = vmax.f32 %v8584, 0.0
    %v8640 = vmax.f32 %v8367, 0.0
    %v8641 = vmax.f32 %v8369, 0.0
    %v8642 = vmax.f32 %v8440, 0.0
    %v8643 = vmax.f32 %v8442, 0.0
    %v8644 = vmax.f32 %v8513, 0.0
    %v8645 = vmax.f32 %v8515, 0.0
    %v8646 = vmax.f32 %v8586, 0.0
    %v8647 = vmax.f32 %v8588, 0.0
    %v8648 = vmax.f32 %v8373, 0.0
    %v8649 = vmax.f32 %v8375, 0.0
    %v8650 = vmax.f32 %v8446, 0.0
    %v8651 = vmax.f32 %v8448, 0.0
    %v8652 = vmax.f32 %v8519, 0.0
    %v8653 = vmax.f32 %v8521, 0.0
    %v8654 = vmax.f32 %v8592, 0.0
    %v8655 = vmax.f32 %v8594, 0.0
    %v8656 = vmax.f32 %v8377, 0.0
    %v8657 = vmax.f32 %v8379, 0.0
    %v8658 = vmax.f32 %v8450, 0.0
    %v8659 = vmax.f32 %v8452, 0.0
    %v8660 = vmax.f32 %v8523, 0.0
    %v8661 = vmax.f32 %v8525, 0.0
    %v8662 = vmax.f32 %v8596, 0.0
    %v8663 = vmax.f32 %v8598, 0.0
    %v8664 = vld [vmem:[%s3] sm:$0xf]
    %v8665 = vld [vmem:[%s3 + $0x4] sm:$0xf]
    %v8666 = vld [vmem:[%s3 + $0x8] sm:$0xf]
    %v8667 = vld [vmem:[%s3 + $0xc] sm:$0xf]
    %v8668 = vld [vmem:[%s3 + $0x10] sm:$0xf]
    %v8669 = vld [vmem:[%s3 + $0x14] sm:$0xf]
    %v8670 = vld [vmem:[%s3 + $0x18] sm:$0xf]
    %v8671 = vld [vmem:[%s3 + $0x1c] sm:$0xf]
    %v8672 = vpack.c.bf16 %v8608, %v8600
    %v8673 = vpack.c.bf16 %v8609, %v8601
    %v8674 = vpack.c.bf16 %v8610, %v8602
    %v8675 = vpack.c.bf16 %v8611, %v8603
    %v8676 = vpack.c.bf16 %v8612, %v8604
    %v8677 = vpack.c.bf16 %v8613, %v8605
    %v8678 = vpack.c.bf16 %v8614, %v8606
    %v8679 = vpack.c.bf16 %v8615, %v8607
    %v8680 = vpack.c.bf16 %v8624, %v8616
    %v8681 = vpack.c.bf16 %v8625, %v8617
    %v8682 = vpack.c.bf16 %v8626, %v8618
    %v8683 = vpack.c.bf16 %v8627, %v8619
    %v8684 = vpack.c.bf16 %v8628, %v8620
    %v8685 = vpack.c.bf16 %v8629, %v8621
    %v8686 = vpack.c.bf16 %v8630, %v8622
    %v8687 = vpack.c.bf16 %v8631, %v8623
    %v8688 = vpack.c.bf16 %v8640, %v8632
    %v8689 = vpack.c.bf16 %v8641, %v8633
    %v8690 = vpack.c.bf16 %v8642, %v8634
    %v8691 = vpack.c.bf16 %v8643, %v8635
    %v8692 = vpack.c.bf16 %v8644, %v8636
    %v8693 = vpack.c.bf16 %v8645, %v8637
    %v8694 = vpack.c.bf16 %v8646, %v8638
    %v8695 = vpack.c.bf16 %v8647, %v8639
    %v8696 = vpack.c.bf16 %v8656, %v8648
    %v8697 = vpack.c.bf16 %v8657, %v8649
    %v8698 = vpack.c.bf16 %v8658, %v8650
    %v8699 = vpack.c.bf16 %v8659, %v8651
    %v8700 = vpack.c.bf16 %v8660, %v8652
    %v8701 = vpack.c.bf16 %v8661, %v8653
    %v8702 = vpack.c.bf16 %v8662, %v8654
    %v8703 = vpack.c.bf16 %v8663, %v8655
    %v8704 = vld [vmem:[%s4] sm:$0xff]
    %v8705 = vld [vmem:[%s4 + $0x8] sm:$0xff]
    %v8706 = vld [vmem:[%s4 + $0x10] sm:$0xff]
    %v8707 = vld [vmem:[%s4 + $0x18] sm:$0xff]
    %v8708 = vld [vmem:[%s4 + $0x20] sm:$0xff]
    %v8709 = vld [vmem:[%s4 + $0x28] sm:$0xff]
    %v8710 = vld [vmem:[%s4 + $0x30] sm:$0xff]
    %v8711 = vld [vmem:[%s4 + $0x38] sm:$0xff]
    %8713 = vset.pattern.permute.xlu0 0
    %8714 = vperm.xlu0 %8713, %v8704
    %v8715 = vpop.permute.xlu0 %8714
    %8718 = vset.pattern.permute.xlu0 0
    %8719 = vperm.xlu0 %8718, %v8705
    %v8720 = vpop.permute.xlu0 %8719
    %8723 = vset.pattern.permute.xlu0 0
    %8724 = vperm.xlu0 %8723, %v8706
    %v8725 = vpop.permute.xlu0 %8724
    %8728 = vset.pattern.permute.xlu0 0
    %8729 = vperm.xlu0 %8728, %v8707
    %v8730 = vpop.permute.xlu0 %8729
    %8733 = vset.pattern.permute.xlu0 0
    %8734 = vperm.xlu0 %8733, %v8708
    %v8735 = vpop.permute.xlu0 %8734
    %8738 = vset.pattern.permute.xlu0 0
    %8739 = vperm.xlu0 %8738, %v8709
    %v8740 = vpop.permute.xlu0 %8739
    %8743 = vset.pattern.permute.xlu0 0
    %8744 = vperm.xlu0 %8743, %v8710
    %v8745 = vpop.permute.xlu0 %8744
    %8748 = vset.pattern.permute.xlu0 0
    %8749 = vperm.xlu0 %8748, %v8711
    %v8750 = vpop.permute.xlu0 %8749
    %v8760 = vunpack.c.l.b16 %v8664
    %v8761 = vunpack.c.l.b16 %v8665
    %v8762 = vunpack.c.l.b16 %v8666
    %v8763 = vunpack.c.l.b16 %v8667
    %v8764 = vunpack.c.l.b16 %v8668
    %v8765 = vunpack.c.l.b16 %v8669
    %v8766 = vunpack.c.l.b16 %v8670
    %v8767 = vunpack.c.l.b16 %v8671
    %v8768 = vpack.c.b16 %v8761, %v8760
    %v8769 = vpack.c.b16 %v8763, %v8762
    %v8770 = vpack.c.b16 %v8765, %v8764
    %v8771 = vpack.c.b16 %v8767, %v8766
    %vm8772 = vcmask 523264
    %v8774 = vsel %vm8772, %v8768, 0
    %v8777 = vsel %vm8772, %v8769, 0
    %v8780 = vsel %vm8772, %v8770, 0
    %v8783 = vsel %vm8772, %v8771, 0
    %8785 = vmatprep.subr.bf16.mxu0 %v8673
    %8786 = vmatpush1.bf16.msra.mxu0 %v8672
    %8787 = vmatprep.subr.bf16.mxu0 %v8681
    %8788 = vmatpush1.bf16.msra.mxu0 %v8680
    %8789 = vmatprep.subr.bf16.mxu0 %v8689
    %8790 = vmatpush1.bf16.msra.mxu0 %v8688
    %8791 = vmatprep.subr.bf16.mxu0 %v8697
    %8792 = vmatpush1.bf16.msra.mxu0 %v8696
    %8793 = vmatprep.subr.bf16.mxu0 0
    %8794 = vmatpush1.bf16.msra.mxu0 0
    %8795 = vmatprep.subr.bf16.mxu0 0
    %8796 = vmatpush1.bf16.msra.mxu0 0
    %8797 = vmatprep.subr.bf16.mxu0 0
    %8798 = vmatpush1.bf16.msra.mxu0 0
    %8799 = vmatprep.subr.bf16.mxu0 0
    %8800 = vmatpush1.bf16.msra.mxu0 0
    %8801 = vmatprep.subr.bf16.mxu0 0
    %8802 = vmatpush1.bf16.msra.mxu0 0
    %8803 = vmatprep.subr.bf16.mxu0 0
    %8804 = vmatpush1.bf16.msra.mxu0 0
    %8805 = vmatprep.subr.bf16.mxu0 0
    %8806 = vmatpush1.bf16.msra.mxu0 0
    %8807 = vmatprep.subr.bf16.mxu0 0
    %8808 = vmatpush1.bf16.msra.mxu0 0
    %8809 = vmatprep.subr.bf16.mxu0 0
    %8810 = vmatpush1.bf16.msra.mxu0 0
    %8811 = vmatprep.subr.bf16.mxu0 0
    %8812 = vmatpush1.bf16.msra.mxu0 0
    %8813 = vmatprep.subr.bf16.mxu0 0
    %8814 = vmatpush1.bf16.msra.mxu0 0
    %8815 = vmatprep.subr.bf16.mxu0 0
    %8816 = vmatpush1.bf16.msra.mxu0 0
    %8817 = vmatprep.mubr.bf16.mxu0 0
    %8818 = vmatmul.mubr.bf16.gmra.mrb[0].mxu0 %v8774
    %v8819 = vpop.f32.mrb[0].mxu0
    %v8820 = vadd.f32 %v8715, %v8819
    %v8821 = vpop.f32.mrb[0].mxu0
    %v8822 = vadd.f32 %v8715, %v8821
    %v8823 = vpop.f32.mrb[0].mxu0
    %v8824 = vadd.f32 %v8720, %v8823
    %v8825 = vpop.f32.mrb[0].mxu0
    %v8826 = vadd.f32 %v8720, %v8825
    %8827 = vmatprep.mubr.bf16.mxu0 0
    %8828 = vmatmul.mubr.bf16.gmra.mrb[0].mxu0 %v8777
    %v8829 = vpop.f32.mrb[0].mxu0
    %v8830 = vadd.f32 %v8725, %v8829
    %v8831 = vpop.f32.mrb[0].mxu0
    %v8832 = vadd.f32 %v8725, %v8831
    %v8833 = vpop.f32.mrb[0].mxu0
    %v8834 = vadd.f32 %v8730, %v8833
    %v8835 = vpop.f32.mrb[0].mxu0
    %v8836 = vadd.f32 %v8730, %v8835
    %8837 = vmatprep.mubr.bf16.mxu0 0
    %8838 = vmatmul.mubr.bf16.gmra.mrb[0].mxu0 %v8780
    %v8839 = vpop.f32.mrb[0].mxu0
    %v8840 = vadd.f32 %v8735, %v8839
    %v8841 = vpop.f32.mrb[0].mxu0
    %v8842 = vadd.f32 %v8735, %v8841
    %v8843 = vpop.f32.mrb[0].mxu0
    %v8844 = vadd.f32 %v8740, %v8843
    %v8845 = vpop.f32.mrb[0].mxu0
    %v8846 = vadd.f32 %v8740, %v8845
    %8847 = vmatprep.mubr.bf16.mxu0 0
    %8848 = vmatmul.mubr.bf16.gmra.mrb[0].mxu0 %v8783
    %v8849 = vpop.f32.mrb[0].mxu0
    %v8850 = vadd.f32 %v8745, %v8849
    %v8851 = vpop.f32.mrb[0].mxu0
    %v8852 = vadd.f32 %v8745, %v8851
    %v8853 = vpop.f32.mrb[0].mxu0
    %v8854 = vadd.f32 %v8750, %v8853
    %v8855 = vpop.f32.mrb[0].mxu0
    %v8856 = vadd.f32 %v8750, %v8855
    %8857 = vdwg.mxu0
    %8858 = vmatprep.subr.bf16.mxu0 %v8675
    %8859 = vmatpush1.bf16.msra.mxu0 %v8674
    %8860 = vmatprep.subr.bf16.mxu0 %v8683
    %8861 = vmatpush1.bf16.msra.mxu0 %v8682
    %8862 = vmatprep.subr.bf16.mxu0 %v8691
    %8863 = vmatpush1.bf16.msra.mxu0 %v8690
    %8864 = vmatprep.subr.bf16.mxu0 %v8699
    %8865 = vmatpush1.bf16.msra.mxu0 %v8698
    %8866 = vmatprep.subr.bf16.mxu0 0
    %8867 = vmatpush1.bf16.msra.mxu0 0
    %8868 = vmatprep.subr.bf16.mxu0 0
    %8869 = vmatpush1.bf16.msra.mxu0 0
    %8870 = vmatprep.subr.bf16.mxu0 0
    %8871 = vmatpush1.bf16.msra.mxu0 0
    %8872 = vmatprep.subr.bf16.mxu0 0
    %8873 = vmatpush1.bf16.msra.mxu0 0
    %8874 = vmatprep.subr.bf16.mxu0 0
    %8875 = vmatpush1.bf16.msra.mxu0 0
    %8876 = vmatprep.subr.bf16.mxu0 0
    %8877 = vmatpush1.bf16.msra.mxu0 0
    %8878 = vmatprep.subr.bf16.mxu0 0
    %8879 = vmatpush1.bf16.msra.mxu0 0
    %8880 = vmatprep.subr.bf16.mxu0 0
    %8881 = vmatpush1.bf16.msra.mxu0 0
    %8882 = vmatprep.subr.bf16.mxu0 0
    %8883 = vmatpush1.bf16.msra.mxu0 0
    %8884 = vmatprep.subr.bf16.mxu0 0
    %8885 = vmatpush1.bf16.msra.mxu0 0
    %8886 = vmatprep.subr.bf16.mxu0 0
    %8887 = vmatpush1.bf16.msra.mxu0 0
    %8888 = vmatprep.subr.bf16.mxu0 0
    %8889 = vmatpush1.bf16.msra.mxu0 0
    %8890 = vmatprep.mubr.bf16.mxu0 0
    %8891 = vmatmul.mubr.bf16.gmra.mrb[0].mxu0 %v8774
    %v8892 = vpop.f32.mrb[0].mxu0
    %v8893 = vadd.f32 %v8715, %v8892
    %v8894 = vpop.f32.mrb[0].mxu0
    %v8895 = vadd.f32 %v8715, %v8894
    %v8896 = vpop.f32.mrb[0].mxu0
    %v8897 = vadd.f32 %v8720, %v8896
    %v8898 = vpop.f32.mrb[0].mxu0
    %v8899 = vadd.f32 %v8720, %v8898
    %8900 = vmatprep.mubr.bf16.mxu0 0
    %8901 = vmatmul.mubr.bf16.gmra.mrb[0].mxu0 %v8777
    %v8902 = vpop.f32.mrb[0].mxu0
    %v8903 = vadd.f32 %v8725, %v8902
    %v8904 = vpop.f32.mrb[0].mxu0
    %v8905 = vadd.f32 %v8725, %v8904
    %v8906 = vpop.f32.mrb[0].mxu0
    %v8907 = vadd.f32 %v8730, %v8906
    %v8908 = vpop.f32.mrb[0].mxu0
    %v8909 = vadd.f32 %v8730, %v8908
    %8910 = vmatprep.mubr.bf16.mxu0 0
    %8911 = vmatmul.mubr.bf16.gmra.mrb[0].mxu0 %v8780
    %v8912 = vpop.f32.mrb[0].mxu0
    %v8913 = vadd.f32 %v8735, %v8912
    %v8914 = vpop.f32.mrb[0].mxu0
    %v8915 = vadd.f32 %v8735, %v8914
    %v8916 = vpop.f32.mrb[0].mxu0
    %v8917 = vadd.f32 %v8740, %v8916
    %v8918 = vpop.f32.mrb[0].mxu0
    %v8919 = vadd.f32 %v8740, %v8918
    %8920 = vmatprep.mubr.bf16.mxu0 0
    %8921 = vmatmul.mubr.bf16.gmra.mrb[0].mxu0 %v8783
    %v8922 = vpop.f32.mrb[0].mxu0
    %v8923 = vadd.f32 %v8745, %v8922
    %v8924 = vpop.f32.mrb[0].mxu0
    %v8925 = vadd.f32 %v8745, %v8924
    %v8926 = vpop.f32.mrb[0].mxu0
    %v8927 = vadd.f32 %v8750, %v8926
    %v8928 = vpop.f32.mrb[0].mxu0
    %v8929 = vadd.f32 %v8750, %v8928
    %8930 = vdwg.mxu0
    %8931 = vmatprep.subr.bf16.mxu0 %v8677
    %8932 = vmatpush1.bf16.msra.mxu0 %v8676
    %8933 = vmatprep.subr.bf16.mxu0 %v8685
    %8934 = vmatpush1.bf16.msra.mxu0 %v8684
    %8935 = vmatprep.subr.bf16.mxu0 %v8693
    %8936 = vmatpush1.bf16.msra.mxu0 %v8692
    %8937 = vmatprep.subr.bf16.mxu0 %v8701
    %8938 = vmatpush1.bf16.msra.mxu0 %v8700
    %8939 = vmatprep.subr.bf16.mxu0 0
    %8940 = vmatpush1.bf16.msra.mxu0 0
    %8941 = vmatprep.subr.bf16.mxu0 0
    %8942 = vmatpush1.bf16.msra.mxu0 0
    %8943 = vmatprep.subr.bf16.mxu0 0
    %8944 = vmatpush1.bf16.msra.mxu0 0
    %8945 = vmatprep.subr.bf16.mxu0 0
    %8946 = vmatpush1.bf16.msra.mxu0 0
    %8947 = vmatprep.subr.bf16.mxu0 0
    %8948 = vmatpush1.bf16.msra.mxu0 0
    %8949 = vmatprep.subr.bf16.mxu0 0
    %8950 = vmatpush1.bf16.msra.mxu0 0
    %8951 = vmatprep.subr.bf16.mxu0 0
    %8952 = vmatpush1.bf16.msra.mxu0 0
    %8953 = vmatprep.subr.bf16.mxu0 0
    %8954 = vmatpush1.bf16.msra.mxu0 0
    %8955 = vmatprep.subr.bf16.mxu0 0
    %8956 = vmatpush1.bf16.msra.mxu0 0
    %8957 = vmatprep.subr.bf16.mxu0 0
    %8958 = vmatpush1.bf16.msra.mxu0 0
    %8959 = vmatprep.subr.bf16.mxu0 0
    %8960 = vmatpush1.bf16.msra.mxu0 0
    %8961 = vmatprep.subr.bf16.mxu0 0
    %8962 = vmatpush1.bf16.msra.mxu0 0
    %8963 = vmatprep.mubr.bf16.mxu0 0
    %8964 = vmatmul.mubr.bf16.gmra.mrb[0].mxu0 %v8774
    %v8965 = vpop.f32.mrb[0].mxu0
    %v8966 = vadd.f32 %v8715, %v8965
    %v8967 = vpop.f32.mrb[0].mxu0
    %v8968 = vadd.f32 %v8715, %v8967
    %v8969 = vpop.f32.mrb[0].mxu0
    %v8970 = vadd.f32 %v8720, %v8969
    %v8971 = vpop.f32.mrb[0].mxu0
    %v8972 = vadd.f32 %v8720, %v8971
    %8973 = vmatprep.mubr.bf16.mxu0 0
    %8974 = vmatmul.mubr.bf16.gmra.mrb[0].mxu0 %v8777
    %v8975 = vpop.f32.mrb[0].mxu0
    %v8976 = vadd.f32 %v8725, %v8975
    %v8977 = vpop.f32.mrb[0].mxu0
    %v8978 = vadd.f32 %v8725, %v8977
    %v8979 = vpop.f32.mrb[0].mxu0
    %v8980 = vadd.f32 %v8730, %v8979
    %v8981 = vpop.f32.mrb[0].mxu0
    %v8982 = vadd.f32 %v8730, %v8981
    %8983 = vmatprep.mubr.bf16.mxu0 0
    %8984 = vmatmul.mubr.bf16.gmra.mrb[0].mxu0 %v8780
    %v8985 = vpop.f32.mrb[0].mxu0
    %v8986 = vadd.f32 %v8735, %v8985
    %v8987 = vpop.f32.mrb[0].mxu0
    %v8988 = vadd.f32 %v8735, %v8987
    %v8989 = vpop.f32.mrb[0].mxu0
    %v8990 = vadd.f32 %v8740, %v8989
    %v8991 = vpop.f32.mrb[0].mxu0
    %v8992 = vadd.f32 %v8740, %v8991
    %8993 = vmatprep.mubr.bf16.mxu0 0
    %8994 = vmatmul.mubr.bf16.gmra.mrb[0].mxu0 %v8783
    %v8995 = vpop.f32.mrb[0].mxu0
    %v8996 = vadd.f32 %v8745, %v8995
    %v8997 = vpop.f32.mrb[0].mxu0
    %v8998 = vadd.f32 %v8745, %v8997
    %v8999 = vpop.f32.mrb[0].mxu0
    %v9000 = vadd.f32 %v8750, %v8999
    %v9001 = vpop.f32.mrb[0].mxu0
    %v9002 = vadd.f32 %v8750, %v9001
    %9003 = vdwg.mxu0
    %9004 = vmatprep.subr.bf16.mxu0 %v8679
    %9005 = vmatpush1.bf16.msra.mxu0 %v8678
    %9006 = vmatprep.subr.bf16.mxu0 %v8687
    %9007 = vmatpush1.bf16.msra.mxu0 %v8686
    %9008 = vmatprep.subr.bf16.mxu0 %v8695
    %9009 = vmatpush1.bf16.msra.mxu0 %v8694
    %9010 = vmatprep.subr.bf16.mxu0 %v8703
    %9011 = vmatpush1.bf16.msra.mxu0 %v8702
    %9012 = vmatprep.subr.bf16.mxu0 0
    %9013 = vmatpush1.bf16.msra.mxu0 0
    %9014 = vmatprep.subr.bf16.mxu0 0
    %9015 = vmatpush1.bf16.msra.mxu0 0
    %9016 = vmatprep.subr.bf16.mxu0 0
    %9017 = vmatpush1.bf16.msra.mxu0 0
    %9018 = vmatprep.subr.bf16.mxu0 0
    %9019 = vmatpush1.bf16.msra.mxu0 0
    %9020 = vmatprep.subr.bf16.mxu0 0
    %9021 = vmatpush1.bf16.msra.mxu0 0
    %9022 = vmatprep.subr.bf16.mxu0 0
    %9023 = vmatpush1.bf16.msra.mxu0 0
    %9024 = vmatprep.subr.bf16.mxu0 0
    %9025 = vmatpush1.bf16.msra.mxu0 0
    %9026 = vmatprep.subr.bf16.mxu0 0
    %9027 = vmatpush1.bf16.msra.mxu0 0
    %9028 = vmatprep.subr.bf16.mxu0 0
    %9029 = vmatpush1.bf16.msra.mxu0 0
    %9030 = vmatprep.subr.bf16.mxu0 0
    %9031 = vmatpush1.bf16.msra.mxu0 0
    %9032 = vmatprep.subr.bf16.mxu0 0
    %9033 = vmatpush1.bf16.msra.mxu0 0
    %9034 = vmatprep.subr.bf16.mxu0 0
    %9035 = vmatpush1.bf16.msra.mxu0 0
    %9036 = vmatprep.mubr.bf16.mxu0 0
    %9037 = vmatmul.mubr.bf16.gmra.mrb[0].mxu0 %v8774
    %v9038 = vpop.f32.mrb[0].mxu0
    %v9039 = vadd.f32 %v8715, %v9038
    %v9040 = vpop.f32.mrb[0].mxu0
    %v9041 = vadd.f32 %v8715, %v9040
    %v9042 = vpop.f32.mrb[0].mxu0
    %v9043 = vadd.f32 %v8720, %v9042
    %v9044 = vpop.f32.mrb[0].mxu0
    %v9045 = vadd.f32 %v8720, %v9044
    %9046 = vmatprep.mubr.bf16.mxu0 0
    %9047 = vmatmul.mubr.bf16.gmra.mrb[0].mxu0 %v8777
    %v9048 = vpop.f32.mrb[0].mxu0
    %v9049 = vadd.f32 %v8725, %v9048
    %v9050 = vpop.f32.mrb[0].mxu0
    %v9051 = vadd.f32 %v8725, %v9050
    %v9052 = vpop.f32.mrb[0].mxu0
    %v9053 = vadd.f32 %v8730, %v9052
    %v9054 = vpop.f32.mrb[0].mxu0
    %v9055 = vadd.f32 %v8730, %v9054
    %9056 = vmatprep.mubr.bf16.mxu0 0
    %9057 = vmatmul.mubr.bf16.gmra.mrb[0].mxu0 %v8780
    %v9058 = vpop.f32.mrb[0].mxu0
    %v9059 = vadd.f32 %v8735, %v9058
    %v9060 = vpop.f32.mrb[0].mxu0
    %v9061 = vadd.f32 %v8735, %v9060
    %v9062 = vpop.f32.mrb[0].mxu0
    %v9063 = vadd.f32 %v8740, %v9062
    %v9064 = vpop.f32.mrb[0].mxu0
    %v9065 = vadd.f32 %v8740, %v9064
    %9066 = vmatprep.mubr.bf16.mxu0 0
    %9067 = vmatmul.mubr.bf16.gmra.mrb[0].mxu0 %v8783
    %v9068 = vpop.f32.mrb[0].mxu0
    %v9069 = vadd.f32 %v8745, %v9068
    %v9070 = vpop.f32.mrb[0].mxu0
    %v9071 = vadd.f32 %v8745, %v9070
    %v9072 = vpop.f32.mrb[0].mxu0
    %v9073 = vadd.f32 %v8750, %v9072
    %v9074 = vpop.f32.mrb[0].mxu0
    %v9075 = vadd.f32 %v8750, %v9074
    %9076 = vdwg.mxu0
    %v9077 = vmax.f32 %v8820, 0.0
    %v9078 = vmax.f32 %v8822, 0.0
    %v9079 = vmax.f32 %v8893, 0.0
    %v9080 = vmax.f32 %v8895, 0.0
    %v9081 = vmax.f32 %v8966, 0.0
    %v9082 = vmax.f32 %v8968, 0.0
    %v9083 = vmax.f32 %v9039, 0.0
    %v9084 = vmax.f32 %v9041, 0.0
    %v9085 = vmax.f32 %v8824, 0.0
    %v9086 = vmax.f32 %v8826, 0.0
    %v9087 = vmax.f32 %v8897, 0.0
    %v9088 = vmax.f32 %v8899, 0.0
    %v9089 = vmax.f32 %v8970, 0.0
    %v9090 = vmax.f32 %v8972, 0.0
    %v9091 = vmax.f32 %v9043, 0.0
    %v9092 = vmax.f32 %v9045, 0.0
    %v9093 = vmax.f32 %v8830, 0.0
    %v9094 = vmax.f32 %v8832, 0.0
    %v9095 = vmax.f32 %v8903, 0.0
    %v9096 = vmax.f32 %v8905, 0.0
    %v9097 = vmax.f32 %v8976, 0.0
    %v9098 = vmax.f32 %v8978, 0.0
    %v9099 = vmax.f32 %v9049, 0.0
    %v9100 = vmax.f32 %v9051, 0.0
    %v9101 = vmax.f32 %v8834, 0.0
    %v9102 = vmax.f32 %v8836, 0.0
    %v9103 = vmax.f32 %v8907, 0.0
    %v9104 = vmax.f32 %v8909, 0.0
    %v9105 = vmax.f32 %v8980, 0.0
    %v9106 = vmax.f32 %v8982, 0.0
    %v9107 = vmax.f32 %v9053, 0.0
    %v9108 = vmax.f32 %v9055, 0.0
    %v9109 = vmax.f32 %v8840, 0.0
    %v9110 = vmax.f32 %v8842, 0.0
    %v9111 = vmax.f32 %v8913, 0.0
    %v9112 = vmax.f32 %v8915, 0.0
    %v9113 = vmax.f32 %v8986, 0.0
    %v9114 = vmax.f32 %v8988, 0.0
    %v9115 = vmax.f32 %v9059, 0.0
    %v9116 = vmax.f32 %v9061, 0.0
    %v9117 = vmax.f32 %v8844, 0.0
    %v9118 = vmax.f32 %v8846, 0.0
    %v9119 = vmax.f32 %v8917, 0.0
    %v9120 = vmax.f32 %v8919, 0.0
    %v9121 = vmax.f32 %v8990, 0.0
    %v9122 = vmax.f32 %v8992, 0.0
    %v9123 = vmax.f32 %v9063, 0.0
    %v9124 = vmax.f32 %v9065, 0.0
    %v9125 = vmax.f32 %v8850, 0.0
    %v9126 = vmax.f32 %v8852, 0.0
    %v9127 = vmax.f32 %v8923, 0.0
    %v9128 = vmax.f32 %v8925, 0.0
    %v9129 = vmax.f32 %v8996, 0.0
    %v9130 = vmax.f32 %v8998, 0.0
    %v9131 = vmax.f32 %v9069, 0.0
    %v9132 = vmax.f32 %v9071, 0.0
    %v9133 = vmax.f32 %v8854, 0.0
    %v9134 = vmax.f32 %v8856, 0.0
    %v9135 = vmax.f32 %v8927, 0.0
    %v9136 = vmax.f32 %v8929, 0.0
    %v9137 = vmax.f32 %v9000, 0.0
    %v9138 = vmax.f32 %v9002, 0.0
    %v9139 = vmax.f32 %v9073, 0.0
    %v9140 = vmax.f32 %v9075, 0.0
    %v9141 = vld [vmem:[%s5] sm:$0xf]
    %v9142 = vld [vmem:[%s5 + $0x4] sm:$0xf]
    %v9143 = vld [vmem:[%s5 + $0x8] sm:$0xf]
    %v9144 = vld [vmem:[%s5 + $0xc] sm:$0xf]
    %v9145 = vld [vmem:[%s5 + $0x10] sm:$0xf]
    %v9146 = vld [vmem:[%s5 + $0x14] sm:$0xf]
    %v9147 = vld [vmem:[%s5 + $0x18] sm:$0xf]
    %v9148 = vld [vmem:[%s5 + $0x1c] sm:$0xf]
    %v9149 = vpack.c.bf16 %v9085, %v9077
    %v9150 = vpack.c.bf16 %v9086, %v9078
    %v9151 = vpack.c.bf16 %v9087, %v9079
    %v9152 = vpack.c.bf16 %v9088, %v9080
    %v9153 = vpack.c.bf16 %v9089, %v9081
    %v9154 = vpack.c.bf16 %v9090, %v9082
    %v9155 = vpack.c.bf16 %v9091, %v9083
    %v9156 = vpack.c.bf16 %v9092, %v9084
    %v9157 = vpack.c.bf16 %v9101, %v9093
    %v9158 = vpack.c.bf16 %v9102, %v9094
    %v9159 = vpack.c.bf16 %v9103, %v9095
    %v9160 = vpack.c.bf16 %v9104, %v9096
    %v9161 = vpack.c.bf16 %v9105, %v9097
    %v9162 = vpack.c.bf16 %v9106, %v9098
    %v9163 = vpack.c.bf16 %v9107, %v9099
    %v9164 = vpack.c.bf16 %v9108, %v9100
    %v9165 = vpack.c.bf16 %v9117, %v9109
    %v9166 = vpack.c.bf16 %v9118, %v9110
    %v9167 = vpack.c.bf16 %v9119, %v9111
    %v9168 = vpack.c.bf16 %v9120, %v9112
    %v9169 = vpack.c.bf16 %v9121, %v9113
    %v9170 = vpack.c.bf16 %v9122, %v9114
    %v9171 = vpack.c.bf16 %v9123, %v9115
    %v9172 = vpack.c.bf16 %v9124, %v9116
    %v9173 = vpack.c.bf16 %v9133, %v9125
    %v9174 = vpack.c.bf16 %v9134, %v9126
    %v9175 = vpack.c.bf16 %v9135, %v9127
    %v9176 = vpack.c.bf16 %v9136, %v9128
    %v9177 = vpack.c.bf16 %v9137, %v9129
    %v9178 = vpack.c.bf16 %v9138, %v9130
    %v9179 = vpack.c.bf16 %v9139, %v9131
    %v9180 = vpack.c.bf16 %v9140, %v9132
    %v9181 = vld [vmem:[%s6] sm:$0xf]
    %v9182 = vld [vmem:[%s6 + $0x4] sm:$0xf]
    %v9183 = vld [vmem:[%s6 + $0x8] sm:$0xf]
    %v9184 = vld [vmem:[%s6 + $0xc] sm:$0xf]
    %v9185 = vld [vmem:[%s6 + $0x10] sm:$0xf]
    %v9186 = vld [vmem:[%s6 + $0x14] sm:$0xf]
    %v9187 = vld [vmem:[%s6 + $0x18] sm:$0xf]
    %v9188 = vld [vmem:[%s6 + $0x1c] sm:$0xf]
    %v9197 = vunpack.c.l.b16 %v9181
    %v9198 = vunpack.c.l.b16 %v9182
    %v9199 = vunpack.c.l.b16 %v9183
    %v9200 = vunpack.c.l.b16 %v9184
    %v9201 = vunpack.c.l.b16 %v9185
    %v9202 = vunpack.c.l.b16 %v9186
    %v9203 = vunpack.c.l.b16 %v9187
    %v9204 = vunpack.c.l.b16 %v9188
    %v9205 = vpack.c.b16 %v9198, %v9197
    %v9206 = vpack.c.b16 %v9200, %v9199
    %v9207 = vpack.c.b16 %v9202, %v9201
    %v9208 = vpack.c.b16 %v9204, %v9203
    %v9210 = vsel %vm8295, %v9205, 0
    %v9213 = vsel %vm8295, %v9206, 0
    %v9216 = vsel %vm8295, %v9207, 0
    %v9219 = vsel %vm8295, %v9208, 0
    %9221 = vmatprep.subr.bf16.mxu0 %v8204
    %9222 = vmatpush1.bf16.msra.mxu0 %v8203
    %9223 = vmatprep.subr.bf16.mxu0 %v8212
    %9224 = vmatpush1.bf16.msra.mxu0 %v8211
    %9225 = vmatprep.subr.bf16.mxu0 0
    %9226 = vmatpush1.bf16.msra.mxu0 0
    %9227 = vmatprep.subr.bf16.mxu0 0
    %9228 = vmatpush1.bf16.msra.mxu0 0
    %9229 = vmatprep.subr.bf16.mxu0 0
    %9230 = vmatpush1.bf16.msra.mxu0 0
    %9231 = vmatprep.subr.bf16.mxu0 0
    %9232 = vmatpush1.bf16.msra.mxu0 0
    %9233 = vmatprep.subr.bf16.mxu0 0
    %9234 = vmatpush1.bf16.msra.mxu0 0
    %9235 = vmatprep.subr.bf16.mxu0 0
    %9236 = vmatpush1.bf16.msra.mxu0 0
    %9237 = vmatprep.subr.bf16.mxu0 0
    %9238 = vmatpush1.bf16.msra.mxu0 0
    %9239 = vmatprep.subr.bf16.mxu0 0
    %9240 = vmatpush1.bf16.msra.mxu0 0
    %9241 = vmatprep.subr.bf16.mxu0 0
    %9242 = vmatpush1.bf16.msra.mxu0 0
    %9243 = vmatprep.subr.bf16.mxu0 0
    %9244 = vmatpush1.bf16.msra.mxu0 0
    %9245 = vmatprep.subr.bf16.mxu0 0
    %9246 = vmatpush1.bf16.msra.mxu0 0
    %9247 = vmatprep.subr.bf16.mxu0 0
    %9248 = vmatpush1.bf16.msra.mxu0 0
    %9249 = vmatprep.subr.bf16.mxu0 0
    %9250 = vmatpush1.bf16.msra.mxu0 0
    %9251 = vmatprep.subr.bf16.mxu0 0
    %9252 = vmatpush1.bf16.msra.mxu0 0
    %9253 = vmatprep.mubr.bf16.mxu0 0
    %9254 = vmatmul.mubr.bf16.gmra.mrb[0].mxu0 %v9210
    %v9255 = vpop.f32.mrb[0].mxu0
    %v9256 = vadd.f32 0.0, %v9255
    %v9257 = vpop.f32.mrb[0].mxu0
    %v9258 = vadd.f32 0.0, %v9257
    %v9259 = vpop.f32.mrb[0].mxu0
    %v9260 = vadd.f32 0.0, %v9259
    %v9261 = vpop.f32.mrb[0].mxu0
    %v9262 = vadd.f32 0.0, %v9261
    %9263 = vmatprep.mubr.bf16.mxu0 0
    %9264 = vmatmul.mubr.bf16.gmra.mrb[0].mxu0 %v9213
    %v9265 = vpop.f32.mrb[0].mxu0
    %v9266 = vadd.f32 0.0, %v9265
    %v9267 = vpop.f32.mrb[0].mxu0
    %v9268 = vadd.f32 0.0, %v9267
    %v9269 = vpop.f32.mrb[0].mxu0
    %v9270 = vadd.f32 0.0, %v9269
    %v9271 = vpop.f32.mrb[0].mxu0
    %v9272 = vadd.f32 0.0, %v9271
    %9273 = vmatprep.mubr.bf16.mxu0 0
    %9274 = vmatmul.mubr.bf16.gmra.mrb[0].mxu0 %v9216
    %v9275 = vpop.f32.mrb[0].mxu0
    %v9276 = vadd.f32 0.0, %v9275
    %v9277 = vpop.f32.mrb[0].mxu0
    %v9278 = vadd.f32 0.0, %v9277
    %v9279 = vpop.f32.mrb[0].mxu0
    %v9280 = vadd.f32 0.0, %v9279
    %v9281 = vpop.f32.mrb[0].mxu0
    %v9282 = vadd.f32 0.0, %v9281
    %9283 = vmatprep.mubr.bf16.mxu0 0
    %9284 = vmatmul.mubr.bf16.gmra.mrb[0].mxu0 %v9219
    %v9285 = vpop.f32.mrb[0].mxu0
    %v9286 = vadd.f32 0.0, %v9285
    %v9287 = vpop.f32.mrb[0].mxu0
    %v9288 = vadd.f32 0.0, %v9287
    %v9289 = vpop.f32.mrb[0].mxu0
    %v9290 = vadd.f32 0.0, %v9289
    %v9291 = vpop.f32.mrb[0].mxu0
    %v9292 = vadd.f32 0.0, %v9291
    %9293 = vdwg.mxu0
    %9294 = vmatprep.subr.bf16.mxu0 %v8206
    %9295 = vmatpush1.bf16.msra.mxu0 %v8205
    %9296 = vmatprep.subr.bf16.mxu0 %v8214
    %9297 = vmatpush1.bf16.msra.mxu0 %v8213
    %9298 = vmatprep.subr.bf16.mxu0 0
    %9299 = vmatpush1.bf16.msra.mxu0 0
    %9300 = vmatprep.subr.bf16.mxu0 0
    %9301 = vmatpush1.bf16.msra.mxu0 0
    %9302 = vmatprep.subr.bf16.mxu0 0
    %9303 = vmatpush1.bf16.msra.mxu0 0
    %9304 = vmatprep.subr.bf16.mxu0 0
    %9305 = vmatpush1.bf16.msra.mxu0 0
    %9306 = vmatprep.subr.bf16.mxu0 0
    %9307 = vmatpush1.bf16.msra.mxu0 0
    %9308 = vmatprep.subr.bf16.mxu0 0
    %9309 = vmatpush1.bf16.msra.mxu0 0
    %9310 = vmatprep.subr.bf16.mxu0 0
    %9311 = vmatpush1.bf16.msra.mxu0 0
    %9312 = vmatprep.subr.bf16.mxu0 0
    %9313 = vmatpush1.bf16.msra.mxu0 0
    %9314 = vmatprep.subr.bf16.mxu0 0
    %9315 = vmatpush1.bf16.msra.mxu0 0
    %9316 = vmatprep.subr.bf16.mxu0 0
    %9317 = vmatpush1.bf16.msra.mxu0 0
    %9318 = vmatprep.subr.bf16.mxu0 0
    %9319 = vmatpush1.bf16.msra.mxu0 0
    %9320 = vmatprep.subr.bf16.mxu0 0
    %9321 = vmatpush1.bf16.msra.mxu0 0
    %9322 = vmatprep.subr.bf16.mxu0 0
    %9323 = vmatpush1.bf16.msra.mxu0 0
    %9324 = vmatprep.subr.bf16.mxu0 0
    %9325 = vmatpush1.bf16.msra.mxu0 0
    %9326 = vmatprep.mubr.bf16.mxu0 0
    %9327 = vmatmul.mubr.bf16.gmra.mrb[0].mxu0 %v9210
    %v9328 = vpop.f32.mrb[0].mxu0
    %v9329 = vadd.f32 0.0, %v9328
    %v9330 = vpop.f32.mrb[0].mxu0
    %v9331 = vadd.f32 0.0, %v9330
    %v9332 = vpop.f32.mrb[0].mxu0
    %v9333 = vadd.f32 0.0, %v9332
    %v9334 = vpop.f32.mrb[0].mxu0
    %v9335 = vadd.f32 0.0, %v9334
    %9336 = vmatprep.mubr.bf16.mxu0 0
    %9337 = vmatmul.mubr.bf16.gmra.mrb[0].mxu0 %v9213
    %v9338 = vpop.f32.mrb[0].mxu0
    %v9339 = vadd.f32 0.0, %v9338
    %v9340 = vpop.f32.mrb[0].mxu0
    %v9341 = vadd.f32 0.0, %v9340
    %v9342 = vpop.f32.mrb[0].mxu0
    %v9343 = vadd.f32 0.0, %v9342
    %v9344 = vpop.f32.mrb[0].mxu0
    %v9345 = vadd.f32 0.0, %v9344
    %9346 = vmatprep.mubr.bf16.mxu0 0
    %9347 = vmatmul.mubr.bf16.gmra.mrb[0].mxu0 %v9216
    %v9348 = vpop.f32.mrb[0].mxu0
    %v9349 = vadd.f32 0.0, %v9348
    %v9350 = vpop.f32.mrb[0].mxu0
    %v9351 = vadd.f32 0.0, %v9350
    %v9352 = vpop.f32.mrb[0].mxu0
    %v9353 = vadd.f32 0.0, %v9352
    %v9354 = vpop.f32.mrb[0].mxu0
    %v9355 = vadd.f32 0.0, %v9354
    %9356 = vmatprep.mubr.bf16.mxu0 0
    %9357 = vmatmul.mubr.bf16.gmra.mrb[0].mxu0 %v9219
    %v9358 = vpop.f32.mrb[0].mxu0
    %v9359 = vadd.f32 0.0, %v9358
    %v9360 = vpop.f32.mrb[0].mxu0
    %v9361 = vadd.f32 0.0, %v9360
    %v9362 = vpop.f32.mrb[0].mxu0
    %v9363 = vadd.f32 0.0, %v9362
    %v9364 = vpop.f32.mrb[0].mxu0
    %v9365 = vadd.f32 0.0, %v9364
    %9366 = vdwg.mxu0
    %9367 = vmatprep.subr.bf16.mxu0 %v8208
    %9368 = vmatpush1.bf16.msra.mxu0 %v8207
    %9369 = vmatprep.subr.bf16.mxu0 %v8216
    %9370 = vmatpush1.bf16.msra.mxu0 %v8215
    %9371 = vmatprep.subr.bf16.mxu0 0
    %9372 = vmatpush1.bf16.msra.mxu0 0
    %9373 = vmatprep.subr.bf16.mxu0 0
    %9374 = vmatpush1.bf16.msra.mxu0 0
    %9375 = vmatprep.subr.bf16.mxu0 0
    %9376 = vmatpush1.bf16.msra.mxu0 0
    %9377 = vmatprep.subr.bf16.mxu0 0
    %9378 = vmatpush1.bf16.msra.mxu0 0
    %9379 = vmatprep.subr.bf16.mxu0 0
    %9380 = vmatpush1.bf16.msra.mxu0 0
    %9381 = vmatprep.subr.bf16.mxu0 0
    %9382 = vmatpush1.bf16.msra.mxu0 0
    %9383 = vmatprep.subr.bf16.mxu0 0
    %9384 = vmatpush1.bf16.msra.mxu0 0
    %9385 = vmatprep.subr.bf16.mxu0 0
    %9386 = vmatpush1.bf16.msra.mxu0 0
    %9387 = vmatprep.subr.bf16.mxu0 0
    %9388 = vmatpush1.bf16.msra.mxu0 0
    %9389 = vmatprep.subr.bf16.mxu0 0
    %9390 = vmatpush1.bf16.msra.mxu0 0
    %9391 = vmatprep.subr.bf16.mxu0 0
    %9392 = vmatpush1.bf16.msra.mxu0 0
    %9393 = vmatprep.subr.bf16.mxu0 0
    %9394 = vmatpush1.bf16.msra.mxu0 0
    %9395 = vmatprep.subr.bf16.mxu0 0
    %9396 = vmatpush1.bf16.msra.mxu0 0
    %9397 = vmatprep.subr.bf16.mxu0 0
    %9398 = vmatpush1.bf16.msra.mxu0 0
    %9399 = vmatprep.mubr.bf16.mxu0 0
    %9400 = vmatmul.mubr.bf16.gmra.mrb[0].mxu0 %v9210
    %v9401 = vpop.f32.mrb[0].mxu0
    %v9402 = vadd.f32 0.0, %v9401
    %v9403 = vpop.f32.mrb[0].mxu0
    %v9404 = vadd.f32 0.0, %v9403
    %v9405 = vpop.f32.mrb[0].mxu0
    %v9406 = vadd.f32 0.0, %v9405
    %v9407 = vpop.f32.mrb[0].mxu0
    %v9408 = vadd.f32 0.0, %v9407
    %9409 = vmatprep.mubr.bf16.mxu0 0
    %9410 = vmatmul.mubr.bf16.gmra.mrb[0].mxu0 %v9213
    %v9411 = vpop.f32.mrb[0].mxu0
    %v9412 = vadd.f32 0.0, %v9411
    %v9413 = vpop.f32.mrb[0].mxu0
    %v9414 = vadd.f32 0.0, %v9413
    %v9415 = vpop.f32.mrb[0].mxu0
    %v9416 = vadd.f32 0.0, %v9415
    %v9417 = vpop.f32.mrb[0].mxu0
    %v9418 = vadd.f32 0.0, %v9417
    %9419 = vmatprep.mubr.bf16.mxu0 0
    %9420 = vmatmul.mubr.bf16.gmra.mrb[0].mxu0 %v9216
    %v9421 = vpop.f32.mrb[0].mxu0
    %v9422 = vadd.f32 0.0, %v9421
    %v9423 = vpop.f32.mrb[0].mxu0
    %v9424 = vadd.f32 0.0, %v9423
    %v9425 = vpop.f32.mrb[0].mxu0
    %v9426 = vadd.f32 0.0, %v9425
    %v9427 = vpop.f32.mrb[0].mxu0
    %v9428 = vadd.f32 0.0, %v9427
    %9429 = vmatprep.mubr.bf16.mxu0 0
    %9430 = vmatmul.mubr.bf16.gmra.mrb[0].mxu0 %v9219
    %v9431 = vpop.f32.mrb[0].mxu0
    %v9432 = vadd.f32 0.0, %v9431
    %v9433 = vpop.f32.mrb[0].mxu0
    %v9434 = vadd.f32 0.0, %v9433
    %v9435 = vpop.f32.mrb[0].mxu0
    %v9436 = vadd.f32 0.0, %v9435
    %v9437 = vpop.f32.mrb[0].mxu0
    %v9438 = vadd.f32 0.0, %v9437
    %9439 = vdwg.mxu0
    %9440 = vmatprep.subr.bf16.mxu0 %v8210
    %9441 = vmatpush1.bf16.msra.mxu0 %v8209
    %9442 = vmatprep.subr.bf16.mxu0 %v8218
    %9443 = vmatpush1.bf16.msra.mxu0 %v8217
    %9444 = vmatprep.subr.bf16.mxu0 0
    %9445 = vmatpush1.bf16.msra.mxu0 0
    %9446 = vmatprep.subr.bf16.mxu0 0
    %9447 = vmatpush1.bf16.msra.mxu0 0
    %9448 = vmatprep.subr.bf16.mxu0 0
    %9449 = vmatpush1.bf16.msra.mxu0 0
    %9450 = vmatprep.subr.bf16.mxu0 0
    %9451 = vmatpush1.bf16.msra.mxu0 0
    %9452 = vmatprep.subr.bf16.mxu0 0
    %9453 = vmatpush1.bf16.msra.mxu0 0
    %9454 = vmatprep.subr.bf16.mxu0 0
    %9455 = vmatpush1.bf16.msra.mxu0 0
    %9456 = vmatprep.subr.bf16.mxu0 0
    %9457 = vmatpush1.bf16.msra.mxu0 0
    %9458 = vmatprep.subr.bf16.mxu0 0
    %9459 = vmatpush1.bf16.msra.mxu0 0
    %9460 = vmatprep.subr.bf16.mxu0 0
    %9461 = vmatpush1.bf16.msra.mxu0 0
    %9462 = vmatprep.subr.bf16.mxu0 0
    %9463 = vmatpush1.bf16.msra.mxu0 0
    %9464 = vmatprep.subr.bf16.mxu0 0
    %9465 = vmatpush1.bf16.msra.mxu0 0
    %9466 = vmatprep.subr.bf16.mxu0 0
    %9467 = vmatpush1.bf16.msra.mxu0 0
    %9468 = vmatprep.subr.bf16.mxu0 0
    %9469 = vmatpush1.bf16.msra.mxu0 0
    %9470 = vmatprep.subr.bf16.mxu0 0
    %9471 = vmatpush1.bf16.msra.mxu0 0
    %9472 = vmatprep.mubr.bf16.mxu0 0
    %9473 = vmatmul.mubr.bf16.gmra.mrb[0].mxu0 %v9210
    %v9474 = vpop.f32.mrb[0].mxu0
    %v9475 = vadd.f32 0.0, %v9474
    %v9476 = vpop.f32.mrb[0].mxu0
    %v9477 = vadd.f32 0.0, %v9476
    %v9478 = vpop.f32.mrb[0].mxu0
    %v9479 = vadd.f32 0.0, %v9478
    %v9480 = vpop.f32.mrb[0].mxu0
    %v9481 = vadd.f32 0.0, %v9480
    %9482 = vmatprep.mubr.bf16.mxu0 0
    %9483 = vmatmul.mubr.bf16.gmra.mrb[0].mxu0 %v9213
    %v9484 = vpop.f32.mrb[0].mxu0
    %v9485 = vadd.f32 0.0, %v9484
    %v9486 = vpop.f32.mrb[0].mxu0
    %v9487 = vadd.f32 0.0, %v9486
    %v9488 = vpop.f32.mrb[0].mxu0
    %v9489 = vadd.f32 0.0, %v9488
    %v9490 = vpop.f32.mrb[0].mxu0
    %v9491 = vadd.f32 0.0, %v9490
    %9492 = vmatprep.mubr.bf16.mxu0 0
    %9493 = vmatmul.mubr.bf16.gmra.mrb[0].mxu0 %v9216
    %v9494 = vpop.f32.mrb[0].mxu0
    %v9495 = vadd.f32 0.0, %v9494
    %v9496 = vpop.f32.mrb[0].mxu0
    %v9497 = vadd.f32 0.0, %v9496
    %v9498 = vpop.f32.mrb[0].mxu0
    %v9499 = vadd.f32 0.0, %v9498
    %v9500 = vpop.f32.mrb[0].mxu0
    %v9501 = vadd.f32 0.0, %v9500
    %9502 = vmatprep.mubr.bf16.mxu0 0
    %9503 = vmatmul.mubr.bf16.gmra.mrb[0].mxu0 %v9219
    %v9504 = vpop.f32.mrb[0].mxu0
    %v9505 = vadd.f32 0.0, %v9504
    %v9506 = vpop.f32.mrb[0].mxu0
    %v9507 = vadd.f32 0.0, %v9506
    %v9508 = vpop.f32.mrb[0].mxu0
    %v9509 = vadd.f32 0.0, %v9508
    %v9510 = vpop.f32.mrb[0].mxu0
    %v9511 = vadd.f32 0.0, %v9510
    %9512 = vdwg.mxu0
    %v9521 = vunpack.c.l.b16 %v9141
    %v9522 = vunpack.c.l.b16 %v9142
    %v9523 = vunpack.c.l.b16 %v9143
    %v9524 = vunpack.c.l.b16 %v9144
    %v9525 = vunpack.c.l.b16 %v9145
    %v9526 = vunpack.c.l.b16 %v9146
    %v9527 = vunpack.c.l.b16 %v9147
    %v9528 = vunpack.c.l.b16 %v9148
    %v9529 = vpack.c.b16 %v9522, %v9521
    %v9530 = vpack.c.b16 %v9524, %v9523
    %v9531 = vpack.c.b16 %v9526, %v9525
    %v9532 = vpack.c.b16 %v9528, %v9527
    %v9534 = vsel %vm8772, %v9529, 0
    %v9537 = vsel %vm8772, %v9530, 0
    %v9540 = vsel %vm8772, %v9531, 0
    %v9543 = vsel %vm8772, %v9532, 0
    %9545 = vmatprep.subr.bf16.mxu0 %v9150
    %9546 = vmatpush1.bf16.msra.mxu0 %v9149
    %9547 = vmatprep.subr.bf16.mxu0 %v9158
    %9548 = vmatpush1.bf16.msra.mxu0 %v9157
    %9549 = vmatprep.subr.bf16.mxu0 %v9166
    %9550 = vmatpush1.bf16.msra.mxu0 %v9165
    %9551 = vmatprep.subr.bf16.mxu0 %v9174
    %9552 = vmatpush1.bf16.msra.mxu0 %v9173
    %9553 = vmatprep.subr.bf16.mxu0 0
    %9554 = vmatpush1.bf16.msra.mxu0 0
    %9555 = vmatprep.subr.bf16.mxu0 0
    %9556 = vmatpush1.bf16.msra.mxu0 0
    %9557 = vmatprep.subr.bf16.mxu0 0
    %9558 = vmatpush1.bf16.msra.mxu0 0
    %9559 = vmatprep.subr.bf16.mxu0 0
    %9560 = vmatpush1.bf16.msra.mxu0 0
    %9561 = vmatprep.subr.bf16.mxu0 0
    %9562 = vmatpush1.bf16.msra.mxu0 0
    %9563 = vmatprep.subr.bf16.mxu0 0
    %9564 = vmatpush1.bf16.msra.mxu0 0
    %9565 = vmatprep.subr.bf16.mxu0 0
    %9566 = vmatpush1.bf16.msra.mxu0 0
    %9567 = vmatprep.subr.bf16.mxu0 0
    %9568 = vmatpush1.bf16.msra.mxu0 0
    %9569 = vmatprep.subr.bf16.mxu0 0
    %9570 = vmatpush1.bf16.msra.mxu0 0
    %9571 = vmatprep.subr.bf16.mxu0 0
    %9572 = vmatpush1.bf16.msra.mxu0 0
    %9573 = vmatprep.subr.bf16.mxu0 0
    %9574 = vmatpush1.bf16.msra.mxu0 0
    %9575 = vmatprep.subr.bf16.mxu0 0
    %9576 = vmatpush1.bf16.msra.mxu0 0
    %9577 = vmatprep.mubr.bf16.mxu0 0
    %9578 = vmatmul.mubr.bf16.gmra.mrb[0].mxu0 %v9534
    %v9579 = vpop.f32.mrb[0].mxu0
    %v9580 = vadd.f32 %v9256, %v9579
    %v9581 = vpop.f32.mrb[0].mxu0
    %v9582 = vadd.f32 %v9258, %v9581
    %v9583 = vpop.f32.mrb[0].mxu0
    %v9584 = vadd.f32 %v9260, %v9583
    %v9585 = vpop.f32.mrb[0].mxu0
    %v9586 = vadd.f32 %v9262, %v9585
    %9587 = vmatprep.mubr.bf16.mxu0 0
    %9588 = vmatmul.mubr.bf16.gmra.mrb[0].mxu0 %v9537
    %v9589 = vpop.f32.mrb[0].mxu0
    %v9590 = vadd.f32 %v9266, %v9589
    %v9591 = vpop.f32.mrb[0].mxu0
    %v9592 = vadd.f32 %v9268, %v9591
    %v9593 = vpop.f32.mrb[0].mxu0
    %v9594 = vadd.f32 %v9270, %v9593
    %v9595 = vpop.f32.mrb[0].mxu0
    %v9596 = vadd.f32 %v9272, %v9595
    %9597 = vmatprep.mubr.bf16.mxu0 0
    %9598 = vmatmul.mubr.bf16.gmra.mrb[0].mxu0 %v9540
    %v9599 = vpop.f32.mrb[0].mxu0
    %v9600 = vadd.f32 %v9276, %v9599
    %v9601 = vpop.f32.mrb[0].mxu0
    %v9602 = vadd.f32 %v9278, %v9601
    %v9603 = vpop.f32.mrb[0].mxu0
    %v9604 = vadd.f32 %v9280, %v9603
    %v9605 = vpop.f32.mrb[0].mxu0
    %v9606 = vadd.f32 %v9282, %v9605
    %9607 = vmatprep.mubr.bf16.mxu0 0
    %9608 = vmatmul.mubr.bf16.gmra.mrb[0].mxu0 %v9543
    %v9609 = vpop.f32.mrb[0].mxu0
    %v9610 = vadd.f32 %v9286, %v9609
    %v9611 = vpop.f32.mrb[0].mxu0
    %v9612 = vadd.f32 %v9288, %v9611
    %v9613 = vpop.f32.mrb[0].mxu0
    %v9614 = vadd.f32 %v9290, %v9613
    %v9615 = vpop.f32.mrb[0].mxu0
    %v9616 = vadd.f32 %v9292, %v9615
    %9617 = vdwg.mxu0
    %9618 = vmatprep.subr.bf16.mxu0 %v9152
    %9619 = vmatpush1.bf16.msra.mxu0 %v9151
    %9620 = vmatprep.subr.bf16.mxu0 %v9160
    %9621 = vmatpush1.bf16.msra.mxu0 %v9159
    %9622 = vmatprep.subr.bf16.mxu0 %v9168
    %9623 = vmatpush1.bf16.msra.mxu0 %v9167
    %9624 = vmatprep.subr.bf16.mxu0 %v9176
    %9625 = vmatpush1.bf16.msra.mxu0 %v9175
    %9626 = vmatprep.subr.bf16.mxu0 0
    %9627 = vmatpush1.bf16.msra.mxu0 0
    %9628 = vmatprep.subr.bf16.mxu0 0
    %9629 = vmatpush1.bf16.msra.mxu0 0
    %9630 = vmatprep.subr.bf16.mxu0 0
    %9631 = vmatpush1.bf16.msra.mxu0 0
    %9632 = vmatprep.subr.bf16.mxu0 0
    %9633 = vmatpush1.bf16.msra.mxu0 0
    %9634 = vmatprep.subr.bf16.mxu0 0
    %9635 = vmatpush1.bf16.msra.mxu0 0
    %9636 = vmatprep.subr.bf16.mxu0 0
    %9637 = vmatpush1.bf16.msra.mxu0 0
    %9638 = vmatprep.subr.bf16.mxu0 0
    %9639 = vmatpush1.bf16.msra.mxu0 0
    %9640 = vmatprep.subr.bf16.mxu0 0
    %9641 = vmatpush1.bf16.msra.mxu0 0
    %9642 = vmatprep.subr.bf16.mxu0 0
    %9643 = vmatpush1.bf16.msra.mxu0 0
    %9644 = vmatprep.subr.bf16.mxu0 0
    %9645 = vmatpush1.bf16.msra.mxu0 0
    %9646 = vmatprep.subr.bf16.mxu0 0
    %9647 = vmatpush1.bf16.msra.mxu0 0
    %9648 = vmatprep.subr.bf16.mxu0 0
    %9649 = vmatpush1.bf16.msra.mxu0 0
    %9650 = vmatprep.mubr.bf16.mxu0 0
    %9651 = vmatmul.mubr.bf16.gmra.mrb[0].mxu0 %v9534
    %v9652 = vpop.f32.mrb[0].mxu0
    %v9653 = vadd.f32 %v9329, %v9652
    %v9654 = vpop.f32.mrb[0].mxu0
    %v9655 = vadd.f32 %v9331, %v9654
    %v9656 = vpop.f32.mrb[0].mxu0
    %v9657 = vadd.f32 %v9333, %v9656
    %v9658 = vpop.f32.mrb[0].mxu0
    %v9659 = vadd.f32 %v9335, %v9658
    %9660 = vmatprep.mubr.bf16.mxu0 0
    %9661 = vmatmul.mubr.bf16.gmra.mrb[0].mxu0 %v9537
    %v9662 = vpop.f32.mrb[0].mxu0
    %v9663 = vadd.f32 %v9339, %v9662
    %v9664 = vpop.f32.mrb[0].mxu0
    %v9665 = vadd.f32 %v9341, %v9664
    %v9666 = vpop.f32.mrb[0].mxu0
    %v9667 = vadd.f32 %v9343, %v9666
    %v9668 = vpop.f32.mrb[0].mxu0
    %v9669 = vadd.f32 %v9345, %v9668
    %9670 = vmatprep.mubr.bf16.mxu0 0
    %9671 = vmatmul.mubr.bf16.gmra.mrb[0].mxu0 %v9540
    %v9672 = vpop.f32.mrb[0].mxu0
    %v9673 = vadd.f32 %v9349, %v9672
    %v9674 = vpop.f32.mrb[0].mxu0
    %v9675 = vadd.f32 %v9351, %v9674
    %v9676 = vpop.f32.mrb[0].mxu0
    %v9677 = vadd.f32 %v9353, %v9676
    %v9678 = vpop.f32.mrb[0].mxu0
    %v9679 = vadd.f32 %v9355, %v9678
    %9680 = vmatprep.mubr.bf16.mxu0 0
    %9681 = vmatmul.mubr.bf16.gmra.mrb[0].mxu0 %v9543
    %v9682 = vpop.f32.mrb[0].mxu0
    %v9683 = vadd.f32 %v9359, %v9682
    %v9684 = vpop.f32.mrb[0].mxu0
    %v9685 = vadd.f32 %v9361, %v9684
    %v9686 = vpop.f32.mrb[0].mxu0
    %v9687 = vadd.f32 %v9363, %v9686
    %v9688 = vpop.f32.mrb[0].mxu0
    %v9689 = vadd.f32 %v9365, %v9688
    %9690 = vdwg.mxu0
    %9691 = vmatprep.subr.bf16.mxu0 %v9154
    %9692 = vmatpush1.bf16.msra.mxu0 %v9153
    %9693 = vmatprep.subr.bf16.mxu0 %v9162
    %9694 = vmatpush1.bf16.msra.mxu0 %v9161
    %9695 = vmatprep.subr.bf16.mxu0 %v9170
    %9696 = vmatpush1.bf16.msra.mxu0 %v9169
    %9697 = vmatprep.subr.bf16.mxu0 %v9178
    %9698 = vmatpush1.bf16.msra.mxu0 %v9177
    %9699 = vmatprep.subr.bf16.mxu0 0
    %9700 = vmatpush1.bf16.msra.mxu0 0
    %9701 = vmatprep.subr.bf16.mxu0 0
    %9702 = vmatpush1.bf16.msra.mxu0 0
    %9703 = vmatprep.subr.bf16.mxu0 0
    %9704 = vmatpush1.bf16.msra.mxu0 0
    %9705 = vmatprep.subr.bf16.mxu0 0
    %9706 = vmatpush1.bf16.msra.mxu0 0
    %9707 = vmatprep.subr.bf16.mxu0 0
    %9708 = vmatpush1.bf16.msra.mxu0 0
    %9709 = vmatprep.subr.bf16.mxu0 0
    %9710 = vmatpush1.bf16.msra.mxu0 0
    %9711 = vmatprep.subr.bf16.mxu0 0
    %9712 = vmatpush1.bf16.msra.mxu0 0
    %9713 = vmatprep.subr.bf16.mxu0 0
    %9714 = vmatpush1.bf16.msra.mxu0 0
    %9715 = vmatprep.subr.bf16.mxu0 0
    %9716 = vmatpush1.bf16.msra.mxu0 0
    %9717 = vmatprep.subr.bf16.mxu0 0
    %9718 = vmatpush1.bf16.msra.mxu0 0
    %9719 = vmatprep.subr.bf16.mxu0 0
    %9720 = vmatpush1.bf16.msra.mxu0 0
    %9721 = vmatprep.subr.bf16.mxu0 0
    %9722 = vmatpush1.bf16.msra.mxu0 0
    %9723 = vmatprep.mubr.bf16.mxu0 0
    %9724 = vmatmul.mubr.bf16.gmra.mrb[0].mxu0 %v9534
    %v9725 = vpop.f32.mrb[0].mxu0
    %v9726 = vadd.f32 %v9402, %v9725
    %v9727 = vpop.f32.mrb[0].mxu0
    %v9728 = vadd.f32 %v9404, %v9727
    %v9729 = vpop.f32.mrb[0].mxu0
    %v9730 = vadd.f32 %v9406, %v9729
    %v9731 = vpop.f32.mrb[0].mxu0
    %v9732 = vadd.f32 %v9408, %v9731
    %9733 = vmatprep.mubr.bf16.mxu0 0
    %9734 = vmatmul.mubr.bf16.gmra.mrb[0].mxu0 %v9537
    %v9735 = vpop.f32.mrb[0].mxu0
    %v9736 = vadd.f32 %v9412, %v9735
    %v9737 = vpop.f32.mrb[0].mxu0
    %v9738 = vadd.f32 %v9414, %v9737
    %v9739 = vpop.f32.mrb[0].mxu0
    %v9740 = vadd.f32 %v9416, %v9739
    %v9741 = vpop.f32.mrb[0].mxu0
    %v9742 = vadd.f32 %v9418, %v9741
    %9743 = vmatprep.mubr.bf16.mxu0 0
    %9744 = vmatmul.mubr.bf16.gmra.mrb[0].mxu0 %v9540
    %v9745 = vpop.f32.mrb[0].mxu0
    %v9746 = vadd.f32 %v9422, %v9745
    %v9747 = vpop.f32.mrb[0].mxu0
    %v9748 = vadd.f32 %v9424, %v9747
    %v9749 = vpop.f32.mrb[0].mxu0
    %v9750 = vadd.f32 %v9426, %v9749
    %v9751 = vpop.f32.mrb[0].mxu0
    %v9752 = vadd.f32 %v9428, %v9751
    %9753 = vmatprep.mubr.bf16.mxu0 0
    %9754 = vmatmul.mubr.bf16.gmra.mrb[0].mxu0 %v9543
    %v9755 = vpop.f32.mrb[0].mxu0
    %v9756 = vadd.f32 %v9432, %v9755
    %v9757 = vpop.f32.mrb[0].mxu0
    %v9758 = vadd.f32 %v9434, %v9757
    %v9759 = vpop.f32.mrb[0].mxu0
    %v9760 = vadd.f32 %v9436, %v9759
    %v9761 = vpop.f32.mrb[0].mxu0
    %v9762 = vadd.f32 %v9438, %v9761
    %9763 = vdwg.mxu0
    %9764 = vmatprep.subr.bf16.mxu0 %v9156
    %9765 = vmatpush1.bf16.msra.mxu0 %v9155
    %9766 = vmatprep.subr.bf16.mxu0 %v9164
    %9767 = vmatpush1.bf16.msra.mxu0 %v9163
    %9768 = vmatprep.subr.bf16.mxu0 %v9172
    %9769 = vmatpush1.bf16.msra.mxu0 %v9171
    %9770 = vmatprep.subr.bf16.mxu0 %v9180
    %9771 = vmatpush1.bf16.msra.mxu0 %v9179
    %9772 = vmatprep.subr.bf16.mxu0 0
    %9773 = vmatpush1.bf16.msra.mxu0 0
    %9774 = vmatprep.subr.bf16.mxu0 0
    %9775 = vmatpush1.bf16.msra.mxu0 0
    %9776 = vmatprep.subr.bf16.mxu0 0
    %9777 = vmatpush1.bf16.msra.mxu0 0
    %9778 = vmatprep.subr.bf16.mxu0 0
    %9779 = vmatpush1.bf16.msra.mxu0 0
    %9780 = vmatprep.subr.bf16.mxu0 0
    %9781 = vmatpush1.bf16.msra.mxu0 0
    %9782 = vmatprep.subr.bf16.mxu0 0
    %9783 = vmatpush1.bf16.msra.mxu0 0
    %9784 = vmatprep.subr.bf16.mxu0 0
    %9785 = vmatpush1.bf16.msra.mxu0 0
    %9786 = vmatprep.subr.bf16.mxu0 0
    %9787 = vmatpush1.bf16.msra.mxu0 0
    %9788 = vmatprep.subr.bf16.mxu0 0
    %9789 = vmatpush1.bf16.msra.mxu0 0
    %9790 = vmatprep.subr.bf16.mxu0 0
    %9791 = vmatpush1.bf16.msra.mxu0 0
    %9792 = vmatprep.subr.bf16.mxu0 0
    %9793 = vmatpush1.bf16.msra.mxu0 0
    %9794 = vmatprep.subr.bf16.mxu0 0
    %9795 = vmatpush1.bf16.msra.mxu0 0
    %9796 = vmatprep.mubr.bf16.mxu0 0
    %9797 = vmatmul.mubr.bf16.gmra.mrb[0].mxu0 %v9534
    %v9798 = vpop.f32.mrb[0].mxu0
    %v9799 = vadd.f32 %v9475, %v9798
    %v9800 = vpop.f32.mrb[0].mxu0
    %v9801 = vadd.f32 %v9477, %v9800
    %v9802 = vpop.f32.mrb[0].mxu0
    %v9803 = vadd.f32 %v9479, %v9802
    %v9804 = vpop.f32.mrb[0].mxu0
    %v9805 = vadd.f32 %v9481, %v9804
    %9806 = vmatprep.mubr.bf16.mxu0 0
    %9807 = vmatmul.mubr.bf16.gmra.mrb[0].mxu0 %v9537
    %v9808 = vpop.f32.mrb[0].mxu0
    %v9809 = vadd.f32 %v9485, %v9808
    %v9810 = vpop.f32.mrb[0].mxu0
    %v9811 = vadd.f32 %v9487, %v9810
    %v9812 = vpop.f32.mrb[0].mxu0
    %v9813 = vadd.f32 %v9489, %v9812
    %v9814 = vpop.f32.mrb[0].mxu0
    %v9815 = vadd.f32 %v9491, %v9814
    %9816 = vmatprep.mubr.bf16.mxu0 0
    %9817 = vmatmul.mubr.bf16.gmra.mrb[0].mxu0 %v9540
    %v9818 = vpop.f32.mrb[0].mxu0
    %v9819 = vadd.f32 %v9495, %v9818
    %v9820 = vpop.f32.mrb[0].mxu0
    %v9821 = vadd.f32 %v9497, %v9820
    %v9822 = vpop.f32.mrb[0].mxu0
    %v9823 = vadd.f32 %v9499, %v9822
    %v9824 = vpop.f32.mrb[0].mxu0
    %v9825 = vadd.f32 %v9501, %v9824
    %9826 = vmatprep.mubr.bf16.mxu0 0
    %9827 = vmatmul.mubr.bf16.gmra.mrb[0].mxu0 %v9543
    %v9828 = vpop.f32.mrb[0].mxu0
    %v9829 = vadd.f32 %v9505, %v9828
    %v9830 = vpop.f32.mrb[0].mxu0
    %v9831 = vadd.f32 %v9507, %v9830
    %v9832 = vpop.f32.mrb[0].mxu0
    %v9833 = vadd.f32 %v9509, %v9832
    %v9834 = vpop.f32.mrb[0].mxu0
    %v9835 = vadd.f32 %v9511, %v9834
    %9836 = vdwg.mxu0
    %v9837 = vld [vmem:[%s7] sm:$0xff]
    %v9838 = vld [vmem:[%s7 + $0x8] sm:$0xff]
    %v9839 = vld [vmem:[%s7 + $0x10] sm:$0xff]
    %v9840 = vld [vmem:[%s7 + $0x18] sm:$0xff]
    %v9841 = vld [vmem:[%s7 + $0x20] sm:$0xff]
    %v9842 = vld [vmem:[%s7 + $0x28] sm:$0xff]
    %v9843 = vld [vmem:[%s7 + $0x30] sm:$0xff]
    %v9844 = vld [vmem:[%s7 + $0x38] sm:$0xff]
    %9846 = vset.pattern.permute.xlu0 0
    %9847 = vperm.xlu0 %9846, %v9837
    %v9848 = vpop.permute.xlu0 %9847
    %9851 = vset.pattern.permute.xlu0 0
    %9852 = vperm.xlu0 %9851, %v9838
    %v9853 = vpop.permute.xlu0 %9852
    %9856 = vset.pattern.permute.xlu0 0
    %9857 = vperm.xlu0 %9856, %v9839
    %v9858 = vpop.permute.xlu0 %9857
    %9861 = vset.pattern.permute.xlu0 0
    %9862 = vperm.xlu0 %9861, %v9840
    %v9863 = vpop.permute.xlu0 %9862
    %9866 = vset.pattern.permute.xlu0 0
    %9867 = vperm.xlu0 %9866, %v9841
    %v9868 = vpop.permute.xlu0 %9867
    %9871 = vset.pattern.permute.xlu0 0
    %9872 = vperm.xlu0 %9871, %v9842
    %v9873 = vpop.permute.xlu0 %9872
    %9876 = vset.pattern.permute.xlu0 0
    %9877 = vperm.xlu0 %9876, %v9843
    %v9878 = vpop.permute.xlu0 %9877
    %9881 = vset.pattern.permute.xlu0 0
    %9882 = vperm.xlu0 %9881, %v9844
    %v9883 = vpop.permute.xlu0 %9882
    %v9885 = vadd.f32 %v9580, %v9848
    %v9886 = vadd.f32 %v9582, %v9848
    %v9887 = vadd.f32 %v9653, %v9848
    %v9888 = vadd.f32 %v9655, %v9848
    %v9889 = vadd.f32 %v9726, %v9848
    %v9890 = vadd.f32 %v9728, %v9848
    %v9891 = vadd.f32 %v9799, %v9848
    %v9892 = vadd.f32 %v9801, %v9848
    %v9893 = vadd.f32 %v9584, %v9853
    %v9894 = vadd.f32 %v9586, %v9853
    %v9895 = vadd.f32 %v9657, %v9853
    %v9896 = vadd.f32 %v9659, %v9853
    %v9897 = vadd.f32 %v9730, %v9853
    %v9898 = vadd.f32 %v9732, %v9853
    %v9899 = vadd.f32 %v9803, %v9853
    %v9900 = vadd.f32 %v9805, %v9853
    %v9901 = vadd.f32 %v9590, %v9858
    %v9902 = vadd.f32 %v9592, %v9858
    %v9903 = vadd.f32 %v9663, %v9858
    %v9904 = vadd.f32 %v9665, %v9858
    %v9905 = vadd.f32 %v9736, %v9858
    %v9906 = vadd.f32 %v9738, %v9858
    %v9907 = vadd.f32 %v9809, %v9858
    %v9908 = vadd.f32 %v9811, %v9858
    %v9909 = vadd.f32 %v9594, %v9863
    %v9910 = vadd.f32 %v9596, %v9863
    %v9911 = vadd.f32 %v9667, %v9863
    %v9912 = vadd.f32 %v9669, %v9863
    %v9913 = vadd.f32 %v9740, %v9863
    %v9914 = vadd.f32 %v9742, %v9863
    %v9915 = vadd.f32 %v9813, %v9863
    %v9916 = vadd.f32 %v9815, %v9863
    %v9917 = vadd.f32 %v9600, %v9868
    %v9918 = vadd.f32 %v9602, %v9868
    %v9919 = vadd.f32 %v9673, %v9868
    %v9920 = vadd.f32 %v9675, %v9868
    %v9921 = vadd.f32 %v9746, %v9868
    %v9922 = vadd.f32 %v9748, %v9868
    %v9923 = vadd.f32 %v9819, %v9868
    %v9924 = vadd.f32 %v9821, %v9868
    %v9925 = vadd.f32 %v9604, %v9873
    %v9926 = vadd.f32 %v9606, %v9873
    %v9927 = vadd.f32 %v9677, %v9873
    %v9928 = vadd.f32 %v9679, %v9873
    %v9929 = vadd.f32 %v9750, %v9873
    %v9930 = vadd.f32 %v9752, %v9873
    %v9931 = vadd.f32 %v9823, %v9873
    %v9932 = vadd.f32 %v9825, %v9873
    %v9933 = vadd.f32 %v9610, %v9878
    %v9934 = vadd.f32 %v9612, %v9878
    %v9935 = vadd.f32 %v9683, %v9878
    %v9936 = vadd.f32 %v9685, %v9878
    %v9937 = vadd.f32 %v9756, %v9878
    %v9938 = vadd.f32 %v9758, %v9878
    %v9939 = vadd.f32 %v9829, %v9878
    %v9940 = vadd.f32 %v9831, %v9878
    %v9941 = vadd.f32 %v9614, %v9883
    %v9942 = vadd.f32 %v9616, %v9883
    %v9943 = vadd.f32 %v9687, %v9883
    %v9944 = vadd.f32 %v9689, %v9883
    %v9945 = vadd.f32 %v9760, %v9883
    %v9946 = vadd.f32 %v9762, %v9883
    %v9947 = vadd.f32 %v9833, %v9883
    %v9948 = vadd.f32 %v9835, %v9883
    %v9949 = vmax.f32 %v9885, 0.0
    %v9950 = vmax.f32 %v9886, 0.0
    %v9951 = vmax.f32 %v9887, 0.0
    %v9952 = vmax.f32 %v9888, 0.0
    %v9953 = vmax.f32 %v9889, 0.0
    %v9954 = vmax.f32 %v9890, 0.0
    %v9955 = vmax.f32 %v9891, 0.0
    %v9956 = vmax.f32 %v9892, 0.0
    %v9957 = vmax.f32 %v9893, 0.0
    %v9958 = vmax.f32 %v9894, 0.0
    %v9959 = vmax.f32 %v9895, 0.0
    %v9960 = vmax.f32 %v9896, 0.0
    %v9961 = vmax.f32 %v9897, 0.0
    %v9962 = vmax.f32 %v9898, 0.0
    %v9963 = vmax.f32 %v9899, 0.0
    %v9964 = vmax.f32 %v9900, 0.0
    %v9965 = vmax.f32 %v9901, 0.0
    %v9966 = vmax.f32 %v9902, 0.0
    %v9967 = vmax.f32 %v9903, 0.0
    %v9968 = vmax.f32 %v9904, 0.0
    %v9969 = vmax.f32 %v9905, 0.0
    %v9970 = vmax.f32 %v9906, 0.0
    %v9971 = vmax.f32 %v9907, 0.0
    %v9972 = vmax.f32 %v9908, 0.0
    %v9973 = vmax.f32 %v9909, 0.0
    %v9974 = vmax.f32 %v9910, 0.0
    %v9975 = vmax.f32 %v9911, 0.0
    %v9976 = vmax.f32 %v9912, 0.0
    %v9977 = vmax.f32 %v9913, 0.0
    %v9978 = vmax.f32 %v9914, 0.0
    %v9979 = vmax.f32 %v9915, 0.0
    %v9980 = vmax.f32 %v9916, 0.0
    %v9981 = vmax.f32 %v9917, 0.0
    %v9982 = vmax.f32 %v9918, 0.0
    %v9983 = vmax.f32 %v9919, 0.0
    %v9984 = vmax.f32 %v9920, 0.0
    %v9985 = vmax.f32 %v9921, 0.0
    %v9986 = vmax.f32 %v9922, 0.0
    %v9987 = vmax.f32 %v9923, 0.0
    %v9988 = vmax.f32 %v9924, 0.0
    %v9989 = vmax.f32 %v9925, 0.0
    %v9990 = vmax.f32 %v9926, 0.0
    %v9991 = vmax.f32 %v9927, 0.0
    %v9992 = vmax.f32 %v9928, 0.0
    %v9993 = vmax.f32 %v9929, 0.0
    %v9994 = vmax.f32 %v9930, 0.0
    %v9995 = vmax.f32 %v9931, 0.0
    %v9996 = vmax.f32 %v9932, 0.0
    %v9997 = vmax.f32 %v9933, 0.0
    %v9998 = vmax.f32 %v9934, 0.0
    %v9999 = vmax.f32 %v9935, 0.0
    %v10000 = vmax.f32 %v9936, 0.0
    %v10001 = vmax.f32 %v9937, 0.0
    %v10002 = vmax.f32 %v9938, 0.0
    %v10003 = vmax.f32 %v9939, 0.0
    %v10004 = vmax.f32 %v9940, 0.0
    %v10005 = vmax.f32 %v9941, 0.0
    %v10006 = vmax.f32 %v9942, 0.0
    %v10007 = vmax.f32 %v9943, 0.0
    %v10008 = vmax.f32 %v9944, 0.0
    %v10009 = vmax.f32 %v9945, 0.0
    %v10010 = vmax.f32 %v9946, 0.0
    %v10011 = vmax.f32 %v9947, 0.0
    %v10012 = vmax.f32 %v9948, 0.0
    %v10013 = vld [vmem:[%s8] sm:$0xf]
    %v10014 = vld [vmem:[%s8 + $0x4] sm:$0xf]
    %v10015 = vld [vmem:[%s8 + $0x8] sm:$0xf]
    %v10016 = vld [vmem:[%s8 + $0xc] sm:$0xf]
    %v10017 = vld [vmem:[%s8 + $0x10] sm:$0xf]
    %v10018 = vld [vmem:[%s8 + $0x14] sm:$0xf]
    %v10019 = vld [vmem:[%s8 + $0x18] sm:$0xf]
    %v10020 = vld [vmem:[%s8 + $0x1c] sm:$0xf]
    %v10021 = vpack.c.bf16 %v9957, %v9949
    %v10022 = vpack.c.bf16 %v9958, %v9950
    %v10023 = vpack.c.bf16 %v9959, %v9951
    %v10024 = vpack.c.bf16 %v9960, %v9952
    %v10025 = vpack.c.bf16 %v9961, %v9953
    %v10026 = vpack.c.bf16 %v9962, %v9954
    %v10027 = vpack.c.bf16 %v9963, %v9955
    %v10028 = vpack.c.bf16 %v9964, %v9956
    %v10029 = vpack.c.bf16 %v9973, %v9965
    %v10030 = vpack.c.bf16 %v9974, %v9966
    %v10031 = vpack.c.bf16 %v9975, %v9967
    %v10032 = vpack.c.bf16 %v9976, %v9968
    %v10033 = vpack.c.bf16 %v9977, %v9969
    %v10034 = vpack.c.bf16 %v9978, %v9970
    %v10035 = vpack.c.bf16 %v9979, %v9971
    %v10036 = vpack.c.bf16 %v9980, %v9972
    %v10037 = vpack.c.bf16 %v9989, %v9981
    %v10038 = vpack.c.bf16 %v9990, %v9982
    %v10039 = vpack.c.bf16 %v9991, %v9983
    %v10040 = vpack.c.bf16 %v9992, %v9984
    %v10041 = vpack.c.bf16 %v9993, %v9985
    %v10042 = vpack.c.bf16 %v9994, %v9986
    %v10043 = vpack.c.bf16 %v9995, %v9987
    %v10044 = vpack.c.bf16 %v9996, %v9988
    %v10045 = vpack.c.bf16 %v10005, %v9997
    %v10046 = vpack.c.bf16 %v10006, %v9998
    %v10047 = vpack.c.bf16 %v10007, %v9999
    %v10048 = vpack.c.bf16 %v10008, %v10000
    %v10049 = vpack.c.bf16 %v10009, %v10001
    %v10050 = vpack.c.bf16 %v10010, %v10002
    %v10051 = vpack.c.bf16 %v10011, %v10003
    %v10052 = vpack.c.bf16 %v10012, %v10004
    %v10053 = vld [vmem:[%s9] sm:$0xff]
    %v10054 = vld [vmem:[%s9 + $0x8] sm:$0xff]
    %v10055 = vld [vmem:[%s9 + $0x10] sm:$0xff]
    %v10056 = vld [vmem:[%s9 + $0x18] sm:$0xff]
    %v10057 = vld [vmem:[%s9 + $0x20] sm:$0xff]
    %v10058 = vld [vmem:[%s9 + $0x28] sm:$0xff]
    %v10059 = vld [vmem:[%s9 + $0x30] sm:$0xff]
    %v10060 = vld [vmem:[%s9 + $0x38] sm:$0xff]
    %10062 = vset.pattern.permute.xlu0 0
    %10063 = vperm.xlu0 %10062, %v10053
    %v10064 = vpop.permute.xlu0 %10063
    %10067 = vset.pattern.permute.xlu0 0
    %10068 = vperm.xlu0 %10067, %v10054
    %v10069 = vpop.permute.xlu0 %10068
    %10072 = vset.pattern.permute.xlu0 0
    %10073 = vperm.xlu0 %10072, %v10055
    %v10074 = vpop.permute.xlu0 %10073
    %10077 = vset.pattern.permute.xlu0 0
    %10078 = vperm.xlu0 %10077, %v10056
    %v10079 = vpop.permute.xlu0 %10078
    %10082 = vset.pattern.permute.xlu0 0
    %10083 = vperm.xlu0 %10082, %v10057
    %v10084 = vpop.permute.xlu0 %10083
    %10087 = vset.pattern.permute.xlu0 0
    %10088 = vperm.xlu0 %10087, %v10058
    %v10089 = vpop.permute.xlu0 %10088
    %10092 = vset.pattern.permute.xlu0 0
    %10093 = vperm.xlu0 %10092, %v10059
    %v10094 = vpop.permute.xlu0 %10093
    %10097 = vset.pattern.permute.xlu0 0
    %10098 = vperm.xlu0 %10097, %v10060
    %v10099 = vpop.permute.xlu0 %10098
    %v10109 = vunpack.c.l.b16 %v10013
    %v10110 = vunpack.c.l.b16 %v10014
    %v10111 = vunpack.c.l.b16 %v10015
    %v10112 = vunpack.c.l.b16 %v10016
    %v10113 = vunpack.c.l.b16 %v10017
    %v10114 = vunpack.c.l.b16 %v10018
    %v10115 = vunpack.c.l.b16 %v10019
    %v10116 = vunpack.c.l.b16 %v10020
    %v10117 = vpack.c.b16 %v10110, %v10109
    %v10118 = vpack.c.b16 %v10112, %v10111
    %v10119 = vpack.c.b16 %v10114, %v10113
    %v10120 = vpack.c.b16 %v10116, %v10115
    %v10122 = vsel %vm8772, %v10117, 0
    %v10125 = vsel %vm8772, %v10118, 0
    %v10128 = vsel %vm8772, %v10119, 0
    %v10131 = vsel %vm8772, %v10120, 0
    %10133 = vmatprep.subr.bf16.mxu0 %v10022
    %10134 = vmatpush1.bf16.msra.mxu0 %v10021
    %10135 = vmatprep.subr.bf16.mxu0 %v10030
    %10136 = vmatpush1.bf16.msra.mxu0 %v10029
    %10137 = vmatprep.subr.bf16.mxu0 %v10038
    %10138 = vmatpush1.bf16.msra.mxu0 %v10037
    %10139 = vmatprep.subr.bf16.mxu0 %v10046
    %10140 = vmatpush1.bf16.msra.mxu0 %v10045
    %10141 = vmatprep.subr.bf16.mxu0 0
    %10142 = vmatpush1.bf16.msra.mxu0 0
    %10143 = vmatprep.subr.bf16.mxu0 0
    %10144 = vmatpush1.bf16.msra.mxu0 0
    %10145 = vmatprep.subr.bf16.mxu0 0
    %10146 = vmatpush1.bf16.msra.mxu0 0
    %10147 = vmatprep.subr.bf16.mxu0 0
    %10148 = vmatpush1.bf16.msra.mxu0 0
    %10149 = vmatprep.subr.bf16.mxu0 0
    %10150 = vmatpush1.bf16.msra.mxu0 0
    %10151 = vmatprep.subr.bf16.mxu0 0
    %10152 = vmatpush1.bf16.msra.mxu0 0
    %10153 = vmatprep.subr.bf16.mxu0 0
    %10154 = vmatpush1.bf16.msra.mxu0 0
    %10155 = vmatprep.subr.bf16.mxu0 0
    %10156 = vmatpush1.bf16.msra.mxu0 0
    %10157 = vmatprep.subr.bf16.mxu0 0
    %10158 = vmatpush1.bf16.msra.mxu0 0
    %10159 = vmatprep.subr.bf16.mxu0 0
    %10160 = vmatpush1.bf16.msra.mxu0 0
    %10161 = vmatprep.subr.bf16.mxu0 0
    %10162 = vmatpush1.bf16.msra.mxu0 0
    %10163 = vmatprep.subr.bf16.mxu0 0
    %10164 = vmatpush1.bf16.msra.mxu0 0
    %10165 = vmatprep.mubr.bf16.mxu0 0
    %10166 = vmatmul.mubr.bf16.gmra.mrb[0].mxu0 %v10122
    %v10167 = vpop.f32.mrb[0].mxu0
    %v10168 = vadd.f32 %v10064, %v10167
    %v10169 = vpop.f32.mrb[0].mxu0
    %v10170 = vadd.f32 %v10064, %v10169
    %v10171 = vpop.f32.mrb[0].mxu0
    %v10172 = vadd.f32 %v10069, %v10171
    %v10173 = vpop.f32.mrb[0].mxu0
    %v10174 = vadd.f32 %v10069, %v10173
    %10175 = vmatprep.mubr.bf16.mxu0 0
    %10176 = vmatmul.mubr.bf16.gmra.mrb[0].mxu0 %v10125
    %v10177 = vpop.f32.mrb[0].mxu0
    %v10178 = vadd.f32 %v10074, %v10177
    %v10179 = vpop.f32.mrb[0].mxu0
    %v10180 = vadd.f32 %v10074, %v10179
    %v10181 = vpop.f32.mrb[0].mxu0
    %v10182 = vadd.f32 %v10079, %v10181
    %v10183 = vpop.f32.mrb[0].mxu0
    %v10184 = vadd.f32 %v10079, %v10183
    %10185 = vmatprep.mubr.bf16.mxu0 0
    %10186 = vmatmul.mubr.bf16.gmra.mrb[0].mxu0 %v10128
    %v10187 = vpop.f32.mrb[0].mxu0
    %v10188 = vadd.f32 %v10084, %v10187
    %v10189 = vpop.f32.mrb[0].mxu0
    %v10190 = vadd.f32 %v10084, %v10189
    %v10191 = vpop.f32.mrb[0].mxu0
    %v10192 = vadd.f32 %v10089, %v10191
    %v10193 = vpop.f32.mrb[0].mxu0
    %v10194 = vadd.f32 %v10089, %v10193
    %10195 = vmatprep.mubr.bf16.mxu0 0
    %10196 = vmatmul.mubr.bf16.gmra.mrb[0].mxu0 %v10131
    %v10197 = vpop.f32.mrb[0].mxu0
    %v10198 = vadd.f32 %v10094, %v10197
    %v10199 = vpop.f32.mrb[0].mxu0
    %v10200 = vadd.f32 %v10094, %v10199
    %v10201 = vpop.f32.mrb[0].mxu0
    %v10202 = vadd.f32 %v10099, %v10201
    %v10203 = vpop.f32.mrb[0].mxu0
    %v10204 = vadd.f32 %v10099, %v10203
    %10205 = vdwg.mxu0
    %10206 = vmatprep.subr.bf16.mxu0 %v10024
    %10207 = vmatpush1.bf16.msra.mxu0 %v10023
    %10208 = vmatprep.subr.bf16.mxu0 %v10032
    %10209 = vmatpush1.bf16.msra.mxu0 %v10031
    %10210 = vmatprep.subr.bf16.mxu0 %v10040
    %10211 = vmatpush1.bf16.msra.mxu0 %v10039
    %10212 = vmatprep.subr.bf16.mxu0 %v10048
    %10213 = vmatpush1.bf16.msra.mxu0 %v10047
    %10214 = vmatprep.subr.bf16.mxu0 0
    %10215 = vmatpush1.bf16.msra.mxu0 0
    %10216 = vmatprep.subr.bf16.mxu0 0
    %10217 = vmatpush1.bf16.msra.mxu0 0
    %10218 = vmatprep.subr.bf16.mxu0 0
    %10219 = vmatpush1.bf16.msra.mxu0 0
    %10220 = vmatprep.subr.bf16.mxu0 0
    %10221 = vmatpush1.bf16.msra.mxu0 0
    %10222 = vmatprep.subr.bf16.mxu0 0
    %10223 = vmatpush1.bf16.msra.mxu0 0
    %10224 = vmatprep.subr.bf16.mxu0 0
    %10225 = vmatpush1.bf16.msra.mxu0 0
    %10226 = vmatprep.subr.bf16.mxu0 0
    %10227 = vmatpush1.bf16.msra.mxu0 0
    %10228 = vmatprep.subr.bf16.mxu0 0
    %10229 = vmatpush1.bf16.msra.mxu0 0
    %10230 = vmatprep.subr.bf16.mxu0 0
    %10231 = vmatpush1.bf16.msra.mxu0 0
    %10232 = vmatprep.subr.bf16.mxu0 0
    %10233 = vmatpush1.bf16.msra.mxu0 0
    %10234 = vmatprep.subr.bf16.mxu0 0
    %10235 = vmatpush1.bf16.msra.mxu0 0
    %10236 = vmatprep.subr.bf16.mxu0 0
    %10237 = vmatpush1.bf16.msra.mxu0 0
    %10238 = vmatprep.mubr.bf16.mxu0 0
    %10239 = vmatmul.mubr.bf16.gmra.mrb[0].mxu0 %v10122
    %v10240 = vpop.f32.mrb[0].mxu0
    %v10241 = vadd.f32 %v10064, %v10240
    %v10242 = vpop.f32.mrb[0].mxu0
    %v10243 = vadd.f32 %v10064, %v10242
    %v10244 = vpop.f32.mrb[0].mxu0
    %v10245 = vadd.f32 %v10069, %v10244
    %v10246 = vpop.f32.mrb[0].mxu0
    %v10247 = vadd.f32 %v10069, %v10246
    %10248 = vmatprep.mubr.bf16.mxu0 0
    %10249 = vmatmul.mubr.bf16.gmra.mrb[0].mxu0 %v10125
    %v10250 = vpop.f32.mrb[0].mxu0
    %v10251 = vadd.f32 %v10074, %v10250
    %v10252 = vpop.f32.mrb[0].mxu0
    %v10253 = vadd.f32 %v10074, %v10252
    %v10254 = vpop.f32.mrb[0].mxu0
    %v10255 = vadd.f32 %v10079, %v10254
    %v10256 = vpop.f32.mrb[0].mxu0
    %v10257 = vadd.f32 %v10079, %v10256
    %10258 = vmatprep.mubr.bf16.mxu0 0
    %10259 = vmatmul.mubr.bf16.gmra.mrb[0].mxu0 %v10128
    %v10260 = vpop.f32.mrb[0].mxu0
    %v10261 = vadd.f32 %v10084, %v10260
    %v10262 = vpop.f32.mrb[0].mxu0
    %v10263 = vadd.f32 %v10084, %v10262
    %v10264 = vpop.f32.mrb[0].mxu0
    %v10265 = vadd.f32 %v10089, %v10264
    %v10266 = vpop.f32.mrb[0].mxu0
    %v10267 = vadd.f32 %v10089, %v10266
    %10268 = vmatprep.mubr.bf16.mxu0 0
    %10269 = vmatmul.mubr.bf16.gmra.mrb[0].mxu0 %v10131
    %v10270 = vpop.f32.mrb[0].mxu0
    %v10271 = vadd.f32 %v10094, %v10270
    %v10272 = vpop.f32.mrb[0].mxu0
    %v10273 = vadd.f32 %v10094, %v10272
    %v10274 = vpop.f32.mrb[0].mxu0
    %v10275 = vadd.f32 %v10099, %v10274
    %v10276 = vpop.f32.mrb[0].mxu0
    %v10277 = vadd.f32 %v10099, %v10276
    %10278 = vdwg.mxu0
    %10279 = vmatprep.subr.bf16.mxu0 %v10026
    %10280 = vmatpush1.bf16.msra.mxu0 %v10025
    %10281 = vmatprep.subr.bf16.mxu0 %v10034
    %10282 = vmatpush1.bf16.msra.mxu0 %v10033
    %10283 = vmatprep.subr.bf16.mxu0 %v10042
    %10284 = vmatpush1.bf16.msra.mxu0 %v10041
    %10285 = vmatprep.subr.bf16.mxu0 %v10050
    %10286 = vmatpush1.bf16.msra.mxu0 %v10049
    %10287 = vmatprep.subr.bf16.mxu0 0
    %10288 = vmatpush1.bf16.msra.mxu0 0
    %10289 = vmatprep.subr.bf16.mxu0 0
    %10290 = vmatpush1.bf16.msra.mxu0 0
    %10291 = vmatprep.subr.bf16.mxu0 0
    %10292 = vmatpush1.bf16.msra.mxu0 0
    %10293 = vmatprep.subr.bf16.mxu0 0
    %10294 = vmatpush1.bf16.msra.mxu0 0
    %10295 = vmatprep.subr.bf16.mxu0 0
    %10296 = vmatpush1.bf16.msra.mxu0 0
    %10297 = vmatprep.subr.bf16.mxu0 0
    %10298 = vmatpush1.bf16.msra.mxu0 0
    %10299 = vmatprep.subr.bf16.mxu0 0
    %10300 = vmatpush1.bf16.msra.mxu0 0
    %10301 = vmatprep.subr.bf16.mxu0 0
    %10302 = vmatpush1.bf16.msra.mxu0 0
    %10303 = vmatprep.subr.bf16.mxu0 0
    %10304 = vmatpush1.bf16.msra.mxu0 0
    %10305 = vmatprep.subr.bf16.mxu0 0
    %10306 = vmatpush1.bf16.msra.mxu0 0
    %10307 = vmatprep.subr.bf16.mxu0 0
    %10308 = vmatpush1.bf16.msra.mxu0 0
    %10309 = vmatprep.subr.bf16.mxu0 0
    %10310 = vmatpush1.bf16.msra.mxu0 0
    %10311 = vmatprep.mubr.bf16.mxu0 0
    %10312 = vmatmul.mubr.bf16.gmra.mrb[0].mxu0 %v10122
    %v10313 = vpop.f32.mrb[0].mxu0
    %v10314 = vadd.f32 %v10064, %v10313
    %v10315 = vpop.f32.mrb[0].mxu0
    %v10316 = vadd.f32 %v10064, %v10315
    %v10317 = vpop.f32.mrb[0].mxu0
    %v10318 = vadd.f32 %v10069, %v10317
    %v10319 = vpop.f32.mrb[0].mxu0
    %v10320 = vadd.f32 %v10069, %v10319
    %10321 = vmatprep.mubr.bf16.mxu0 0
    %10322 = vmatmul.mubr.bf16.gmra.mrb[0].mxu0 %v10125
    %v10323 = vpop.f32.mrb[0].mxu0
    %v10324 = vadd.f32 %v10074, %v10323
    %v10325 = vpop.f32.mrb[0].mxu0
    %v10326 = vadd.f32 %v10074, %v10325
    %v10327 = vpop.f32.mrb[0].mxu0
    %v10328 = vadd.f32 %v10079, %v10327
    %v10329 = vpop.f32.mrb[0].mxu0
    %v10330 = vadd.f32 %v10079, %v10329
    %10331 = vmatprep.mubr.bf16.mxu0 0
    %10332 = vmatmul.mubr.bf16.gmra.mrb[0].mxu0 %v10128
    %v10333 = vpop.f32.mrb[0].mxu0
    %v10334 = vadd.f32 %v10084, %v10333
    %v10335 = vpop.f32.mrb[0].mxu0
    %v10336 = vadd.f32 %v10084, %v10335
    %v10337 = vpop.f32.mrb[0].mxu0
    %v10338 = vadd.f32 %v10089, %v10337
    %v10339 = vpop.f32.mrb[0].mxu0
    %v10340 = vadd.f32 %v10089, %v10339
    %10341 = vmatprep.mubr.bf16.mxu0 0
    %10342 = vmatmul.mubr.bf16.gmra.mrb[0].mxu0 %v10131
    %v10343 = vpop.f32.mrb[0].mxu0
    %v10344 = vadd.f32 %v10094, %v10343
    %v10345 = vpop.f32.mrb[0].mxu0
    %v10346 = vadd.f32 %v10094, %v10345
    %v10347 = vpop.f32.mrb[0].mxu0
    %v10348 = vadd.f32 %v10099, %v10347
    %v10349 = vpop.f32.mrb[0].mxu0
    %v10350 = vadd.f32 %v10099, %v10349
    %10351 = vdwg.mxu0
    %10352 = vmatprep.subr.bf16.mxu0 %v10028
    %10353 = vmatpush1.bf16.msra.mxu0 %v10027
    %10354 = vmatprep.subr.bf16.mxu0 %v10036
    %10355 = vmatpush1.bf16.msra.mxu0 %v10035
    %10356 = vmatprep.subr.bf16.mxu0 %v10044
    %10357 = vmatpush1.bf16.msra.mxu0 %v10043
    %10358 = vmatprep.subr.bf16.mxu0 %v10052
    %10359 = vmatpush1.bf16.msra.mxu0 %v10051
    %10360 = vmatprep.subr.bf16.mxu0 0
    %10361 = vmatpush1.bf16.msra.mxu0 0
    %10362 = vmatprep.subr.bf16.mxu0 0
    %10363 = vmatpush1.bf16.msra.mxu0 0
    %10364 = vmatprep.subr.bf16.mxu0 0
    %10365 = vmatpush1.bf16.msra.mxu0 0
    %10366 = vmatprep.subr.bf16.mxu0 0
    %10367 = vmatpush1.bf16.msra.mxu0 0
    %10368 = vmatprep.subr.bf16.mxu0 0
    %10369 = vmatpush1.bf16.msra.mxu0 0
    %10370 = vmatprep.subr.bf16.mxu0 0
    %10371 = vmatpush1.bf16.msra.mxu0 0
    %10372 = vmatprep.subr.bf16.mxu0 0
    %10373 = vmatpush1.bf16.msra.mxu0 0
    %10374 = vmatprep.subr.bf16.mxu0 0
    %10375 = vmatpush1.bf16.msra.mxu0 0
    %10376 = vmatprep.subr.bf16.mxu0 0
    %10377 = vmatpush1.bf16.msra.mxu0 0
    %10378 = vmatprep.subr.bf16.mxu0 0
    %10379 = vmatpush1.bf16.msra.mxu0 0
    %10380 = vmatprep.subr.bf16.mxu0 0
    %10381 = vmatpush1.bf16.msra.mxu0 0
    %10382 = vmatprep.subr.bf16.mxu0 0
    %10383 = vmatpush1.bf16.msra.mxu0 0
    %10384 = vmatprep.mubr.bf16.mxu0 0
    %10385 = vmatmul.mubr.bf16.gmra.mrb[0].mxu0 %v10122
    %v10386 = vpop.f32.mrb[0].mxu0
    %v10387 = vadd.f32 %v10064, %v10386
    %v10388 = vpop.f32.mrb[0].mxu0
    %v10389 = vadd.f32 %v10064, %v10388
    %v10390 = vpop.f32.mrb[0].mxu0
    %v10391 = vadd.f32 %v10069, %v10390
    %v10392 = vpop.f32.mrb[0].mxu0
    %v10393 = vadd.f32 %v10069, %v10392
    %10394 = vmatprep.mubr.bf16.mxu0 0
    %10395 = vmatmul.mubr.bf16.gmra.mrb[0].mxu0 %v10125
    %v10396 = vpop.f32.mrb[0].mxu0
    %v10397 = vadd.f32 %v10074, %v10396
    %v10398 = vpop.f32.mrb[0].mxu0
    %v10399 = vadd.f32 %v10074, %v10398
    %v10400 = vpop.f32.mrb[0].mxu0
    %v10401 = vadd.f32 %v10079, %v10400
    %v10402 = vpop.f32.mrb[0].mxu0
    %v10403 = vadd.f32 %v10079, %v10402
    %10404 = vmatprep.mubr.bf16.mxu0 0
    %10405 = vmatmul.mubr.bf16.gmra.mrb[0].mxu0 %v10128
    %v10406 = vpop.f32.mrb[0].mxu0
    %v10407 = vadd.f32 %v10084, %v10406
    %v10408 = vpop.f32.mrb[0].mxu0
    %v10409 = vadd.f32 %v10084, %v10408
    %v10410 = vpop.f32.mrb[0].mxu0
    %v10411 = vadd.f32 %v10089, %v10410
    %v10412 = vpop.f32.mrb[0].mxu0
    %v10413 = vadd.f32 %v10089, %v10412
    %10414 = vmatprep.mubr.bf16.mxu0 0
    %10415 = vmatmul.mubr.bf16.gmra.mrb[0].mxu0 %v10131
    %v10416 = vpop.f32.mrb[0].mxu0
    %v10417 = vadd.f32 %v10094, %v10416
    %v10418 = vpop.f32.mrb[0].mxu0
    %v10419 = vadd.f32 %v10094, %v10418
    %v10420 = vpop.f32.mrb[0].mxu0
    %v10421 = vadd.f32 %v10099, %v10420
    %v10422 = vpop.f32.mrb[0].mxu0
    %v10423 = vadd.f32 %v10099, %v10422
    %10424 = vdwg.mxu0
    %v10425 = vmax.f32 %v10168, 0.0
    %v10426 = vmax.f32 %v10170, 0.0
    %v10427 = vmax.f32 %v10241, 0.0
    %v10428 = vmax.f32 %v10243, 0.0
    %v10429 = vmax.f32 %v10314, 0.0
    %v10430 = vmax.f32 %v10316, 0.0
    %v10431 = vmax.f32 %v10387, 0.0
    %v10432 = vmax.f32 %v10389, 0.0
    %v10433 = vmax.f32 %v10172, 0.0
    %v10434 = vmax.f32 %v10174, 0.0
    %v10435 = vmax.f32 %v10245, 0.0
    %v10436 = vmax.f32 %v10247, 0.0
    %v10437 = vmax.f32 %v10318, 0.0
    %v10438 = vmax.f32 %v10320, 0.0
    %v10439 = vmax.f32 %v10391, 0.0
    %v10440 = vmax.f32 %v10393, 0.0
    %v10441 = vmax.f32 %v10178, 0.0
    %v10442 = vmax.f32 %v10180, 0.0
    %v10443 = vmax.f32 %v10251, 0.0
    %v10444 = vmax.f32 %v10253, 0.0
    %v10445 = vmax.f32 %v10324, 0.0
    %v10446 = vmax.f32 %v10326, 0.0
    %v10447 = vmax.f32 %v10397, 0.0
    %v10448 = vmax.f32 %v10399, 0.0
    %v10449 = vmax.f32 %v10182, 0.0
    %v10450 = vmax.f32 %v10184, 0.0
    %v10451 = vmax.f32 %v10255, 0.0
    %v10452 = vmax.f32 %v10257, 0.0
    %v10453 = vmax.f32 %v10328, 0.0
    %v10454 = vmax.f32 %v10330, 0.0
    %v10455 = vmax.f32 %v10401, 0.0
    %v10456 = vmax.f32 %v10403, 0.0
    %v10457 = vmax.f32 %v10188, 0.0
    %v10458 = vmax.f32 %v10190, 0.0
    %v10459 = vmax.f32 %v10261, 0.0
    %v10460 = vmax.f32 %v10263, 0.0
    %v10461 = vmax.f32 %v10334, 0.0
    %v10462 = vmax.f32 %v10336, 0.0
    %v10463 = vmax.f32 %v10407, 0.0
    %v10464 = vmax.f32 %v10409, 0.0
    %v10465 = vmax.f32 %v10192, 0.0
    %v10466 = vmax.f32 %v10194, 0.0
    %v10467 = vmax.f32 %v10265, 0.0
    %v10468 = vmax.f32 %v10267, 0.0
    %v10469 = vmax.f32 %v10338, 0.0
    %v10470 = vmax.f32 %v10340, 0.0
    %v10471 = vmax.f32 %v10411, 0.0
    %v10472 = vmax.f32 %v10413, 0.0
    %v10473 = vmax.f32 %v10198, 0.0
    %v10474 = vmax.f32 %v10200, 0.0
    %v10475 = vmax.f32 %v10271, 0.0
    %v10476 = vmax.f32 %v10273, 0.0
    %v10477 = vmax.f32 %v10344, 0.0
    %v10478 = vmax.f32 %v10346, 0.0
    %v10479 = vmax.f32 %v10417, 0.0
    %v10480 = vmax.f32 %v10419, 0.0
    %v10481 = vmax.f32 %v10202, 0.0
    %v10482 = vmax.f32 %v10204, 0.0
    %v10483 = vmax.f32 %v10275, 0.0
    %v10484 = vmax.f32 %v10277, 0.0
    %v10485 = vmax.f32 %v10348, 0.0
    %v10486 = vmax.f32 %v10350, 0.0
    %v10487 = vmax.f32 %v10421, 0.0
    %v10488 = vmax.f32 %v10423, 0.0
    %v10489 = vld [vmem:[%s10] sm:$0xf]
    %v10490 = vpack.c.bf16 %v10433, %v10425
    %v10491 = vpack.c.bf16 %v10434, %v10426
    %v10492 = vpack.c.bf16 %v10435, %v10427
    %v10493 = vpack.c.bf16 %v10436, %v10428
    %v10494 = vpack.c.bf16 %v10437, %v10429
    %v10495 = vpack.c.bf16 %v10438, %v10430
    %v10496 = vpack.c.bf16 %v10439, %v10431
    %v10497 = vpack.c.bf16 %v10440, %v10432
    %v10498 = vpack.c.bf16 %v10449, %v10441
    %v10499 = vpack.c.bf16 %v10450, %v10442
    %v10500 = vpack.c.bf16 %v10451, %v10443
    %v10501 = vpack.c.bf16 %v10452, %v10444
    %v10502 = vpack.c.bf16 %v10453, %v10445
    %v10503 = vpack.c.bf16 %v10454, %v10446
    %v10504 = vpack.c.bf16 %v10455, %v10447
    %v10505 = vpack.c.bf16 %v10456, %v10448
    %v10506 = vpack.c.bf16 %v10465, %v10457
    %v10507 = vpack.c.bf16 %v10466, %v10458
    %v10508 = vpack.c.bf16 %v10467, %v10459
    %v10509 = vpack.c.bf16 %v10468, %v10460
    %v10510 = vpack.c.bf16 %v10469, %v10461
    %v10511 = vpack.c.bf16 %v10470, %v10462
    %v10512 = vpack.c.bf16 %v10471, %v10463
    %v10513 = vpack.c.bf16 %v10472, %v10464
    %v10514 = vpack.c.bf16 %v10481, %v10473
    %v10515 = vpack.c.bf16 %v10482, %v10474
    %v10516 = vpack.c.bf16 %v10483, %v10475
    %v10517 = vpack.c.bf16 %v10484, %v10476
    %v10518 = vpack.c.bf16 %v10485, %v10477
    %v10519 = vpack.c.bf16 %v10486, %v10478
    %v10520 = vpack.c.bf16 %v10487, %v10479
    %v10521 = vpack.c.bf16 %v10488, %v10480
    %v10522 = vld [vmem:[%s11] sm:$0xff]
    %10524 = vset.pattern.permute.xlu0 0
    %10525 = vperm.xlu0 %10524, %v10522
    %v10526 = vpop.permute.xlu0 %10525
    %v10529 = vsel %vm8772, %v10489, 0
    %10531 = vmatprep.subr.bf16.mxu0 %v10491
    %10532 = vmatpush1.bf16.msra.mxu0 %v10490
    %10533 = vmatprep.subr.bf16.mxu0 %v10499
    %10534 = vmatpush1.bf16.msra.mxu0 %v10498
    %10535 = vmatprep.subr.bf16.mxu0 %v10507
    %10536 = vmatpush1.bf16.msra.mxu0 %v10506
    %10537 = vmatprep.subr.bf16.mxu0 %v10515
    %10538 = vmatpush1.bf16.msra.mxu0 %v10514
    %10539 = vmatprep.subr.bf16.mxu0 0
    %10540 = vmatpush1.bf16.msra.mxu0 0
    %10541 = vmatprep.subr.bf16.mxu0 0
    %10542 = vmatpush1.bf16.msra.mxu0 0
    %10543 = vmatprep.subr.bf16.mxu0 0
    %10544 = vmatpush1.bf16.msra.mxu0 0
    %10545 = vmatprep.subr.bf16.mxu0 0
    %10546 = vmatpush1.bf16.msra.mxu0 0
    %10547 = vmatprep.subr.bf16.mxu0 0
    %10548 = vmatpush1.bf16.msra.mxu0 0
    %10549 = vmatprep.subr.bf16.mxu0 0
    %10550 = vmatpush1.bf16.msra.mxu0 0
    %10551 = vmatprep.subr.bf16.mxu0 0
    %10552 = vmatpush1.bf16.msra.mxu0 0
    %10553 = vmatprep.subr.bf16.mxu0 0
    %10554 = vmatpush1.bf16.msra.mxu0 0
    %10555 = vmatprep.subr.bf16.mxu0 0
    %10556 = vmatpush1.bf16.msra.mxu0 0
    %10557 = vmatprep.subr.bf16.mxu0 0
    %10558 = vmatpush1.bf16.msra.mxu0 0
    %10559 = vmatprep.subr.bf16.mxu0 0
    %10560 = vmatpush1.bf16.msra.mxu0 0
    %10561 = vmatprep.subr.bf16.mxu0 0
    %10562 = vmatpush1.bf16.msra.mxu0 0
    %10563 = vmatprep.mubr.bf16.mxu0 0
    %10564 = vmatmul.mubr.bf16.gmra.mrb[0].mxu0 %v10529
    %v10565 = vpop.f32.mrb[0].mxu0
    %v10566 = vadd.f32 %v10526, %v10565
    %v10567 = vpop.f32.mrb[0].mxu0
    %v10568 = vadd.f32 %v10526, %v10567
    %v10569 = vpop.f32.mrb[0].mxu0
    %v10570 = vpop.f32.mrb[0].mxu0
    %10571 = vdwg.mxu0
    %10572 = vmatprep.subr.bf16.mxu0 %v10493
    %10573 = vmatpush1.bf16.msra.mxu0 %v10492
    %10574 = vmatprep.subr.bf16.mxu0 %v10501
    %10575 = vmatpush1.bf16.msra.mxu0 %v10500
    %10576 = vmatprep.subr.bf16.mxu0 %v10509
    %10577 = vmatpush1.bf16.msra.mxu0 %v10508
    %10578 = vmatprep.subr.bf16.mxu0 %v10517
    %10579 = vmatpush1.bf16.msra.mxu0 %v10516
    %10580 = vmatprep.subr.bf16.mxu0 0
    %10581 = vmatpush1.bf16.msra.mxu0 0
    %10582 = vmatprep.subr.bf16.mxu0 0
    %10583 = vmatpush1.bf16.msra.mxu0 0
    %10584 = vmatprep.subr.bf16.mxu0 0
    %10585 = vmatpush1.bf16.msra.mxu0 0
    %10586 = vmatprep.subr.bf16.mxu0 0
    %10587 = vmatpush1.bf16.msra.mxu0 0
    %10588 = vmatprep.subr.bf16.mxu0 0
    %10589 = vmatpush1.bf16.msra.mxu0 0
    %10590 = vmatprep.subr.bf16.mxu0 0
    %10591 = vmatpush1.bf16.msra.mxu0 0
    %10592 = vmatprep.subr.bf16.mxu0 0
    %10593 = vmatpush1.bf16.msra.mxu0 0
    %10594 = vmatprep.subr.bf16.mxu0 0
    %10595 = vmatpush1.bf16.msra.mxu0 0
    %10596 = vmatprep.subr.bf16.mxu0 0
    %10597 = vmatpush1.bf16.msra.mxu0 0
    %10598 = vmatprep.subr.bf16.mxu0 0
    %10599 = vmatpush1.bf16.msra.mxu0 0
    %10600 = vmatprep.subr.bf16.mxu0 0
    %10601 = vmatpush1.bf16.msra.mxu0 0
    %10602 = vmatprep.subr.bf16.mxu0 0
    %10603 = vmatpush1.bf16.msra.mxu0 0
    %10604 = vmatprep.mubr.bf16.mxu0 0
    %10605 = vmatmul.mubr.bf16.gmra.mrb[0].mxu0 %v10529
    %v10606 = vpop.f32.mrb[0].mxu0
    %v10607 = vadd.f32 %v10526, %v10606
    %v10608 = vpop.f32.mrb[0].mxu0
    %v10609 = vadd.f32 %v10526, %v10608
    %v10610 = vpop.f32.mrb[0].mxu0
    %v10611 = vpop.f32.mrb[0].mxu0
    %10612 = vdwg.mxu0
    %10613 = vmatprep.subr.bf16.mxu0 %v10495
    %10614 = vmatpush1.bf16.msra.mxu0 %v10494
    %10615 = vmatprep.subr.bf16.mxu0 %v10503
    %10616 = vmatpush1.bf16.msra.mxu0 %v10502
    %10617 = vmatprep.subr.bf16.mxu0 %v10511
    %10618 = vmatpush1.bf16.msra.mxu0 %v10510
    %10619 = vmatprep.subr.bf16.mxu0 %v10519
    %10620 = vmatpush1.bf16.msra.mxu0 %v10518
    %10621 = vmatprep.subr.bf16.mxu0 0
    %10622 = vmatpush1.bf16.msra.mxu0 0
    %10623 = vmatprep.subr.bf16.mxu0 0
    %10624 = vmatpush1.bf16.msra.mxu0 0
    %10625 = vmatprep.subr.bf16.mxu0 0
    %10626 = vmatpush1.bf16.msra.mxu0 0
    %10627 = vmatprep.subr.bf16.mxu0 0
    %10628 = vmatpush1.bf16.msra.mxu0 0
    %10629 = vmatprep.subr.bf16.mxu0 0
    %10630 = vmatpush1.bf16.msra.mxu0 0
    %10631 = vmatprep.subr.bf16.mxu0 0
    %10632 = vmatpush1.bf16.msra.mxu0 0
    %10633 = vmatprep.subr.bf16.mxu0 0
    %10634 = vmatpush1.bf16.msra.mxu0 0
    %10635 = vmatprep.subr.bf16.mxu0 0
    %10636 = vmatpush1.bf16.msra.mxu0 0
    %10637 = vmatprep.subr.bf16.mxu0 0
    %10638 = vmatpush1.bf16.msra.mxu0 0
    %10639 = vmatprep.subr.bf16.mxu0 0
    %10640 = vmatpush1.bf16.msra.mxu0 0
    %10641 = vmatprep.subr.bf16.mxu0 0
    %10642 = vmatpush1.bf16.msra.mxu0 0
    %10643 = vmatprep.subr.bf16.mxu0 0
    %10644 = vmatpush1.bf16.msra.mxu0 0
    %10645 = vmatprep.mubr.bf16.mxu0 0
    %10646 = vmatmul.mubr.bf16.gmra.mrb[0].mxu0 %v10529
    %v10647 = vpop.f32.mrb[0].mxu0
    %v10648 = vadd.f32 %v10526, %v10647
    %v10649 = vpop.f32.mrb[0].mxu0
    %v10650 = vadd.f32 %v10526, %v10649
    %v10651 = vpop.f32.mrb[0].mxu0
    %v10652 = vpop.f32.mrb[0].mxu0
    %10653 = vdwg.mxu0
    %10654 = vmatprep.subr.bf16.mxu0 %v10497
    %10655 = vmatpush1.bf16.msra.mxu0 %v10496
    %10656 = vmatprep.subr.bf16.mxu0 %v10505
    %10657 = vmatpush1.bf16.msra.mxu0 %v10504
    %10658 = vmatprep.subr.bf16.mxu0 %v10513
    %10659 = vmatpush1.bf16.msra.mxu0 %v10512
    %10660 = vmatprep.subr.bf16.mxu0 %v10521
    %10661 = vmatpush1.bf16.msra.mxu0 %v10520
    %10662 = vmatprep.subr.bf16.mxu0 0
    %10663 = vmatpush1.bf16.msra.mxu0 0
    %10664 = vmatprep.subr.bf16.mxu0 0
    %10665 = vmatpush1.bf16.msra.mxu0 0
    %10666 = vmatprep.subr.bf16.mxu0 0
    %10667 = vmatpush1.bf16.msra.mxu0 0
    %10668 = vmatprep.subr.bf16.mxu0 0
    %10669 = vmatpush1.bf16.msra.mxu0 0
    %10670 = vmatprep.subr.bf16.mxu0 0
    %10671 = vmatpush1.bf16.msra.mxu0 0
    %10672 = vmatprep.subr.bf16.mxu0 0
    %10673 = vmatpush1.bf16.msra.mxu0 0
    %10674 = vmatprep.subr.bf16.mxu0 0
    %10675 = vmatpush1.bf16.msra.mxu0 0
    %10676 = vmatprep.subr.bf16.mxu0 0
    %10677 = vmatpush1.bf16.msra.mxu0 0
    %10678 = vmatprep.subr.bf16.mxu0 0
    %10679 = vmatpush1.bf16.msra.mxu0 0
    %10680 = vmatprep.subr.bf16.mxu0 0
    %10681 = vmatpush1.bf16.msra.mxu0 0
    %10682 = vmatprep.subr.bf16.mxu0 0
    %10683 = vmatpush1.bf16.msra.mxu0 0
    %10684 = vmatprep.subr.bf16.mxu0 0
    %10685 = vmatpush1.bf16.msra.mxu0 0
    %10686 = vmatprep.mubr.bf16.mxu0 0
    %10687 = vmatmul.mubr.bf16.gmra.mrb[0].mxu0 %v10529
    %v10688 = vpop.f32.mrb[0].mxu0
    %v10689 = vadd.f32 %v10526, %v10688
    %v10690 = vpop.f32.mrb[0].mxu0
    %v10691 = vadd.f32 %v10526, %v10690
    %v10692 = vpop.f32.mrb[0].mxu0
    %v10693 = vpop.f32.mrb[0].mxu0
    %10694 = vdwg.mxu0
    %v10695 = vxor.u32 %v10566, 2147483648
    %v10696 = vxor.u32 %v10568, 2147483648
    %v10697 = vxor.u32 %v10607, 2147483648
    %v10698 = vxor.u32 %v10609, 2147483648
    %v10699 = vxor.u32 %v10648, 2147483648
    %v10700 = vxor.u32 %v10650, 2147483648
    %v10701 = vxor.u32 %v10689, 2147483648
    %v10702 = vxor.u32 %v10691, 2147483648
    %v10703 = vmul.f32 %v10695, 1.442695
    %v10704 = vpow.pop %v10703
    %v10705 = vmul.f32 %v10696, 1.442695
    %v10706 = vpow.pop %v10705
    %v10707 = vmul.f32 %v10697, 1.442695
    %v10708 = vpow.pop %v10707
    %v10709 = vmul.f32 %v10698, 1.442695
    %v10710 = vpow.pop %v10709
    %v10711 = vmul.f32 %v10699, 1.442695
    %v10712 = vpow.pop %v10711
    %v10713 = vmul.f32 %v10700, 1.442695
    %v10714 = vpow.pop %v10713
    %v10715 = vmul.f32 %v10701, 1.442695
    %v10716 = vpow.pop %v10715
    %v10717 = vmul.f32 %v10702, 1.442695
    %v10718 = vpow.pop %v10717
    %v10719 = vadd.f32 %v10704, 1.0
    %v10720 = vadd.f32 %v10706, 1.0
    %v10721 = vadd.f32 %v10708, 1.0
    %v10722 = vadd.f32 %v10710, 1.0
    %v10723 = vadd.f32 %v10712, 1.0
    %v10724 = vadd.f32 %v10714, 1.0
    %v10725 = vadd.f32 %v10716, 1.0
    %v10726 = vadd.f32 %v10718, 1.0
    %v10727 = vrcp.pop %v10719
    %v10728 = vmul.f32 1.0, %v10727
    %v10729 = vrcp.pop %v10720
    %v10730 = vmul.f32 1.0, %v10729
    %v10731 = vrcp.pop %v10721
    %v10732 = vmul.f32 1.0, %v10731
    %v10733 = vrcp.pop %v10722
    %v10734 = vmul.f32 1.0, %v10733
    %v10735 = vrcp.pop %v10723
    %v10736 = vmul.f32 1.0, %v10735
    %v10737 = vrcp.pop %v10724
    %v10738 = vmul.f32 1.0, %v10737
    %v10739 = vrcp.pop %v10725
    %v10740 = vmul.f32 1.0, %v10739
    %v10741 = vrcp.pop %v10726
    %v10742 = vmul.f32 1.0, %v10741
    %v10751 = vrot.slane %v10728, 1
    %v10752 = vrot.slane %v10730, 1
    %v10753 = vrot.slane %v10732, 1
    %v10754 = vrot.slane %v10734, 1
    %v10755 = vrot.slane %v10736, 1
    %v10756 = vrot.slane %v10738, 1
    %v10757 = vrot.slane %v10740, 1
    %v10758 = vrot.slane %v10742, 1
    %10767 = vst [vmem:[#allocation3] sm:$0x80] %v10751
    %10768 = vst [vmem:[#allocation3 + $0x8] sm:$0x80] %v10752
    %10769 = vst [vmem:[#allocation3 + $0x10] sm:$0x80] %v10753
    %10770 = vst [vmem:[#allocation3 + $0x18] sm:$0x80] %v10754
    %10771 = vst [vmem:[#allocation3 + $0x20] sm:$0x80] %v10755
    %10772 = vst [vmem:[#allocation3 + $0x28] sm:$0x80] %v10756
    %10773 = vst [vmem:[#allocation3 + $0x30] sm:$0x80] %v10757
    %10774 = vst [vmem:[#allocation3 + $0x38] sm:$0x80] %v10758
    %10775 = vst [vmem:[#allocation3 + $0x40] sm:$0x3] %v10751
    %10776 = vst [vmem:[#allocation3 + $0x48] sm:$0x3] %v10752
    %10777 = vst [vmem:[#allocation3 + $0x50] sm:$0x3] %v10753
    %10778 = vst [vmem:[#allocation3 + $0x58] sm:$0x3] %v10754
    %10779 = vst [vmem:[#allocation3 + $0x60] sm:$0x3] %v10755
    %10780 = vst [vmem:[#allocation3 + $0x68] sm:$0x3] %v10756
    %10781 = vst [vmem:[#allocation3 + $0x70] sm:$0x3] %v10757
    %10782 = vst [vmem:[#allocation3 + $0x78] sm:$0x3] %v10758
    %v10791 = vrot.slane %v10566, 6
    %v10792 = vrot.slane %v10568, 6
    %v10793 = vrot.slane %v10607, 6
    %v10794 = vrot.slane %v10609, 6
    %v10795 = vrot.slane %v10648, 6
    %v10796 = vrot.slane %v10650, 6
    %v10797 = vrot.slane %v10689, 6
    %v10798 = vrot.slane %v10691, 6
    %10807 = vst [vmem:[#allocation3 + $0x40] sm:$0x1c] %v10791
    %10808 = vst [vmem:[#allocation3 + $0x48] sm:$0x1c] %v10792
    %10809 = vst [vmem:[#allocation3 + $0x50] sm:$0x1c] %v10793
    %10810 = vst [vmem:[#allocation3 + $0x58] sm:$0x1c] %v10794
    %10811 = vst [vmem:[#allocation3 + $0x60] sm:$0x1c] %v10795
    %10812 = vst [vmem:[#allocation3 + $0x68] sm:$0x1c] %v10796
    %10813 = vst [vmem:[#allocation3 + $0x70] sm:$0x1c] %v10797
    %10814 = vst [vmem:[#allocation3 + $0x78] sm:$0x1c] %v10798
    %10815 = vst [vmem:[#allocation3 + $0x40] sm:$0xe0] 0.0
    %10816 = vst [vmem:[#allocation3 + $0x48] sm:$0xe0] 0.0
    %10817 = vst [vmem:[#allocation3 + $0x50] sm:$0xe0] 0.0
    %10818 = vst [vmem:[#allocation3 + $0x58] sm:$0xe0] 0.0
    %10819 = vst [vmem:[#allocation3 + $0x60] sm:$0xe0] 0.0
    %10820 = vst [vmem:[#allocation3 + $0x68] sm:$0xe0] 0.0
    %10821 = vst [vmem:[#allocation3 + $0x70] sm:$0xe0] 0.0
    %10822 = vst [vmem:[#allocation3 + $0x78] sm:$0xe0] 0.0
    // Predicated region
    $region50: #{tpu_custom_call.1} parent=1 // pred_check
      _
    $region51: #{tpu_custom_call.1} parent=1 // pred_check_branch
      %10824 = sbr.rel (0) target = $region53
    $region52: #{tpu_custom_call.1} parent=1 // pred_region
      %s10826 = ssub.s32 2048, 2048
      %10827 = vsyncadd [#allocation4], %s10826
      %s10828 = sshll.u32 [#allocation3], 4
      %s10829 = int_to_ptr.vmem [resolvable:$true] %s10828
      %10834 = dma.vmem_to_hbm [thread:$0]  %s10829, 2048, %s12, [#allocation4], 1024, 1024, 64
    $region53: #{tpu_custom_call.1} parent=1 // pred_fallthru
      _
    // Predicated region
    $region54: #{tpu_custom_call.1} parent=1 // pred_check
      _
    $region55: #{tpu_custom_call.1} parent=1 // pred_check_branch
      %10836 = sbr.rel (0) target = $region57
    $region56: #{tpu_custom_call.1} parent=1 // pred_region
      %10837 = dma.done [#allocation4], 2048
    $region57: #{tpu_custom_call.1} parent=1 // pred_fallthru
      _
    %10838 = vsyncpa [#allocation4], 1

</llo_original>
